<compile_context>
chip_gen: v5e
topology: v5e:2x2
jax: 0.10.0
libtpu: 0.0.40
codegen_flags: <defaults>
</compile_context>

<pallas_src>
import jax
import jax.numpy as jnp
from jax.experimental import pallas as pl
from jax.experimental.pallas import tpu as pltpu

EPS = 1e-5  # torch.nn.GroupNorm default


def _conv3x3_im2col(src_bf16, w_ref, bias_row, h, w):
    """3x3 conv, stride 1, over an already padded (B, H+2, W_pad, Cin) bf16 block.

    All nine taps are packed into the contraction dimension (w_ref: (9*Cin, Cout) bf16),
    so the conv is ONE MXU dot with M = B*H*W, K = 9*Cin, f32 accumulation.
    Returns (B*H*W, Cout) float32.
    """
    bb, _, _, cin = src_bf16.shape
    taps = []
    for kh in range(3):
        for kw in range(3):
            taps.append(src_bf16[:, kh:kh + h, kw:kw + w, :])      # (B, H, W, Cin)
    patch = jnp.concatenate(taps, axis=-1).reshape(bb * h * w, 9 * cin)
    y = jnp.dot(patch, w_ref[...], preferred_element_type=jnp.float32)
    return y + bias_row


def _gn_scale_shift(y3, gamma, beta, m_cg, m_gc, n_per_group):
    """Per-sample GroupNorm affine.  y3: (B, H*W, C) f32.

    Returns (scale, shift) of shape (B, 1, C) such that
    y * scale + shift == (y - mean) * rsqrt(var + eps) * gamma + beta.
    One-pass (sum, sum-of-squares) statistics in f32, biased variance (torch semantics).
    """
    s_c = jnp.sum(y3, axis=1)                                                  # (B, C)
    ss_c = jnp.sum(y3 * y3, axis=1)                                            # (B, C)
    s_g = jnp.dot(s_c, m_cg, preferred_element_type=jnp.float32)               # (B, G)
    ss_g = jnp.dot(ss_c, m_cg, preferred_element_type=jnp.float32)             # (B, G)
    mean_g = s_g / n_per_group
    var_g = jnp.maximum(ss_g / n_per_group - mean_g * mean_g, 0.0)
    inv_g = jax.lax.rsqrt(var_g + EPS)
    mean_c = jnp.dot(mean_g, m_gc, preferred_element_type=jnp.float32)         # (B, C)
    inv_c = jnp.dot(inv_g, m_gc, preferred_element_type=jnp.float32)           # (B, C)
    scale = inv_c * gamma
    shift = beta - mean_c * scale
    return scale[:, None, :], shift[:, None, :]


def resblock_kernel(x_ref, w1_ref, b1_ref, g1_ref, be1_ref,
                    w2_ref, b2_ref, g2_ref, be2_ref, mcg_ref, mgc_ref,
                    o_ref, pad_ref):
    bb, _, wpad, c = x_ref.shape
    h, w = o_ref.shape[1], o_ref.shape[2]
    n_per_group = float(h * w * 16)        # 16 channels per group (GroupNorm(C // 16, C))

    m_cg = mcg_ref[...]                    # (C, G) constant one-hot maps (built in wrapper)
    m_gc = mgc_ref[...]                    # (G, C)
    x_pad = x_ref[...]                     # (B, H+2, W_pad, C) f32, pre-padded, 8-aligned W

    # ---- conv1: one K=9*Cin MXU dot over all samples in the block (M = B*H*W) ----
    y = _conv3x3_im2col(x_pad.astype(jnp.bfloat16), w1_ref, b1_ref[...], h, w)

    # ---- GroupNorm1 + ReLU (per-sample stats, fused scale/shift epilogue) ----
    y3 = y.reshape(bb, h * w, c)
    scale, shift = _gn_scale_shift(y3, g1_ref[...], be1_ref[...], m_cg, m_gc, n_per_group)
    y3 = jnp.maximum(y3 * scale + shift, 0.0)

    # ---- stage GN1 output into the persistent padded bf16 scratch for conv2 ----
    # Interior is fully overwritten every step; only the 1-pixel halo that conv2 actually
    # reads needs zeroing (columns beyond W+1 of the 8-aligned width are never read).
    # (Cannot zero "once" at program_id==0: under megacore parallel partitioning a core
    # may never run grid step 0 and scratch is per-core.)
    zrow = jnp.zeros((bb, 1, wpad, c), jnp.bfloat16)
    zcol = jnp.zeros((bb, h, 1, c), jnp.bfloat16)
    pad_ref[:, 0:1, :, :] = zrow
    pad_ref[:, h + 1:h + 2, :, :] = zrow
    pad_ref[:, 1:h + 1, 0:1, :] = zcol
    pad_ref[:, 1:h + 1, w + 1:w + 2, :] = zcol
    pad_ref[:, 1:h + 1, 1:w + 1, :] = y3.reshape(bb, h, w, c).astype(jnp.bfloat16)

    # ---- conv2 ----
    y = _conv3x3_im2col(pad_ref[...], w2_ref, b2_ref[...], h, w)

    # ---- GroupNorm2 (no ReLU before the residual) ----
    y3 = y.reshape(bb, h * w, c)
    scale, shift = _gn_scale_shift(y3, g2_ref[...], be2_ref[...], m_cg, m_gc, n_per_group)
    y3 = y3 * scale + shift

    # ---- residual add (exact f32 input) + ReLU ----
    x_int = x_pad[:, 1:h + 1, 1:w + 1, :]
    out = jnp.maximum(x_int + y3.reshape(bb, h, w, c), 0.0)
    # TODO(synk): emit bf16 output (and accept a bf16 residual) if downstream tolerates it
    # to halve the dominant HBM bytes at this size; kept f32 for torch bit-closeness.
    o_ref[...] = out.astype(o_ref.dtype)


def _pick_batch_block(n, cap=8):
    """Samples per grid step: amortize the ~0.35us per-step overhead, but keep the parallel
    grid axis >= 2 steps when possible so v7x's two TensorCores both get work."""
    upper = min(cap, max(n // 2, 1))
    for bb in range(upper, 0, -1):
        if n % bb == 0:
            return bb
    return 1


def _vmem_budget_bytes(bb, h, w_pad, w, c):
    """Explicit per-step VMEM budget (blocks + scratch + im2col + intermediates)."""
    f32, bf16 = 4, 2
    x_blk = bb * (h + 2) * w_pad * c * f32          # double-buffered input block
    o_blk = bb * h * w * c * f32                    # double-buffered output block
    weights = 2 * 9 * c * c * bf16                  # single-buffered (Buffered(1))
    params = 6 * c * f32 + 2 * c * (c // 16) * f32  # GN params + group maps
    scratch = bb * (h + 2) * w_pad * c * bf16       # persistent padded conv2 input
    patch = bb * h * w * 9 * c * bf16               # im2col patch (one live per conv)
    inter = 3 * bb * h * w * c * f32                # y / normalized / residual temporaries
    total = 2 * (x_blk + o_blk) + weights + params + scratch + patch + inter
    # 2x headroom for compiler temporaries; cap below v7x's 64 MiB physical VMEM per TC.
    return int(min(max(2 * total, 32 << 20), 56 << 20))


def restnet_basic_block(x_nchw, params, batch_block=None):
    """Forward pass of RestNetBasicBlock. Input/output are NCHW float32 like PyTorch."""
    n, c, h, w = x_nchw.shape
    assert c % 16 == 0, "GroupNorm(out_channels // 16, out_channels) requires C % 16 == 0"
    assert params["w1"].shape == (c, c, 3, 3) and params["w2"].shape == (c, c, 3, 3), \
        "residual add requires stride == 1 and in_channels == out_channels"

    bb = _pick_batch_block(n) if batch_block is None else batch_block
    assert n % bb == 0
    groups = c // 16

    # NHWC, pre-padded once here.  Padded width rounded up to a multiple of 8 sublanes so
    # slab slices / scratch stores / DMAs are unmasked; extra zero columns are never read.
    w_pad = ((w + 2 + 7) // 8) * 8
    x = jnp.transpose(x_nchw, (0, 2, 3, 1)).astype(jnp.float32)
    x_padded = jnp.pad(x, ((0, 0), (1, 1), (1, w_pad - w - 1), (0, 0)))

    def pack_w(wt):
        # torch (Cout, Cin, 3, 3) -> (9*Cin, Cout): all nine taps packed into K so each
        # conv is a single MXU dot (no K-remainder passes / accumulator VALU adds).
        return jnp.transpose(wt, (2, 3, 1, 0)).reshape(9 * c, c).astype(jnp.bfloat16)

    row = lambda p: p.reshape(1, c).astype(jnp.float32)
    w1, w2 = pack_w(params["w1"]), pack_w(params["w2"])
    b1, g1, be1 = row(params["b1"]), row(params["gamma1"]), row(params["beta1"])
    b2, g2, be2 = row(params["b2"]), row(params["gamma2"]), row(params["beta2"])

    # channel<->group one-hot maps, built once here (hoisted out of the kernel).
    ch = jnp.arange(c, dtype=jnp.int32)
    gi = jnp.arange(groups, dtype=jnp.int32)
    m_cg = (ch[:, None] // 16 == gi[None, :]).astype(jnp.float32)    # (C, G)
    m_gc = jnp.transpose(m_cg)                                       # (G, C)

    const1 = pl.Buffered(1)  # constant-index operands: single-buffer -> free VMEM headroom
    xspec = pl.BlockSpec((bb, h + 2, w_pad, c), lambda i: (i, 0, 0, 0))
    ospec = pl.BlockSpec((bb, h, w, c), lambda i: (i, 0, 0, 0))
    wspec = pl.BlockSpec((9 * c, c), lambda i: (0, 0), pipeline_mode=const1)
    pspec = pl.BlockSpec((1, c), lambda i: (0, 0), pipeline_mode=const1)
    cgspec = pl.BlockSpec((c, groups), lambda i: (0, 0), pipeline_mode=const1)
    gcspec = pl.BlockSpec((groups, c), lambda i: (0, 0), pipeline_mode=const1)

    out = pl.pallas_call(
        resblock_kernel,
        out_shape=jax.ShapeDtypeStruct((n, h, w, c), jnp.float32),
        grid_spec=pltpu.PrefetchScalarGridSpec(
            num_scalar_prefetch=0,
            # bb samples per grid step; GroupNorm stats span the full image, so any further
            # spatial tiling for very large H/W/C needs a two-pass stats/normalize scheme.
            grid=(n // bb,),
            in_specs=[xspec, wspec, pspec, pspec, pspec,
                      wspec, pspec, pspec, pspec, cgspec, gcspec],
            out_specs=ospec,
            scratch_shapes=[pltpu.VMEM((bb, h + 2, w_pad, c), jnp.bfloat16)],
        ),
        compiler_params=pltpu.CompilerParams(
            dimension_semantics=("parallel",),
            vmem_limit_bytes=_vmem_budget_bytes(bb, h, w_pad, w, c)),
    )(x_padded, w1, b1, g1, be1, w2, b2, g2, be2, m_cg, m_gc)
    return jnp.transpose(out, (0, 3, 1, 2))                                     # back to NCHW


def init_params(key, in_channels, out_channels):
    k1, k2, k3, k4 = jax.random.split(key, 4)
    return {
        # torch conv weight layout (Cout, Cin, kH, kW)
        "w1": 0.05 * jax.random.normal(k1, (out_channels, in_channels, 3, 3), jnp.float32),
        "b1": 0.01 * jax.random.normal(k2, (out_channels,), jnp.float32),
        "w2": 0.05 * jax.random.normal(k3, (out_channels, out_channels, 3, 3), jnp.float32),
        "b2": 0.01 * jax.random.normal(k4, (out_channels,), jnp.float32),
        # GroupNorm affine params (torch default init)
        "gamma1": jnp.ones((out_channels,), jnp.float32),
        "beta1": jnp.zeros((out_channels,), jnp.float32),
        "gamma2": jnp.ones((out_channels,), jnp.float32),
        "beta2": jnp.zeros((out_channels,), jnp.float32),
    }


if __name__ == "__main__":
    key = jax.random.PRNGKey(0)
    kx, kp = jax.random.split(key)

    # stride == 1 and in_channels == out_channels (required for the residual add);
    # channels is a multiple of 16 (GroupNorm) and chosen as 128 so blocks are lane-dense.
    # batch=4 -> 2 samples per grid step and 2 parallel grid steps (both v7x TCs busy).
    batch, channels, spatial = 4, 128, 16
    x = jax.random.normal(kx, (batch, channels, spatial, spatial), jnp.float32)  # NCHW
    params = init_params(kp, channels, channels)

    out = restnet_basic_block(x, params)
    jax.block_until_ready(out)
    assert out.shape == x.shape and out.dtype == jnp.float32
    assert bool(jnp.all(jnp.isfinite(out)))
    assert bool(jnp.all(out >= 0.0))  # final ReLU
    print("KERNEL_OK")
</pallas_src>

<mosaic_0001>
module attributes {stable_mosaic.version = 11 : i64} {
  func.func @resblock_kernel(%arg0: i32, %arg1: memref<2x18x24x128xf32, #tpu.memory_space<vmem>>, %arg2: memref<1152x128xbf16, #tpu.memory_space<vmem>>, %arg3: memref<1x128xf32, #tpu.memory_space<vmem>>, %arg4: memref<1x128xf32, #tpu.memory_space<vmem>>, %arg5: memref<1x128xf32, #tpu.memory_space<vmem>>, %arg6: memref<1152x128xbf16, #tpu.memory_space<vmem>>, %arg7: memref<1x128xf32, #tpu.memory_space<vmem>>, %arg8: memref<1x128xf32, #tpu.memory_space<vmem>>, %arg9: memref<1x128xf32, #tpu.memory_space<vmem>>, %arg10: memref<128x8xf32, #tpu.memory_space<vmem>>, %arg11: memref<8x128xf32, #tpu.memory_space<vmem>>, %arg12: memref<2x16x16x128xf32, #tpu.memory_space<vmem>>, %arg13: memref<2x18x24x128xbf16, #tpu.memory_space<vmem>>) attributes {dimension_semantics = [#tpu.dimension_semantics<parallel>], iteration_bounds = array<i64: 2>, scalar_prefetch = 0 : i64, scratch_operands = 1 : i64, tpu.core_type = #tpu.core_type<tc>, window_params = [{transform_indices = @transform_0, window_bounds = array<i64: 2, 18, 24, 128>}, {pipeline_mode = #tpu.pipeline_mode<synchronous>, transform_indices = @transform_1, window_bounds = array<i64: 1152, 128>}, {pipeline_mode = #tpu.pipeline_mode<synchronous>, transform_indices = @transform_2, window_bounds = array<i64: 1, 128>}, {pipeline_mode = #tpu.pipeline_mode<synchronous>, transform_indices = @transform_3, window_bounds = array<i64: 1, 128>}, {pipeline_mode = #tpu.pipeline_mode<synchronous>, transform_indices = @transform_4, window_bounds = array<i64: 1, 128>}, {pipeline_mode = #tpu.pipeline_mode<synchronous>, transform_indices = @transform_5, window_bounds = array<i64: 1152, 128>}, {pipeline_mode = #tpu.pipeline_mode<synchronous>, transform_indices = @transform_6, window_bounds = array<i64: 1, 128>}, {pipeline_mode = #tpu.pipeline_mode<synchronous>, transform_indices = @transform_7, window_bounds = array<i64: 1, 128>}, {pipeline_mode = #tpu.pipeline_mode<synchronous>, transform_indices = @transform_8, window_bounds = array<i64: 1, 128>}, {pipeline_mode = #tpu.pipeline_mode<synchronous>, transform_indices = @transform_9, window_bounds = array<i64: 128, 8>}, {pipeline_mode = #tpu.pipeline_mode<synchronous>, transform_indices = @transform_10, window_bounds = array<i64: 8, 128>}, {transform_indices = @transform_11, window_bounds = array<i64: 2, 16, 16, 128>}]} {
    %c0 = arith.constant 0 : index
    %c0_0 = arith.constant 0 : index
    %0 = vector.load %arg10[%c0, %c0_0] : memref<128x8xf32, #tpu.memory_space<vmem>>, vector<128x8xf32>
    %c0_1 = arith.constant 0 : index
    %c0_2 = arith.constant 0 : index
    %1 = vector.load %arg11[%c0_1, %c0_2] : memref<8x128xf32, #tpu.memory_space<vmem>>, vector<8x128xf32>
    %c0_3 = arith.constant 0 : index
    %c0_4 = arith.constant 0 : index
    %c0_5 = arith.constant 0 : index
    %c0_6 = arith.constant 0 : index
    %2 = vector.load %arg1[%c0_3, %c0_4, %c0_5, %c0_6] : memref<2x18x24x128xf32, #tpu.memory_space<vmem>>, vector<2x18x24x128xf32>
    %3 = arith.truncf %2 : vector<2x18x24x128xf32> to vector<2x18x24x128xbf16>
    %c0_7 = arith.constant 0 : index
    %c0_8 = arith.constant 0 : index
    %4 = vector.load %arg3[%c0_7, %c0_8] : memref<1x128xf32, #tpu.memory_space<vmem>>, vector<1x128xf32>
    %5 = vector.extract_strided_slice %3 {offsets = [0, 0, 0, 0], sizes = [2, 16, 16, 128], strides = [1, 1, 1, 1]} : vector<2x18x24x128xbf16> to vector<2x16x16x128xbf16>
    %6 = vector.extract_strided_slice %3 {offsets = [0, 0, 1, 0], sizes = [2, 16, 16, 128], strides = [1, 1, 1, 1]} : vector<2x18x24x128xbf16> to vector<2x16x16x128xbf16>
    %7 = vector.extract_strided_slice %3 {offsets = [0, 0, 2, 0], sizes = [2, 16, 16, 128], strides = [1, 1, 1, 1]} : vector<2x18x24x128xbf16> to vector<2x16x16x128xbf16>
    %8 = vector.extract_strided_slice %3 {offsets = [0, 1, 0, 0], sizes = [2, 16, 16, 128], strides = [1, 1, 1, 1]} : vector<2x18x24x128xbf16> to vector<2x16x16x128xbf16>
    %9 = vector.extract_strided_slice %3 {offsets = [0, 1, 1, 0], sizes = [2, 16, 16, 128], strides = [1, 1, 1, 1]} : vector<2x18x24x128xbf16> to vector<2x16x16x128xbf16>
    %10 = vector.extract_strided_slice %3 {offsets = [0, 1, 2, 0], sizes = [2, 16, 16, 128], strides = [1, 1, 1, 1]} : vector<2x18x24x128xbf16> to vector<2x16x16x128xbf16>
    %11 = vector.extract_strided_slice %3 {offsets = [0, 2, 0, 0], sizes = [2, 16, 16, 128], strides = [1, 1, 1, 1]} : vector<2x18x24x128xbf16> to vector<2x16x16x128xbf16>
    %12 = vector.extract_strided_slice %3 {offsets = [0, 2, 1, 0], sizes = [2, 16, 16, 128], strides = [1, 1, 1, 1]} : vector<2x18x24x128xbf16> to vector<2x16x16x128xbf16>
    %13 = vector.extract_strided_slice %3 {offsets = [0, 2, 2, 0], sizes = [2, 16, 16, 128], strides = [1, 1, 1, 1]} : vector<2x18x24x128xbf16> to vector<2x16x16x128xbf16>
    %14 = tpu.concatenate %5, %6, %7, %8, %9, %10, %11, %12, %13 in 3 : vector<2x16x16x128xbf16>, vector<2x16x16x128xbf16>, vector<2x16x16x128xbf16>, vector<2x16x16x128xbf16>, vector<2x16x16x128xbf16>, vector<2x16x16x128xbf16>, vector<2x16x16x128xbf16>, vector<2x16x16x128xbf16>, vector<2x16x16x128xbf16> -> vector<2x16x16x1152xbf16>
    %15 = vector.shape_cast %14 : vector<2x16x16x1152xbf16> to vector<512x1152xbf16>
    %c0_9 = arith.constant 0 : index
    %c0_10 = arith.constant 0 : index
    %16 = vector.load %arg2[%c0_9, %c0_10] : memref<1152x128xbf16, #tpu.memory_space<vmem>>, vector<1152x128xbf16>
    %cst = arith.constant dense<0.000000e+00> : vector<512x128xf32>
    %17 = tpu.matmul %15, %16, %cst {dimension_numbers = #tpu.dot_dimension_numbers<[1], [0], [0], [1], [0, 0, 1, 1], [], []>} : vector<512x1152xbf16>, vector<1152x128xbf16>, vector<512x128xf32> -> vector<512x128xf32>
    %18 = vector.broadcast %4 : vector<1x128xf32> to vector<512x128xf32>
    %19 = arith.addf %17, %18 : vector<512x128xf32>
    %20 = vector.shape_cast %19 : vector<512x128xf32> to vector<2x256x128xf32>
    %c0_11 = arith.constant 0 : index
    %c0_12 = arith.constant 0 : index
    %21 = vector.load %arg4[%c0_11, %c0_12] : memref<1x128xf32, #tpu.memory_space<vmem>>, vector<1x128xf32>
    %c0_13 = arith.constant 0 : index
    %c0_14 = arith.constant 0 : index
    %22 = vector.load %arg5[%c0_13, %c0_14] : memref<1x128xf32, #tpu.memory_space<vmem>>, vector<1x128xf32>
    %cst_15 = arith.constant dense<0.000000e+00> : vector<2x128xf32>
    %23 = vector.multi_reduction <add>, %20, %cst_15 [1] : vector<2x256x128xf32> to vector<2x128xf32>
    %24 = arith.mulf %20, %20 : vector<2x256x128xf32>
    %cst_16 = arith.constant dense<0.000000e+00> : vector<2x128xf32>
    %25 = vector.multi_reduction <add>, %24, %cst_16 [1] : vector<2x256x128xf32> to vector<2x128xf32>
    %cst_17 = arith.constant dense<0.000000e+00> : vector<2x8xf32>
    %26 = tpu.matmul %23, %0, %cst_17 {dimension_numbers = #tpu.dot_dimension_numbers<[1], [0], [0], [1], [0, 0, 1, 1], [], []>} : vector<2x128xf32>, vector<128x8xf32>, vector<2x8xf32> -> vector<2x8xf32>
    %cst_18 = arith.constant dense<0.000000e+00> : vector<2x8xf32>
    %27 = tpu.matmul %25, %0, %cst_18 {dimension_numbers = #tpu.dot_dimension_numbers<[1], [0], [0], [1], [0, 0, 1, 1], [], []>} : vector<2x128xf32>, vector<128x8xf32>, vector<2x8xf32> -> vector<2x8xf32>
    %cst_19 = arith.constant 4.096000e+03 : f32
    %28 = vector.broadcast %cst_19 : f32 to vector<2x8xf32>
    %29 = arith.divf %26, %28 : vector<2x8xf32>
    %cst_20 = arith.constant 4.096000e+03 : f32
    %30 = vector.broadcast %cst_20 : f32 to vector<2x8xf32>
    %31 = arith.divf %27, %30 : vector<2x8xf32>
    %32 = arith.mulf %29, %29 : vector<2x8xf32>
    %33 = arith.subf %31, %32 : vector<2x8xf32>
    %cst_21 = arith.constant 0.000000e+00 : f32
    %34 = vector.broadcast %cst_21 : f32 to vector<2x8xf32>
    %35 = arith.maximumf %33, %34 : vector<2x8xf32>
    %cst_22 = arith.constant 9.99999974E-6 : f32
    %36 = vector.broadcast %cst_22 : f32 to vector<2x8xf32>
    %37 = arith.addf %35, %36 : vector<2x8xf32>
    %38 = math.rsqrt %37 : vector<2x8xf32>
    %cst_23 = arith.constant dense<0.000000e+00> : vector<2x128xf32>
    %39 = tpu.matmul %29, %1, %cst_23 {dimension_numbers = #tpu.dot_dimension_numbers<[1], [0], [0], [1], [0, 0, 1, 1], [], []>} : vector<2x8xf32>, vector<8x128xf32>, vector<2x128xf32> -> vector<2x128xf32>
    %cst_24 = arith.constant dense<0.000000e+00> : vector<2x128xf32>
    %40 = tpu.matmul %38, %1, %cst_24 {dimension_numbers = #tpu.dot_dimension_numbers<[1], [0], [0], [1], [0, 0, 1, 1], [], []>} : vector<2x8xf32>, vector<8x128xf32>, vector<2x128xf32> -> vector<2x128xf32>
    %41 = vector.broadcast %21 : vector<1x128xf32> to vector<2x128xf32>
    %42 = arith.mulf %40, %41 : vector<2x128xf32>
    %43 = arith.mulf %39, %42 : vector<2x128xf32>
    %44 = vector.broadcast %22 : vector<1x128xf32> to vector<2x128xf32>
    %45 = arith.subf %44, %43 : vector<2x128xf32>
    %46 = vector.shape_cast %42 : vector<2x128xf32> to vector<2x1x128xf32>
    %47 = vector.shape_cast %45 : vector<2x128xf32> to vector<2x1x128xf32>
    %48 = vector.broadcast %46 : vector<2x1x128xf32> to vector<2x256x128xf32>
    %49 = arith.mulf %20, %48 : vector<2x256x128xf32>
    %50 = vector.broadcast %47 : vector<2x1x128xf32> to vector<2x256x128xf32>
    %51 = arith.addf %49, %50 : vector<2x256x128xf32>
    %cst_25 = arith.constant 0.000000e+00 : f32
    %52 = vector.broadcast %cst_25 : f32 to vector<2x256x128xf32>
    %53 = arith.maximumf %51, %52 : vector<2x256x128xf32>
    %cst_26 = arith.constant 0.000000e+00 : bf16
    %54 = vector.broadcast %cst_26 : bf16 to vector<2x1x24x128xbf16>
    %cst_27 = arith.constant 0.000000e+00 : bf16
    %55 = vector.broadcast %cst_27 : bf16 to vector<2x16x1x128xbf16>
    %c0_28 = arith.constant 0 : index
    %c0_29 = arith.constant 0 : index
    %c0_30 = arith.constant 0 : index
    %c0_31 = arith.constant 0 : index
    %56 = vector.load %arg13[%c0_28, %c0_29, %c0_30, %c0_31] : memref<2x18x24x128xbf16, #tpu.memory_space<vmem>>, vector<2x1x24x128xbf16>
    tpu.vector_store %arg13[%c0_28, %c0_29, %c0_30, %c0_31], %54 {strides = array<i32>} : memref<2x18x24x128xbf16, #tpu.memory_space<vmem>>, vector<2x1x24x128xbf16>,
    %c0_32 = arith.constant 0 : index
    %c17 = arith.constant 17 : index
    %c0_33 = arith.constant 0 : index
    %c0_34 = arith.constant 0 : index
    %57 = vector.load %arg13[%c0_32, %c17, %c0_33, %c0_34] : memref<2x18x24x128xbf16, #tpu.memory_space<vmem>>, vector<2x1x24x128xbf16>
    tpu.vector_store %arg13[%c0_32, %c17, %c0_33, %c0_34], %54 {strides = array<i32>} : memref<2x18x24x128xbf16, #tpu.memory_space<vmem>>, vector<2x1x24x128xbf16>,
    %c0_35 = arith.constant 0 : index
    %c1 = arith.constant 1 : index
    %c0_36 = arith.constant 0 : index
    %c0_37 = arith.constant 0 : index
    %58 = vector.load %arg13[%c0_35, %c1, %c0_36, %c0_37] : memref<2x18x24x128xbf16, #tpu.memory_space<vmem>>, vector<2x16x1x128xbf16>
    tpu.vector_store %arg13[%c0_35, %c1, %c0_36, %c0_37], %55 {strides = array<i32>} : memref<2x18x24x128xbf16, #tpu.memory_space<vmem>>, vector<2x16x1x128xbf16>,
    %c0_38 = arith.constant 0 : index
    %c1_39 = arith.constant 1 : index
    %c17_40 = arith.constant 17 : index
    %c0_41 = arith.constant 0 : index
    %59 = vector.load %arg13[%c0_38, %c1_39, %c17_40, %c0_41] : memref<2x18x24x128xbf16, #tpu.memory_space<vmem>>, vector<2x16x1x128xbf16>
    tpu.vector_store %arg13[%c0_38, %c1_39, %c17_40, %c0_41], %55 {strides = array<i32>} : memref<2x18x24x128xbf16, #tpu.memory_space<vmem>>, vector<2x16x1x128xbf16>,
    %60 = vector.shape_cast %53 : vector<2x256x128xf32> to vector<2x16x16x128xf32>
    %61 = arith.truncf %60 : vector<2x16x16x128xf32> to vector<2x16x16x128xbf16>
    %c0_42 = arith.constant 0 : index
    %c1_43 = arith.constant 1 : index
    %c1_44 = arith.constant 1 : index
    %c0_45 = arith.constant 0 : index
    %62 = vector.load %arg13[%c0_42, %c1_43, %c1_44, %c0_45] : memref<2x18x24x128xbf16, #tpu.memory_space<vmem>>, vector<2x16x16x128xbf16>
    tpu.vector_store %arg13[%c0_42, %c1_43, %c1_44, %c0_45], %61 {strides = array<i32>} : memref<2x18x24x128xbf16, #tpu.memory_space<vmem>>, vector<2x16x16x128xbf16>,
    %c0_46 = arith.constant 0 : index
    %c0_47 = arith.constant 0 : index
    %c0_48 = arith.constant 0 : index
    %c0_49 = arith.constant 0 : index
    %63 = vector.load %arg13[%c0_46, %c0_47, %c0_48, %c0_49] : memref<2x18x24x128xbf16, #tpu.memory_space<vmem>>, vector<2x18x24x128xbf16>
    %c0_50 = arith.constant 0 : index
    %c0_51 = arith.constant 0 : index
    %64 = vector.load %arg7[%c0_50, %c0_51] : memref<1x128xf32, #tpu.memory_space<vmem>>, vector<1x128xf32>
    %65 = vector.extract_strided_slice %63 {offsets = [0, 0, 0, 0], sizes = [2, 16, 16, 128], strides = [1, 1, 1, 1]} : vector<2x18x24x128xbf16> to vector<2x16x16x128xbf16>
    %66 = vector.extract_strided_slice %63 {offsets = [0, 0, 1, 0], sizes = [2, 16, 16, 128], strides = [1, 1, 1, 1]} : vector<2x18x24x128xbf16> to vector<2x16x16x128xbf16>
    %67 = vector.extract_strided_slice %63 {offsets = [0, 0, 2, 0], sizes = [2, 16, 16, 128], strides = [1, 1, 1, 1]} : vector<2x18x24x128xbf16> to vector<2x16x16x128xbf16>
    %68 = vector.extract_strided_slice %63 {offsets = [0, 1, 0, 0], sizes = [2, 16, 16, 128], strides = [1, 1, 1, 1]} : vector<2x18x24x128xbf16> to vector<2x16x16x128xbf16>
    %69 = vector.extract_strided_slice %63 {offsets = [0, 1, 1, 0], sizes = [2, 16, 16, 128], strides = [1, 1, 1, 1]} : vector<2x18x24x128xbf16> to vector<2x16x16x128xbf16>
    %70 = vector.extract_strided_slice %63 {offsets = [0, 1, 2, 0], sizes = [2, 16, 16, 128], strides = [1, 1, 1, 1]} : vector<2x18x24x128xbf16> to vector<2x16x16x128xbf16>
    %71 = vector.extract_strided_slice %63 {offsets = [0, 2, 0, 0], sizes = [2, 16, 16, 128], strides = [1, 1, 1, 1]} : vector<2x18x24x128xbf16> to vector<2x16x16x128xbf16>
    %72 = vector.extract_strided_slice %63 {offsets = [0, 2, 1, 0], sizes = [2, 16, 16, 128], strides = [1, 1, 1, 1]} : vector<2x18x24x128xbf16> to vector<2x16x16x128xbf16>
    %73 = vector.extract_strided_slice %63 {offsets = [0, 2, 2, 0], sizes = [2, 16, 16, 128], strides = [1, 1, 1, 1]} : vector<2x18x24x128xbf16> to vector<2x16x16x128xbf16>
    %74 = tpu.concatenate %65, %66, %67, %68, %69, %70, %71, %72, %73 in 3 : vector<2x16x16x128xbf16>, vector<2x16x16x128xbf16>, vector<2x16x16x128xbf16>, vector<2x16x16x128xbf16>, vector<2x16x16x128xbf16>, vector<2x16x16x128xbf16>, vector<2x16x16x128xbf16>, vector<2x16x16x128xbf16>, vector<2x16x16x128xbf16> -> vector<2x16x16x1152xbf16>
    %75 = vector.shape_cast %74 : vector<2x16x16x1152xbf16> to vector<512x1152xbf16>
    %c0_52 = arith.constant 0 : index
    %c0_53 = arith.constant 0 : index
    %76 = vector.load %arg6[%c0_52, %c0_53] : memref<1152x128xbf16, #tpu.memory_space<vmem>>, vector<1152x128xbf16>
    %cst_54 = arith.constant dense<0.000000e+00> : vector<512x128xf32>
    %77 = tpu.matmul %75, %76, %cst_54 {dimension_numbers = #tpu.dot_dimension_numbers<[1], [0], [0], [1], [0, 0, 1, 1], [], []>} : vector<512x1152xbf16>, vector<1152x128xbf16>, vector<512x128xf32> -> vector<512x128xf32>
    %78 = vector.broadcast %64 : vector<1x128xf32> to vector<512x128xf32>
    %79 = arith.addf %77, %78 : vector<512x128xf32>
    %80 = vector.shape_cast %79 : vector<512x128xf32> to vector<2x256x128xf32>
    %c0_55 = arith.constant 0 : index
    %c0_56 = arith.constant 0 : index
    %81 = vector.load %arg8[%c0_55, %c0_56] : memref<1x128xf32, #tpu.memory_space<vmem>>, vector<1x128xf32>
    %c0_57 = arith.constant 0 : index
    %c0_58 = arith.constant 0 : index
    %82 = vector.load %arg9[%c0_57, %c0_58] : memref<1x128xf32, #tpu.memory_space<vmem>>, vector<1x128xf32>
    %cst_59 = arith.constant dense<0.000000e+00> : vector<2x128xf32>
    %83 = vector.multi_reduction <add>, %80, %cst_59 [1] : vector<2x256x128xf32> to vector<2x128xf32>
    %84 = arith.mulf %80, %80 : vector<2x256x128xf32>
    %cst_60 = arith.constant dense<0.000000e+00> : vector<2x128xf32>
    %85 = vector.multi_reduction <add>, %84, %cst_60 [1] : vector<2x256x128xf32> to vector<2x128xf32>
    %cst_61 = arith.constant dense<0.000000e+00> : vector<2x8xf32>
    %86 = tpu.matmul %83, %0, %cst_61 {dimension_numbers = #tpu.dot_dimension_numbers<[1], [0], [0], [1], [0, 0, 1, 1], [], []>} : vector<2x128xf32>, vector<128x8xf32>, vector<2x8xf32> -> vector<2x8xf32>
    %cst_62 = arith.constant dense<0.000000e+00> : vector<2x8xf32>
    %87 = tpu.matmul %85, %0, %cst_62 {dimension_numbers = #tpu.dot_dimension_numbers<[1], [0], [0], [1], [0, 0, 1, 1], [], []>} : vector<2x128xf32>, vector<128x8xf32>, vector<2x8xf32> -> vector<2x8xf32>
    %cst_63 = arith.constant 4.096000e+03 : f32
    %88 = vector.broadcast %cst_63 : f32 to vector<2x8xf32>
    %89 = arith.divf %86, %88 : vector<2x8xf32>
    %cst_64 = arith.constant 4.096000e+03 : f32
    %90 = vector.broadcast %cst_64 : f32 to vector<2x8xf32>
    %91 = arith.divf %87, %90 : vector<2x8xf32>
    %92 = arith.mulf %89, %89 : vector<2x8xf32>
    %93 = arith.subf %91, %92 : vector<2x8xf32>
    %cst_65 = arith.constant 0.000000e+00 : f32
    %94 = vector.broadcast %cst_65 : f32 to vector<2x8xf32>
    %95 = arith.maximumf %93, %94 : vector<2x8xf32>
    %cst_66 = arith.constant 9.99999974E-6 : f32
    %96 = vector.broadcast %cst_66 : f32 to vector<2x8xf32>
    %97 = arith.addf %95, %96 : vector<2x8xf32>
    %98 = math.rsqrt %97 : vector<2x8xf32>
    %cst_67 = arith.constant dense<0.000000e+00> : vector<2x128xf32>
    %99 = tpu.matmul %89, %1, %cst_67 {dimension_numbers = #tpu.dot_dimension_numbers<[1], [0], [0], [1], [0, 0, 1, 1], [], []>} : vector<2x8xf32>, vector<8x128xf32>, vector<2x128xf32> -> vector<2x128xf32>
    %cst_68 = arith.constant dense<0.000000e+00> : vector<2x128xf32>
    %100 = tpu.matmul %98, %1, %cst_68 {dimension_numbers = #tpu.dot_dimension_numbers<[1], [0], [0], [1], [0, 0, 1, 1], [], []>} : vector<2x8xf32>, vector<8x128xf32>, vector<2x128xf32> -> vector<2x128xf32>
    %101 = vector.broadcast %81 : vector<1x128xf32> to vector<2x128xf32>
    %102 = arith.mulf %100, %101 : vector<2x128xf32>
    %103 = arith.mulf %99, %102 : vector<2x128xf32>
    %104 = vector.broadcast %82 : vector<1x128xf32> to vector<2x128xf32>
    %105 = arith.subf %104, %103 : vector<2x128xf32>
    %106 = vector.shape_cast %102 : vector<2x128xf32> to vector<2x1x128xf32>
    %107 = vector.shape_cast %105 : vector<2x128xf32> to vector<2x1x128xf32>
    %108 = vector.broadcast %106 : vector<2x1x128xf32> to vector<2x256x128xf32>
    %109 = arith.mulf %80, %108 : vector<2x256x128xf32>
    %110 = vector.broadcast %107 : vector<2x1x128xf32> to vector<2x256x128xf32>
    %111 = arith.addf %109, %110 : vector<2x256x128xf32>
    %112 = vector.extract_strided_slice %2 {offsets = [0, 1, 1, 0], sizes = [2, 16, 16, 128], strides = [1, 1, 1, 1]} : vector<2x18x24x128xf32> to vector<2x16x16x128xf32>
    %113 = vector.shape_cast %111 : vector<2x256x128xf32> to vector<2x16x16x128xf32>
    %114 = arith.addf %112, %113 : vector<2x16x16x128xf32>
    %cst_69 = arith.constant 0.000000e+00 : f32
    %115 = vector.broadcast %cst_69 : f32 to vector<2x16x16x128xf32>
    %116 = arith.maximumf %114, %115 : vector<2x16x16x128xf32>
    %c0_70 = arith.constant 0 : index
    %c0_71 = arith.constant 0 : index
    %c0_72 = arith.constant 0 : index
    %c0_73 = arith.constant 0 : index
    %117 = vector.load %arg12[%c0_70, %c0_71, %c0_72, %c0_73] : memref<2x16x16x128xf32, #tpu.memory_space<vmem>>, vector<2x16x16x128xf32>
    tpu.vector_store %arg12[%c0_70, %c0_71, %c0_72, %c0_73], %116 {strides = array<i32>} : memref<2x16x16x128xf32, #tpu.memory_space<vmem>>, vector<2x16x16x128xf32>,
    return
  }
  func.func @transform_0(%arg0: i32) -> (i32, i32, i32, i32) {
    %c0_i32 = arith.constant 0 : i32
    %c0_i32_0 = arith.constant 0 : i32
    %c0_i32_1 = arith.constant 0 : i32
    %c0_i32_2 = arith.constant 0 : i32
    return %arg0, %c0_i32, %c0_i32_0, %c0_i32_1 : i32, i32, i32, i32
  }
  func.func @transform_1(%arg0: i32) -> (i32, i32) {
    %c0_i32 = arith.constant 0 : i32
    %c0_i32_0 = arith.constant 0 : i32
    %c0_i32_1 = arith.constant 0 : i32
    return %c0_i32, %c0_i32_0 : i32, i32
  }
  func.func @transform_2(%arg0: i32) -> (i32, i32) {
    %c0_i32 = arith.constant 0 : i32
    %c0_i32_0 = arith.constant 0 : i32
    %c0_i32_1 = arith.constant 0 : i32
    return %c0_i32, %c0_i32_0 : i32, i32
  }
  func.func @transform_3(%arg0: i32) -> (i32, i32) {
    %c0_i32 = arith.constant 0 : i32
    %c0_i32_0 = arith.constant 0 : i32
    %c0_i32_1 = arith.constant 0 : i32
    return %c0_i32, %c0_i32_0 : i32, i32
  }
  func.func @transform_4(%arg0: i32) -> (i32, i32) {
    %c0_i32 = arith.constant 0 : i32
    %c0_i32_0 = arith.constant 0 : i32
    %c0_i32_1 = arith.constant 0 : i32
    return %c0_i32, %c0_i32_0 : i32, i32
  }
  func.func @transform_5(%arg0: i32) -> (i32, i32) {
    %c0_i32 = arith.constant 0 : i32
    %c0_i32_0 = arith.constant 0 : i32
    %c0_i32_1 = arith.constant 0 : i32
    return %c0_i32, %c0_i32_0 : i32, i32
  }
  func.func @transform_6(%arg0: i32) -> (i32, i32) {
    %c0_i32 = arith.constant 0 : i32
    %c0_i32_0 = arith.constant 0 : i32
    %c0_i32_1 = arith.constant 0 : i32
    return %c0_i32, %c0_i32_0 : i32, i32
  }
  func.func @transform_7(%arg0: i32) -> (i32, i32) {
    %c0_i32 = arith.constant 0 : i32
    %c0_i32_0 = arith.constant 0 : i32
    %c0_i32_1 = arith.constant 0 : i32
    return %c0_i32, %c0_i32_0 : i32, i32
  }
  func.func @transform_8(%arg0: i32) -> (i32, i32) {
    %c0_i32 = arith.constant 0 : i32
    %c0_i32_0 = arith.constant 0 : i32
    %c0_i32_1 = arith.constant 0 : i32
    return %c0_i32, %c0_i32_0 : i32, i32
  }
  func.func @transform_9(%arg0: i32) -> (i32, i32) {
    %c0_i32 = arith.constant 0 : i32
    %c0_i32_0 = arith.constant 0 : i32
    %c0_i32_1 = arith.constant 0 : i32
    return %c0_i32, %c0_i32_0 : i32, i32
  }
  func.func @transform_10(%arg0: i32) -> (i32, i32) {
    %c0_i32 = arith.constant 0 : i32
    %c0_i32_0 = arith.constant 0 : i32
    %c0_i32_1 = arith.constant 0 : i32
    return %c0_i32, %c0_i32_0 : i32, i32
  }
  func.func @transform_11(%arg0: i32) -> (i32, i32, i32, i32) {
    %c0_i32 = arith.constant 0 : i32
    %c0_i32_0 = arith.constant 0 : i32
    %c0_i32_1 = arith.constant 0 : i32
    %c0_i32_2 = arith.constant 0 : i32
    return %arg0, %c0_i32, %c0_i32_0, %c0_i32_1 : i32, i32, i32, i32
  }
}

</mosaic_0001>

<llo_original>
// kernel: tpu_custom_call.1
$region0: #{tpu_custom_call.1}
  #allocation0 [shape = 'u32[]', space=smem, size = 0x4, offset = 0x4, fixed_abs, tag = 'smem constant byte address 0x4 - core index']
  #allocation1 [shape = 'u32[72,128]{1,0:T(1,128)}', space=vmem, size = 0x9000, scoped, tag = 'internal scratch']
  #allocation2 [shape = 'bf16[2,18,24,128]{3,2,1,0:T(8,128)(2,1)}', space=vmem, size = 0x36000, scoped, tag = 'scratch operand']
  %s0 = inlined_call_operand.hbm [shape: f32[4,18,24,128], index: 0, kind: input, shape index: {}]
  %s1 = inlined_call_operand.hbm [shape: bf16[1152,128], index: 1, kind: input, shape index: {}]
  %s2 = inlined_call_operand.vmem [shape: f32[1,128], index: 2, kind: input, shape index: {}]
  %s3 = inlined_call_operand.vmem [shape: f32[1,128], index: 3, kind: input, shape index: {}]
  %s4 = inlined_call_operand.vmem [shape: f32[1,128], index: 4, kind: input, shape index: {}]
  %s5 = inlined_call_operand.hbm [shape: bf16[1152,128], index: 5, kind: input, shape index: {}]
  %s6 = inlined_call_operand.vmem [shape: f32[1,128], index: 6, kind: input, shape index: {}]
  %s7 = inlined_call_operand.vmem [shape: f32[1,128], index: 7, kind: input, shape index: {}]
  %s8 = inlined_call_operand.vmem [shape: f32[1,128], index: 8, kind: input, shape index: {}]
  %s9 = inlined_call_operand.vmem [shape: f32[128,8], index: 9, kind: input, shape index: {}]
  %s10 = inlined_call_operand.vmem [shape: f32[8,128], index: 10, kind: input, shape index: {}]
  %s11 = inlined_call_operand.hbm [shape: f32[4,16,16,128], index: 11, kind: output, shape index: {}]
  %s12 = sld [smem:[#allocation0]]
  $region89: #{tpu_custom_call.1} parent=0
    _
  %s14 = ssub.s32 1, %s12
  %s15 = scalar_select 0, %s14, %s12
  $region1: #{tpu_custom_call.1} parent=0
    #allocation3 [shape = 'u8[884736]{0}', space=vmem, size = 0xd8000, scoped, tag = 'input window, operand 0']
    #allocation4 [shape = 's32[2]{0}', space=sflag, size = 0x8, scoped, tag = 'scoped memory for tpu_custom_call.1']
    #allocation5 [shape = 's32[2]{0}', space=sflag, size = 0x8, scoped, tag = 'scoped memory for tpu_custom_call.1']
    #allocation6 [shape = 'u8[294912]{0}', space=vmem, size = 0x48000, scoped, tag = 'input window, operand 1, single buffered']
    #allocation7 [shape = 's32[1]{0}', space=sflag, size = 0x4, scoped, tag = 'scoped memory for tpu_custom_call.1']
    #allocation8 [shape = 'u8[294912]{0}', space=vmem, size = 0x48000, scoped, tag = 'input window, operand 5, single buffered']
    #allocation9 [shape = 'u8[524288]{0}', space=vmem, size = 0x80000, scoped, tag = 'output window, operand 0']
    %16 = vsyncpa [#allocation4], 0
    %s17 = scalar_lea.sflag [#allocation4], 1
    %18 = vsyncpa %s17, 0
    %19 = vsyncpa [#allocation7], 0
    %20 = vsyncpa [#allocation5], 0
    %s21 = scalar_lea.sflag [#allocation5], 1
    %22 = vsyncpa %s21, 0
    loop: start=0, step=1, limit=4
    $region2: #{tpu_custom_call.1} parent=1 // loop_pre_header
      _
    $region3: #{tpu_custom_call.1} parent=1 // loop_header
      %s24 = sphi 0, %s28
      %p25 = scmp.ge.s32.totalorder %s24, 4
      %s34 = sphi 0, %s36
      %s37 = sphi 0, %s34
      %s38 = sphi 0, %s37
      %s54 = sphi 0, %s38
      %s58 = sphi 0, %s58
      %s60 = sphi 0, %s58
      %s61 = sphi 0, %s60
      %s75 = sphi 0, %s61
      %s79 = sphi 0, %s79
      %s81 = sphi 0, %s79
      %s82 = sphi 0, %s81
      %s96 = sphi 0, %s82
      %s100 = sphi 0, %s100
      %s102 = sphi 0, %s100
      %s103 = sphi 0, %s102
      %s117 = sphi 0, %s103
      %s121 = sphi 0, %s121
      %s123 = sphi 0, %s121
      %s124 = sphi 0, %s123
      %s138 = sphi 0, %s124
      %s142 = sphi 0, %s142
      %s144 = sphi 0, %s142
      %s145 = sphi 0, %s144
      %s159 = sphi 0, %s145
      %s163 = sphi 0, %s163
      %s165 = sphi 0, %s163
      %s166 = sphi 0, %s165
      %s180 = sphi 0, %s166
      %s184 = sphi 0, %s184
      %s186 = sphi 0, %s184
      %s187 = sphi 0, %s186
      %s201 = sphi 0, %s187
      %s205 = sphi 0, %s205
      %s207 = sphi 0, %s205
      %s208 = sphi 0, %s207
      %s222 = sphi 0, %s208
      %s226 = sphi 0, %s226
      %s228 = sphi 0, %s226
      %s229 = sphi 0, %s228
      %s243 = sphi 0, %s229
      %s247 = sphi 0, %s247
      %s249 = sphi 0, %s247
      %s250 = sphi 0, %s249
      %s264 = sphi 0, %s250
      %s270 = sphi 0, %s272
      %s273 = sphi 0, %s270
      %s274 = sphi 0, %s273
      %s290 = sphi 0, %s274
    $region4: #{tpu_custom_call.1} parent=1 // loop_header_branch
      %27 = sbr.rel (%p25) target = $region8
    $region5: #{tpu_custom_call.1} parent=1 // loop_body
      %s29 = ssub.s32 %s24, 1
      %s30 = ssub.s32 %s24, 2
      %s31 = sadd.s32 %s24, 1
      %s32 = ssub.s32 %s24, %s31
      %p33 = scmp.eq.s32.totalorder %s32, 0
      %s35 = sadd.s32 %s34, 1
      %s36 = scalar_select %p33, %s34, %s35
      %p39 = pneg %p33
      %p40 = scmp.eq.s32.totalorder %s24, 1
      %p41 = por %p39, %p40
      %p42 = scmp.ne.s32.totalorder %s34, %s37
      %p43 = scmp.eq.s32.totalorder %s24, 0
      %p44 = por %p42, %p43
      %p45 = scmp.ne.s32.totalorder %s34, %s37
      %p46 = scmp.eq.s32.totalorder %s29, 1
      %p47 = por %p45, %p46
      %p48 = scmp.ne.s32.totalorder %s37, %s38
      %p49 = scmp.eq.s32.totalorder %s29, 0
      %p50 = por %p48, %p49
      %p51 = scmp.ne.s32.totalorder %s37, %s38
      %p52 = scmp.eq.s32.totalorder %s30, 1
      %p53 = por %p51, %p52
      %p55 = scmp.ne.s32.totalorder %s38, %s54
      %p56 = scmp.eq.s32.totalorder %s30, 0
      %p57 = por %p55, %p56
      %s59 = sadd.s32 %s58, 1
      %p62 = scmp.eq.s32.totalorder %s24, 1
      %p63 = scmp.ne.s32.totalorder %s58, %s60
      %p64 = scmp.eq.s32.totalorder %s24, 0
      %p65 = por %p63, %p64
      %p66 = scmp.ne.s32.totalorder %s58, %s60
      %p67 = scmp.eq.s32.totalorder %s29, 1
      %p68 = por %p66, %p67
      %p69 = scmp.ne.s32.totalorder %s60, %s61
      %p70 = scmp.eq.s32.totalorder %s29, 0
      %p71 = por %p69, %p70
      %p72 = scmp.ne.s32.totalorder %s60, %s61
      %p73 = scmp.eq.s32.totalorder %s30, 1
      %p74 = por %p72, %p73
      %p76 = scmp.ne.s32.totalorder %s61, %s75
      %p77 = scmp.eq.s32.totalorder %s30, 0
      %p78 = por %p76, %p77
      %s80 = sadd.s32 %s79, 1
      %p83 = scmp.eq.s32.totalorder %s24, 1
      %p84 = scmp.ne.s32.totalorder %s79, %s81
      %p85 = scmp.eq.s32.totalorder %s24, 0
      %p86 = por %p84, %p85
      %p87 = scmp.ne.s32.totalorder %s79, %s81
      %p88 = scmp.eq.s32.totalorder %s29, 1
      %p89 = por %p87, %p88
      %p90 = scmp.ne.s32.totalorder %s81, %s82
      %p91 = scmp.eq.s32.totalorder %s29, 0
      %p92 = por %p90, %p91
      %p93 = scmp.ne.s32.totalorder %s81, %s82
      %p94 = scmp.eq.s32.totalorder %s30, 1
      %p95 = por %p93, %p94
      %p97 = scmp.ne.s32.totalorder %s82, %s96
      %p98 = scmp.eq.s32.totalorder %s30, 0
      %p99 = por %p97, %p98
      %s101 = sadd.s32 %s100, 1
      %p104 = scmp.eq.s32.totalorder %s24, 1
      %p105 = scmp.ne.s32.totalorder %s100, %s102
      %p106 = scmp.eq.s32.totalorder %s24, 0
      %p107 = por %p105, %p106
      %p108 = scmp.ne.s32.totalorder %s100, %s102
      %p109 = scmp.eq.s32.totalorder %s29, 1
      %p110 = por %p108, %p109
      %p111 = scmp.ne.s32.totalorder %s102, %s103
      %p112 = scmp.eq.s32.totalorder %s29, 0
      %p113 = por %p111, %p112
      %p114 = scmp.ne.s32.totalorder %s102, %s103
      %p115 = scmp.eq.s32.totalorder %s30, 1
      %p116 = por %p114, %p115
      %p118 = scmp.ne.s32.totalorder %s103, %s117
      %p119 = scmp.eq.s32.totalorder %s30, 0
      %p120 = por %p118, %p119
      %s122 = sadd.s32 %s121, 1
      %p125 = scmp.eq.s32.totalorder %s24, 1
      %p126 = scmp.ne.s32.totalorder %s121, %s123
      %p127 = scmp.eq.s32.totalorder %s24, 0
      %p128 = por %p126, %p127
      %p129 = scmp.ne.s32.totalorder %s121, %s123
      %p130 = scmp.eq.s32.totalorder %s29, 1
      %p131 = por %p129, %p130
      %p132 = scmp.ne.s32.totalorder %s123, %s124
      %p133 = scmp.eq.s32.totalorder %s29, 0
      %p134 = por %p132, %p133
      %p135 = scmp.ne.s32.totalorder %s123, %s124
      %p136 = scmp.eq.s32.totalorder %s30, 1
      %p137 = por %p135, %p136
      %p139 = scmp.ne.s32.totalorder %s124, %s138
      %p140 = scmp.eq.s32.totalorder %s30, 0
      %p141 = por %p139, %p140
      %s143 = sadd.s32 %s142, 1
      %p146 = scmp.eq.s32.totalorder %s24, 1
      %p147 = scmp.ne.s32.totalorder %s142, %s144
      %p148 = scmp.eq.s32.totalorder %s24, 0
      %p149 = por %p147, %p148
      %p150 = scmp.ne.s32.totalorder %s142, %s144
      %p151 = scmp.eq.s32.totalorder %s29, 1
      %p152 = por %p150, %p151
      %p153 = scmp.ne.s32.totalorder %s144, %s145
      %p154 = scmp.eq.s32.totalorder %s29, 0
      %p155 = por %p153, %p154
      %p156 = scmp.ne.s32.totalorder %s144, %s145
      %p157 = scmp.eq.s32.totalorder %s30, 1
      %p158 = por %p156, %p157
      %p160 = scmp.ne.s32.totalorder %s145, %s159
      %p161 = scmp.eq.s32.totalorder %s30, 0
      %p162 = por %p160, %p161
      %s164 = sadd.s32 %s163, 1
      %p167 = scmp.eq.s32.totalorder %s24, 1
      %p168 = scmp.ne.s32.totalorder %s163, %s165
      %p169 = scmp.eq.s32.totalorder %s24, 0
      %p170 = por %p168, %p169
      %p171 = scmp.ne.s32.totalorder %s163, %s165
      %p172 = scmp.eq.s32.totalorder %s29, 1
      %p173 = por %p171, %p172
      %p174 = scmp.ne.s32.totalorder %s165, %s166
      %p175 = scmp.eq.s32.totalorder %s29, 0
      %p176 = por %p174, %p175
      %p177 = scmp.ne.s32.totalorder %s165, %s166
      %p178 = scmp.eq.s32.totalorder %s30, 1
      %p179 = por %p177, %p178
      %p181 = scmp.ne.s32.totalorder %s166, %s180
      %p182 = scmp.eq.s32.totalorder %s30, 0
      %p183 = por %p181, %p182
      %s185 = sadd.s32 %s184, 1
      %p188 = scmp.eq.s32.totalorder %s24, 1
      %p189 = scmp.ne.s32.totalorder %s184, %s186
      %p190 = scmp.eq.s32.totalorder %s24, 0
      %p191 = por %p189, %p190
      %p192 = scmp.ne.s32.totalorder %s184, %s186
      %p193 = scmp.eq.s32.totalorder %s29, 1
      %p194 = por %p192, %p193
      %p195 = scmp.ne.s32.totalorder %s186, %s187
      %p196 = scmp.eq.s32.totalorder %s29, 0
      %p197 = por %p195, %p196
      %p198 = scmp.ne.s32.totalorder %s186, %s187
      %p199 = scmp.eq.s32.totalorder %s30, 1
      %p200 = por %p198, %p199
      %p202 = scmp.ne.s32.totalorder %s187, %s201
      %p203 = scmp.eq.s32.totalorder %s30, 0
      %p204 = por %p202, %p203
      %s206 = sadd.s32 %s205, 1
      %p209 = scmp.eq.s32.totalorder %s24, 1
      %p210 = scmp.ne.s32.totalorder %s205, %s207
      %p211 = scmp.eq.s32.totalorder %s24, 0
      %p212 = por %p210, %p211
      %p213 = scmp.ne.s32.totalorder %s205, %s207
      %p214 = scmp.eq.s32.totalorder %s29, 1
      %p215 = por %p213, %p214
      %p216 = scmp.ne.s32.totalorder %s207, %s208
      %p217 = scmp.eq.s32.totalorder %s29, 0
      %p218 = por %p216, %p217
      %p219 = scmp.ne.s32.totalorder %s207, %s208
      %p220 = scmp.eq.s32.totalorder %s30, 1
      %p221 = por %p219, %p220
      %p223 = scmp.ne.s32.totalorder %s208, %s222
      %p224 = scmp.eq.s32.totalorder %s30, 0
      %p225 = por %p223, %p224
      %s227 = sadd.s32 %s226, 1
      %p230 = scmp.eq.s32.totalorder %s24, 1
      %p231 = scmp.ne.s32.totalorder %s226, %s228
      %p232 = scmp.eq.s32.totalorder %s24, 0
      %p233 = por %p231, %p232
      %p234 = scmp.ne.s32.totalorder %s226, %s228
      %p235 = scmp.eq.s32.totalorder %s29, 1
      %p236 = por %p234, %p235
      %p237 = scmp.ne.s32.totalorder %s228, %s229
      %p238 = scmp.eq.s32.totalorder %s29, 0
      %p239 = por %p237, %p238
      %p240 = scmp.ne.s32.totalorder %s228, %s229
      %p241 = scmp.eq.s32.totalorder %s30, 1
      %p242 = por %p240, %p241
      %p244 = scmp.ne.s32.totalorder %s229, %s243
      %p245 = scmp.eq.s32.totalorder %s30, 0
      %p246 = por %p244, %p245
      %s248 = sadd.s32 %s247, 1
      %p251 = scmp.eq.s32.totalorder %s24, 1
      %p252 = scmp.ne.s32.totalorder %s247, %s249
      %p253 = scmp.eq.s32.totalorder %s24, 0
      %p254 = por %p252, %p253
      %p255 = scmp.ne.s32.totalorder %s247, %s249
      %p256 = scmp.eq.s32.totalorder %s29, 1
      %p257 = por %p255, %p256
      %p258 = scmp.ne.s32.totalorder %s249, %s250
      %p259 = scmp.eq.s32.totalorder %s29, 0
      %p260 = por %p258, %p259
      %p261 = scmp.ne.s32.totalorder %s249, %s250
      %p262 = scmp.eq.s32.totalorder %s30, 1
      %p263 = por %p261, %p262
      %p265 = scmp.ne.s32.totalorder %s250, %s264
      %p266 = scmp.eq.s32.totalorder %s30, 0
      %p267 = por %p265, %p266
      %s268 = ssub.s32 %s24, %s31
      %p269 = scmp.eq.s32.totalorder %s268, 0
      %s271 = sadd.s32 %s270, 1
      %s272 = scalar_select %p269, %s270, %s271
      %p275 = pneg %p269
      %p276 = scmp.eq.s32.totalorder %s24, 1
      %p277 = por %p275, %p276
      %p278 = scmp.ne.s32.totalorder %s270, %s273
      %p279 = scmp.eq.s32.totalorder %s24, 0
      %p280 = por %p278, %p279
      %p281 = scmp.ne.s32.totalorder %s270, %s273
      %p282 = scmp.eq.s32.totalorder %s29, 1
      %p283 = por %p281, %p282
      %p284 = scmp.ne.s32.totalorder %s273, %s274
      %p285 = scmp.eq.s32.totalorder %s29, 0
      %p286 = por %p284, %p285
      %p287 = scmp.ne.s32.totalorder %s273, %s274
      %p288 = scmp.eq.s32.totalorder %s30, 1
      %p289 = por %p287, %p288
      %p291 = scmp.ne.s32.totalorder %s274, %s290
      %p292 = scmp.eq.s32.totalorder %s30, 0
      %p293 = por %p291, %p292
      %p294 = scmp.le.s32.totalorder 1, %s24
      %p295 = scmp.lt.s32.totalorder %s24, 3
      %p296 = pnand %p294, %p295
      %p297 = pneg %p296
      // Predicated region
      $region9: #{tpu_custom_call.1} parent=5 // pred_check
        _
      $region10: #{tpu_custom_call.1} parent=5 // pred_check_branch
        %299 = sbr.rel (%p296) target = $region12
      $region11: #{tpu_custom_call.1} parent=5 // pred_region
        %s300 = ssub.s32 %s24, 1
        // Predicated region
        $region13: #{tpu_custom_call.1} parent=11 // pred_check
          %p301 = pneg %p71
        $region14: #{tpu_custom_call.1} parent=11 // pred_check_branch
          %303 = sbr.rel (%p301) target = $region16
        $region15: #{tpu_custom_call.1} parent=11 // pred_region
          %305 = vsyncadd [#allocation7], 0
          %s306 = sshll.u32 %s1, 4
          %s307 = int_to_ptr.hbm [resolvable:$true] %s306
          %s308 = sshll.u32 [#allocation6], 4
          %s309 = int_to_ptr.vmem [resolvable:$true] %s308
          %314 = dma.hbm_to_vmem [thread:$0]  %s307, 9216, %s309, [#allocation7], 64, 64, 4
        $region16: #{tpu_custom_call.1} parent=11 // pred_fallthru
          _
        // Predicated region
        $region17: #{tpu_custom_call.1} parent=11 // pred_check
          %p315 = pneg %p92
        $region18: #{tpu_custom_call.1} parent=11 // pred_check_branch
          %317 = sbr.rel (%p315) target = $region20
        $region19: #{tpu_custom_call.1} parent=11 // pred_region
          _
        $region20: #{tpu_custom_call.1} parent=11 // pred_fallthru
          _
        // Predicated region
        $region21: #{tpu_custom_call.1} parent=11 // pred_check
          %p318 = pneg %p113
        $region22: #{tpu_custom_call.1} parent=11 // pred_check_branch
          %320 = sbr.rel (%p318) target = $region24
        $region23: #{tpu_custom_call.1} parent=11 // pred_region
          _
        $region24: #{tpu_custom_call.1} parent=11 // pred_fallthru
          _
        // Predicated region
        $region25: #{tpu_custom_call.1} parent=11 // pred_check
          %p321 = pneg %p134
        $region26: #{tpu_custom_call.1} parent=11 // pred_check_branch
          %323 = sbr.rel (%p321) target = $region28
        $region27: #{tpu_custom_call.1} parent=11 // pred_region
          _
        $region28: #{tpu_custom_call.1} parent=11 // pred_fallthru
          _
        // Predicated region
        $region29: #{tpu_custom_call.1} parent=11 // pred_check
          %p324 = pneg %p155
        $region30: #{tpu_custom_call.1} parent=11 // pred_check_branch
          %326 = sbr.rel (%p324) target = $region32
        $region31: #{tpu_custom_call.1} parent=11 // pred_region
          %328 = vsyncadd [#allocation7], 0
          %s329 = sshll.u32 %s5, 4
          %s330 = int_to_ptr.hbm [resolvable:$true] %s329
          %s331 = sshll.u32 [#allocation8], 4
          %s332 = int_to_ptr.vmem [resolvable:$true] %s331
          %337 = dma.hbm_to_vmem [thread:$0]  %s330, 9216, %s332, [#allocation7], 64, 64, 4
        $region32: #{tpu_custom_call.1} parent=11 // pred_fallthru
          _
        // Predicated region
        $region33: #{tpu_custom_call.1} parent=11 // pred_check
          %p338 = pneg %p176
        $region34: #{tpu_custom_call.1} parent=11 // pred_check_branch
          %340 = sbr.rel (%p338) target = $region36
        $region35: #{tpu_custom_call.1} parent=11 // pred_region
          _
        $region36: #{tpu_custom_call.1} parent=11 // pred_fallthru
          _
        // Predicated region
        $region37: #{tpu_custom_call.1} parent=11 // pred_check
          %p341 = pneg %p197
        $region38: #{tpu_custom_call.1} parent=11 // pred_check_branch
          %343 = sbr.rel (%p341) target = $region40
        $region39: #{tpu_custom_call.1} parent=11 // pred_region
          _
        $region40: #{tpu_custom_call.1} parent=11 // pred_fallthru
          _
        // Predicated region
        $region41: #{tpu_custom_call.1} parent=11 // pred_check
          %p344 = pneg %p218
        $region42: #{tpu_custom_call.1} parent=11 // pred_check_branch
          %346 = sbr.rel (%p344) target = $region44
        $region43: #{tpu_custom_call.1} parent=11 // pred_region
          _
        $region44: #{tpu_custom_call.1} parent=11 // pred_fallthru
          _
        // Predicated region
        $region45: #{tpu_custom_call.1} parent=11 // pred_check
          %p347 = pneg %p239
        $region46: #{tpu_custom_call.1} parent=11 // pred_check_branch
          %349 = sbr.rel (%p347) target = $region48
        $region47: #{tpu_custom_call.1} parent=11 // pred_region
          _
        $region48: #{tpu_custom_call.1} parent=11 // pred_fallthru
          _
        // Predicated region
        $region49: #{tpu_custom_call.1} parent=11 // pred_check
          %p350 = pneg %p260
        $region50: #{tpu_custom_call.1} parent=11 // pred_check_branch
          %352 = sbr.rel (%p350) target = $region52
        $region51: #{tpu_custom_call.1} parent=11 // pred_region
          _
        $region52: #{tpu_custom_call.1} parent=11 // pred_fallthru
          _
      $region12: #{tpu_custom_call.1} parent=5 // pred_fallthru
        _
      %p353 = scmp.lt.s32.totalorder %s24, 2
      // Predicated region
      $region53: #{tpu_custom_call.1} parent=5 // pred_check
        %p354 = pneg %p353
      $region54: #{tpu_custom_call.1} parent=5 // pred_check_branch
        %356 = sbr.rel (%p354) target = $region56
      $region55: #{tpu_custom_call.1} parent=5 // pred_region
        // Predicated region
        $region57: #{tpu_custom_call.1} parent=55 // pred_check
          %p357 = pneg %p44
        $region58: #{tpu_custom_call.1} parent=55 // pred_check_branch
          %359 = sbr.rel (%p357) target = $region60
        $region59: #{tpu_custom_call.1} parent=55 // pred_region
          %s360 = sand.u32 %s34, 1
          %s361 = scalar_lea.sflag [#allocation4], %s360
          %s362 = sand.u32 %s34, 1
          %s363 = smul.addr %s362, 864
          %s364 = scalar_lea.vmem [#allocation3], %s363
          %s365 = smul.u32 2, %s24
          %367 = vsyncadd %s361, 0
          %s368 = smul.addr %s365, 54
          %s369 = smul.addr %s368, 8
          %s370 = scalar_lea.hbm %s0, %s369
          %s371 = sshll.u32 %s370, 4
          %s372 = int_to_ptr.hbm [resolvable:$true] %s371
          %s373 = sshll.u32 %s364, 4
          %s374 = int_to_ptr.vmem [resolvable:$true] %s373
          %379 = dma.hbm_to_vmem [thread:$0]  %s372, 13824, %s374, %s361, 128, 128, 8
        $region60: #{tpu_custom_call.1} parent=55 // pred_fallthru
          _
      $region56: #{tpu_custom_call.1} parent=5 // pred_fallthru
        _
      %p380 = scmp.le.s32.totalorder 1, %s24
      %p381 = scmp.lt.s32.totalorder %s24, 3
      %p382 = pnand %p380, %p381
      %p383 = pneg %p382
      // Predicated region
      $region61: #{tpu_custom_call.1} parent=5 // pred_check
        _
      $region62: #{tpu_custom_call.1} parent=5 // pred_check_branch
        %385 = sbr.rel (%p382) target = $region64
      $region63: #{tpu_custom_call.1} parent=5 // pred_region
        %s386 = ssub.s32 %s24, 1
        %s387 = sand.u32 %s37, 1
        %s388 = scalar_lea.sflag [#allocation4], %s387
        %s389 = sand.u32 %s37, 1
        %s390 = smul.addr %s389, 864
        %s391 = scalar_lea.vmem [#allocation3], %s390
        // Predicated region
        $region65: #{tpu_custom_call.1} parent=63 // pred_check
          %p392 = pneg %p50
        $region66: #{tpu_custom_call.1} parent=63 // pred_check_branch
          %394 = sbr.rel (%p392) target = $region68
        $region67: #{tpu_custom_call.1} parent=63 // pred_region
          %396 = dma.done %s388, 13824
        $region68: #{tpu_custom_call.1} parent=63 // pred_fallthru
          _
        // Predicated region
        $region69: #{tpu_custom_call.1} parent=63 // pred_check
          %p397 = pneg %p71
        $region70: #{tpu_custom_call.1} parent=63 // pred_check_branch
          %399 = sbr.rel (%p397) target = $region72
        $region71: #{tpu_custom_call.1} parent=63 // pred_region
          %401 = dma.done [#allocation7], 9216
        $region72: #{tpu_custom_call.1} parent=63 // pred_fallthru
          _
        // Predicated region
        $region73: #{tpu_custom_call.1} parent=63 // pred_check
          %p402 = pneg %p155
        $region74: #{tpu_custom_call.1} parent=63 // pred_check_branch
          %404 = sbr.rel (%p402) target = $region76
        $region75: #{tpu_custom_call.1} parent=63 // pred_region
          %406 = dma.done [#allocation7], 9216
        $region76: #{tpu_custom_call.1} parent=63 // pred_fallthru
          _
        %s407 = sand.u32 %s37, 1
        %s408 = scalar_lea.sflag [#allocation4], %s407
        %s409 = sand.u32 %s37, 1
        %s410 = smul.addr %s409, 864
        %s411 = scalar_lea.vmem [#allocation3], %s410
        %p412 = pneg %p50
        %p413 = pneg %p47
        %p414 = pneg %p71
        %p415 = pneg %p68
        %p416 = pneg %p92
        %p417 = pneg %p89
        %p418 = pneg %p113
        %p419 = pneg %p110
        %p420 = pneg %p134
        %p421 = pneg %p131
        %p422 = pneg %p155
        %p423 = pneg %p152
        %p424 = pneg %p176
        %p425 = pneg %p173
        %p426 = pneg %p197
        %p427 = pneg %p194
        %p428 = pneg %p218
        %p429 = pneg %p215
        %p430 = pneg %p239
        %p431 = pneg %p236
        %p432 = pneg %p260
        %p433 = pneg %p257
        %p434 = pneg %p286
        %p435 = pneg %p283
        %s436 = sand.u32 %s273, 1
        %s437 = scalar_lea.sflag [#allocation5], %s436
        %s438 = sand.u32 %s273, 1
        %s439 = smul.addr %s438, 512
        %s440 = scalar_lea.vmem [#allocation9], %s439
        %s441 = smul.u32 2, %s29
        %s442 = smul.u32 2, %s29
        %v444 = vld [vmem:[%s9] sm:$0xff]
        %v445 = vld [vmem:[%s9 + $0x8] sm:$0xff]
        %v446 = vld [vmem:[%s9 + $0x10] sm:$0xff]
        %v447 = vld [vmem:[%s9 + $0x18] sm:$0xff]
        %v448 = vld [vmem:[%s9 + $0x20] sm:$0xff]
        %v449 = vld [vmem:[%s9 + $0x28] sm:$0xff]
        %v450 = vld [vmem:[%s9 + $0x30] sm:$0xff]
        %v451 = vld [vmem:[%s9 + $0x38] sm:$0xff]
        %v452 = vld [vmem:[%s9 + $0x40] sm:$0xff]
        %v453 = vld [vmem:[%s9 + $0x48] sm:$0xff]
        %v454 = vld [vmem:[%s9 + $0x50] sm:$0xff]
        %v455 = vld [vmem:[%s9 + $0x58] sm:$0xff]
        %v456 = vld [vmem:[%s9 + $0x60] sm:$0xff]
        %v457 = vld [vmem:[%s9 + $0x68] sm:$0xff]
        %v458 = vld [vmem:[%s9 + $0x70] sm:$0xff]
        %v459 = vld [vmem:[%s9 + $0x78] sm:$0xff]
        %v460 = vld [vmem:[%s10] sm:$0xff]
        %v461 = vld [vmem:[%s391] sm:$0xff]
        %v462 = vld [vmem:[%s391 + $0x8] sm:$0xff]
        %v463 = vld [vmem:[%s391 + $0x10] sm:$0xff]
        %v464 = vld [vmem:[%s391 + $0x18] sm:$0xff]
        %v465 = vld [vmem:[%s391 + $0x20] sm:$0xff]
        %v466 = vld [vmem:[%s391 + $0x28] sm:$0xff]
        %v467 = vld [vmem:[%s391 + $0x30] sm:$0xff]
        %v468 = vld [vmem:[%s391 + $0x38] sm:$0xff]
        %v469 = vld [vmem:[%s391 + $0x40] sm:$0xff]
        %v470 = vld [vmem:[%s391 + $0x48] sm:$0xff]
        %v471 = vld [vmem:[%s391 + $0x50] sm:$0xff]
        %v472 = vld [vmem:[%s391 + $0x58] sm:$0xff]
        %v473 = vld [vmem:[%s391 + $0x60] sm:$0xff]
        %v474 = vld [vmem:[%s391 + $0x68] sm:$0xff]
        %v475 = vld [vmem:[%s391 + $0x70] sm:$0xff]
        %v476 = vld [vmem:[%s391 + $0x78] sm:$0xff]
        %v477 = vld [vmem:[%s391 + $0x80] sm:$0xff]
        %v478 = vld [vmem:[%s391 + $0x88] sm:$0xff]
        %v479 = vld [vmem:[%s391 + $0x90] sm:$0xff]
        %v480 = vld [vmem:[%s391 + $0x98] sm:$0xff]
        %v481 = vld [vmem:[%s391 + $0xa0] sm:$0xff]
        %v482 = vld [vmem:[%s391 + $0xa8] sm:$0xff]
        %v483 = vld [vmem:[%s391 + $0xb0] sm:$0xff]
        %v484 = vld [vmem:[%s391 + $0xb8] sm:$0xff]
        %v485 = vld [vmem:[%s391 + $0xc0] sm:$0xff]
        %v486 = vld [vmem:[%s391 + $0xc8] sm:$0xff]
        %v487 = vld [vmem:[%s391 + $0xd0] sm:$0xff]
        %v488 = vld [vmem:[%s391 + $0xd8] sm:$0xff]
        %v489 = vld [vmem:[%s391 + $0xe0] sm:$0xff]
        %v490 = vld [vmem:[%s391 + $0xe8] sm:$0xff]
        %v491 = vld [vmem:[%s391 + $0xf0] sm:$0xff]
        %v492 = vld [vmem:[%s391 + $0xf8] sm:$0xff]
        %v493 = vld [vmem:[%s391 + $0x100] sm:$0xff]
        %v494 = vld [vmem:[%s391 + $0x108] sm:$0xff]
        %v495 = vld [vmem:[%s391 + $0x110] sm:$0xff]
        %v496 = vld [vmem:[%s391 + $0x118] sm:$0xff]
        %v497 = vld [vmem:[%s391 + $0x120] sm:$0xff]
        %v498 = vld [vmem:[%s391 + $0x128] sm:$0xff]
        %v499 = vld [vmem:[%s391 + $0x130] sm:$0xff]
        %v500 = vld [vmem:[%s391 + $0x138] sm:$0xff]
        %v501 = vld [vmem:[%s391 + $0x140] sm:$0xff]
        %v502 = vld [vmem:[%s391 + $0x148] sm:$0xff]
        %v503 = vld [vmem:[%s391 + $0x150] sm:$0xff]
        %v504 = vld [vmem:[%s391 + $0x158] sm:$0xff]
        %v505 = vld [vmem:[%s391 + $0x160] sm:$0xff]
        %v506 = vld [vmem:[%s391 + $0x168] sm:$0xff]
        %v507 = vld [vmem:[%s391 + $0x170] sm:$0xff]
        %v508 = vld [vmem:[%s391 + $0x178] sm:$0xff]
        %v509 = vld [vmem:[%s391 + $0x180] sm:$0xff]
        %v510 = vld [vmem:[%s391 + $0x188] sm:$0xff]
        %v511 = vld [vmem:[%s391 + $0x190] sm:$0xff]
        %v512 = vld [vmem:[%s391 + $0x198] sm:$0xff]
        %v513 = vld [vmem:[%s391 + $0x1a0] sm:$0xff]
        %v514 = vld [vmem:[%s391 + $0x1a8] sm:$0xff]
        %v515 = vld [vmem:[%s391 + $0x1b0] sm:$0xff]
        %v516 = vld [vmem:[%s391 + $0x1b8] sm:$0xff]
        %v517 = vld [vmem:[%s391 + $0x1c0] sm:$0xff]
        %v518 = vld [vmem:[%s391 + $0x1c8] sm:$0xff]
        %v519 = vld [vmem:[%s391 + $0x1d0] sm:$0xff]
        %v520 = vld [vmem:[%s391 + $0x1d8] sm:$0xff]
        %v521 = vld [vmem:[%s391 + $0x1e0] sm:$0xff]
        %v522 = vld [vmem:[%s391 + $0x1e8] sm:$0xff]
        %v523 = vld [vmem:[%s391 + $0x1f0] sm:$0xff]
        %v524 = vld [vmem:[%s391 + $0x1f8] sm:$0xff]
        %v525 = vld [vmem:[%s391 + $0x200] sm:$0xff]
        %v526 = vld [vmem:[%s391 + $0x208] sm:$0xff]
        %v527 = vld [vmem:[%s391 + $0x210] sm:$0xff]
        %v528 = vld [vmem:[%s391 + $0x218] sm:$0xff]
        %v529 = vld [vmem:[%s391 + $0x220] sm:$0xff]
        %v530 = vld [vmem:[%s391 + $0x228] sm:$0xff]
        %v531 = vld [vmem:[%s391 + $0x230] sm:$0xff]
        %v532 = vld [vmem:[%s391 + $0x238] sm:$0xff]
        %v533 = vld [vmem:[%s391 + $0x240] sm:$0xff]
        %v534 = vld [vmem:[%s391 + $0x248] sm:$0xff]
        %v535 = vld [vmem:[%s391 + $0x250] sm:$0xff]
        %v536 = vld [vmem:[%s391 + $0x258] sm:$0xff]
        %v537 = vld [vmem:[%s391 + $0x260] sm:$0xff]
        %v538 = vld [vmem:[%s391 + $0x268] sm:$0xff]
        %v539 = vld [vmem:[%s391 + $0x270] sm:$0xff]
        %v540 = vld [vmem:[%s391 + $0x278] sm:$0xff]
        %v541 = vld [vmem:[%s391 + $0x280] sm:$0xff]
        %v542 = vld [vmem:[%s391 + $0x288] sm:$0xff]
        %v543 = vld [vmem:[%s391 + $0x290] sm:$0xff]
        %v544 = vld [vmem:[%s391 + $0x298] sm:$0xff]
        %v545 = vld [vmem:[%s391 + $0x2a0] sm:$0xff]
        %v546 = vld [vmem:[%s391 + $0x2a8] sm:$0xff]
        %v547 = vld [vmem:[%s391 + $0x2b0] sm:$0xff]
        %v548 = vld [vmem:[%s391 + $0x2b8] sm:$0xff]
        %v549 = vld [vmem:[%s391 + $0x2c0] sm:$0xff]
        %v550 = vld [vmem:[%s391 + $0x2c8] sm:$0xff]
        %v551 = vld [vmem:[%s391 + $0x2d0] sm:$0xff]
        %v552 = vld [vmem:[%s391 + $0x2d8] sm:$0xff]
        %v553 = vld [vmem:[%s391 + $0x2e0] sm:$0xff]
        %v554 = vld [vmem:[%s391 + $0x2e8] sm:$0xff]
        %v555 = vld [vmem:[%s391 + $0x2f0] sm:$0xff]
        %v556 = vld [vmem:[%s391 + $0x2f8] sm:$0xff]
        %v557 = vld [vmem:[%s391 + $0x300] sm:$0xff]
        %v558 = vld [vmem:[%s391 + $0x308] sm:$0xff]
        %v559 = vld [vmem:[%s391 + $0x310] sm:$0xff]
        %v560 = vld [vmem:[%s391 + $0x318] sm:$0xff]
        %v561 = vld [vmem:[%s391 + $0x320] sm:$0xff]
        %v562 = vld [vmem:[%s391 + $0x328] sm:$0xff]
        %v563 = vld [vmem:[%s391 + $0x330] sm:$0xff]
        %v564 = vld [vmem:[%s391 + $0x338] sm:$0xff]
        %v565 = vld [vmem:[%s391 + $0x340] sm:$0xff]
        %v566 = vld [vmem:[%s391 + $0x348] sm:$0xff]
        %v567 = vld [vmem:[%s391 + $0x350] sm:$0xff]
        %v568 = vld [vmem:[%s391 + $0x358] sm:$0xff]
        %v569 = vpack.c.bf16 %v461, %v461
        %v570 = vpack.c.bf16 %v462, %v462
        %v571 = vpack.c.bf16 %v463, %v463
        %v572 = vpack.c.bf16 %v464, %v464
        %v573 = vpack.c.bf16 %v465, %v465
        %v574 = vpack.c.bf16 %v466, %v466
        %v575 = vpack.c.bf16 %v467, %v467
        %v576 = vpack.c.bf16 %v468, %v468
        %v577 = vpack.c.bf16 %v469, %v469
        %v578 = vpack.c.bf16 %v470, %v470
        %v579 = vpack.c.bf16 %v471, %v471
        %v580 = vpack.c.bf16 %v472, %v472
        %v581 = vpack.c.bf16 %v473, %v473
        %v582 = vpack.c.bf16 %v474, %v474
        %v583 = vpack.c.bf16 %v475, %v475
        %v584 = vpack.c.bf16 %v476, %v476
        %v585 = vpack.c.bf16 %v477, %v477
        %v586 = vpack.c.bf16 %v478, %v478
        %v587 = vpack.c.bf16 %v479, %v479
        %v588 = vpack.c.bf16 %v480, %v480
        %v589 = vpack.c.bf16 %v481, %v481
        %v590 = vpack.c.bf16 %v482, %v482
        %v591 = vpack.c.bf16 %v483, %v483
        %v592 = vpack.c.bf16 %v484, %v484
        %v593 = vpack.c.bf16 %v485, %v485
        %v594 = vpack.c.bf16 %v486, %v486
        %v595 = vpack.c.bf16 %v487, %v487
        %v596 = vpack.c.bf16 %v488, %v488
        %v597 = vpack.c.bf16 %v489, %v489
        %v598 = vpack.c.bf16 %v490, %v490
        %v599 = vpack.c.bf16 %v491, %v491
        %v600 = vpack.c.bf16 %v492, %v492
        %v601 = vpack.c.bf16 %v493, %v493
        %v602 = vpack.c.bf16 %v494, %v494
        %v603 = vpack.c.bf16 %v495, %v495
        %v604 = vpack.c.bf16 %v496, %v496
        %v605 = vpack.c.bf16 %v497, %v497
        %v606 = vpack.c.bf16 %v498, %v498
        %v607 = vpack.c.bf16 %v499, %v499
        %v608 = vpack.c.bf16 %v500, %v500
        %v609 = vpack.c.bf16 %v501, %v501
        %v610 = vpack.c.bf16 %v502, %v502
        %v611 = vpack.c.bf16 %v503, %v503
        %v612 = vpack.c.bf16 %v504, %v504
        %v613 = vpack.c.bf16 %v505, %v505
        %v614 = vpack.c.bf16 %v506, %v506
        %v615 = vpack.c.bf16 %v507, %v507
        %v616 = vpack.c.bf16 %v508, %v508
        %v617 = vpack.c.bf16 %v509, %v509
        %v618 = vpack.c.bf16 %v510, %v510
        %v619 = vpack.c.bf16 %v511, %v511
        %v620 = vpack.c.bf16 %v512, %v512
        %v621 = vpack.c.bf16 %v513, %v513
        %v622 = vpack.c.bf16 %v514, %v514
        %v623 = vpack.c.bf16 %v515, %v515
        %v624 = vpack.c.bf16 %v516, %v516
        %v625 = vpack.c.bf16 %v517, %v517
        %v626 = vpack.c.bf16 %v518, %v518
        %v627 = vpack.c.bf16 %v519, %v519
        %v628 = vpack.c.bf16 %v520, %v520
        %v629 = vpack.c.bf16 %v521, %v521
        %v630 = vpack.c.bf16 %v522, %v522
        %v631 = vpack.c.bf16 %v523, %v523
        %v632 = vpack.c.bf16 %v524, %v524
        %v633 = vpack.c.bf16 %v525, %v525
        %v634 = vpack.c.bf16 %v526, %v526
        %v635 = vpack.c.bf16 %v527, %v527
        %v636 = vpack.c.bf16 %v528, %v528
        %v637 = vpack.c.bf16 %v529, %v529
        %v638 = vpack.c.bf16 %v530, %v530
        %v639 = vpack.c.bf16 %v531, %v531
        %v640 = vpack.c.bf16 %v532, %v532
        %v641 = vpack.c.bf16 %v533, %v533
        %v642 = vpack.c.bf16 %v534, %v534
        %v643 = vpack.c.bf16 %v535, %v535
        %v644 = vpack.c.bf16 %v536, %v536
        %v645 = vpack.c.bf16 %v537, %v537
        %v646 = vpack.c.bf16 %v538, %v538
        %v647 = vpack.c.bf16 %v539, %v539
        %v648 = vpack.c.bf16 %v540, %v540
        %v649 = vpack.c.bf16 %v541, %v541
        %v650 = vpack.c.bf16 %v542, %v542
        %v651 = vpack.c.bf16 %v543, %v543
        %v652 = vpack.c.bf16 %v544, %v544
        %v653 = vpack.c.bf16 %v545, %v545
        %v654 = vpack.c.bf16 %v546, %v546
        %v655 = vpack.c.bf16 %v547, %v547
        %v656 = vpack.c.bf16 %v548, %v548
        %v657 = vpack.c.bf16 %v549, %v549
        %v658 = vpack.c.bf16 %v550, %v550
        %v659 = vpack.c.bf16 %v551, %v551
        %v660 = vpack.c.bf16 %v552, %v552
        %v661 = vpack.c.bf16 %v553, %v553
        %v662 = vpack.c.bf16 %v554, %v554
        %v663 = vpack.c.bf16 %v555, %v555
        %v664 = vpack.c.bf16 %v556, %v556
        %v665 = vpack.c.bf16 %v557, %v557
        %v666 = vpack.c.bf16 %v558, %v558
        %v667 = vpack.c.bf16 %v559, %v559
        %v668 = vpack.c.bf16 %v560, %v560
        %v669 = vpack.c.bf16 %v561, %v561
        %v670 = vpack.c.bf16 %v562, %v562
        %v671 = vpack.c.bf16 %v563, %v563
        %v672 = vpack.c.bf16 %v564, %v564
        %v673 = vpack.c.bf16 %v565, %v565
        %v674 = vpack.c.bf16 %v566, %v566
        %v675 = vpack.c.bf16 %v567, %v567
        %v676 = vpack.c.bf16 %v568, %v568
        %v677 = vld [vmem:[%s2] sm:$0x1]
        %v742 = vunpack.c.l.b16 %v569
        %v743 = vunpack.c.l.b16 %v570
        %v744 = vunpack.c.l.b16 %v572
        %v745 = vunpack.c.l.b16 %v573
        %v746 = vunpack.c.l.b16 %v575
        %v747 = vunpack.c.l.b16 %v576
        %v748 = vunpack.c.l.b16 %v578
        %v749 = vunpack.c.l.b16 %v579
        %v750 = vunpack.c.l.b16 %v581
        %v751 = vunpack.c.l.b16 %v582
        %v752 = vunpack.c.l.b16 %v584
        %v753 = vunpack.c.l.b16 %v585
        %v754 = vunpack.c.l.b16 %v587
        %v755 = vunpack.c.l.b16 %v588
        %v756 = vunpack.c.l.b16 %v590
        %v757 = vunpack.c.l.b16 %v591
        %v758 = vunpack.c.l.b16 %v593
        %v759 = vunpack.c.l.b16 %v594
        %v760 = vunpack.c.l.b16 %v596
        %v761 = vunpack.c.l.b16 %v597
        %v762 = vunpack.c.l.b16 %v599
        %v763 = vunpack.c.l.b16 %v600
        %v764 = vunpack.c.l.b16 %v602
        %v765 = vunpack.c.l.b16 %v603
        %v766 = vunpack.c.l.b16 %v605
        %v767 = vunpack.c.l.b16 %v606
        %v768 = vunpack.c.l.b16 %v608
        %v769 = vunpack.c.l.b16 %v609
        %v770 = vunpack.c.l.b16 %v611
        %v771 = vunpack.c.l.b16 %v612
        %v772 = vunpack.c.l.b16 %v614
        %v773 = vunpack.c.l.b16 %v615
        %v774 = vunpack.c.l.b16 %v623
        %v775 = vunpack.c.l.b16 %v624
        %v776 = vunpack.c.l.b16 %v626
        %v777 = vunpack.c.l.b16 %v627
        %v778 = vunpack.c.l.b16 %v629
        %v779 = vunpack.c.l.b16 %v630
        %v780 = vunpack.c.l.b16 %v632
        %v781 = vunpack.c.l.b16 %v633
        %v782 = vunpack.c.l.b16 %v635
        %v783 = vunpack.c.l.b16 %v636
        %v784 = vunpack.c.l.b16 %v638
        %v785 = vunpack.c.l.b16 %v639
        %v786 = vunpack.c.l.b16 %v641
        %v787 = vunpack.c.l.b16 %v642
        %v788 = vunpack.c.l.b16 %v644
        %v789 = vunpack.c.l.b16 %v645
        %v790 = vunpack.c.l.b16 %v647
        %v791 = vunpack.c.l.b16 %v648
        %v792 = vunpack.c.l.b16 %v650
        %v793 = vunpack.c.l.b16 %v651
        %v794 = vunpack.c.l.b16 %v653
        %v795 = vunpack.c.l.b16 %v654
        %v796 = vunpack.c.l.b16 %v656
        %v797 = vunpack.c.l.b16 %v657
        %v798 = vunpack.c.l.b16 %v659
        %v799 = vunpack.c.l.b16 %v660
        %v800 = vunpack.c.l.b16 %v662
        %v801 = vunpack.c.l.b16 %v663
        %v802 = vunpack.c.l.b16 %v665
        %v803 = vunpack.c.l.b16 %v666
        %v804 = vunpack.c.l.b16 %v668
        %v805 = vunpack.c.l.b16 %v669
        %v806 = vpack.c.b16 %v743, %v742
        %v807 = vpack.c.b16 %v745, %v744
        %v808 = vpack.c.b16 %v747, %v746
        %v809 = vpack.c.b16 %v749, %v748
        %v810 = vpack.c.b16 %v751, %v750
        %v811 = vpack.c.b16 %v753, %v752
        %v812 = vpack.c.b16 %v755, %v754
        %v813 = vpack.c.b16 %v757, %v756
        %v814 = vpack.c.b16 %v759, %v758
        %v815 = vpack.c.b16 %v761, %v760
        %v816 = vpack.c.b16 %v763, %v762
        %v817 = vpack.c.b16 %v765, %v764
        %v818 = vpack.c.b16 %v767, %v766
        %v819 = vpack.c.b16 %v769, %v768
        %v820 = vpack.c.b16 %v771, %v770
        %v821 = vpack.c.b16 %v773, %v772
        %v822 = vpack.c.b16 %v775, %v774
        %v823 = vpack.c.b16 %v777, %v776
        %v824 = vpack.c.b16 %v779, %v778
        %v825 = vpack.c.b16 %v781, %v780
        %v826 = vpack.c.b16 %v783, %v782
        %v827 = vpack.c.b16 %v785, %v784
        %v828 = vpack.c.b16 %v787, %v786
        %v829 = vpack.c.b16 %v789, %v788
        %v830 = vpack.c.b16 %v791, %v790
        %v831 = vpack.c.b16 %v793, %v792
        %v832 = vpack.c.b16 %v795, %v794
        %v833 = vpack.c.b16 %v797, %v796
        %v834 = vpack.c.b16 %v799, %v798
        %v835 = vpack.c.b16 %v801, %v800
        %v836 = vpack.c.b16 %v803, %v802
        %v837 = vpack.c.b16 %v805, %v804
        %v902 = vunpack.c.l.b16 %v571
        %v903 = vunpack.c.l.b16 %v574
        %v904 = vunpack.c.l.b16 %v577
        %v905 = vunpack.c.l.b16 %v580
        %v906 = vunpack.c.l.b16 %v583
        %v907 = vunpack.c.l.b16 %v586
        %v908 = vunpack.c.l.b16 %v589
        %v909 = vunpack.c.l.b16 %v592
        %v910 = vunpack.c.l.b16 %v595
        %v911 = vunpack.c.l.b16 %v598
        %v912 = vunpack.c.l.b16 %v601
        %v913 = vunpack.c.l.b16 %v604
        %v914 = vunpack.c.l.b16 %v607
        %v915 = vunpack.c.l.b16 %v610
        %v916 = vunpack.c.l.b16 %v613
        %v917 = vunpack.c.l.b16 %v616
        %v918 = vunpack.c.l.b16 %v625
        %v919 = vunpack.c.l.b16 %v628
        %v920 = vunpack.c.l.b16 %v631
        %v921 = vunpack.c.l.b16 %v634
        %v922 = vunpack.c.l.b16 %v637
        %v923 = vunpack.c.l.b16 %v640
        %v924 = vunpack.c.l.b16 %v643
        %v925 = vunpack.c.l.b16 %v646
        %v926 = vunpack.c.l.b16 %v649
        %v927 = vunpack.c.l.b16 %v652
        %v928 = vunpack.c.l.b16 %v655
        %v929 = vunpack.c.l.b16 %v658
        %v930 = vunpack.c.l.b16 %v661
        %v931 = vunpack.c.l.b16 %v664
        %v932 = vunpack.c.l.b16 %v667
        %v933 = vunpack.c.l.b16 %v670
        %v934 = vpack.c.b16 %v902, %v902
        %v935 = vpack.c.b16 %v903, %v903
        %v936 = vpack.c.b16 %v904, %v904
        %v937 = vpack.c.b16 %v905, %v905
        %v938 = vpack.c.b16 %v906, %v906
        %v939 = vpack.c.b16 %v907, %v907
        %v940 = vpack.c.b16 %v908, %v908
        %v941 = vpack.c.b16 %v909, %v909
        %v942 = vpack.c.b16 %v910, %v910
        %v943 = vpack.c.b16 %v911, %v911
        %v944 = vpack.c.b16 %v912, %v912
        %v945 = vpack.c.b16 %v913, %v913
        %v946 = vpack.c.b16 %v914, %v914
        %v947 = vpack.c.b16 %v915, %v915
        %v948 = vpack.c.b16 %v916, %v916
        %v949 = vpack.c.b16 %v917, %v917
        %v950 = vpack.c.b16 %v918, %v918
        %v951 = vpack.c.b16 %v919, %v919
        %v952 = vpack.c.b16 %v920, %v920
        %v953 = vpack.c.b16 %v921, %v921
        %v954 = vpack.c.b16 %v922, %v922
        %v955 = vpack.c.b16 %v923, %v923
        %v956 = vpack.c.b16 %v924, %v924
        %v957 = vpack.c.b16 %v925, %v925
        %v958 = vpack.c.b16 %v926, %v926
        %v959 = vpack.c.b16 %v927, %v927
        %v960 = vpack.c.b16 %v928, %v928
        %v961 = vpack.c.b16 %v929, %v929
        %v962 = vpack.c.b16 %v930, %v930
        %v963 = vpack.c.b16 %v931, %v931
        %v964 = vpack.c.b16 %v932, %v932
        %v965 = vpack.c.b16 %v933, %v933
        %vm966 = vsmask.f32 7424
        %v968 = vshrl.u32 %v806, 16
        %v970 = vshll.u32 %v806, 16
        %v972 = vrot.slane %v970, 1
        %v973 = vor.u32 %v968, %v972
        %v975 = vshll.u32 %v934, 16
        %v977 = vrot.slane %v975, 1
        %v978 = vsel %vm966, %v973, %v977
        %v980 = vshrl.u32 %v807, 16
        %v982 = vshll.u32 %v807, 16
        %v984 = vrot.slane %v982, 1
        %v985 = vor.u32 %v980, %v984
        %v987 = vshll.u32 %v935, 16
        %v989 = vrot.slane %v987, 1
        %v990 = vsel %vm966, %v985, %v989
        %v992 = vshrl.u32 %v808, 16
        %v994 = vshll.u32 %v808, 16
        %v996 = vrot.slane %v994, 1
        %v997 = vor.u32 %v992, %v996
        %v999 = vshll.u32 %v936, 16
        %v1001 = vrot.slane %v999, 1
        %v1002 = vsel %vm966, %v997, %v1001
        %v1004 = vshrl.u32 %v809, 16
        %v1006 = vshll.u32 %v809, 16
        %v1008 = vrot.slane %v1006, 1
        %v1009 = vor.u32 %v1004, %v1008
        %v1011 = vshll.u32 %v937, 16
        %v1013 = vrot.slane %v1011, 1
        %v1014 = vsel %vm966, %v1009, %v1013
        %v1016 = vshrl.u32 %v810, 16
        %v1018 = vshll.u32 %v810, 16
        %v1020 = vrot.slane %v1018, 1
        %v1021 = vor.u32 %v1016, %v1020
        %v1023 = vshll.u32 %v938, 16
        %v1025 = vrot.slane %v1023, 1
        %v1026 = vsel %vm966, %v1021, %v1025
        %v1028 = vshrl.u32 %v811, 16
        %v1030 = vshll.u32 %v811, 16
        %v1032 = vrot.slane %v1030, 1
        %v1033 = vor.u32 %v1028, %v1032
        %v1035 = vshll.u32 %v939, 16
        %v1037 = vrot.slane %v1035, 1
        %v1038 = vsel %vm966, %v1033, %v1037
        %v1040 = vshrl.u32 %v812, 16
        %v1042 = vshll.u32 %v812, 16
        %v1044 = vrot.slane %v1042, 1
        %v1045 = vor.u32 %v1040, %v1044
        %v1047 = vshll.u32 %v940, 16
        %v1049 = vrot.slane %v1047, 1
        %v1050 = vsel %vm966, %v1045, %v1049
        %v1052 = vshrl.u32 %v813, 16
        %v1054 = vshll.u32 %v813, 16
        %v1056 = vrot.slane %v1054, 1
        %v1057 = vor.u32 %v1052, %v1056
        %v1059 = vshll.u32 %v941, 16
        %v1061 = vrot.slane %v1059, 1
        %v1062 = vsel %vm966, %v1057, %v1061
        %v1064 = vshrl.u32 %v814, 16
        %v1066 = vshll.u32 %v814, 16
        %v1068 = vrot.slane %v1066, 1
        %v1069 = vor.u32 %v1064, %v1068
        %v1071 = vshll.u32 %v942, 16
        %v1073 = vrot.slane %v1071, 1
        %v1074 = vsel %vm966, %v1069, %v1073
        %v1076 = vshrl.u32 %v815, 16
        %v1078 = vshll.u32 %v815, 16
        %v1080 = vrot.slane %v1078, 1
        %v1081 = vor.u32 %v1076, %v1080
        %v1083 = vshll.u32 %v943, 16
        %v1085 = vrot.slane %v1083, 1
        %v1086 = vsel %vm966, %v1081, %v1085
        %v1088 = vshrl.u32 %v816, 16
        %v1090 = vshll.u32 %v816, 16
        %v1092 = vrot.slane %v1090, 1
        %v1093 = vor.u32 %v1088, %v1092
        %v1095 = vshll.u32 %v944, 16
        %v1097 = vrot.slane %v1095, 1
        %v1098 = vsel %vm966, %v1093, %v1097
        %v1100 = vshrl.u32 %v817, 16
        %v1102 = vshll.u32 %v817, 16
        %v1104 = vrot.slane %v1102, 1
        %v1105 = vor.u32 %v1100, %v1104
        %v1107 = vshll.u32 %v945, 16
        %v1109 = vrot.slane %v1107, 1
        %v1110 = vsel %vm966, %v1105, %v1109
        %v1112 = vshrl.u32 %v818, 16
        %v1114 = vshll.u32 %v818, 16
        %v1116 = vrot.slane %v1114, 1
        %v1117 = vor.u32 %v1112, %v1116
        %v1119 = vshll.u32 %v946, 16
        %v1121 = vrot.slane %v1119, 1
        %v1122 = vsel %vm966, %v1117, %v1121
        %v1124 = vshrl.u32 %v819, 16
        %v1126 = vshll.u32 %v819, 16
        %v1128 = vrot.slane %v1126, 1
        %v1129 = vor.u32 %v1124, %v1128
        %v1131 = vshll.u32 %v947, 16
        %v1133 = vrot.slane %v1131, 1
        %v1134 = vsel %vm966, %v1129, %v1133
        %v1136 = vshrl.u32 %v820, 16
        %v1138 = vshll.u32 %v820, 16
        %v1140 = vrot.slane %v1138, 1
        %v1141 = vor.u32 %v1136, %v1140
        %v1143 = vshll.u32 %v948, 16
        %v1145 = vrot.slane %v1143, 1
        %v1146 = vsel %vm966, %v1141, %v1145
        %v1148 = vshrl.u32 %v821, 16
        %v1150 = vshll.u32 %v821, 16
        %v1152 = vrot.slane %v1150, 1
        %v1153 = vor.u32 %v1148, %v1152
        %v1155 = vshll.u32 %v949, 16
        %v1157 = vrot.slane %v1155, 1
        %v1158 = vsel %vm966, %v1153, %v1157
        %v1160 = vshrl.u32 %v822, 16
        %v1162 = vshll.u32 %v822, 16
        %v1164 = vrot.slane %v1162, 1
        %v1165 = vor.u32 %v1160, %v1164
        %v1167 = vshll.u32 %v950, 16
        %v1169 = vrot.slane %v1167, 1
        %v1170 = vsel %vm966, %v1165, %v1169
        %v1172 = vshrl.u32 %v823, 16
        %v1174 = vshll.u32 %v823, 16
        %v1176 = vrot.slane %v1174, 1
        %v1177 = vor.u32 %v1172, %v1176
        %v1179 = vshll.u32 %v951, 16
        %v1181 = vrot.slane %v1179, 1
        %v1182 = vsel %vm966, %v1177, %v1181
        %v1184 = vshrl.u32 %v824, 16
        %v1186 = vshll.u32 %v824, 16
        %v1188 = vrot.slane %v1186, 1
        %v1189 = vor.u32 %v1184, %v1188
        %v1191 = vshll.u32 %v952, 16
        %v1193 = vrot.slane %v1191, 1
        %v1194 = vsel %vm966, %v1189, %v1193
        %v1196 = vshrl.u32 %v825, 16
        %v1198 = vshll.u32 %v825, 16
        %v1200 = vrot.slane %v1198, 1
        %v1201 = vor.u32 %v1196, %v1200
        %v1203 = vshll.u32 %v953, 16
        %v1205 = vrot.slane %v1203, 1
        %v1206 = vsel %vm966, %v1201, %v1205
        %v1208 = vshrl.u32 %v826, 16
        %v1210 = vshll.u32 %v826, 16
        %v1212 = vrot.slane %v1210, 1
        %v1213 = vor.u32 %v1208, %v1212
        %v1215 = vshll.u32 %v954, 16
        %v1217 = vrot.slane %v1215, 1
        %v1218 = vsel %vm966, %v1213, %v1217
        %v1220 = vshrl.u32 %v827, 16
        %v1222 = vshll.u32 %v827, 16
        %v1224 = vrot.slane %v1222, 1
        %v1225 = vor.u32 %v1220, %v1224
        %v1227 = vshll.u32 %v955, 16
        %v1229 = vrot.slane %v1227, 1
        %v1230 = vsel %vm966, %v1225, %v1229
        %v1232 = vshrl.u32 %v828, 16
        %v1234 = vshll.u32 %v828, 16
        %v1236 = vrot.slane %v1234, 1
        %v1237 = vor.u32 %v1232, %v1236
        %v1239 = vshll.u32 %v956, 16
        %v1241 = vrot.slane %v1239, 1
        %v1242 = vsel %vm966, %v1237, %v1241
        %v1244 = vshrl.u32 %v829, 16
        %v1246 = vshll.u32 %v829, 16
        %v1248 = vrot.slane %v1246, 1
        %v1249 = vor.u32 %v1244, %v1248
        %v1251 = vshll.u32 %v957, 16
        %v1253 = vrot.slane %v1251, 1
        %v1254 = vsel %vm966, %v1249, %v1253
        %v1256 = vshrl.u32 %v830, 16
        %v1258 = vshll.u32 %v830, 16
        %v1260 = vrot.slane %v1258, 1
        %v1261 = vor.u32 %v1256, %v1260
        %v1263 = vshll.u32 %v958, 16
        %v1265 = vrot.slane %v1263, 1
        %v1266 = vsel %vm966, %v1261, %v1265
        %v1268 = vshrl.u32 %v831, 16
        %v1270 = vshll.u32 %v831, 16
        %v1272 = vrot.slane %v1270, 1
        %v1273 = vor.u32 %v1268, %v1272
        %v1275 = vshll.u32 %v959, 16
        %v1277 = vrot.slane %v1275, 1
        %v1278 = vsel %vm966, %v1273, %v1277
        %v1280 = vshrl.u32 %v832, 16
        %v1282 = vshll.u32 %v832, 16
        %v1284 = vrot.slane %v1282, 1
        %v1285 = vor.u32 %v1280, %v1284
        %v1287 = vshll.u32 %v960, 16
        %v1289 = vrot.slane %v1287, 1
        %v1290 = vsel %vm966, %v1285, %v1289
        %v1292 = vshrl.u32 %v833, 16
        %v1294 = vshll.u32 %v833, 16
        %v1296 = vrot.slane %v1294, 1
        %v1297 = vor.u32 %v1292, %v1296
        %v1299 = vshll.u32 %v961, 16
        %v1301 = vrot.slane %v1299, 1
        %v1302 = vsel %vm966, %v1297, %v1301
        %v1304 = vshrl.u32 %v834, 16
        %v1306 = vshll.u32 %v834, 16
        %v1308 = vrot.slane %v1306, 1
        %v1309 = vor.u32 %v1304, %v1308
        %v1311 = vshll.u32 %v962, 16
        %v1313 = vrot.slane %v1311, 1
        %v1314 = vsel %vm966, %v1309, %v1313
        %v1316 = vshrl.u32 %v835, 16
        %v1318 = vshll.u32 %v835, 16
        %v1320 = vrot.slane %v1318, 1
        %v1321 = vor.u32 %v1316, %v1320
        %v1323 = vshll.u32 %v963, 16
        %v1325 = vrot.slane %v1323, 1
        %v1326 = vsel %vm966, %v1321, %v1325
        %v1328 = vshrl.u32 %v836, 16
        %v1330 = vshll.u32 %v836, 16
        %v1332 = vrot.slane %v1330, 1
        %v1333 = vor.u32 %v1328, %v1332
        %v1335 = vshll.u32 %v964, 16
        %v1337 = vrot.slane %v1335, 1
        %v1338 = vsel %vm966, %v1333, %v1337
        %v1340 = vshrl.u32 %v837, 16
        %v1342 = vshll.u32 %v837, 16
        %v1344 = vrot.slane %v1342, 1
        %v1345 = vor.u32 %v1340, %v1344
        %v1347 = vshll.u32 %v965, 16
        %v1349 = vrot.slane %v1347, 1
        %v1350 = vsel %vm966, %v1345, %v1349
        %vm1383 = vcmask 1046528
        %v1384 = vrot.slane %v806, 1
        %v1385 = vrot.slane %v934, 1
        %v1386 = vsel %vm1383, %v1384, %v1385
        %v1387 = vrot.slane %v807, 1
        %v1388 = vrot.slane %v935, 1
        %v1389 = vsel %vm1383, %v1387, %v1388
        %v1390 = vrot.slane %v808, 1
        %v1391 = vrot.slane %v936, 1
        %v1392 = vsel %vm1383, %v1390, %v1391
        %v1393 = vrot.slane %v809, 1
        %v1394 = vrot.slane %v937, 1
        %v1395 = vsel %vm1383, %v1393, %v1394
        %v1396 = vrot.slane %v810, 1
        %v1397 = vrot.slane %v938, 1
        %v1398 = vsel %vm1383, %v1396, %v1397
        %v1399 = vrot.slane %v811, 1
        %v1400 = vrot.slane %v939, 1
        %v1401 = vsel %vm1383, %v1399, %v1400
        %v1402 = vrot.slane %v812, 1
        %v1403 = vrot.slane %v940, 1
        %v1404 = vsel %vm1383, %v1402, %v1403
        %v1405 = vrot.slane %v813, 1
        %v1406 = vrot.slane %v941, 1
        %v1407 = vsel %vm1383, %v1405, %v1406
        %v1408 = vrot.slane %v814, 1
        %v1409 = vrot.slane %v942, 1
        %v1410 = vsel %vm1383, %v1408, %v1409
        %v1411 = vrot.slane %v815, 1
        %v1412 = vrot.slane %v943, 1
        %v1413 = vsel %vm1383, %v1411, %v1412
        %v1414 = vrot.slane %v816, 1
        %v1415 = vrot.slane %v944, 1
        %v1416 = vsel %vm1383, %v1414, %v1415
        %v1417 = vrot.slane %v817, 1
        %v1418 = vrot.slane %v945, 1
        %v1419 = vsel %vm1383, %v1417, %v1418
        %v1420 = vrot.slane %v818, 1
        %v1421 = vrot.slane %v946, 1
        %v1422 = vsel %vm1383, %v1420, %v1421
        %v1423 = vrot.slane %v819, 1
        %v1424 = vrot.slane %v947, 1
        %v1425 = vsel %vm1383, %v1423, %v1424
        %v1426 = vrot.slane %v820, 1
        %v1427 = vrot.slane %v948, 1
        %v1428 = vsel %vm1383, %v1426, %v1427
        %v1429 = vrot.slane %v821, 1
        %v1430 = vrot.slane %v949, 1
        %v1431 = vsel %vm1383, %v1429, %v1430
        %v1432 = vrot.slane %v822, 1
        %v1433 = vrot.slane %v950, 1
        %v1434 = vsel %vm1383, %v1432, %v1433
        %v1435 = vrot.slane %v823, 1
        %v1436 = vrot.slane %v951, 1
        %v1437 = vsel %vm1383, %v1435, %v1436
        %v1438 = vrot.slane %v824, 1
        %v1439 = vrot.slane %v952, 1
        %v1440 = vsel %vm1383, %v1438, %v1439
        %v1441 = vrot.slane %v825, 1
        %v1442 = vrot.slane %v953, 1
        %v1443 = vsel %vm1383, %v1441, %v1442
        %v1444 = vrot.slane %v826, 1
        %v1445 = vrot.slane %v954, 1
        %v1446 = vsel %vm1383, %v1444, %v1445
        %v1447 = vrot.slane %v827, 1
        %v1448 = vrot.slane %v955, 1
        %v1449 = vsel %vm1383, %v1447, %v1448
        %v1450 = vrot.slane %v828, 1
        %v1451 = vrot.slane %v956, 1
        %v1452 = vsel %vm1383, %v1450, %v1451
        %v1453 = vrot.slane %v829, 1
        %v1454 = vrot.slane %v957, 1
        %v1455 = vsel %vm1383, %v1453, %v1454
        %v1456 = vrot.slane %v830, 1
        %v1457 = vrot.slane %v958, 1
        %v1458 = vsel %vm1383, %v1456, %v1457
        %v1459 = vrot.slane %v831, 1
        %v1460 = vrot.slane %v959, 1
        %v1461 = vsel %vm1383, %v1459, %v1460
        %v1462 = vrot.slane %v832, 1
        %v1463 = vrot.slane %v960, 1
        %v1464 = vsel %vm1383, %v1462, %v1463
        %v1465 = vrot.slane %v833, 1
        %v1466 = vrot.slane %v961, 1
        %v1467 = vsel %vm1383, %v1465, %v1466
        %v1468 = vrot.slane %v834, 1
        %v1469 = vrot.slane %v962, 1
        %v1470 = vsel %vm1383, %v1468, %v1469
        %v1471 = vrot.slane %v835, 1
        %v1472 = vrot.slane %v963, 1
        %v1473 = vsel %vm1383, %v1471, %v1472
        %v1474 = vrot.slane %v836, 1
        %v1475 = vrot.slane %v964, 1
        %v1476 = vsel %vm1383, %v1474, %v1475
        %v1477 = vrot.slane %v837, 1
        %v1478 = vrot.slane %v965, 1
        %v1479 = vsel %vm1383, %v1477, %v1478
        %v1516 = vunpack.c.l.b16 %v617
        %v1517 = vunpack.c.l.b16 %v618
        %v1518 = vunpack.c.l.b16 %v671
        %v1519 = vunpack.c.l.b16 %v672
        %v1520 = vpack.c.b16 %v1517, %v1516
        %v1521 = vpack.c.b16 %v1519, %v1518
        %v1526 = vunpack.c.l.b16 %v619
        %v1527 = vunpack.c.l.b16 %v673
        %v1528 = vpack.c.b16 %v1526, %v1526
        %v1529 = vpack.c.b16 %v1527, %v1527
        %v1531 = vshrl.u32 %v1520, 16
        %v1533 = vshll.u32 %v1520, 16
        %v1535 = vrot.slane %v1533, 1
        %v1536 = vor.u32 %v1531, %v1535
        %v1538 = vshll.u32 %v1528, 16
        %v1540 = vrot.slane %v1538, 1
        %v1541 = vsel %vm966, %v1536, %v1540
        %v1543 = vshrl.u32 %v1521, 16
        %v1545 = vshll.u32 %v1521, 16
        %v1547 = vrot.slane %v1545, 1
        %v1548 = vor.u32 %v1543, %v1547
        %v1550 = vshll.u32 %v1529, 16
        %v1552 = vrot.slane %v1550, 1
        %v1553 = vsel %vm966, %v1548, %v1552
        %v1556 = vrot.slane %v1520, 1
        %v1557 = vrot.slane %v1528, 1
        %v1558 = vsel %vm1383, %v1556, %v1557
        %v1559 = vrot.slane %v1521, 1
        %v1560 = vrot.slane %v1529, 1
        %v1561 = vsel %vm1383, %v1559, %v1560
        %v1568 = vunpack.c.l.b16 %v620
        %v1569 = vunpack.c.l.b16 %v621
        %v1570 = vunpack.c.l.b16 %v674
        %v1571 = vunpack.c.l.b16 %v675
        %v1572 = vpack.c.b16 %v1569, %v1568
        %v1573 = vpack.c.b16 %v1571, %v1570
        %v1578 = vunpack.c.l.b16 %v622
        %v1579 = vunpack.c.l.b16 %v676
        %v1580 = vpack.c.b16 %v1578, %v1578
        %v1581 = vpack.c.b16 %v1579, %v1579
        %v1583 = vshrl.u32 %v1572, 16
        %v1585 = vshll.u32 %v1572, 16
        %v1587 = vrot.slane %v1585, 1
        %v1588 = vor.u32 %v1583, %v1587
        %v1590 = vshll.u32 %v1580, 16
        %v1592 = vrot.slane %v1590, 1
        %v1593 = vsel %vm966, %v1588, %v1592
        %v1595 = vshrl.u32 %v1573, 16
        %v1597 = vshll.u32 %v1573, 16
        %v1599 = vrot.slane %v1597, 1
        %v1600 = vor.u32 %v1595, %v1599
        %v1602 = vshll.u32 %v1581, 16
        %v1604 = vrot.slane %v1602, 1
        %v1605 = vsel %vm966, %v1600, %v1604
        %v1608 = vrot.slane %v1572, 1
        %v1609 = vrot.slane %v1580, 1
        %v1610 = vsel %vm1383, %v1608, %v1609
        %v1611 = vrot.slane %v1573, 1
        %v1612 = vrot.slane %v1581, 1
        %v1613 = vsel %vm1383, %v1611, %v1612
        %v1616 = vld [vmem:[#allocation6] sm:$0xf]
        %v1617 = vld [vmem:[#allocation6 + $0x4] sm:$0xf]
        %v1618 = vld [vmem:[#allocation6 + $0x8] sm:$0xf]
        %v1619 = vld [vmem:[#allocation6 + $0xc] sm:$0xf]
        %v1620 = vld [vmem:[#allocation6 + $0x10] sm:$0xf]
        %v1621 = vld [vmem:[#allocation6 + $0x14] sm:$0xf]
        %v1622 = vld [vmem:[#allocation6 + $0x18] sm:$0xf]
        %v1623 = vld [vmem:[#allocation6 + $0x1c] sm:$0xf]
        %v1624 = vld [vmem:[#allocation6 + $0x20] sm:$0xf]
        %v1625 = vld [vmem:[#allocation6 + $0x24] sm:$0xf]
        %v1626 = vld [vmem:[#allocation6 + $0x28] sm:$0xf]
        %v1627 = vld [vmem:[#allocation6 + $0x2c] sm:$0xf]
        %v1628 = vld [vmem:[#allocation6 + $0x30] sm:$0xf]
        %v1629 = vld [vmem:[#allocation6 + $0x34] sm:$0xf]
        %v1630 = vld [vmem:[#allocation6 + $0x38] sm:$0xf]
        %v1631 = vld [vmem:[#allocation6 + $0x3c] sm:$0xf]
        %v1632 = vld [vmem:[#allocation6 + $0x40] sm:$0xf]
        %v1633 = vld [vmem:[#allocation6 + $0x44] sm:$0xf]
        %v1634 = vld [vmem:[#allocation6 + $0x48] sm:$0xf]
        %v1635 = vld [vmem:[#allocation6 + $0x4c] sm:$0xf]
        %v1636 = vld [vmem:[#allocation6 + $0x50] sm:$0xf]
        %v1637 = vld [vmem:[#allocation6 + $0x54] sm:$0xf]
        %v1638 = vld [vmem:[#allocation6 + $0x58] sm:$0xf]
        %v1639 = vld [vmem:[#allocation6 + $0x5c] sm:$0xf]
        %v1640 = vld [vmem:[#allocation6 + $0x60] sm:$0xf]
        %v1641 = vld [vmem:[#allocation6 + $0x64] sm:$0xf]
        %v1642 = vld [vmem:[#allocation6 + $0x68] sm:$0xf]
        %v1643 = vld [vmem:[#allocation6 + $0x6c] sm:$0xf]
        %v1644 = vld [vmem:[#allocation6 + $0x70] sm:$0xf]
        %v1645 = vld [vmem:[#allocation6 + $0x74] sm:$0xf]
        %v1646 = vld [vmem:[#allocation6 + $0x78] sm:$0xf]
        %v1647 = vld [vmem:[#allocation6 + $0x7c] sm:$0xf]
        %v1648 = vld [vmem:[#allocation6 + $0x80] sm:$0xf]
        %v1649 = vld [vmem:[#allocation6 + $0x84] sm:$0xf]
        %v1650 = vld [vmem:[#allocation6 + $0x88] sm:$0xf]
        %v1651 = vld [vmem:[#allocation6 + $0x8c] sm:$0xf]
        %v1652 = vld [vmem:[#allocation6 + $0x90] sm:$0xf]
        %v1653 = vld [vmem:[#allocation6 + $0x94] sm:$0xf]
        %v1654 = vld [vmem:[#allocation6 + $0x98] sm:$0xf]
        %v1655 = vld [vmem:[#allocation6 + $0x9c] sm:$0xf]
        %v1656 = vld [vmem:[#allocation6 + $0xa0] sm:$0xf]
        %v1657 = vld [vmem:[#allocation6 + $0xa4] sm:$0xf]
        %v1658 = vld [vmem:[#allocation6 + $0xa8] sm:$0xf]
        %v1659 = vld [vmem:[#allocation6 + $0xac] sm:$0xf]
        %v1660 = vld [vmem:[#allocation6 + $0xb0] sm:$0xf]
        %v1661 = vld [vmem:[#allocation6 + $0xb4] sm:$0xf]
        %v1662 = vld [vmem:[#allocation6 + $0xb8] sm:$0xf]
        %v1663 = vld [vmem:[#allocation6 + $0xbc] sm:$0xf]
        %v1664 = vld [vmem:[#allocation6 + $0xc0] sm:$0xf]
        %v1665 = vld [vmem:[#allocation6 + $0xc4] sm:$0xf]
        %v1666 = vld [vmem:[#allocation6 + $0xc8] sm:$0xf]
        %v1667 = vld [vmem:[#allocation6 + $0xcc] sm:$0xf]
        %v1668 = vld [vmem:[#allocation6 + $0xd0] sm:$0xf]
        %v1669 = vld [vmem:[#allocation6 + $0xd4] sm:$0xf]
        %v1670 = vld [vmem:[#allocation6 + $0xd8] sm:$0xf]
        %v1671 = vld [vmem:[#allocation6 + $0xdc] sm:$0xf]
        %v1672 = vld [vmem:[#allocation6 + $0xe0] sm:$0xf]
        %v1673 = vld [vmem:[#allocation6 + $0xe4] sm:$0xf]
        %v1674 = vld [vmem:[#allocation6 + $0xe8] sm:$0xf]
        %v1675 = vld [vmem:[#allocation6 + $0xec] sm:$0xf]
        %v1676 = vld [vmem:[#allocation6 + $0xf0] sm:$0xf]
        %v1677 = vld [vmem:[#allocation6 + $0xf4] sm:$0xf]
        %v1678 = vld [vmem:[#allocation6 + $0xf8] sm:$0xf]
        %v1679 = vld [vmem:[#allocation6 + $0xfc] sm:$0xf]
        %v1680 = vld [vmem:[#allocation6 + $0x100] sm:$0xf]
        %v1681 = vld [vmem:[#allocation6 + $0x104] sm:$0xf]
        %v1682 = vld [vmem:[#allocation6 + $0x108] sm:$0xf]
        %v1683 = vld [vmem:[#allocation6 + $0x10c] sm:$0xf]
        %v1684 = vld [vmem:[#allocation6 + $0x110] sm:$0xf]
        %v1685 = vld [vmem:[#allocation6 + $0x114] sm:$0xf]
        %v1686 = vld [vmem:[#allocation6 + $0x118] sm:$0xf]
        %v1687 = vld [vmem:[#allocation6 + $0x11c] sm:$0xf]
        %v1688 = vld [vmem:[#allocation6 + $0x120] sm:$0xf]
        %v1689 = vld [vmem:[#allocation6 + $0x124] sm:$0xf]
        %v1690 = vld [vmem:[#allocation6 + $0x128] sm:$0xf]
        %v1691 = vld [vmem:[#allocation6 + $0x12c] sm:$0xf]
        %v1692 = vld [vmem:[#allocation6 + $0x130] sm:$0xf]
        %v1693 = vld [vmem:[#allocation6 + $0x134] sm:$0xf]
        %v1694 = vld [vmem:[#allocation6 + $0x138] sm:$0xf]
        %v1695 = vld [vmem:[#allocation6 + $0x13c] sm:$0xf]
        %v1696 = vld [vmem:[#allocation6 + $0x140] sm:$0xf]
        %v1697 = vld [vmem:[#allocation6 + $0x144] sm:$0xf]
        %v1698 = vld [vmem:[#allocation6 + $0x148] sm:$0xf]
        %v1699 = vld [vmem:[#allocation6 + $0x14c] sm:$0xf]
        %v1700 = vld [vmem:[#allocation6 + $0x150] sm:$0xf]
        %v1701 = vld [vmem:[#allocation6 + $0x154] sm:$0xf]
        %v1702 = vld [vmem:[#allocation6 + $0x158] sm:$0xf]
        %v1703 = vld [vmem:[#allocation6 + $0x15c] sm:$0xf]
        %v1704 = vld [vmem:[#allocation6 + $0x160] sm:$0xf]
        %v1705 = vld [vmem:[#allocation6 + $0x164] sm:$0xf]
        %v1706 = vld [vmem:[#allocation6 + $0x168] sm:$0xf]
        %v1707 = vld [vmem:[#allocation6 + $0x16c] sm:$0xf]
        %v1708 = vld [vmem:[#allocation6 + $0x170] sm:$0xf]
        %v1709 = vld [vmem:[#allocation6 + $0x174] sm:$0xf]
        %v1710 = vld [vmem:[#allocation6 + $0x178] sm:$0xf]
        %v1711 = vld [vmem:[#allocation6 + $0x17c] sm:$0xf]
        %v1712 = vld [vmem:[#allocation6 + $0x180] sm:$0xf]
        %v1713 = vld [vmem:[#allocation6 + $0x184] sm:$0xf]
        %v1714 = vld [vmem:[#allocation6 + $0x188] sm:$0xf]
        %v1715 = vld [vmem:[#allocation6 + $0x18c] sm:$0xf]
        %v1716 = vld [vmem:[#allocation6 + $0x190] sm:$0xf]
        %v1717 = vld [vmem:[#allocation6 + $0x194] sm:$0xf]
        %v1718 = vld [vmem:[#allocation6 + $0x198] sm:$0xf]
        %v1719 = vld [vmem:[#allocation6 + $0x19c] sm:$0xf]
        %v1720 = vld [vmem:[#allocation6 + $0x1a0] sm:$0xf]
        %v1721 = vld [vmem:[#allocation6 + $0x1a4] sm:$0xf]
        %v1722 = vld [vmem:[#allocation6 + $0x1a8] sm:$0xf]
        %v1723 = vld [vmem:[#allocation6 + $0x1ac] sm:$0xf]
        %v1724 = vld [vmem:[#allocation6 + $0x1b0] sm:$0xf]
        %v1725 = vld [vmem:[#allocation6 + $0x1b4] sm:$0xf]
        %v1726 = vld [vmem:[#allocation6 + $0x1b8] sm:$0xf]
        %v1727 = vld [vmem:[#allocation6 + $0x1bc] sm:$0xf]
        %v1728 = vld [vmem:[#allocation6 + $0x1c0] sm:$0xf]
        %v1729 = vld [vmem:[#allocation6 + $0x1c4] sm:$0xf]
        %v1730 = vld [vmem:[#allocation6 + $0x1c8] sm:$0xf]
        %v1731 = vld [vmem:[#allocation6 + $0x1cc] sm:$0xf]
        %v1732 = vld [vmem:[#allocation6 + $0x1d0] sm:$0xf]
        %v1733 = vld [vmem:[#allocation6 + $0x1d4] sm:$0xf]
        %v1734 = vld [vmem:[#allocation6 + $0x1d8] sm:$0xf]
        %v1735 = vld [vmem:[#allocation6 + $0x1dc] sm:$0xf]
        %v1736 = vld [vmem:[#allocation6 + $0x1e0] sm:$0xf]
        %v1737 = vld [vmem:[#allocation6 + $0x1e4] sm:$0xf]
        %v1738 = vld [vmem:[#allocation6 + $0x1e8] sm:$0xf]
        %v1739 = vld [vmem:[#allocation6 + $0x1ec] sm:$0xf]
        %v1740 = vld [vmem:[#allocation6 + $0x1f0] sm:$0xf]
        %v1741 = vld [vmem:[#allocation6 + $0x1f4] sm:$0xf]
        %v1742 = vld [vmem:[#allocation6 + $0x1f8] sm:$0xf]
        %v1743 = vld [vmem:[#allocation6 + $0x1fc] sm:$0xf]
        %v1744 = vld [vmem:[#allocation6 + $0x200] sm:$0xf]
        %v1745 = vld [vmem:[#allocation6 + $0x204] sm:$0xf]
        %v1746 = vld [vmem:[#allocation6 + $0x208] sm:$0xf]
        %v1747 = vld [vmem:[#allocation6 + $0x20c] sm:$0xf]
        %v1748 = vld [vmem:[#allocation6 + $0x210] sm:$0xf]
        %v1749 = vld [vmem:[#allocation6 + $0x214] sm:$0xf]
        %v1750 = vld [vmem:[#allocation6 + $0x218] sm:$0xf]
        %v1751 = vld [vmem:[#allocation6 + $0x21c] sm:$0xf]
        %v1752 = vld [vmem:[#allocation6 + $0x220] sm:$0xf]
        %v1753 = vld [vmem:[#allocation6 + $0x224] sm:$0xf]
        %v1754 = vld [vmem:[#allocation6 + $0x228] sm:$0xf]
        %v1755 = vld [vmem:[#allocation6 + $0x22c] sm:$0xf]
        %v1756 = vld [vmem:[#allocation6 + $0x230] sm:$0xf]
        %v1757 = vld [vmem:[#allocation6 + $0x234] sm:$0xf]
        %v1758 = vld [vmem:[#allocation6 + $0x238] sm:$0xf]
        %v1759 = vld [vmem:[#allocation6 + $0x23c] sm:$0xf]
        %v1761 = vperm.slane %v677, 0
        %v1907 = vunpack.c.l.b16 %v1616
        %v1908 = vunpack.c.l.b16 %v1617
        %v1909 = vunpack.c.l.b16 %v1618
        %v1910 = vunpack.c.l.b16 %v1619
        %v1911 = vunpack.c.l.b16 %v1620
        %v1912 = vunpack.c.l.b16 %v1621
        %v1913 = vunpack.c.l.b16 %v1622
        %v1914 = vunpack.c.l.b16 %v1623
        %v1915 = vunpack.c.l.b16 %v1624
        %v1916 = vunpack.c.l.b16 %v1625
        %v1917 = vunpack.c.l.b16 %v1626
        %v1918 = vunpack.c.l.b16 %v1627
        %v1919 = vunpack.c.l.b16 %v1628
        %v1920 = vunpack.c.l.b16 %v1629
        %v1921 = vunpack.c.l.b16 %v1630
        %v1922 = vunpack.c.l.b16 %v1631
        %v1923 = vunpack.c.l.b16 %v1632
        %v1924 = vunpack.c.l.b16 %v1633
        %v1925 = vunpack.c.l.b16 %v1634
        %v1926 = vunpack.c.l.b16 %v1635
        %v1927 = vunpack.c.l.b16 %v1636
        %v1928 = vunpack.c.l.b16 %v1637
        %v1929 = vunpack.c.l.b16 %v1638
        %v1930 = vunpack.c.l.b16 %v1639
        %v1931 = vunpack.c.l.b16 %v1640
        %v1932 = vunpack.c.l.b16 %v1641
        %v1933 = vunpack.c.l.b16 %v1642
        %v1934 = vunpack.c.l.b16 %v1643
        %v1935 = vunpack.c.l.b16 %v1644
        %v1936 = vunpack.c.l.b16 %v1645
        %v1937 = vunpack.c.l.b16 %v1646
        %v1938 = vunpack.c.l.b16 %v1647
        %v1939 = vunpack.c.l.b16 %v1648
        %v1940 = vunpack.c.l.b16 %v1649
        %v1941 = vunpack.c.l.b16 %v1650
        %v1942 = vunpack.c.l.b16 %v1651
        %v1943 = vunpack.c.l.b16 %v1652
        %v1944 = vunpack.c.l.b16 %v1653
        %v1945 = vunpack.c.l.b16 %v1654
        %v1946 = vunpack.c.l.b16 %v1655
        %v1947 = vunpack.c.l.b16 %v1656
        %v1948 = vunpack.c.l.b16 %v1657
        %v1949 = vunpack.c.l.b16 %v1658
        %v1950 = vunpack.c.l.b16 %v1659
        %v1951 = vunpack.c.l.b16 %v1660
        %v1952 = vunpack.c.l.b16 %v1661
        %v1953 = vunpack.c.l.b16 %v1662
        %v1954 = vunpack.c.l.b16 %v1663
        %v1955 = vunpack.c.l.b16 %v1664
        %v1956 = vunpack.c.l.b16 %v1665
        %v1957 = vunpack.c.l.b16 %v1666
        %v1958 = vunpack.c.l.b16 %v1667
        %v1959 = vunpack.c.l.b16 %v1668
        %v1960 = vunpack.c.l.b16 %v1669
        %v1961 = vunpack.c.l.b16 %v1670
        %v1962 = vunpack.c.l.b16 %v1671
        %v1963 = vunpack.c.l.b16 %v1672
        %v1964 = vunpack.c.l.b16 %v1673
        %v1965 = vunpack.c.l.b16 %v1674
        %v1966 = vunpack.c.l.b16 %v1675
        %v1967 = vunpack.c.l.b16 %v1676
        %v1968 = vunpack.c.l.b16 %v1677
        %v1969 = vunpack.c.l.b16 %v1678
        %v1970 = vunpack.c.l.b16 %v1679
        %v1971 = vunpack.c.l.b16 %v1680
        %v1972 = vunpack.c.l.b16 %v1681
        %v1973 = vunpack.c.l.b16 %v1682
        %v1974 = vunpack.c.l.b16 %v1683
        %v1975 = vunpack.c.l.b16 %v1684
        %v1976 = vunpack.c.l.b16 %v1685
        %v1977 = vunpack.c.l.b16 %v1686
        %v1978 = vunpack.c.l.b16 %v1687
        %v1979 = vunpack.c.l.b16 %v1688
        %v1980 = vunpack.c.l.b16 %v1689
        %v1981 = vunpack.c.l.b16 %v1690
        %v1982 = vunpack.c.l.b16 %v1691
        %v1983 = vunpack.c.l.b16 %v1692
        %v1984 = vunpack.c.l.b16 %v1693
        %v1985 = vunpack.c.l.b16 %v1694
        %v1986 = vunpack.c.l.b16 %v1695
        %v1987 = vunpack.c.l.b16 %v1696
        %v1988 = vunpack.c.l.b16 %v1697
        %v1989 = vunpack.c.l.b16 %v1698
        %v1990 = vunpack.c.l.b16 %v1699
        %v1991 = vunpack.c.l.b16 %v1700
        %v1992 = vunpack.c.l.b16 %v1701
        %v1993 = vunpack.c.l.b16 %v1702
        %v1994 = vunpack.c.l.b16 %v1703
        %v1995 = vunpack.c.l.b16 %v1704
        %v1996 = vunpack.c.l.b16 %v1705
        %v1997 = vunpack.c.l.b16 %v1706
        %v1998 = vunpack.c.l.b16 %v1707
        %v1999 = vunpack.c.l.b16 %v1708
        %v2000 = vunpack.c.l.b16 %v1709
        %v2001 = vunpack.c.l.b16 %v1710
        %v2002 = vunpack.c.l.b16 %v1711
        %v2003 = vunpack.c.l.b16 %v1712
        %v2004 = vunpack.c.l.b16 %v1713
        %v2005 = vunpack.c.l.b16 %v1714
        %v2006 = vunpack.c.l.b16 %v1715
        %v2007 = vunpack.c.l.b16 %v1716
        %v2008 = vunpack.c.l.b16 %v1717
        %v2009 = vunpack.c.l.b16 %v1718
        %v2010 = vunpack.c.l.b16 %v1719
        %v2011 = vunpack.c.l.b16 %v1720
        %v2012 = vunpack.c.l.b16 %v1721
        %v2013 = vunpack.c.l.b16 %v1722
        %v2014 = vunpack.c.l.b16 %v1723
        %v2015 = vunpack.c.l.b16 %v1724
        %v2016 = vunpack.c.l.b16 %v1725
        %v2017 = vunpack.c.l.b16 %v1726
        %v2018 = vunpack.c.l.b16 %v1727
        %v2019 = vunpack.c.l.b16 %v1728
        %v2020 = vunpack.c.l.b16 %v1729
        %v2021 = vunpack.c.l.b16 %v1730
        %v2022 = vunpack.c.l.b16 %v1731
        %v2023 = vunpack.c.l.b16 %v1732
        %v2024 = vunpack.c.l.b16 %v1733
        %v2025 = vunpack.c.l.b16 %v1734
        %v2026 = vunpack.c.l.b16 %v1735
        %v2027 = vunpack.c.l.b16 %v1736
        %v2028 = vunpack.c.l.b16 %v1737
        %v2029 = vunpack.c.l.b16 %v1738
        %v2030 = vunpack.c.l.b16 %v1739
        %v2031 = vunpack.c.l.b16 %v1740
        %v2032 = vunpack.c.l.b16 %v1741
        %v2033 = vunpack.c.l.b16 %v1742
        %v2034 = vunpack.c.l.b16 %v1743
        %v2035 = vunpack.c.l.b16 %v1744
        %v2036 = vunpack.c.l.b16 %v1745
        %v2037 = vunpack.c.l.b16 %v1746
        %v2038 = vunpack.c.l.b16 %v1747
        %v2039 = vunpack.c.l.b16 %v1748
        %v2040 = vunpack.c.l.b16 %v1749
        %v2041 = vunpack.c.l.b16 %v1750
        %v2042 = vunpack.c.l.b16 %v1751
        %v2043 = vunpack.c.l.b16 %v1752
        %v2044 = vunpack.c.l.b16 %v1753
        %v2045 = vunpack.c.l.b16 %v1754
        %v2046 = vunpack.c.l.b16 %v1755
        %v2047 = vunpack.c.l.b16 %v1756
        %v2048 = vunpack.c.l.b16 %v1757
        %v2049 = vunpack.c.l.b16 %v1758
        %v2050 = vunpack.c.l.b16 %v1759
        %v2051 = vpack.c.b16 %v1908, %v1907
        %v2052 = vpack.c.b16 %v1910, %v1909
        %v2053 = vpack.c.b16 %v1912, %v1911
        %v2054 = vpack.c.b16 %v1914, %v1913
        %v2055 = vpack.c.b16 %v1916, %v1915
        %v2056 = vpack.c.b16 %v1918, %v1917
        %v2057 = vpack.c.b16 %v1920, %v1919
        %v2058 = vpack.c.b16 %v1922, %v1921
        %v2059 = vpack.c.b16 %v1924, %v1923
        %v2060 = vpack.c.b16 %v1926, %v1925
        %v2061 = vpack.c.b16 %v1928, %v1927
        %v2062 = vpack.c.b16 %v1930, %v1929
        %v2063 = vpack.c.b16 %v1932, %v1931
        %v2064 = vpack.c.b16 %v1934, %v1933
        %v2065 = vpack.c.b16 %v1936, %v1935
        %v2066 = vpack.c.b16 %v1938, %v1937
        %v2067 = vpack.c.b16 %v1940, %v1939
        %v2068 = vpack.c.b16 %v1942, %v1941
        %v2069 = vpack.c.b16 %v1944, %v1943
        %v2070 = vpack.c.b16 %v1946, %v1945
        %v2071 = vpack.c.b16 %v1948, %v1947
        %v2072 = vpack.c.b16 %v1950, %v1949
        %v2073 = vpack.c.b16 %v1952, %v1951
        %v2074 = vpack.c.b16 %v1954, %v1953
        %v2075 = vpack.c.b16 %v1956, %v1955
        %v2076 = vpack.c.b16 %v1958, %v1957
        %v2077 = vpack.c.b16 %v1960, %v1959
        %v2078 = vpack.c.b16 %v1962, %v1961
        %v2079 = vpack.c.b16 %v1964, %v1963
        %v2080 = vpack.c.b16 %v1966, %v1965
        %v2081 = vpack.c.b16 %v1968, %v1967
        %v2082 = vpack.c.b16 %v1970, %v1969
        %v2083 = vpack.c.b16 %v1972, %v1971
        %v2084 = vpack.c.b16 %v1974, %v1973
        %v2085 = vpack.c.b16 %v1976, %v1975
        %v2086 = vpack.c.b16 %v1978, %v1977
        %v2087 = vpack.c.b16 %v1980, %v1979
        %v2088 = vpack.c.b16 %v1982, %v1981
        %v2089 = vpack.c.b16 %v1984, %v1983
        %v2090 = vpack.c.b16 %v1986, %v1985
        %v2091 = vpack.c.b16 %v1988, %v1987
        %v2092 = vpack.c.b16 %v1990, %v1989
        %v2093 = vpack.c.b16 %v1992, %v1991
        %v2094 = vpack.c.b16 %v1994, %v1993
        %v2095 = vpack.c.b16 %v1996, %v1995
        %v2096 = vpack.c.b16 %v1998, %v1997
        %v2097 = vpack.c.b16 %v2000, %v1999
        %v2098 = vpack.c.b16 %v2002, %v2001
        %v2099 = vpack.c.b16 %v2004, %v2003
        %v2100 = vpack.c.b16 %v2006, %v2005
        %v2101 = vpack.c.b16 %v2008, %v2007
        %v2102 = vpack.c.b16 %v2010, %v2009
        %v2103 = vpack.c.b16 %v2012, %v2011
        %v2104 = vpack.c.b16 %v2014, %v2013
        %v2105 = vpack.c.b16 %v2016, %v2015
        %v2106 = vpack.c.b16 %v2018, %v2017
        %v2107 = vpack.c.b16 %v2020, %v2019
        %v2108 = vpack.c.b16 %v2022, %v2021
        %v2109 = vpack.c.b16 %v2024, %v2023
        %v2110 = vpack.c.b16 %v2026, %v2025
        %v2111 = vpack.c.b16 %v2028, %v2027
        %v2112 = vpack.c.b16 %v2030, %v2029
        %v2113 = vpack.c.b16 %v2032, %v2031
        %v2114 = vpack.c.b16 %v2034, %v2033
        %v2115 = vpack.c.b16 %v2036, %v2035
        %v2116 = vpack.c.b16 %v2038, %v2037
        %v2117 = vpack.c.b16 %v2040, %v2039
        %v2118 = vpack.c.b16 %v2042, %v2041
        %v2119 = vpack.c.b16 %v2044, %v2043
        %v2120 = vpack.c.b16 %v2046, %v2045
        %v2121 = vpack.c.b16 %v2048, %v2047
        %v2122 = vpack.c.b16 %v2050, %v2049
        %2195 = vmatpush.bf16.msra.mxu0 %v2058
        %2196 = vmatpush.bf16.msra.mxu0 %v2057
        %2197 = vmatpush.bf16.msra.mxu0 %v2056
        %2198 = vmatpush.bf16.msra.mxu0 %v2055
        %2199 = vmatpush.bf16.msra.mxu0 %v2054
        %2200 = vmatpush.bf16.msra.mxu0 %v2053
        %2201 = vmatpush.bf16.msra.mxu0 %v2052
        %2202 = vmatpush.bf16.msra.mxu0 %v2051
        %2203 = vmatmul.bf16.gmra.mxu0 %v806
        %v2204 = vpop.f32.mrf.mxu0
        %v2205 = vadd.f32 %v1761, %v2204
        %v2206 = vpop.f32.mrf.mxu0
        %v2207 = vadd.f32 %v1761, %v2206
        %2208 = vmatmul.bf16.gmra.mxu0 %v807
        %v2209 = vpop.f32.mrf.mxu0
        %v2210 = vadd.f32 %v1761, %v2209
        %v2211 = vpop.f32.mrf.mxu0
        %v2212 = vadd.f32 %v1761, %v2211
        %2213 = vmatmul.bf16.gmra.mxu0 %v808
        %v2214 = vpop.f32.mrf.mxu0
        %v2215 = vadd.f32 %v1761, %v2214
        %v2216 = vpop.f32.mrf.mxu0
        %v2217 = vadd.f32 %v1761, %v2216
        %2218 = vmatmul.bf16.gmra.mxu0 %v809
        %v2219 = vpop.f32.mrf.mxu0
        %v2220 = vadd.f32 %v1761, %v2219
        %v2221 = vpop.f32.mrf.mxu0
        %v2222 = vadd.f32 %v1761, %v2221
        %2223 = vmatmul.bf16.gmra.mxu0 %v810
        %v2224 = vpop.f32.mrf.mxu0
        %v2225 = vadd.f32 %v1761, %v2224
        %v2226 = vpop.f32.mrf.mxu0
        %v2227 = vadd.f32 %v1761, %v2226
        %2228 = vmatmul.bf16.gmra.mxu0 %v811
        %v2229 = vpop.f32.mrf.mxu0
        %v2230 = vadd.f32 %v1761, %v2229
        %v2231 = vpop.f32.mrf.mxu0
        %v2232 = vadd.f32 %v1761, %v2231
        %2233 = vmatmul.bf16.gmra.mxu0 %v812
        %v2234 = vpop.f32.mrf.mxu0
        %v2235 = vadd.f32 %v1761, %v2234
        %v2236 = vpop.f32.mrf.mxu0
        %v2237 = vadd.f32 %v1761, %v2236
        %2238 = vmatmul.bf16.gmra.mxu0 %v813
        %v2239 = vpop.f32.mrf.mxu0
        %v2240 = vadd.f32 %v1761, %v2239
        %v2241 = vpop.f32.mrf.mxu0
        %v2242 = vadd.f32 %v1761, %v2241
        %2243 = vmatmul.bf16.gmra.mxu0 %v814
        %v2244 = vpop.f32.mrf.mxu0
        %v2245 = vadd.f32 %v1761, %v2244
        %v2246 = vpop.f32.mrf.mxu0
        %v2247 = vadd.f32 %v1761, %v2246
        %2248 = vmatmul.bf16.gmra.mxu0 %v815
        %v2249 = vpop.f32.mrf.mxu0
        %v2250 = vadd.f32 %v1761, %v2249
        %v2251 = vpop.f32.mrf.mxu0
        %v2252 = vadd.f32 %v1761, %v2251
        %2253 = vmatmul.bf16.gmra.mxu0 %v816
        %v2254 = vpop.f32.mrf.mxu0
        %v2255 = vadd.f32 %v1761, %v2254
        %v2256 = vpop.f32.mrf.mxu0
        %v2257 = vadd.f32 %v1761, %v2256
        %2258 = vmatmul.bf16.gmra.mxu0 %v817
        %v2259 = vpop.f32.mrf.mxu0
        %v2260 = vadd.f32 %v1761, %v2259
        %v2261 = vpop.f32.mrf.mxu0
        %v2262 = vadd.f32 %v1761, %v2261
        %2263 = vmatmul.bf16.gmra.mxu0 %v818
        %v2264 = vpop.f32.mrf.mxu0
        %v2265 = vadd.f32 %v1761, %v2264
        %v2266 = vpop.f32.mrf.mxu0
        %v2267 = vadd.f32 %v1761, %v2266
        %2268 = vmatmul.bf16.gmra.mxu0 %v819
        %v2269 = vpop.f32.mrf.mxu0
        %v2270 = vadd.f32 %v1761, %v2269
        %v2271 = vpop.f32.mrf.mxu0
        %v2272 = vadd.f32 %v1761, %v2271
        %2273 = vmatmul.bf16.gmra.mxu0 %v820
        %v2274 = vpop.f32.mrf.mxu0
        %v2275 = vadd.f32 %v1761, %v2274
        %v2276 = vpop.f32.mrf.mxu0
        %v2277 = vadd.f32 %v1761, %v2276
        %2278 = vmatmul.bf16.gmra.mxu0 %v821
        %v2279 = vpop.f32.mrf.mxu0
        %v2280 = vadd.f32 %v1761, %v2279
        %v2281 = vpop.f32.mrf.mxu0
        %v2282 = vadd.f32 %v1761, %v2281
        %2283 = vmatmul.bf16.gmra.mxu0 %v822
        %v2284 = vpop.f32.mrf.mxu0
        %v2285 = vadd.f32 %v1761, %v2284
        %v2286 = vpop.f32.mrf.mxu0
        %v2287 = vadd.f32 %v1761, %v2286
        %2288 = vmatmul.bf16.gmra.mxu0 %v823
        %v2289 = vpop.f32.mrf.mxu0
        %v2290 = vadd.f32 %v1761, %v2289
        %v2291 = vpop.f32.mrf.mxu0
        %v2292 = vadd.f32 %v1761, %v2291
        %2293 = vmatmul.bf16.gmra.mxu0 %v824
        %v2294 = vpop.f32.mrf.mxu0
        %v2295 = vadd.f32 %v1761, %v2294
        %v2296 = vpop.f32.mrf.mxu0
        %v2297 = vadd.f32 %v1761, %v2296
        %2298 = vmatmul.bf16.gmra.mxu0 %v825
        %v2299 = vpop.f32.mrf.mxu0
        %v2300 = vadd.f32 %v1761, %v2299
        %v2301 = vpop.f32.mrf.mxu0
        %v2302 = vadd.f32 %v1761, %v2301
        %2303 = vmatmul.bf16.gmra.mxu0 %v826
        %v2304 = vpop.f32.mrf.mxu0
        %v2305 = vadd.f32 %v1761, %v2304
        %v2306 = vpop.f32.mrf.mxu0
        %v2307 = vadd.f32 %v1761, %v2306
        %2308 = vmatmul.bf16.gmra.mxu0 %v827
        %v2309 = vpop.f32.mrf.mxu0
        %v2310 = vadd.f32 %v1761, %v2309
        %v2311 = vpop.f32.mrf.mxu0
        %v2312 = vadd.f32 %v1761, %v2311
        %2313 = vmatmul.bf16.gmra.mxu0 %v828
        %v2314 = vpop.f32.mrf.mxu0
        %v2315 = vadd.f32 %v1761, %v2314
        %v2316 = vpop.f32.mrf.mxu0
        %v2317 = vadd.f32 %v1761, %v2316
        %2318 = vmatmul.bf16.gmra.mxu0 %v829
        %v2319 = vpop.f32.mrf.mxu0
        %v2320 = vadd.f32 %v1761, %v2319
        %v2321 = vpop.f32.mrf.mxu0
        %v2322 = vadd.f32 %v1761, %v2321
        %2323 = vmatmul.bf16.gmra.mxu0 %v830
        %v2324 = vpop.f32.mrf.mxu0
        %v2325 = vadd.f32 %v1761, %v2324
        %v2326 = vpop.f32.mrf.mxu0
        %v2327 = vadd.f32 %v1761, %v2326
        %2328 = vmatmul.bf16.gmra.mxu0 %v831
        %v2329 = vpop.f32.mrf.mxu0
        %v2330 = vadd.f32 %v1761, %v2329
        %v2331 = vpop.f32.mrf.mxu0
        %v2332 = vadd.f32 %v1761, %v2331
        %2333 = vmatmul.bf16.gmra.mxu0 %v832
        %v2334 = vpop.f32.mrf.mxu0
        %v2335 = vadd.f32 %v1761, %v2334
        %v2336 = vpop.f32.mrf.mxu0
        %v2337 = vadd.f32 %v1761, %v2336
        %2338 = vmatmul.bf16.gmra.mxu0 %v833
        %v2339 = vpop.f32.mrf.mxu0
        %v2340 = vadd.f32 %v1761, %v2339
        %v2341 = vpop.f32.mrf.mxu0
        %v2342 = vadd.f32 %v1761, %v2341
        %2343 = vmatmul.bf16.gmra.mxu0 %v834
        %v2344 = vpop.f32.mrf.mxu0
        %v2345 = vadd.f32 %v1761, %v2344
        %v2346 = vpop.f32.mrf.mxu0
        %v2347 = vadd.f32 %v1761, %v2346
        %2348 = vmatmul.bf16.gmra.mxu0 %v835
        %v2349 = vpop.f32.mrf.mxu0
        %v2350 = vadd.f32 %v1761, %v2349
        %v2351 = vpop.f32.mrf.mxu0
        %v2352 = vadd.f32 %v1761, %v2351
        %2353 = vmatmul.bf16.gmra.mxu0 %v836
        %v2354 = vpop.f32.mrf.mxu0
        %v2355 = vadd.f32 %v1761, %v2354
        %v2356 = vpop.f32.mrf.mxu0
        %v2357 = vadd.f32 %v1761, %v2356
        %2358 = vmatmul.bf16.gmra.mxu0 %v837
        %v2359 = vpop.f32.mrf.mxu0
        %v2360 = vadd.f32 %v1761, %v2359
        %v2361 = vpop.f32.mrf.mxu0
        %v2362 = vadd.f32 %v1761, %v2361
        %2363 = vdwg.mxu0
        %2364 = vmatpush.bf16.msra.mxu0 %v2066
        %2365 = vmatpush.bf16.msra.mxu0 %v2065
        %2366 = vmatpush.bf16.msra.mxu0 %v2064
        %2367 = vmatpush.bf16.msra.mxu0 %v2063
        %2368 = vmatpush.bf16.msra.mxu0 %v2062
        %2369 = vmatpush.bf16.msra.mxu0 %v2061
        %2370 = vmatpush.bf16.msra.mxu0 %v2060
        %2371 = vmatpush.bf16.msra.mxu0 %v2059
        %2372 = vmatmul.bf16.gmra.mxu0 %v978
        %v2373 = vpop.f32.mrf.mxu0
        %v2374 = vadd.f32 %v2205, %v2373
        %v2375 = vpop.f32.mrf.mxu0
        %v2376 = vadd.f32 %v2207, %v2375
        %2377 = vmatmul.bf16.gmra.mxu0 %v990
        %v2378 = vpop.f32.mrf.mxu0
        %v2379 = vadd.f32 %v2210, %v2378
        %v2380 = vpop.f32.mrf.mxu0
        %v2381 = vadd.f32 %v2212, %v2380
        %2382 = vmatmul.bf16.gmra.mxu0 %v1002
        %v2383 = vpop.f32.mrf.mxu0
        %v2384 = vadd.f32 %v2215, %v2383
        %v2385 = vpop.f32.mrf.mxu0
        %v2386 = vadd.f32 %v2217, %v2385
        %2387 = vmatmul.bf16.gmra.mxu0 %v1014
        %v2388 = vpop.f32.mrf.mxu0
        %v2389 = vadd.f32 %v2220, %v2388
        %v2390 = vpop.f32.mrf.mxu0
        %v2391 = vadd.f32 %v2222, %v2390
        %2392 = vmatmul.bf16.gmra.mxu0 %v1026
        %v2393 = vpop.f32.mrf.mxu0
        %v2394 = vadd.f32 %v2225, %v2393
        %v2395 = vpop.f32.mrf.mxu0
        %v2396 = vadd.f32 %v2227, %v2395
        %2397 = vmatmul.bf16.gmra.mxu0 %v1038
        %v2398 = vpop.f32.mrf.mxu0
        %v2399 = vadd.f32 %v2230, %v2398
        %v2400 = vpop.f32.mrf.mxu0
        %v2401 = vadd.f32 %v2232, %v2400
        %2402 = vmatmul.bf16.gmra.mxu0 %v1050
        %v2403 = vpop.f32.mrf.mxu0
        %v2404 = vadd.f32 %v2235, %v2403
        %v2405 = vpop.f32.mrf.mxu0
        %v2406 = vadd.f32 %v2237, %v2405
        %2407 = vmatmul.bf16.gmra.mxu0 %v1062
        %v2408 = vpop.f32.mrf.mxu0
        %v2409 = vadd.f32 %v2240, %v2408
        %v2410 = vpop.f32.mrf.mxu0
        %v2411 = vadd.f32 %v2242, %v2410
        %2412 = vmatmul.bf16.gmra.mxu0 %v1074
        %v2413 = vpop.f32.mrf.mxu0
        %v2414 = vadd.f32 %v2245, %v2413
        %v2415 = vpop.f32.mrf.mxu0
        %v2416 = vadd.f32 %v2247, %v2415
        %2417 = vmatmul.bf16.gmra.mxu0 %v1086
        %v2418 = vpop.f32.mrf.mxu0
        %v2419 = vadd.f32 %v2250, %v2418
        %v2420 = vpop.f32.mrf.mxu0
        %v2421 = vadd.f32 %v2252, %v2420
        %2422 = vmatmul.bf16.gmra.mxu0 %v1098
        %v2423 = vpop.f32.mrf.mxu0
        %v2424 = vadd.f32 %v2255, %v2423
        %v2425 = vpop.f32.mrf.mxu0
        %v2426 = vadd.f32 %v2257, %v2425
        %2427 = vmatmul.bf16.gmra.mxu0 %v1110
        %v2428 = vpop.f32.mrf.mxu0
        %v2429 = vadd.f32 %v2260, %v2428
        %v2430 = vpop.f32.mrf.mxu0
        %v2431 = vadd.f32 %v2262, %v2430
        %2432 = vmatmul.bf16.gmra.mxu0 %v1122
        %v2433 = vpop.f32.mrf.mxu0
        %v2434 = vadd.f32 %v2265, %v2433
        %v2435 = vpop.f32.mrf.mxu0
        %v2436 = vadd.f32 %v2267, %v2435
        %2437 = vmatmul.bf16.gmra.mxu0 %v1134
        %v2438 = vpop.f32.mrf.mxu0
        %v2439 = vadd.f32 %v2270, %v2438
        %v2440 = vpop.f32.mrf.mxu0
        %v2441 = vadd.f32 %v2272, %v2440
        %2442 = vmatmul.bf16.gmra.mxu0 %v1146
        %v2443 = vpop.f32.mrf.mxu0
        %v2444 = vadd.f32 %v2275, %v2443
        %v2445 = vpop.f32.mrf.mxu0
        %v2446 = vadd.f32 %v2277, %v2445
        %2447 = vmatmul.bf16.gmra.mxu0 %v1158
        %v2448 = vpop.f32.mrf.mxu0
        %v2449 = vadd.f32 %v2280, %v2448
        %v2450 = vpop.f32.mrf.mxu0
        %v2451 = vadd.f32 %v2282, %v2450
        %2452 = vmatmul.bf16.gmra.mxu0 %v1170
        %v2453 = vpop.f32.mrf.mxu0
        %v2454 = vadd.f32 %v2285, %v2453
        %v2455 = vpop.f32.mrf.mxu0
        %v2456 = vadd.f32 %v2287, %v2455
        %2457 = vmatmul.bf16.gmra.mxu0 %v1182
        %v2458 = vpop.f32.mrf.mxu0
        %v2459 = vadd.f32 %v2290, %v2458
        %v2460 = vpop.f32.mrf.mxu0
        %v2461 = vadd.f32 %v2292, %v2460
        %2462 = vmatmul.bf16.gmra.mxu0 %v1194
        %v2463 = vpop.f32.mrf.mxu0
        %v2464 = vadd.f32 %v2295, %v2463
        %v2465 = vpop.f32.mrf.mxu0
        %v2466 = vadd.f32 %v2297, %v2465
        %2467 = vmatmul.bf16.gmra.mxu0 %v1206
        %v2468 = vpop.f32.mrf.mxu0
        %v2469 = vadd.f32 %v2300, %v2468
        %v2470 = vpop.f32.mrf.mxu0
        %v2471 = vadd.f32 %v2302, %v2470
        %2472 = vmatmul.bf16.gmra.mxu0 %v1218
        %v2473 = vpop.f32.mrf.mxu0
        %v2474 = vadd.f32 %v2305, %v2473
        %v2475 = vpop.f32.mrf.mxu0
        %v2476 = vadd.f32 %v2307, %v2475
        %2477 = vmatmul.bf16.gmra.mxu0 %v1230
        %v2478 = vpop.f32.mrf.mxu0
        %v2479 = vadd.f32 %v2310, %v2478
        %v2480 = vpop.f32.mrf.mxu0
        %v2481 = vadd.f32 %v2312, %v2480
        %2482 = vmatmul.bf16.gmra.mxu0 %v1242
        %v2483 = vpop.f32.mrf.mxu0
        %v2484 = vadd.f32 %v2315, %v2483
        %v2485 = vpop.f32.mrf.mxu0
        %v2486 = vadd.f32 %v2317, %v2485
        %2487 = vmatmul.bf16.gmra.mxu0 %v1254
        %v2488 = vpop.f32.mrf.mxu0
        %v2489 = vadd.f32 %v2320, %v2488
        %v2490 = vpop.f32.mrf.mxu0
        %v2491 = vadd.f32 %v2322, %v2490
        %2492 = vmatmul.bf16.gmra.mxu0 %v1266
        %v2493 = vpop.f32.mrf.mxu0
        %v2494 = vadd.f32 %v2325, %v2493
        %v2495 = vpop.f32.mrf.mxu0
        %v2496 = vadd.f32 %v2327, %v2495
        %2497 = vmatmul.bf16.gmra.mxu0 %v1278
        %v2498 = vpop.f32.mrf.mxu0
        %v2499 = vadd.f32 %v2330, %v2498
        %v2500 = vpop.f32.mrf.mxu0
        %v2501 = vadd.f32 %v2332, %v2500
        %2502 = vmatmul.bf16.gmra.mxu0 %v1290
        %v2503 = vpop.f32.mrf.mxu0
        %v2504 = vadd.f32 %v2335, %v2503
        %v2505 = vpop.f32.mrf.mxu0
        %v2506 = vadd.f32 %v2337, %v2505
        %2507 = vmatmul.bf16.gmra.mxu0 %v1302
        %v2508 = vpop.f32.mrf.mxu0
        %v2509 = vadd.f32 %v2340, %v2508
        %v2510 = vpop.f32.mrf.mxu0
        %v2511 = vadd.f32 %v2342, %v2510
        %2512 = vmatmul.bf16.gmra.mxu0 %v1314
        %v2513 = vpop.f32.mrf.mxu0
        %v2514 = vadd.f32 %v2345, %v2513
        %v2515 = vpop.f32.mrf.mxu0
        %v2516 = vadd.f32 %v2347, %v2515
        %2517 = vmatmul.bf16.gmra.mxu0 %v1326
        %v2518 = vpop.f32.mrf.mxu0
        %v2519 = vadd.f32 %v2350, %v2518
        %v2520 = vpop.f32.mrf.mxu0
        %v2521 = vadd.f32 %v2352, %v2520
        %2522 = vmatmul.bf16.gmra.mxu0 %v1338
        %v2523 = vpop.f32.mrf.mxu0
        %v2524 = vadd.f32 %v2355, %v2523
        %v2525 = vpop.f32.mrf.mxu0
        %v2526 = vadd.f32 %v2357, %v2525
        %2527 = vmatmul.bf16.gmra.mxu0 %v1350
        %v2528 = vpop.f32.mrf.mxu0
        %v2529 = vadd.f32 %v2360, %v2528
        %v2530 = vpop.f32.mrf.mxu0
        %v2531 = vadd.f32 %v2362, %v2530
        %2532 = vdwg.mxu0
        %2533 = vmatpush.bf16.msra.mxu0 %v2074
        %2534 = vmatpush.bf16.msra.mxu0 %v2073
        %2535 = vmatpush.bf16.msra.mxu0 %v2072
        %2536 = vmatpush.bf16.msra.mxu0 %v2071
        %2537 = vmatpush.bf16.msra.mxu0 %v2070
        %2538 = vmatpush.bf16.msra.mxu0 %v2069
        %2539 = vmatpush.bf16.msra.mxu0 %v2068
        %2540 = vmatpush.bf16.msra.mxu0 %v2067
        %2541 = vmatmul.bf16.gmra.mxu0 %v1386
        %v2542 = vpop.f32.mrf.mxu0
        %v2543 = vadd.f32 %v2374, %v2542
        %v2544 = vpop.f32.mrf.mxu0
        %v2545 = vadd.f32 %v2376, %v2544
        %2546 = vmatmul.bf16.gmra.mxu0 %v1389
        %v2547 = vpop.f32.mrf.mxu0
        %v2548 = vadd.f32 %v2379, %v2547
        %v2549 = vpop.f32.mrf.mxu0
        %v2550 = vadd.f32 %v2381, %v2549
        %2551 = vmatmul.bf16.gmra.mxu0 %v1392
        %v2552 = vpop.f32.mrf.mxu0
        %v2553 = vadd.f32 %v2384, %v2552
        %v2554 = vpop.f32.mrf.mxu0
        %v2555 = vadd.f32 %v2386, %v2554
        %2556 = vmatmul.bf16.gmra.mxu0 %v1395
        %v2557 = vpop.f32.mrf.mxu0
        %v2558 = vadd.f32 %v2389, %v2557
        %v2559 = vpop.f32.mrf.mxu0
        %v2560 = vadd.f32 %v2391, %v2559
        %2561 = vmatmul.bf16.gmra.mxu0 %v1398
        %v2562 = vpop.f32.mrf.mxu0
        %v2563 = vadd.f32 %v2394, %v2562
        %v2564 = vpop.f32.mrf.mxu0
        %v2565 = vadd.f32 %v2396, %v2564
        %2566 = vmatmul.bf16.gmra.mxu0 %v1401
        %v2567 = vpop.f32.mrf.mxu0
        %v2568 = vadd.f32 %v2399, %v2567
        %v2569 = vpop.f32.mrf.mxu0
        %v2570 = vadd.f32 %v2401, %v2569
        %2571 = vmatmul.bf16.gmra.mxu0 %v1404
        %v2572 = vpop.f32.mrf.mxu0
        %v2573 = vadd.f32 %v2404, %v2572
        %v2574 = vpop.f32.mrf.mxu0
        %v2575 = vadd.f32 %v2406, %v2574
        %2576 = vmatmul.bf16.gmra.mxu0 %v1407
        %v2577 = vpop.f32.mrf.mxu0
        %v2578 = vadd.f32 %v2409, %v2577
        %v2579 = vpop.f32.mrf.mxu0
        %v2580 = vadd.f32 %v2411, %v2579
        %2581 = vmatmul.bf16.gmra.mxu0 %v1410
        %v2582 = vpop.f32.mrf.mxu0
        %v2583 = vadd.f32 %v2414, %v2582
        %v2584 = vpop.f32.mrf.mxu0
        %v2585 = vadd.f32 %v2416, %v2584
        %2586 = vmatmul.bf16.gmra.mxu0 %v1413
        %v2587 = vpop.f32.mrf.mxu0
        %v2588 = vadd.f32 %v2419, %v2587
        %v2589 = vpop.f32.mrf.mxu0
        %v2590 = vadd.f32 %v2421, %v2589
        %2591 = vmatmul.bf16.gmra.mxu0 %v1416
        %v2592 = vpop.f32.mrf.mxu0
        %v2593 = vadd.f32 %v2424, %v2592
        %v2594 = vpop.f32.mrf.mxu0
        %v2595 = vadd.f32 %v2426, %v2594
        %2596 = vmatmul.bf16.gmra.mxu0 %v1419
        %v2597 = vpop.f32.mrf.mxu0
        %v2598 = vadd.f32 %v2429, %v2597
        %v2599 = vpop.f32.mrf.mxu0
        %v2600 = vadd.f32 %v2431, %v2599
        %2601 = vmatmul.bf16.gmra.mxu0 %v1422
        %v2602 = vpop.f32.mrf.mxu0
        %v2603 = vadd.f32 %v2434, %v2602
        %v2604 = vpop.f32.mrf.mxu0
        %v2605 = vadd.f32 %v2436, %v2604
        %2606 = vmatmul.bf16.gmra.mxu0 %v1425
        %v2607 = vpop.f32.mrf.mxu0
        %v2608 = vadd.f32 %v2439, %v2607
        %v2609 = vpop.f32.mrf.mxu0
        %v2610 = vadd.f32 %v2441, %v2609
        %2611 = vmatmul.bf16.gmra.mxu0 %v1428
        %v2612 = vpop.f32.mrf.mxu0
        %v2613 = vadd.f32 %v2444, %v2612
        %v2614 = vpop.f32.mrf.mxu0
        %v2615 = vadd.f32 %v2446, %v2614
        %2616 = vmatmul.bf16.gmra.mxu0 %v1431
        %v2617 = vpop.f32.mrf.mxu0
        %v2618 = vadd.f32 %v2449, %v2617
        %v2619 = vpop.f32.mrf.mxu0
        %v2620 = vadd.f32 %v2451, %v2619
        %2621 = vmatmul.bf16.gmra.mxu0 %v1434
        %v2622 = vpop.f32.mrf.mxu0
        %v2623 = vadd.f32 %v2454, %v2622
        %v2624 = vpop.f32.mrf.mxu0
        %v2625 = vadd.f32 %v2456, %v2624
        %2626 = vmatmul.bf16.gmra.mxu0 %v1437
        %v2627 = vpop.f32.mrf.mxu0
        %v2628 = vadd.f32 %v2459, %v2627
        %v2629 = vpop.f32.mrf.mxu0
        %v2630 = vadd.f32 %v2461, %v2629
        %2631 = vmatmul.bf16.gmra.mxu0 %v1440
        %v2632 = vpop.f32.mrf.mxu0
        %v2633 = vadd.f32 %v2464, %v2632
        %v2634 = vpop.f32.mrf.mxu0
        %v2635 = vadd.f32 %v2466, %v2634
        %2636 = vmatmul.bf16.gmra.mxu0 %v1443
        %v2637 = vpop.f32.mrf.mxu0
        %v2638 = vadd.f32 %v2469, %v2637
        %v2639 = vpop.f32.mrf.mxu0
        %v2640 = vadd.f32 %v2471, %v2639
        %2641 = vmatmul.bf16.gmra.mxu0 %v1446
        %v2642 = vpop.f32.mrf.mxu0
        %v2643 = vadd.f32 %v2474, %v2642
        %v2644 = vpop.f32.mrf.mxu0
        %v2645 = vadd.f32 %v2476, %v2644
        %2646 = vmatmul.bf16.gmra.mxu0 %v1449
        %v2647 = vpop.f32.mrf.mxu0
        %v2648 = vadd.f32 %v2479, %v2647
        %v2649 = vpop.f32.mrf.mxu0
        %v2650 = vadd.f32 %v2481, %v2649
        %2651 = vmatmul.bf16.gmra.mxu0 %v1452
        %v2652 = vpop.f32.mrf.mxu0
        %v2653 = vadd.f32 %v2484, %v2652
        %v2654 = vpop.f32.mrf.mxu0
        %v2655 = vadd.f32 %v2486, %v2654
        %2656 = vmatmul.bf16.gmra.mxu0 %v1455
        %v2657 = vpop.f32.mrf.mxu0
        %v2658 = vadd.f32 %v2489, %v2657
        %v2659 = vpop.f32.mrf.mxu0
        %v2660 = vadd.f32 %v2491, %v2659
        %2661 = vmatmul.bf16.gmra.mxu0 %v1458
        %v2662 = vpop.f32.mrf.mxu0
        %v2663 = vadd.f32 %v2494, %v2662
        %v2664 = vpop.f32.mrf.mxu0
        %v2665 = vadd.f32 %v2496, %v2664
        %2666 = vmatmul.bf16.gmra.mxu0 %v1461
        %v2667 = vpop.f32.mrf.mxu0
        %v2668 = vadd.f32 %v2499, %v2667
        %v2669 = vpop.f32.mrf.mxu0
        %v2670 = vadd.f32 %v2501, %v2669
        %2671 = vmatmul.bf16.gmra.mxu0 %v1464
        %v2672 = vpop.f32.mrf.mxu0
        %v2673 = vadd.f32 %v2504, %v2672
        %v2674 = vpop.f32.mrf.mxu0
        %v2675 = vadd.f32 %v2506, %v2674
        %2676 = vmatmul.bf16.gmra.mxu0 %v1467
        %v2677 = vpop.f32.mrf.mxu0
        %v2678 = vadd.f32 %v2509, %v2677
        %v2679 = vpop.f32.mrf.mxu0
        %v2680 = vadd.f32 %v2511, %v2679
        %2681 = vmatmul.bf16.gmra.mxu0 %v1470
        %v2682 = vpop.f32.mrf.mxu0
        %v2683 = vadd.f32 %v2514, %v2682
        %v2684 = vpop.f32.mrf.mxu0
        %v2685 = vadd.f32 %v2516, %v2684
        %2686 = vmatmul.bf16.gmra.mxu0 %v1473
        %v2687 = vpop.f32.mrf.mxu0
        %v2688 = vadd.f32 %v2519, %v2687
        %v2689 = vpop.f32.mrf.mxu0
        %v2690 = vadd.f32 %v2521, %v2689
        %2691 = vmatmul.bf16.gmra.mxu0 %v1476
        %v2692 = vpop.f32.mrf.mxu0
        %v2693 = vadd.f32 %v2524, %v2692
        %v2694 = vpop.f32.mrf.mxu0
        %v2695 = vadd.f32 %v2526, %v2694
        %2696 = vmatmul.bf16.gmra.mxu0 %v1479
        %v2697 = vpop.f32.mrf.mxu0
        %v2698 = vadd.f32 %v2529, %v2697
        %v2699 = vpop.f32.mrf.mxu0
        %v2700 = vadd.f32 %v2531, %v2699
        %2701 = vdwg.mxu0
        %2702 = vmatpush.bf16.msra.mxu0 %v2082
        %2703 = vmatpush.bf16.msra.mxu0 %v2081
        %2704 = vmatpush.bf16.msra.mxu0 %v2080
        %2705 = vmatpush.bf16.msra.mxu0 %v2079
        %2706 = vmatpush.bf16.msra.mxu0 %v2078
        %2707 = vmatpush.bf16.msra.mxu0 %v2077
        %2708 = vmatpush.bf16.msra.mxu0 %v2076
        %2709 = vmatpush.bf16.msra.mxu0 %v2075
        %2710 = vmatmul.bf16.gmra.mxu0 %v807
        %v2711 = vpop.f32.mrf.mxu0
        %v2712 = vadd.f32 %v2543, %v2711
        %v2713 = vpop.f32.mrf.mxu0
        %v2714 = vadd.f32 %v2545, %v2713
        %2715 = vmatmul.bf16.gmra.mxu0 %v808
        %v2716 = vpop.f32.mrf.mxu0
        %v2717 = vadd.f32 %v2548, %v2716
        %v2718 = vpop.f32.mrf.mxu0
        %v2719 = vadd.f32 %v2550, %v2718
        %2720 = vmatmul.bf16.gmra.mxu0 %v809
        %v2721 = vpop.f32.mrf.mxu0
        %v2722 = vadd.f32 %v2553, %v2721
        %v2723 = vpop.f32.mrf.mxu0
        %v2724 = vadd.f32 %v2555, %v2723
        %2725 = vmatmul.bf16.gmra.mxu0 %v810
        %v2726 = vpop.f32.mrf.mxu0
        %v2727 = vadd.f32 %v2558, %v2726
        %v2728 = vpop.f32.mrf.mxu0
        %v2729 = vadd.f32 %v2560, %v2728
        %2730 = vmatmul.bf16.gmra.mxu0 %v811
        %v2731 = vpop.f32.mrf.mxu0
        %v2732 = vadd.f32 %v2563, %v2731
        %v2733 = vpop.f32.mrf.mxu0
        %v2734 = vadd.f32 %v2565, %v2733
        %2735 = vmatmul.bf16.gmra.mxu0 %v812
        %v2736 = vpop.f32.mrf.mxu0
        %v2737 = vadd.f32 %v2568, %v2736
        %v2738 = vpop.f32.mrf.mxu0
        %v2739 = vadd.f32 %v2570, %v2738
        %2740 = vmatmul.bf16.gmra.mxu0 %v813
        %v2741 = vpop.f32.mrf.mxu0
        %v2742 = vadd.f32 %v2573, %v2741
        %v2743 = vpop.f32.mrf.mxu0
        %v2744 = vadd.f32 %v2575, %v2743
        %2745 = vmatmul.bf16.gmra.mxu0 %v814
        %v2746 = vpop.f32.mrf.mxu0
        %v2747 = vadd.f32 %v2578, %v2746
        %v2748 = vpop.f32.mrf.mxu0
        %v2749 = vadd.f32 %v2580, %v2748
        %2750 = vmatmul.bf16.gmra.mxu0 %v815
        %v2751 = vpop.f32.mrf.mxu0
        %v2752 = vadd.f32 %v2583, %v2751
        %v2753 = vpop.f32.mrf.mxu0
        %v2754 = vadd.f32 %v2585, %v2753
        %2755 = vmatmul.bf16.gmra.mxu0 %v816
        %v2756 = vpop.f32.mrf.mxu0
        %v2757 = vadd.f32 %v2588, %v2756
        %v2758 = vpop.f32.mrf.mxu0
        %v2759 = vadd.f32 %v2590, %v2758
        %2760 = vmatmul.bf16.gmra.mxu0 %v817
        %v2761 = vpop.f32.mrf.mxu0
        %v2762 = vadd.f32 %v2593, %v2761
        %v2763 = vpop.f32.mrf.mxu0
        %v2764 = vadd.f32 %v2595, %v2763
        %2765 = vmatmul.bf16.gmra.mxu0 %v818
        %v2766 = vpop.f32.mrf.mxu0
        %v2767 = vadd.f32 %v2598, %v2766
        %v2768 = vpop.f32.mrf.mxu0
        %v2769 = vadd.f32 %v2600, %v2768
        %2770 = vmatmul.bf16.gmra.mxu0 %v819
        %v2771 = vpop.f32.mrf.mxu0
        %v2772 = vadd.f32 %v2603, %v2771
        %v2773 = vpop.f32.mrf.mxu0
        %v2774 = vadd.f32 %v2605, %v2773
        %2775 = vmatmul.bf16.gmra.mxu0 %v820
        %v2776 = vpop.f32.mrf.mxu0
        %v2777 = vadd.f32 %v2608, %v2776
        %v2778 = vpop.f32.mrf.mxu0
        %v2779 = vadd.f32 %v2610, %v2778
        %2780 = vmatmul.bf16.gmra.mxu0 %v821
        %v2781 = vpop.f32.mrf.mxu0
        %v2782 = vadd.f32 %v2613, %v2781
        %v2783 = vpop.f32.mrf.mxu0
        %v2784 = vadd.f32 %v2615, %v2783
        %2785 = vmatmul.bf16.gmra.mxu0 %v1520
        %v2786 = vpop.f32.mrf.mxu0
        %v2787 = vadd.f32 %v2618, %v2786
        %v2788 = vpop.f32.mrf.mxu0
        %v2789 = vadd.f32 %v2620, %v2788
        %2790 = vmatmul.bf16.gmra.mxu0 %v823
        %v2791 = vpop.f32.mrf.mxu0
        %v2792 = vadd.f32 %v2623, %v2791
        %v2793 = vpop.f32.mrf.mxu0
        %v2794 = vadd.f32 %v2625, %v2793
        %2795 = vmatmul.bf16.gmra.mxu0 %v824
        %v2796 = vpop.f32.mrf.mxu0
        %v2797 = vadd.f32 %v2628, %v2796
        %v2798 = vpop.f32.mrf.mxu0
        %v2799 = vadd.f32 %v2630, %v2798
        %2800 = vmatmul.bf16.gmra.mxu0 %v825
        %v2801 = vpop.f32.mrf.mxu0
        %v2802 = vadd.f32 %v2633, %v2801
        %v2803 = vpop.f32.mrf.mxu0
        %v2804 = vadd.f32 %v2635, %v2803
        %2805 = vmatmul.bf16.gmra.mxu0 %v826
        %v2806 = vpop.f32.mrf.mxu0
        %v2807 = vadd.f32 %v2638, %v2806
        %v2808 = vpop.f32.mrf.mxu0
        %v2809 = vadd.f32 %v2640, %v2808
        %2810 = vmatmul.bf16.gmra.mxu0 %v827
        %v2811 = vpop.f32.mrf.mxu0
        %v2812 = vadd.f32 %v2643, %v2811
        %v2813 = vpop.f32.mrf.mxu0
        %v2814 = vadd.f32 %v2645, %v2813
        %2815 = vmatmul.bf16.gmra.mxu0 %v828
        %v2816 = vpop.f32.mrf.mxu0
        %v2817 = vadd.f32 %v2648, %v2816
        %v2818 = vpop.f32.mrf.mxu0
        %v2819 = vadd.f32 %v2650, %v2818
        %2820 = vmatmul.bf16.gmra.mxu0 %v829
        %v2821 = vpop.f32.mrf.mxu0
        %v2822 = vadd.f32 %v2653, %v2821
        %v2823 = vpop.f32.mrf.mxu0
        %v2824 = vadd.f32 %v2655, %v2823
        %2825 = vmatmul.bf16.gmra.mxu0 %v830
        %v2826 = vpop.f32.mrf.mxu0
        %v2827 = vadd.f32 %v2658, %v2826
        %v2828 = vpop.f32.mrf.mxu0
        %v2829 = vadd.f32 %v2660, %v2828
        %2830 = vmatmul.bf16.gmra.mxu0 %v831
        %v2831 = vpop.f32.mrf.mxu0
        %v2832 = vadd.f32 %v2663, %v2831
        %v2833 = vpop.f32.mrf.mxu0
        %v2834 = vadd.f32 %v2665, %v2833
        %2835 = vmatmul.bf16.gmra.mxu0 %v832
        %v2836 = vpop.f32.mrf.mxu0
        %v2837 = vadd.f32 %v2668, %v2836
        %v2838 = vpop.f32.mrf.mxu0
        %v2839 = vadd.f32 %v2670, %v2838
        %2840 = vmatmul.bf16.gmra.mxu0 %v833
        %v2841 = vpop.f32.mrf.mxu0
        %v2842 = vadd.f32 %v2673, %v2841
        %v2843 = vpop.f32.mrf.mxu0
        %v2844 = vadd.f32 %v2675, %v2843
        %2845 = vmatmul.bf16.gmra.mxu0 %v834
        %v2846 = vpop.f32.mrf.mxu0
        %v2847 = vadd.f32 %v2678, %v2846
        %v2848 = vpop.f32.mrf.mxu0
        %v2849 = vadd.f32 %v2680, %v2848
        %2850 = vmatmul.bf16.gmra.mxu0 %v835
        %v2851 = vpop.f32.mrf.mxu0
        %v2852 = vadd.f32 %v2683, %v2851
        %v2853 = vpop.f32.mrf.mxu0
        %v2854 = vadd.f32 %v2685, %v2853
        %2855 = vmatmul.bf16.gmra.mxu0 %v836
        %v2856 = vpop.f32.mrf.mxu0
        %v2857 = vadd.f32 %v2688, %v2856
        %v2858 = vpop.f32.mrf.mxu0
        %v2859 = vadd.f32 %v2690, %v2858
        %2860 = vmatmul.bf16.gmra.mxu0 %v837
        %v2861 = vpop.f32.mrf.mxu0
        %v2862 = vadd.f32 %v2693, %v2861
        %v2863 = vpop.f32.mrf.mxu0
        %v2864 = vadd.f32 %v2695, %v2863
        %2865 = vmatmul.bf16.gmra.mxu0 %v1521
        %v2866 = vpop.f32.mrf.mxu0
        %v2867 = vadd.f32 %v2698, %v2866
        %v2868 = vpop.f32.mrf.mxu0
        %v2869 = vadd.f32 %v2700, %v2868
        %2870 = vdwg.mxu0
        %2871 = vmatpush.bf16.msra.mxu0 %v2090
        %2872 = vmatpush.bf16.msra.mxu0 %v2089
        %2873 = vmatpush.bf16.msra.mxu0 %v2088
        %2874 = vmatpush.bf16.msra.mxu0 %v2087
        %2875 = vmatpush.bf16.msra.mxu0 %v2086
        %2876 = vmatpush.bf16.msra.mxu0 %v2085
        %2877 = vmatpush.bf16.msra.mxu0 %v2084
        %2878 = vmatpush.bf16.msra.mxu0 %v2083
        %2879 = vmatmul.bf16.gmra.mxu0 %v990
        %v2880 = vpop.f32.mrf.mxu0
        %v2881 = vadd.f32 %v2712, %v2880
        %v2882 = vpop.f32.mrf.mxu0
        %v2883 = vadd.f32 %v2714, %v2882
        %2884 = vmatmul.bf16.gmra.mxu0 %v1002
        %v2885 = vpop.f32.mrf.mxu0
        %v2886 = vadd.f32 %v2717, %v2885
        %v2887 = vpop.f32.mrf.mxu0
        %v2888 = vadd.f32 %v2719, %v2887
        %2889 = vmatmul.bf16.gmra.mxu0 %v1014
        %v2890 = vpop.f32.mrf.mxu0
        %v2891 = vadd.f32 %v2722, %v2890
        %v2892 = vpop.f32.mrf.mxu0
        %v2893 = vadd.f32 %v2724, %v2892
        %2894 = vmatmul.bf16.gmra.mxu0 %v1026
        %v2895 = vpop.f32.mrf.mxu0
        %v2896 = vadd.f32 %v2727, %v2895
        %v2897 = vpop.f32.mrf.mxu0
        %v2898 = vadd.f32 %v2729, %v2897
        %2899 = vmatmul.bf16.gmra.mxu0 %v1038
        %v2900 = vpop.f32.mrf.mxu0
        %v2901 = vadd.f32 %v2732, %v2900
        %v2902 = vpop.f32.mrf.mxu0
        %v2903 = vadd.f32 %v2734, %v2902
        %2904 = vmatmul.bf16.gmra.mxu0 %v1050
        %v2905 = vpop.f32.mrf.mxu0
        %v2906 = vadd.f32 %v2737, %v2905
        %v2907 = vpop.f32.mrf.mxu0
        %v2908 = vadd.f32 %v2739, %v2907
        %2909 = vmatmul.bf16.gmra.mxu0 %v1062
        %v2910 = vpop.f32.mrf.mxu0
        %v2911 = vadd.f32 %v2742, %v2910
        %v2912 = vpop.f32.mrf.mxu0
        %v2913 = vadd.f32 %v2744, %v2912
        %2914 = vmatmul.bf16.gmra.mxu0 %v1074
        %v2915 = vpop.f32.mrf.mxu0
        %v2916 = vadd.f32 %v2747, %v2915
        %v2917 = vpop.f32.mrf.mxu0
        %v2918 = vadd.f32 %v2749, %v2917
        %2919 = vmatmul.bf16.gmra.mxu0 %v1086
        %v2920 = vpop.f32.mrf.mxu0
        %v2921 = vadd.f32 %v2752, %v2920
        %v2922 = vpop.f32.mrf.mxu0
        %v2923 = vadd.f32 %v2754, %v2922
        %2924 = vmatmul.bf16.gmra.mxu0 %v1098
        %v2925 = vpop.f32.mrf.mxu0
        %v2926 = vadd.f32 %v2757, %v2925
        %v2927 = vpop.f32.mrf.mxu0
        %v2928 = vadd.f32 %v2759, %v2927
        %2929 = vmatmul.bf16.gmra.mxu0 %v1110
        %v2930 = vpop.f32.mrf.mxu0
        %v2931 = vadd.f32 %v2762, %v2930
        %v2932 = vpop.f32.mrf.mxu0
        %v2933 = vadd.f32 %v2764, %v2932
        %2934 = vmatmul.bf16.gmra.mxu0 %v1122
        %v2935 = vpop.f32.mrf.mxu0
        %v2936 = vadd.f32 %v2767, %v2935
        %v2937 = vpop.f32.mrf.mxu0
        %v2938 = vadd.f32 %v2769, %v2937
        %2939 = vmatmul.bf16.gmra.mxu0 %v1134
        %v2940 = vpop.f32.mrf.mxu0
        %v2941 = vadd.f32 %v2772, %v2940
        %v2942 = vpop.f32.mrf.mxu0
        %v2943 = vadd.f32 %v2774, %v2942
        %2944 = vmatmul.bf16.gmra.mxu0 %v1146
        %v2945 = vpop.f32.mrf.mxu0
        %v2946 = vadd.f32 %v2777, %v2945
        %v2947 = vpop.f32.mrf.mxu0
        %v2948 = vadd.f32 %v2779, %v2947
        %2949 = vmatmul.bf16.gmra.mxu0 %v1158
        %v2950 = vpop.f32.mrf.mxu0
        %v2951 = vadd.f32 %v2782, %v2950
        %v2952 = vpop.f32.mrf.mxu0
        %v2953 = vadd.f32 %v2784, %v2952
        %2954 = vmatmul.bf16.gmra.mxu0 %v1541
        %v2955 = vpop.f32.mrf.mxu0
        %v2956 = vadd.f32 %v2787, %v2955
        %v2957 = vpop.f32.mrf.mxu0
        %v2958 = vadd.f32 %v2789, %v2957
        %2959 = vmatmul.bf16.gmra.mxu0 %v1182
        %v2960 = vpop.f32.mrf.mxu0
        %v2961 = vadd.f32 %v2792, %v2960
        %v2962 = vpop.f32.mrf.mxu0
        %v2963 = vadd.f32 %v2794, %v2962
        %2964 = vmatmul.bf16.gmra.mxu0 %v1194
        %v2965 = vpop.f32.mrf.mxu0
        %v2966 = vadd.f32 %v2797, %v2965
        %v2967 = vpop.f32.mrf.mxu0
        %v2968 = vadd.f32 %v2799, %v2967
        %2969 = vmatmul.bf16.gmra.mxu0 %v1206
        %v2970 = vpop.f32.mrf.mxu0
        %v2971 = vadd.f32 %v2802, %v2970
        %v2972 = vpop.f32.mrf.mxu0
        %v2973 = vadd.f32 %v2804, %v2972
        %2974 = vmatmul.bf16.gmra.mxu0 %v1218
        %v2975 = vpop.f32.mrf.mxu0
        %v2976 = vadd.f32 %v2807, %v2975
        %v2977 = vpop.f32.mrf.mxu0
        %v2978 = vadd.f32 %v2809, %v2977
        %2979 = vmatmul.bf16.gmra.mxu0 %v1230
        %v2980 = vpop.f32.mrf.mxu0
        %v2981 = vadd.f32 %v2812, %v2980
        %v2982 = vpop.f32.mrf.mxu0
        %v2983 = vadd.f32 %v2814, %v2982
        %2984 = vmatmul.bf16.gmra.mxu0 %v1242
        %v2985 = vpop.f32.mrf.mxu0
        %v2986 = vadd.f32 %v2817, %v2985
        %v2987 = vpop.f32.mrf.mxu0
        %v2988 = vadd.f32 %v2819, %v2987
        %2989 = vmatmul.bf16.gmra.mxu0 %v1254
        %v2990 = vpop.f32.mrf.mxu0
        %v2991 = vadd.f32 %v2822, %v2990
        %v2992 = vpop.f32.mrf.mxu0
        %v2993 = vadd.f32 %v2824, %v2992
        %2994 = vmatmul.bf16.gmra.mxu0 %v1266
        %v2995 = vpop.f32.mrf.mxu0
        %v2996 = vadd.f32 %v2827, %v2995
        %v2997 = vpop.f32.mrf.mxu0
        %v2998 = vadd.f32 %v2829, %v2997
        %2999 = vmatmul.bf16.gmra.mxu0 %v1278
        %v3000 = vpop.f32.mrf.mxu0
        %v3001 = vadd.f32 %v2832, %v3000
        %v3002 = vpop.f32.mrf.mxu0
        %v3003 = vadd.f32 %v2834, %v3002
        %3004 = vmatmul.bf16.gmra.mxu0 %v1290
        %v3005 = vpop.f32.mrf.mxu0
        %v3006 = vadd.f32 %v2837, %v3005
        %v3007 = vpop.f32.mrf.mxu0
        %v3008 = vadd.f32 %v2839, %v3007
        %3009 = vmatmul.bf16.gmra.mxu0 %v1302
        %v3010 = vpop.f32.mrf.mxu0
        %v3011 = vadd.f32 %v2842, %v3010
        %v3012 = vpop.f32.mrf.mxu0
        %v3013 = vadd.f32 %v2844, %v3012
        %3014 = vmatmul.bf16.gmra.mxu0 %v1314
        %v3015 = vpop.f32.mrf.mxu0
        %v3016 = vadd.f32 %v2847, %v3015
        %v3017 = vpop.f32.mrf.mxu0
        %v3018 = vadd.f32 %v2849, %v3017
        %3019 = vmatmul.bf16.gmra.mxu0 %v1326
        %v3020 = vpop.f32.mrf.mxu0
        %v3021 = vadd.f32 %v2852, %v3020
        %v3022 = vpop.f32.mrf.mxu0
        %v3023 = vadd.f32 %v2854, %v3022
        %3024 = vmatmul.bf16.gmra.mxu0 %v1338
        %v3025 = vpop.f32.mrf.mxu0
        %v3026 = vadd.f32 %v2857, %v3025
        %v3027 = vpop.f32.mrf.mxu0
        %v3028 = vadd.f32 %v2859, %v3027
        %3029 = vmatmul.bf16.gmra.mxu0 %v1350
        %v3030 = vpop.f32.mrf.mxu0
        %v3031 = vadd.f32 %v2862, %v3030
        %v3032 = vpop.f32.mrf.mxu0
        %v3033 = vadd.f32 %v2864, %v3032
        %3034 = vmatmul.bf16.gmra.mxu0 %v1553
        %v3035 = vpop.f32.mrf.mxu0
        %v3036 = vadd.f32 %v2867, %v3035
        %v3037 = vpop.f32.mrf.mxu0
        %v3038 = vadd.f32 %v2869, %v3037
        %3039 = vdwg.mxu0
        %3040 = vmatpush.bf16.msra.mxu0 %v2098
        %3041 = vmatpush.bf16.msra.mxu0 %v2097
        %3042 = vmatpush.bf16.msra.mxu0 %v2096
        %3043 = vmatpush.bf16.msra.mxu0 %v2095
        %3044 = vmatpush.bf16.msra.mxu0 %v2094
        %3045 = vmatpush.bf16.msra.mxu0 %v2093
        %3046 = vmatpush.bf16.msra.mxu0 %v2092
        %3047 = vmatpush.bf16.msra.mxu0 %v2091
        %3048 = vmatmul.bf16.gmra.mxu0 %v1389
        %v3049 = vpop.f32.mrf.mxu0
        %v3050 = vadd.f32 %v2881, %v3049
        %v3051 = vpop.f32.mrf.mxu0
        %v3052 = vadd.f32 %v2883, %v3051
        %3053 = vmatmul.bf16.gmra.mxu0 %v1392
        %v3054 = vpop.f32.mrf.mxu0
        %v3055 = vadd.f32 %v2886, %v3054
        %v3056 = vpop.f32.mrf.mxu0
        %v3057 = vadd.f32 %v2888, %v3056
        %3058 = vmatmul.bf16.gmra.mxu0 %v1395
        %v3059 = vpop.f32.mrf.mxu0
        %v3060 = vadd.f32 %v2891, %v3059
        %v3061 = vpop.f32.mrf.mxu0
        %v3062 = vadd.f32 %v2893, %v3061
        %3063 = vmatmul.bf16.gmra.mxu0 %v1398
        %v3064 = vpop.f32.mrf.mxu0
        %v3065 = vadd.f32 %v2896, %v3064
        %v3066 = vpop.f32.mrf.mxu0
        %v3067 = vadd.f32 %v2898, %v3066
        %3068 = vmatmul.bf16.gmra.mxu0 %v1401
        %v3069 = vpop.f32.mrf.mxu0
        %v3070 = vadd.f32 %v2901, %v3069
        %v3071 = vpop.f32.mrf.mxu0
        %v3072 = vadd.f32 %v2903, %v3071
        %3073 = vmatmul.bf16.gmra.mxu0 %v1404
        %v3074 = vpop.f32.mrf.mxu0
        %v3075 = vadd.f32 %v2906, %v3074
        %v3076 = vpop.f32.mrf.mxu0
        %v3077 = vadd.f32 %v2908, %v3076
        %3078 = vmatmul.bf16.gmra.mxu0 %v1407
        %v3079 = vpop.f32.mrf.mxu0
        %v3080 = vadd.f32 %v2911, %v3079
        %v3081 = vpop.f32.mrf.mxu0
        %v3082 = vadd.f32 %v2913, %v3081
        %3083 = vmatmul.bf16.gmra.mxu0 %v1410
        %v3084 = vpop.f32.mrf.mxu0
        %v3085 = vadd.f32 %v2916, %v3084
        %v3086 = vpop.f32.mrf.mxu0
        %v3087 = vadd.f32 %v2918, %v3086
        %3088 = vmatmul.bf16.gmra.mxu0 %v1413
        %v3089 = vpop.f32.mrf.mxu0
        %v3090 = vadd.f32 %v2921, %v3089
        %v3091 = vpop.f32.mrf.mxu0
        %v3092 = vadd.f32 %v2923, %v3091
        %3093 = vmatmul.bf16.gmra.mxu0 %v1416
        %v3094 = vpop.f32.mrf.mxu0
        %v3095 = vadd.f32 %v2926, %v3094
        %v3096 = vpop.f32.mrf.mxu0
        %v3097 = vadd.f32 %v2928, %v3096
        %3098 = vmatmul.bf16.gmra.mxu0 %v1419
        %v3099 = vpop.f32.mrf.mxu0
        %v3100 = vadd.f32 %v2931, %v3099
        %v3101 = vpop.f32.mrf.mxu0
        %v3102 = vadd.f32 %v2933, %v3101
        %3103 = vmatmul.bf16.gmra.mxu0 %v1422
        %v3104 = vpop.f32.mrf.mxu0
        %v3105 = vadd.f32 %v2936, %v3104
        %v3106 = vpop.f32.mrf.mxu0
        %v3107 = vadd.f32 %v2938, %v3106
        %3108 = vmatmul.bf16.gmra.mxu0 %v1425
        %v3109 = vpop.f32.mrf.mxu0
        %v3110 = vadd.f32 %v2941, %v3109
        %v3111 = vpop.f32.mrf.mxu0
        %v3112 = vadd.f32 %v2943, %v3111
        %3113 = vmatmul.bf16.gmra.mxu0 %v1428
        %v3114 = vpop.f32.mrf.mxu0
        %v3115 = vadd.f32 %v2946, %v3114
        %v3116 = vpop.f32.mrf.mxu0
        %v3117 = vadd.f32 %v2948, %v3116
        %3118 = vmatmul.bf16.gmra.mxu0 %v1431
        %v3119 = vpop.f32.mrf.mxu0
        %v3120 = vadd.f32 %v2951, %v3119
        %v3121 = vpop.f32.mrf.mxu0
        %v3122 = vadd.f32 %v2953, %v3121
        %3123 = vmatmul.bf16.gmra.mxu0 %v1558
        %v3124 = vpop.f32.mrf.mxu0
        %v3125 = vadd.f32 %v2956, %v3124
        %v3126 = vpop.f32.mrf.mxu0
        %v3127 = vadd.f32 %v2958, %v3126
        %3128 = vmatmul.bf16.gmra.mxu0 %v1437
        %v3129 = vpop.f32.mrf.mxu0
        %v3130 = vadd.f32 %v2961, %v3129
        %v3131 = vpop.f32.mrf.mxu0
        %v3132 = vadd.f32 %v2963, %v3131
        %3133 = vmatmul.bf16.gmra.mxu0 %v1440
        %v3134 = vpop.f32.mrf.mxu0
        %v3135 = vadd.f32 %v2966, %v3134
        %v3136 = vpop.f32.mrf.mxu0
        %v3137 = vadd.f32 %v2968, %v3136
        %3138 = vmatmul.bf16.gmra.mxu0 %v1443
        %v3139 = vpop.f32.mrf.mxu0
        %v3140 = vadd.f32 %v2971, %v3139
        %v3141 = vpop.f32.mrf.mxu0
        %v3142 = vadd.f32 %v2973, %v3141
        %3143 = vmatmul.bf16.gmra.mxu0 %v1446
        %v3144 = vpop.f32.mrf.mxu0
        %v3145 = vadd.f32 %v2976, %v3144
        %v3146 = vpop.f32.mrf.mxu0
        %v3147 = vadd.f32 %v2978, %v3146
        %3148 = vmatmul.bf16.gmra.mxu0 %v1449
        %v3149 = vpop.f32.mrf.mxu0
        %v3150 = vadd.f32 %v2981, %v3149
        %v3151 = vpop.f32.mrf.mxu0
        %v3152 = vadd.f32 %v2983, %v3151
        %3153 = vmatmul.bf16.gmra.mxu0 %v1452
        %v3154 = vpop.f32.mrf.mxu0
        %v3155 = vadd.f32 %v2986, %v3154
        %v3156 = vpop.f32.mrf.mxu0
        %v3157 = vadd.f32 %v2988, %v3156
        %3158 = vmatmul.bf16.gmra.mxu0 %v1455
        %v3159 = vpop.f32.mrf.mxu0
        %v3160 = vadd.f32 %v2991, %v3159
        %v3161 = vpop.f32.mrf.mxu0
        %v3162 = vadd.f32 %v2993, %v3161
        %3163 = vmatmul.bf16.gmra.mxu0 %v1458
        %v3164 = vpop.f32.mrf.mxu0
        %v3165 = vadd.f32 %v2996, %v3164
        %v3166 = vpop.f32.mrf.mxu0
        %v3167 = vadd.f32 %v2998, %v3166
        %3168 = vmatmul.bf16.gmra.mxu0 %v1461
        %v3169 = vpop.f32.mrf.mxu0
        %v3170 = vadd.f32 %v3001, %v3169
        %v3171 = vpop.f32.mrf.mxu0
        %v3172 = vadd.f32 %v3003, %v3171
        %3173 = vmatmul.bf16.gmra.mxu0 %v1464
        %v3174 = vpop.f32.mrf.mxu0
        %v3175 = vadd.f32 %v3006, %v3174
        %v3176 = vpop.f32.mrf.mxu0
        %v3177 = vadd.f32 %v3008, %v3176
        %3178 = vmatmul.bf16.gmra.mxu0 %v1467
        %v3179 = vpop.f32.mrf.mxu0
        %v3180 = vadd.f32 %v3011, %v3179
        %v3181 = vpop.f32.mrf.mxu0
        %v3182 = vadd.f32 %v3013, %v3181
        %3183 = vmatmul.bf16.gmra.mxu0 %v1470
        %v3184 = vpop.f32.mrf.mxu0
        %v3185 = vadd.f32 %v3016, %v3184
        %v3186 = vpop.f32.mrf.mxu0
        %v3187 = vadd.f32 %v3018, %v3186
        %3188 = vmatmul.bf16.gmra.mxu0 %v1473
        %v3189 = vpop.f32.mrf.mxu0
        %v3190 = vadd.f32 %v3021, %v3189
        %v3191 = vpop.f32.mrf.mxu0
        %v3192 = vadd.f32 %v3023, %v3191
        %3193 = vmatmul.bf16.gmra.mxu0 %v1476
        %v3194 = vpop.f32.mrf.mxu0
        %v3195 = vadd.f32 %v3026, %v3194
        %v3196 = vpop.f32.mrf.mxu0
        %v3197 = vadd.f32 %v3028, %v3196
        %3198 = vmatmul.bf16.gmra.mxu0 %v1479
        %v3199 = vpop.f32.mrf.mxu0
        %v3200 = vadd.f32 %v3031, %v3199
        %v3201 = vpop.f32.mrf.mxu0
        %v3202 = vadd.f32 %v3033, %v3201
        %3203 = vmatmul.bf16.gmra.mxu0 %v1561
        %v3204 = vpop.f32.mrf.mxu0
        %v3205 = vadd.f32 %v3036, %v3204
        %v3206 = vpop.f32.mrf.mxu0
        %v3207 = vadd.f32 %v3038, %v3206
        %3208 = vdwg.mxu0
        %3209 = vmatpush.bf16.msra.mxu0 %v2106
        %3210 = vmatpush.bf16.msra.mxu0 %v2105
        %3211 = vmatpush.bf16.msra.mxu0 %v2104
        %3212 = vmatpush.bf16.msra.mxu0 %v2103
        %3213 = vmatpush.bf16.msra.mxu0 %v2102
        %3214 = vmatpush.bf16.msra.mxu0 %v2101
        %3215 = vmatpush.bf16.msra.mxu0 %v2100
        %3216 = vmatpush.bf16.msra.mxu0 %v2099
        %3217 = vmatmul.bf16.gmra.mxu0 %v808
        %v3218 = vpop.f32.mrf.mxu0
        %v3219 = vadd.f32 %v3050, %v3218
        %v3220 = vpop.f32.mrf.mxu0
        %v3221 = vadd.f32 %v3052, %v3220
        %3222 = vmatmul.bf16.gmra.mxu0 %v809
        %v3223 = vpop.f32.mrf.mxu0
        %v3224 = vadd.f32 %v3055, %v3223
        %v3225 = vpop.f32.mrf.mxu0
        %v3226 = vadd.f32 %v3057, %v3225
        %3227 = vmatmul.bf16.gmra.mxu0 %v810
        %v3228 = vpop.f32.mrf.mxu0
        %v3229 = vadd.f32 %v3060, %v3228
        %v3230 = vpop.f32.mrf.mxu0
        %v3231 = vadd.f32 %v3062, %v3230
        %3232 = vmatmul.bf16.gmra.mxu0 %v811
        %v3233 = vpop.f32.mrf.mxu0
        %v3234 = vadd.f32 %v3065, %v3233
        %v3235 = vpop.f32.mrf.mxu0
        %v3236 = vadd.f32 %v3067, %v3235
        %3237 = vmatmul.bf16.gmra.mxu0 %v812
        %v3238 = vpop.f32.mrf.mxu0
        %v3239 = vadd.f32 %v3070, %v3238
        %v3240 = vpop.f32.mrf.mxu0
        %v3241 = vadd.f32 %v3072, %v3240
        %3242 = vmatmul.bf16.gmra.mxu0 %v813
        %v3243 = vpop.f32.mrf.mxu0
        %v3244 = vadd.f32 %v3075, %v3243
        %v3245 = vpop.f32.mrf.mxu0
        %v3246 = vadd.f32 %v3077, %v3245
        %3247 = vmatmul.bf16.gmra.mxu0 %v814
        %v3248 = vpop.f32.mrf.mxu0
        %v3249 = vadd.f32 %v3080, %v3248
        %v3250 = vpop.f32.mrf.mxu0
        %v3251 = vadd.f32 %v3082, %v3250
        %3252 = vmatmul.bf16.gmra.mxu0 %v815
        %v3253 = vpop.f32.mrf.mxu0
        %v3254 = vadd.f32 %v3085, %v3253
        %v3255 = vpop.f32.mrf.mxu0
        %v3256 = vadd.f32 %v3087, %v3255
        %3257 = vmatmul.bf16.gmra.mxu0 %v816
        %v3258 = vpop.f32.mrf.mxu0
        %v3259 = vadd.f32 %v3090, %v3258
        %v3260 = vpop.f32.mrf.mxu0
        %v3261 = vadd.f32 %v3092, %v3260
        %3262 = vmatmul.bf16.gmra.mxu0 %v817
        %v3263 = vpop.f32.mrf.mxu0
        %v3264 = vadd.f32 %v3095, %v3263
        %v3265 = vpop.f32.mrf.mxu0
        %v3266 = vadd.f32 %v3097, %v3265
        %3267 = vmatmul.bf16.gmra.mxu0 %v818
        %v3268 = vpop.f32.mrf.mxu0
        %v3269 = vadd.f32 %v3100, %v3268
        %v3270 = vpop.f32.mrf.mxu0
        %v3271 = vadd.f32 %v3102, %v3270
        %3272 = vmatmul.bf16.gmra.mxu0 %v819
        %v3273 = vpop.f32.mrf.mxu0
        %v3274 = vadd.f32 %v3105, %v3273
        %v3275 = vpop.f32.mrf.mxu0
        %v3276 = vadd.f32 %v3107, %v3275
        %3277 = vmatmul.bf16.gmra.mxu0 %v820
        %v3278 = vpop.f32.mrf.mxu0
        %v3279 = vadd.f32 %v3110, %v3278
        %v3280 = vpop.f32.mrf.mxu0
        %v3281 = vadd.f32 %v3112, %v3280
        %3282 = vmatmul.bf16.gmra.mxu0 %v821
        %v3283 = vpop.f32.mrf.mxu0
        %v3284 = vadd.f32 %v3115, %v3283
        %v3285 = vpop.f32.mrf.mxu0
        %v3286 = vadd.f32 %v3117, %v3285
        %3287 = vmatmul.bf16.gmra.mxu0 %v1520
        %v3288 = vpop.f32.mrf.mxu0
        %v3289 = vadd.f32 %v3120, %v3288
        %v3290 = vpop.f32.mrf.mxu0
        %v3291 = vadd.f32 %v3122, %v3290
        %3292 = vmatmul.bf16.gmra.mxu0 %v1572
        %v3293 = vpop.f32.mrf.mxu0
        %v3294 = vadd.f32 %v3125, %v3293
        %v3295 = vpop.f32.mrf.mxu0
        %v3296 = vadd.f32 %v3127, %v3295
        %3297 = vmatmul.bf16.gmra.mxu0 %v824
        %v3298 = vpop.f32.mrf.mxu0
        %v3299 = vadd.f32 %v3130, %v3298
        %v3300 = vpop.f32.mrf.mxu0
        %v3301 = vadd.f32 %v3132, %v3300
        %3302 = vmatmul.bf16.gmra.mxu0 %v825
        %v3303 = vpop.f32.mrf.mxu0
        %v3304 = vadd.f32 %v3135, %v3303
        %v3305 = vpop.f32.mrf.mxu0
        %v3306 = vadd.f32 %v3137, %v3305
        %3307 = vmatmul.bf16.gmra.mxu0 %v826
        %v3308 = vpop.f32.mrf.mxu0
        %v3309 = vadd.f32 %v3140, %v3308
        %v3310 = vpop.f32.mrf.mxu0
        %v3311 = vadd.f32 %v3142, %v3310
        %3312 = vmatmul.bf16.gmra.mxu0 %v827
        %v3313 = vpop.f32.mrf.mxu0
        %v3314 = vadd.f32 %v3145, %v3313
        %v3315 = vpop.f32.mrf.mxu0
        %v3316 = vadd.f32 %v3147, %v3315
        %3317 = vmatmul.bf16.gmra.mxu0 %v828
        %v3318 = vpop.f32.mrf.mxu0
        %v3319 = vadd.f32 %v3150, %v3318
        %v3320 = vpop.f32.mrf.mxu0
        %v3321 = vadd.f32 %v3152, %v3320
        %3322 = vmatmul.bf16.gmra.mxu0 %v829
        %v3323 = vpop.f32.mrf.mxu0
        %v3324 = vadd.f32 %v3155, %v3323
        %v3325 = vpop.f32.mrf.mxu0
        %v3326 = vadd.f32 %v3157, %v3325
        %3327 = vmatmul.bf16.gmra.mxu0 %v830
        %v3328 = vpop.f32.mrf.mxu0
        %v3329 = vadd.f32 %v3160, %v3328
        %v3330 = vpop.f32.mrf.mxu0
        %v3331 = vadd.f32 %v3162, %v3330
        %3332 = vmatmul.bf16.gmra.mxu0 %v831
        %v3333 = vpop.f32.mrf.mxu0
        %v3334 = vadd.f32 %v3165, %v3333
        %v3335 = vpop.f32.mrf.mxu0
        %v3336 = vadd.f32 %v3167, %v3335
        %3337 = vmatmul.bf16.gmra.mxu0 %v832
        %v3338 = vpop.f32.mrf.mxu0
        %v3339 = vadd.f32 %v3170, %v3338
        %v3340 = vpop.f32.mrf.mxu0
        %v3341 = vadd.f32 %v3172, %v3340
        %3342 = vmatmul.bf16.gmra.mxu0 %v833
        %v3343 = vpop.f32.mrf.mxu0
        %v3344 = vadd.f32 %v3175, %v3343
        %v3345 = vpop.f32.mrf.mxu0
        %v3346 = vadd.f32 %v3177, %v3345
        %3347 = vmatmul.bf16.gmra.mxu0 %v834
        %v3348 = vpop.f32.mrf.mxu0
        %v3349 = vadd.f32 %v3180, %v3348
        %v3350 = vpop.f32.mrf.mxu0
        %v3351 = vadd.f32 %v3182, %v3350
        %3352 = vmatmul.bf16.gmra.mxu0 %v835
        %v3353 = vpop.f32.mrf.mxu0
        %v3354 = vadd.f32 %v3185, %v3353
        %v3355 = vpop.f32.mrf.mxu0
        %v3356 = vadd.f32 %v3187, %v3355
        %3357 = vmatmul.bf16.gmra.mxu0 %v836
        %v3358 = vpop.f32.mrf.mxu0
        %v3359 = vadd.f32 %v3190, %v3358
        %v3360 = vpop.f32.mrf.mxu0
        %v3361 = vadd.f32 %v3192, %v3360
        %3362 = vmatmul.bf16.gmra.mxu0 %v837
        %v3363 = vpop.f32.mrf.mxu0
        %v3364 = vadd.f32 %v3195, %v3363
        %v3365 = vpop.f32.mrf.mxu0
        %v3366 = vadd.f32 %v3197, %v3365
        %3367 = vmatmul.bf16.gmra.mxu0 %v1521
        %v3368 = vpop.f32.mrf.mxu0
        %v3369 = vadd.f32 %v3200, %v3368
        %v3370 = vpop.f32.mrf.mxu0
        %v3371 = vadd.f32 %v3202, %v3370
        %3372 = vmatmul.bf16.gmra.mxu0 %v1573
        %v3373 = vpop.f32.mrf.mxu0
        %v3374 = vadd.f32 %v3205, %v3373
        %v3375 = vpop.f32.mrf.mxu0
        %v3376 = vadd.f32 %v3207, %v3375
        %3377 = vdwg.mxu0
        %3378 = vmatpush.bf16.msra.mxu0 %v2114
        %3379 = vmatpush.bf16.msra.mxu0 %v2113
        %3380 = vmatpush.bf16.msra.mxu0 %v2112
        %3381 = vmatpush.bf16.msra.mxu0 %v2111
        %3382 = vmatpush.bf16.msra.mxu0 %v2110
        %3383 = vmatpush.bf16.msra.mxu0 %v2109
        %3384 = vmatpush.bf16.msra.mxu0 %v2108
        %3385 = vmatpush.bf16.msra.mxu0 %v2107
        %3386 = vmatmul.bf16.gmra.mxu0 %v1002
        %v3387 = vpop.f32.mrf.mxu0
        %v3388 = vadd.f32 %v3219, %v3387
        %v3389 = vpop.f32.mrf.mxu0
        %v3390 = vadd.f32 %v3221, %v3389
        %3391 = vmatmul.bf16.gmra.mxu0 %v1014
        %v3392 = vpop.f32.mrf.mxu0
        %v3393 = vadd.f32 %v3224, %v3392
        %v3394 = vpop.f32.mrf.mxu0
        %v3395 = vadd.f32 %v3226, %v3394
        %3396 = vmatmul.bf16.gmra.mxu0 %v1026
        %v3397 = vpop.f32.mrf.mxu0
        %v3398 = vadd.f32 %v3229, %v3397
        %v3399 = vpop.f32.mrf.mxu0
        %v3400 = vadd.f32 %v3231, %v3399
        %3401 = vmatmul.bf16.gmra.mxu0 %v1038
        %v3402 = vpop.f32.mrf.mxu0
        %v3403 = vadd.f32 %v3234, %v3402
        %v3404 = vpop.f32.mrf.mxu0
        %v3405 = vadd.f32 %v3236, %v3404
        %3406 = vmatmul.bf16.gmra.mxu0 %v1050
        %v3407 = vpop.f32.mrf.mxu0
        %v3408 = vadd.f32 %v3239, %v3407
        %v3409 = vpop.f32.mrf.mxu0
        %v3410 = vadd.f32 %v3241, %v3409
        %3411 = vmatmul.bf16.gmra.mxu0 %v1062
        %v3412 = vpop.f32.mrf.mxu0
        %v3413 = vadd.f32 %v3244, %v3412
        %v3414 = vpop.f32.mrf.mxu0
        %v3415 = vadd.f32 %v3246, %v3414
        %3416 = vmatmul.bf16.gmra.mxu0 %v1074
        %v3417 = vpop.f32.mrf.mxu0
        %v3418 = vadd.f32 %v3249, %v3417
        %v3419 = vpop.f32.mrf.mxu0
        %v3420 = vadd.f32 %v3251, %v3419
        %3421 = vmatmul.bf16.gmra.mxu0 %v1086
        %v3422 = vpop.f32.mrf.mxu0
        %v3423 = vadd.f32 %v3254, %v3422
        %v3424 = vpop.f32.mrf.mxu0
        %v3425 = vadd.f32 %v3256, %v3424
        %3426 = vmatmul.bf16.gmra.mxu0 %v1098
        %v3427 = vpop.f32.mrf.mxu0
        %v3428 = vadd.f32 %v3259, %v3427
        %v3429 = vpop.f32.mrf.mxu0
        %v3430 = vadd.f32 %v3261, %v3429
        %3431 = vmatmul.bf16.gmra.mxu0 %v1110
        %v3432 = vpop.f32.mrf.mxu0
        %v3433 = vadd.f32 %v3264, %v3432
        %v3434 = vpop.f32.mrf.mxu0
        %v3435 = vadd.f32 %v3266, %v3434
        %3436 = vmatmul.bf16.gmra.mxu0 %v1122
        %v3437 = vpop.f32.mrf.mxu0
        %v3438 = vadd.f32 %v3269, %v3437
        %v3439 = vpop.f32.mrf.mxu0
        %v3440 = vadd.f32 %v3271, %v3439
        %3441 = vmatmul.bf16.gmra.mxu0 %v1134
        %v3442 = vpop.f32.mrf.mxu0
        %v3443 = vadd.f32 %v3274, %v3442
        %v3444 = vpop.f32.mrf.mxu0
        %v3445 = vadd.f32 %v3276, %v3444
        %3446 = vmatmul.bf16.gmra.mxu0 %v1146
        %v3447 = vpop.f32.mrf.mxu0
        %v3448 = vadd.f32 %v3279, %v3447
        %v3449 = vpop.f32.mrf.mxu0
        %v3450 = vadd.f32 %v3281, %v3449
        %3451 = vmatmul.bf16.gmra.mxu0 %v1158
        %v3452 = vpop.f32.mrf.mxu0
        %v3453 = vadd.f32 %v3284, %v3452
        %v3454 = vpop.f32.mrf.mxu0
        %v3455 = vadd.f32 %v3286, %v3454
        %3456 = vmatmul.bf16.gmra.mxu0 %v1541
        %v3457 = vpop.f32.mrf.mxu0
        %v3458 = vadd.f32 %v3289, %v3457
        %v3459 = vpop.f32.mrf.mxu0
        %v3460 = vadd.f32 %v3291, %v3459
        %3461 = vmatmul.bf16.gmra.mxu0 %v1593
        %v3462 = vpop.f32.mrf.mxu0
        %v3463 = vadd.f32 %v3294, %v3462
        %v3464 = vpop.f32.mrf.mxu0
        %v3465 = vadd.f32 %v3296, %v3464
        %3466 = vmatmul.bf16.gmra.mxu0 %v1194
        %v3467 = vpop.f32.mrf.mxu0
        %v3468 = vadd.f32 %v3299, %v3467
        %v3469 = vpop.f32.mrf.mxu0
        %v3470 = vadd.f32 %v3301, %v3469
        %3471 = vmatmul.bf16.gmra.mxu0 %v1206
        %v3472 = vpop.f32.mrf.mxu0
        %v3473 = vadd.f32 %v3304, %v3472
        %v3474 = vpop.f32.mrf.mxu0
        %v3475 = vadd.f32 %v3306, %v3474
        %3476 = vmatmul.bf16.gmra.mxu0 %v1218
        %v3477 = vpop.f32.mrf.mxu0
        %v3478 = vadd.f32 %v3309, %v3477
        %v3479 = vpop.f32.mrf.mxu0
        %v3480 = vadd.f32 %v3311, %v3479
        %3481 = vmatmul.bf16.gmra.mxu0 %v1230
        %v3482 = vpop.f32.mrf.mxu0
        %v3483 = vadd.f32 %v3314, %v3482
        %v3484 = vpop.f32.mrf.mxu0
        %v3485 = vadd.f32 %v3316, %v3484
        %3486 = vmatmul.bf16.gmra.mxu0 %v1242
        %v3487 = vpop.f32.mrf.mxu0
        %v3488 = vadd.f32 %v3319, %v3487
        %v3489 = vpop.f32.mrf.mxu0
        %v3490 = vadd.f32 %v3321, %v3489
        %3491 = vmatmul.bf16.gmra.mxu0 %v1254
        %v3492 = vpop.f32.mrf.mxu0
        %v3493 = vadd.f32 %v3324, %v3492
        %v3494 = vpop.f32.mrf.mxu0
        %v3495 = vadd.f32 %v3326, %v3494
        %3496 = vmatmul.bf16.gmra.mxu0 %v1266
        %v3497 = vpop.f32.mrf.mxu0
        %v3498 = vadd.f32 %v3329, %v3497
        %v3499 = vpop.f32.mrf.mxu0
        %v3500 = vadd.f32 %v3331, %v3499
        %3501 = vmatmul.bf16.gmra.mxu0 %v1278
        %v3502 = vpop.f32.mrf.mxu0
        %v3503 = vadd.f32 %v3334, %v3502
        %v3504 = vpop.f32.mrf.mxu0
        %v3505 = vadd.f32 %v3336, %v3504
        %3506 = vmatmul.bf16.gmra.mxu0 %v1290
        %v3507 = vpop.f32.mrf.mxu0
        %v3508 = vadd.f32 %v3339, %v3507
        %v3509 = vpop.f32.mrf.mxu0
        %v3510 = vadd.f32 %v3341, %v3509
        %3511 = vmatmul.bf16.gmra.mxu0 %v1302
        %v3512 = vpop.f32.mrf.mxu0
        %v3513 = vadd.f32 %v3344, %v3512
        %v3514 = vpop.f32.mrf.mxu0
        %v3515 = vadd.f32 %v3346, %v3514
        %3516 = vmatmul.bf16.gmra.mxu0 %v1314
        %v3517 = vpop.f32.mrf.mxu0
        %v3518 = vadd.f32 %v3349, %v3517
        %v3519 = vpop.f32.mrf.mxu0
        %v3520 = vadd.f32 %v3351, %v3519
        %3521 = vmatmul.bf16.gmra.mxu0 %v1326
        %v3522 = vpop.f32.mrf.mxu0
        %v3523 = vadd.f32 %v3354, %v3522
        %v3524 = vpop.f32.mrf.mxu0
        %v3525 = vadd.f32 %v3356, %v3524
        %3526 = vmatmul.bf16.gmra.mxu0 %v1338
        %v3527 = vpop.f32.mrf.mxu0
        %v3528 = vadd.f32 %v3359, %v3527
        %v3529 = vpop.f32.mrf.mxu0
        %v3530 = vadd.f32 %v3361, %v3529
        %3531 = vmatmul.bf16.gmra.mxu0 %v1350
        %v3532 = vpop.f32.mrf.mxu0
        %v3533 = vadd.f32 %v3364, %v3532
        %v3534 = vpop.f32.mrf.mxu0
        %v3535 = vadd.f32 %v3366, %v3534
        %3536 = vmatmul.bf16.gmra.mxu0 %v1553
        %v3537 = vpop.f32.mrf.mxu0
        %v3538 = vadd.f32 %v3369, %v3537
        %v3539 = vpop.f32.mrf.mxu0
        %v3540 = vadd.f32 %v3371, %v3539
        %3541 = vmatmul.bf16.gmra.mxu0 %v1605
        %v3542 = vpop.f32.mrf.mxu0
        %v3543 = vadd.f32 %v3374, %v3542
        %v3544 = vpop.f32.mrf.mxu0
        %v3545 = vadd.f32 %v3376, %v3544
        %3546 = vdwg.mxu0
        %3547 = vmatpush.bf16.msra.mxu0 %v2122
        %3548 = vmatpush.bf16.msra.mxu0 %v2121
        %3549 = vmatpush.bf16.msra.mxu0 %v2120
        %3550 = vmatpush.bf16.msra.mxu0 %v2119
        %3551 = vmatpush.bf16.msra.mxu0 %v2118
        %3552 = vmatpush.bf16.msra.mxu0 %v2117
        %3553 = vmatpush.bf16.msra.mxu0 %v2116
        %3554 = vmatpush.bf16.msra.mxu0 %v2115
        %3555 = vmatmul.bf16.gmra.mxu0 %v1392
        %v3556 = vpop.f32.mrf.mxu0
        %v3557 = vadd.f32 %v3388, %v3556
        %v3558 = vpop.f32.mrf.mxu0
        %v3559 = vadd.f32 %v3390, %v3558
        %3560 = vmatmul.bf16.gmra.mxu0 %v1395
        %v3561 = vpop.f32.mrf.mxu0
        %v3562 = vadd.f32 %v3393, %v3561
        %v3563 = vpop.f32.mrf.mxu0
        %v3564 = vadd.f32 %v3395, %v3563
        %3565 = vmatmul.bf16.gmra.mxu0 %v1398
        %v3566 = vpop.f32.mrf.mxu0
        %v3567 = vadd.f32 %v3398, %v3566
        %v3568 = vpop.f32.mrf.mxu0
        %v3569 = vadd.f32 %v3400, %v3568
        %3570 = vmatmul.bf16.gmra.mxu0 %v1401
        %v3571 = vpop.f32.mrf.mxu0
        %v3572 = vadd.f32 %v3403, %v3571
        %v3573 = vpop.f32.mrf.mxu0
        %v3574 = vadd.f32 %v3405, %v3573
        %3575 = vmatmul.bf16.gmra.mxu0 %v1404
        %v3576 = vpop.f32.mrf.mxu0
        %v3577 = vadd.f32 %v3408, %v3576
        %v3578 = vpop.f32.mrf.mxu0
        %v3579 = vadd.f32 %v3410, %v3578
        %3580 = vmatmul.bf16.gmra.mxu0 %v1407
        %v3581 = vpop.f32.mrf.mxu0
        %v3582 = vadd.f32 %v3413, %v3581
        %v3583 = vpop.f32.mrf.mxu0
        %v3584 = vadd.f32 %v3415, %v3583
        %3585 = vmatmul.bf16.gmra.mxu0 %v1410
        %v3586 = vpop.f32.mrf.mxu0
        %v3587 = vadd.f32 %v3418, %v3586
        %v3588 = vpop.f32.mrf.mxu0
        %v3589 = vadd.f32 %v3420, %v3588
        %3590 = vmatmul.bf16.gmra.mxu0 %v1413
        %v3591 = vpop.f32.mrf.mxu0
        %v3592 = vadd.f32 %v3423, %v3591
        %v3593 = vpop.f32.mrf.mxu0
        %v3594 = vadd.f32 %v3425, %v3593
        %3595 = vmatmul.bf16.gmra.mxu0 %v1416
        %v3596 = vpop.f32.mrf.mxu0
        %v3597 = vadd.f32 %v3428, %v3596
        %v3598 = vpop.f32.mrf.mxu0
        %v3599 = vadd.f32 %v3430, %v3598
        %3600 = vmatmul.bf16.gmra.mxu0 %v1419
        %v3601 = vpop.f32.mrf.mxu0
        %v3602 = vadd.f32 %v3433, %v3601
        %v3603 = vpop.f32.mrf.mxu0
        %v3604 = vadd.f32 %v3435, %v3603
        %3605 = vmatmul.bf16.gmra.mxu0 %v1422
        %v3606 = vpop.f32.mrf.mxu0
        %v3607 = vadd.f32 %v3438, %v3606
        %v3608 = vpop.f32.mrf.mxu0
        %v3609 = vadd.f32 %v3440, %v3608
        %3610 = vmatmul.bf16.gmra.mxu0 %v1425
        %v3611 = vpop.f32.mrf.mxu0
        %v3612 = vadd.f32 %v3443, %v3611
        %v3613 = vpop.f32.mrf.mxu0
        %v3614 = vadd.f32 %v3445, %v3613
        %3615 = vmatmul.bf16.gmra.mxu0 %v1428
        %v3616 = vpop.f32.mrf.mxu0
        %v3617 = vadd.f32 %v3448, %v3616
        %v3618 = vpop.f32.mrf.mxu0
        %v3619 = vadd.f32 %v3450, %v3618
        %3620 = vmatmul.bf16.gmra.mxu0 %v1431
        %v3621 = vpop.f32.mrf.mxu0
        %v3622 = vadd.f32 %v3453, %v3621
        %v3623 = vpop.f32.mrf.mxu0
        %v3624 = vadd.f32 %v3455, %v3623
        %3625 = vmatmul.bf16.gmra.mxu0 %v1558
        %v3626 = vpop.f32.mrf.mxu0
        %v3627 = vadd.f32 %v3458, %v3626
        %v3628 = vpop.f32.mrf.mxu0
        %v3629 = vadd.f32 %v3460, %v3628
        %3630 = vmatmul.bf16.gmra.mxu0 %v1610
        %v3631 = vpop.f32.mrf.mxu0
        %v3632 = vadd.f32 %v3463, %v3631
        %v3633 = vpop.f32.mrf.mxu0
        %v3634 = vadd.f32 %v3465, %v3633
        %3635 = vmatmul.bf16.gmra.mxu0 %v1440
        %v3636 = vpop.f32.mrf.mxu0
        %v3637 = vadd.f32 %v3468, %v3636
        %v3638 = vpop.f32.mrf.mxu0
        %v3639 = vadd.f32 %v3470, %v3638
        %3640 = vmatmul.bf16.gmra.mxu0 %v1443
        %v3641 = vpop.f32.mrf.mxu0
        %v3642 = vadd.f32 %v3473, %v3641
        %v3643 = vpop.f32.mrf.mxu0
        %v3644 = vadd.f32 %v3475, %v3643
        %3645 = vmatmul.bf16.gmra.mxu0 %v1446
        %v3646 = vpop.f32.mrf.mxu0
        %v3647 = vadd.f32 %v3478, %v3646
        %v3648 = vpop.f32.mrf.mxu0
        %v3649 = vadd.f32 %v3480, %v3648
        %3650 = vmatmul.bf16.gmra.mxu0 %v1449
        %v3651 = vpop.f32.mrf.mxu0
        %v3652 = vadd.f32 %v3483, %v3651
        %v3653 = vpop.f32.mrf.mxu0
        %v3654 = vadd.f32 %v3485, %v3653
        %3655 = vmatmul.bf16.gmra.mxu0 %v1452
        %v3656 = vpop.f32.mrf.mxu0
        %v3657 = vadd.f32 %v3488, %v3656
        %v3658 = vpop.f32.mrf.mxu0
        %v3659 = vadd.f32 %v3490, %v3658
        %3660 = vmatmul.bf16.gmra.mxu0 %v1455
        %v3661 = vpop.f32.mrf.mxu0
        %v3662 = vadd.f32 %v3493, %v3661
        %v3663 = vpop.f32.mrf.mxu0
        %v3664 = vadd.f32 %v3495, %v3663
        %3665 = vmatmul.bf16.gmra.mxu0 %v1458
        %v3666 = vpop.f32.mrf.mxu0
        %v3667 = vadd.f32 %v3498, %v3666
        %v3668 = vpop.f32.mrf.mxu0
        %v3669 = vadd.f32 %v3500, %v3668
        %3670 = vmatmul.bf16.gmra.mxu0 %v1461
        %v3671 = vpop.f32.mrf.mxu0
        %v3672 = vadd.f32 %v3503, %v3671
        %v3673 = vpop.f32.mrf.mxu0
        %v3674 = vadd.f32 %v3505, %v3673
        %3675 = vmatmul.bf16.gmra.mxu0 %v1464
        %v3676 = vpop.f32.mrf.mxu0
        %v3677 = vadd.f32 %v3508, %v3676
        %v3678 = vpop.f32.mrf.mxu0
        %v3679 = vadd.f32 %v3510, %v3678
        %3680 = vmatmul.bf16.gmra.mxu0 %v1467
        %v3681 = vpop.f32.mrf.mxu0
        %v3682 = vadd.f32 %v3513, %v3681
        %v3683 = vpop.f32.mrf.mxu0
        %v3684 = vadd.f32 %v3515, %v3683
        %3685 = vmatmul.bf16.gmra.mxu0 %v1470
        %v3686 = vpop.f32.mrf.mxu0
        %v3687 = vadd.f32 %v3518, %v3686
        %v3688 = vpop.f32.mrf.mxu0
        %v3689 = vadd.f32 %v3520, %v3688
        %3690 = vmatmul.bf16.gmra.mxu0 %v1473
        %v3691 = vpop.f32.mrf.mxu0
        %v3692 = vadd.f32 %v3523, %v3691
        %v3693 = vpop.f32.mrf.mxu0
        %v3694 = vadd.f32 %v3525, %v3693
        %3695 = vmatmul.bf16.gmra.mxu0 %v1476
        %v3696 = vpop.f32.mrf.mxu0
        %v3697 = vadd.f32 %v3528, %v3696
        %v3698 = vpop.f32.mrf.mxu0
        %v3699 = vadd.f32 %v3530, %v3698
        %3700 = vmatmul.bf16.gmra.mxu0 %v1479
        %v3701 = vpop.f32.mrf.mxu0
        %v3702 = vadd.f32 %v3533, %v3701
        %v3703 = vpop.f32.mrf.mxu0
        %v3704 = vadd.f32 %v3535, %v3703
        %3705 = vmatmul.bf16.gmra.mxu0 %v1561
        %v3706 = vpop.f32.mrf.mxu0
        %v3707 = vadd.f32 %v3538, %v3706
        %v3708 = vpop.f32.mrf.mxu0
        %v3709 = vadd.f32 %v3540, %v3708
        %3710 = vmatmul.bf16.gmra.mxu0 %v1613
        %v3711 = vpop.f32.mrf.mxu0
        %v3712 = vadd.f32 %v3543, %v3711
        %v3713 = vpop.f32.mrf.mxu0
        %v3714 = vadd.f32 %v3545, %v3713
        %3715 = vdwg.mxu0
        %v3716 = vld [vmem:[%s3] sm:$0x1]
        %v3717 = vld [vmem:[%s4] sm:$0x1]
        %v3718 = vadd.f32 %v3557, %v3559
        %v3719 = vadd.f32 %v3718, %v3562
        %v3720 = vadd.f32 %v3719, %v3564
        %v3721 = vadd.f32 %v3720, %v3567
        %v3722 = vadd.f32 %v3721, %v3569
        %v3723 = vadd.f32 %v3722, %v3572
        %v3724 = vadd.f32 %v3723, %v3574
        %v3725 = vadd.f32 %v3724, %v3577
        %v3726 = vadd.f32 %v3725, %v3579
        %v3727 = vadd.f32 %v3726, %v3582
        %v3728 = vadd.f32 %v3727, %v3584
        %v3729 = vadd.f32 %v3728, %v3587
        %v3730 = vadd.f32 %v3729, %v3589
        %v3731 = vadd.f32 %v3730, %v3592
        %v3732 = vadd.f32 %v3731, %v3594
        %v3733 = vadd.f32 %v3732, %v3597
        %v3734 = vadd.f32 %v3733, %v3599
        %v3735 = vadd.f32 %v3734, %v3602
        %v3736 = vadd.f32 %v3735, %v3604
        %v3737 = vadd.f32 %v3736, %v3607
        %v3738 = vadd.f32 %v3737, %v3609
        %v3739 = vadd.f32 %v3738, %v3612
        %v3740 = vadd.f32 %v3739, %v3614
        %v3741 = vadd.f32 %v3740, %v3617
        %v3742 = vadd.f32 %v3741, %v3619
        %v3743 = vadd.f32 %v3742, %v3622
        %v3744 = vadd.f32 %v3743, %v3624
        %v3745 = vadd.f32 %v3744, %v3627
        %v3746 = vadd.f32 %v3745, %v3629
        %v3747 = vadd.f32 %v3746, %v3632
        %v3748 = vadd.f32 %v3747, %v3634
        %v3749 = vrot.slane %v3748, 4
        %v3750 = vadd.f32 %v3748, %v3749
        %v3751 = vrot.slane %v3750, 2
        %v3752 = vadd.f32 %v3750, %v3751
        %v3753 = vrot.slane %v3752, 1
        %v3754 = vadd.f32 %v3752, %v3753
        %v3755 = vadd.f32 %v3637, %v3639
        %v3756 = vadd.f32 %v3755, %v3642
        %v3757 = vadd.f32 %v3756, %v3644
        %v3758 = vadd.f32 %v3757, %v3647
        %v3759 = vadd.f32 %v3758, %v3649
        %v3760 = vadd.f32 %v3759, %v3652
        %v3761 = vadd.f32 %v3760, %v3654
        %v3762 = vadd.f32 %v3761, %v3657
        %v3763 = vadd.f32 %v3762, %v3659
        %v3764 = vadd.f32 %v3763, %v3662
        %v3765 = vadd.f32 %v3764, %v3664
        %v3766 = vadd.f32 %v3765, %v3667
        %v3767 = vadd.f32 %v3766, %v3669
        %v3768 = vadd.f32 %v3767, %v3672
        %v3769 = vadd.f32 %v3768, %v3674
        %v3770 = vadd.f32 %v3769, %v3677
        %v3771 = vadd.f32 %v3770, %v3679
        %v3772 = vadd.f32 %v3771, %v3682
        %v3773 = vadd.f32 %v3772, %v3684
        %v3774 = vadd.f32 %v3773, %v3687
        %v3775 = vadd.f32 %v3774, %v3689
        %v3776 = vadd.f32 %v3775, %v3692
        %v3777 = vadd.f32 %v3776, %v3694
        %v3778 = vadd.f32 %v3777, %v3697
        %v3779 = vadd.f32 %v3778, %v3699
        %v3780 = vadd.f32 %v3779, %v3702
        %v3781 = vadd.f32 %v3780, %v3704
        %v3782 = vadd.f32 %v3781, %v3707
        %v3783 = vadd.f32 %v3782, %v3709
        %v3784 = vadd.f32 %v3783, %v3712
        %v3785 = vadd.f32 %v3784, %v3714
        %v3786 = vrot.slane %v3785, 4
        %v3787 = vadd.f32 %v3785, %v3786
        %v3788 = vrot.slane %v3787, 2
        %v3789 = vadd.f32 %v3787, %v3788
        %v3790 = vrot.slane %v3789, 1
        %v3791 = vadd.f32 %v3789, %v3790
        %v3792 = vmul.f32 %v3557, %v3557
        %v3793 = vmul.f32 %v3559, %v3559
        %v3794 = vmul.f32 %v3562, %v3562
        %v3795 = vmul.f32 %v3564, %v3564
        %v3796 = vmul.f32 %v3567, %v3567
        %v3797 = vmul.f32 %v3569, %v3569
        %v3798 = vmul.f32 %v3572, %v3572
        %v3799 = vmul.f32 %v3574, %v3574
        %v3800 = vmul.f32 %v3577, %v3577
        %v3801 = vmul.f32 %v3579, %v3579
        %v3802 = vmul.f32 %v3582, %v3582
        %v3803 = vmul.f32 %v3584, %v3584
        %v3804 = vmul.f32 %v3587, %v3587
        %v3805 = vmul.f32 %v3589, %v3589
        %v3806 = vmul.f32 %v3592, %v3592
        %v3807 = vmul.f32 %v3594, %v3594
        %v3808 = vmul.f32 %v3597, %v3597
        %v3809 = vmul.f32 %v3599, %v3599
        %v3810 = vmul.f32 %v3602, %v3602
        %v3811 = vmul.f32 %v3604, %v3604
        %v3812 = vmul.f32 %v3607, %v3607
        %v3813 = vmul.f32 %v3609, %v3609
        %v3814 = vmul.f32 %v3612, %v3612
        %v3815 = vmul.f32 %v3614, %v3614
        %v3816 = vmul.f32 %v3617, %v3617
        %v3817 = vmul.f32 %v3619, %v3619
        %v3818 = vmul.f32 %v3622, %v3622
        %v3819 = vmul.f32 %v3624, %v3624
        %v3820 = vmul.f32 %v3627, %v3627
        %v3821 = vmul.f32 %v3629, %v3629
        %v3822 = vmul.f32 %v3632, %v3632
        %v3823 = vmul.f32 %v3634, %v3634
        %v3824 = vmul.f32 %v3637, %v3637
        %v3825 = vmul.f32 %v3639, %v3639
        %v3826 = vmul.f32 %v3642, %v3642
        %v3827 = vmul.f32 %v3644, %v3644
        %v3828 = vmul.f32 %v3647, %v3647
        %v3829 = vmul.f32 %v3649, %v3649
        %v3830 = vmul.f32 %v3652, %v3652
        %v3831 = vmul.f32 %v3654, %v3654
        %v3832 = vmul.f32 %v3657, %v3657
        %v3833 = vmul.f32 %v3659, %v3659
        %v3834 = vmul.f32 %v3662, %v3662
        %v3835 = vmul.f32 %v3664, %v3664
        %v3836 = vmul.f32 %v3667, %v3667
        %v3837 = vmul.f32 %v3669, %v3669
        %v3838 = vmul.f32 %v3672, %v3672
        %v3839 = vmul.f32 %v3674, %v3674
        %v3840 = vmul.f32 %v3677, %v3677
        %v3841 = vmul.f32 %v3679, %v3679
        %v3842 = vmul.f32 %v3682, %v3682
        %v3843 = vmul.f32 %v3684, %v3684
        %v3844 = vmul.f32 %v3687, %v3687
        %v3845 = vmul.f32 %v3689, %v3689
        %v3846 = vmul.f32 %v3692, %v3692
        %v3847 = vmul.f32 %v3694, %v3694
        %v3848 = vmul.f32 %v3697, %v3697
        %v3849 = vmul.f32 %v3699, %v3699
        %v3850 = vmul.f32 %v3702, %v3702
        %v3851 = vmul.f32 %v3704, %v3704
        %v3852 = vmul.f32 %v3707, %v3707
        %v3853 = vmul.f32 %v3709, %v3709
        %v3854 = vmul.f32 %v3712, %v3712
        %v3855 = vmul.f32 %v3714, %v3714
        %v3856 = vadd.f32 %v3792, %v3793
        %v3857 = vadd.f32 %v3856, %v3794
        %v3858 = vadd.f32 %v3857, %v3795
        %v3859 = vadd.f32 %v3858, %v3796
        %v3860 = vadd.f32 %v3859, %v3797
        %v3861 = vadd.f32 %v3860, %v3798
        %v3862 = vadd.f32 %v3861, %v3799
        %v3863 = vadd.f32 %v3862, %v3800
        %v3864 = vadd.f32 %v3863, %v3801
        %v3865 = vadd.f32 %v3864, %v3802
        %v3866 = vadd.f32 %v3865, %v3803
        %v3867 = vadd.f32 %v3866, %v3804
        %v3868 = vadd.f32 %v3867, %v3805
        %v3869 = vadd.f32 %v3868, %v3806
        %v3870 = vadd.f32 %v3869, %v3807
        %v3871 = vadd.f32 %v3870, %v3808
        %v3872 = vadd.f32 %v3871, %v3809
        %v3873 = vadd.f32 %v3872, %v3810
        %v3874 = vadd.f32 %v3873, %v3811
        %v3875 = vadd.f32 %v3874, %v3812
        %v3876 = vadd.f32 %v3875, %v3813
        %v3877 = vadd.f32 %v3876, %v3814
        %v3878 = vadd.f32 %v3877, %v3815
        %v3879 = vadd.f32 %v3878, %v3816
        %v3880 = vadd.f32 %v3879, %v3817
        %v3881 = vadd.f32 %v3880, %v3818
        %v3882 = vadd.f32 %v3881, %v3819
        %v3883 = vadd.f32 %v3882, %v3820
        %v3884 = vadd.f32 %v3883, %v3821
        %v3885 = vadd.f32 %v3884, %v3822
        %v3886 = vadd.f32 %v3885, %v3823
        %v3887 = vrot.slane %v3886, 4
        %v3888 = vadd.f32 %v3886, %v3887
        %v3889 = vrot.slane %v3888, 2
        %v3890 = vadd.f32 %v3888, %v3889
        %v3891 = vrot.slane %v3890, 1
        %v3892 = vadd.f32 %v3890, %v3891
        %v3893 = vadd.f32 %v3824, %v3825
        %v3894 = vadd.f32 %v3893, %v3826
        %v3895 = vadd.f32 %v3894, %v3827
        %v3896 = vadd.f32 %v3895, %v3828
        %v3897 = vadd.f32 %v3896, %v3829
        %v3898 = vadd.f32 %v3897, %v3830
        %v3899 = vadd.f32 %v3898, %v3831
        %v3900 = vadd.f32 %v3899, %v3832
        %v3901 = vadd.f32 %v3900, %v3833
        %v3902 = vadd.f32 %v3901, %v3834
        %v3903 = vadd.f32 %v3902, %v3835
        %v3904 = vadd.f32 %v3903, %v3836
        %v3905 = vadd.f32 %v3904, %v3837
        %v3906 = vadd.f32 %v3905, %v3838
        %v3907 = vadd.f32 %v3906, %v3839
        %v3908 = vadd.f32 %v3907, %v3840
        %v3909 = vadd.f32 %v3908, %v3841
        %v3910 = vadd.f32 %v3909, %v3842
        %v3911 = vadd.f32 %v3910, %v3843
        %v3912 = vadd.f32 %v3911, %v3844
        %v3913 = vadd.f32 %v3912, %v3845
        %v3914 = vadd.f32 %v3913, %v3846
        %v3915 = vadd.f32 %v3914, %v3847
        %v3916 = vadd.f32 %v3915, %v3848
        %v3917 = vadd.f32 %v3916, %v3849
        %v3918 = vadd.f32 %v3917, %v3850
        %v3919 = vadd.f32 %v3918, %v3851
        %v3920 = vadd.f32 %v3919, %v3852
        %v3921 = vadd.f32 %v3920, %v3853
        %v3922 = vadd.f32 %v3921, %v3854
        %v3923 = vadd.f32 %v3922, %v3855
        %v3924 = vrot.slane %v3923, 4
        %v3925 = vadd.f32 %v3923, %v3924
        %v3926 = vrot.slane %v3925, 2
        %v3927 = vadd.f32 %v3925, %v3926
        %v3928 = vrot.slane %v3927, 1
        %v3929 = vadd.f32 %v3927, %v3928
        %vm3932 = vcmask 1041409
        %v3933 = vsel %vm3932, %v3791, %v3754
        %3935 = vmatpush.msra.mxu0 %v459
        %3936 = vmatpush.msra.mxu0 %v458
        %3937 = vmatpush.msra.mxu0 %v457
        %3938 = vmatpush.msra.mxu0 %v456
        %3939 = vmatpush.msra.mxu0 %v455
        %3940 = vmatpush.msra.mxu0 %v454
        %3941 = vmatpush.msra.mxu0 %v453
        %3942 = vmatpush.msra.mxu0 %v452
        %3943 = vmatpush.msra.mxu0 %v451
        %3944 = vmatpush.msra.mxu0 %v450
        %3945 = vmatpush.msra.mxu0 %v449
        %3946 = vmatpush.msra.mxu0 %v448
        %3947 = vmatpush.msra.mxu0 %v447
        %3948 = vmatpush.msra.mxu0 %v446
        %3949 = vmatpush.msra.mxu0 %v445
        %3950 = vmatpush.msra.mxu0 %v444
        %3951 = vmatmul.f32.gmra.mxu0 %v3933
        %v3952 = vpop.f32.mrf.mxu0
        %v3953 = vadd.f32 0.0, %v3952
        %3954 = vdwg.mxu0
        %v3957 = vsel %vm3932, %v3929, %v3892
        %3959 = vmatpush.msra.mxu0 %v459
        %3960 = vmatpush.msra.mxu0 %v458
        %3961 = vmatpush.msra.mxu0 %v457
        %3962 = vmatpush.msra.mxu0 %v456
        %3963 = vmatpush.msra.mxu0 %v455
        %3964 = vmatpush.msra.mxu0 %v454
        %3965 = vmatpush.msra.mxu0 %v453
        %3966 = vmatpush.msra.mxu0 %v452
        %3967 = vmatpush.msra.mxu0 %v451
        %3968 = vmatpush.msra.mxu0 %v450
        %3969 = vmatpush.msra.mxu0 %v449
        %3970 = vmatpush.msra.mxu0 %v448
        %3971 = vmatpush.msra.mxu0 %v447
        %3972 = vmatpush.msra.mxu0 %v446
        %3973 = vmatpush.msra.mxu0 %v445
        %3974 = vmatpush.msra.mxu0 %v444
        %3975 = vmatmul.f32.gmra.mxu0 %v3957
        %v3976 = vpop.f32.mrf.mxu0
        %v3977 = vadd.f32 0.0, %v3976
        %3978 = vdwg.mxu0
        %v3979 = vrcp.pop 4096.0
        %v3980 = vmul.f32 4096.0, %v3979
        %v3981 = vsub.f32 1.0, %v3980
        %v3982 = vmul.f32 %v3979, %v3981
        %v3983 = vadd.f32 %v3979, %v3982
        %vm3984 = vweird.f32 %v3979
        %v3985 = vsel %vm3984, %v3979, %v3983
        %v3986 = vmul.f32 %v3953, %v3985
        %v3987 = vmul.f32 %v3977, %v3985
        %v3988 = vmul.f32 %v3986, %v3986
        %v3989 = vsub.f32 %v3987, %v3988
        %v3990 = vmax.f32 %v3989, 0.0
        %v3991 = vadd.f32 %v3990, 1e-05
        %v3992 = vrsqrt.pop %v3991
        %v3993 = vmul.f32 %v3992, %v3991
        %v3994 = vmul.f32 %v3993, %v3992
        %v3995 = vmul.f32 0.5, %v3994
        %v3996 = vsub.f32 1.5, %v3995
        %v3997 = vmul.f32 %v3992, %v3996
        %vm3998 = vweird.f32 %v3991
        %vm3999 = vweird.f32 %v3992
        %vm4000 = vmor %vm3998, %vm3999
        %v4001 = vsel %vm4000, %v3992, %v3997
        %vm4002 = vcmask 64512
        %v4004 = vsel %vm4002, %v3986, 0
        %4006 = vmatpush.msra.mxu0 0.0
        %4007 = vmatpush.msra.mxu0 0.0
        %4008 = vmatpush.msra.mxu0 0.0
        %4009 = vmatpush.msra.mxu0 0.0
        %4010 = vmatpush.msra.mxu0 0.0
        %4011 = vmatpush.msra.mxu0 0.0
        %4012 = vmatpush.msra.mxu0 0.0
        %4013 = vmatpush.msra.mxu0 0.0
        %4014 = vmatpush.msra.mxu0 0.0
        %4015 = vmatpush.msra.mxu0 0.0
        %4016 = vmatpush.msra.mxu0 0.0
        %4017 = vmatpush.msra.mxu0 0.0
        %4018 = vmatpush.msra.mxu0 0.0
        %4019 = vmatpush.msra.mxu0 0.0
        %4020 = vmatpush.msra.mxu0 0.0
        %4021 = vmatpush.msra.mxu0 %v460
        %4022 = vmatmul.f32.gmra.mxu0 %v4004
        %v4023 = vpop.f32.mrf.mxu0
        %v4024 = vadd.f32 0.0, %v4023
        %4025 = vdwg.mxu0
        %v4027 = vsel %vm4002, %v4001, 0
        %4029 = vmatpush.msra.mxu0 0.0
        %4030 = vmatpush.msra.mxu0 0.0
        %4031 = vmatpush.msra.mxu0 0.0
        %4032 = vmatpush.msra.mxu0 0.0
        %4033 = vmatpush.msra.mxu0 0.0
        %4034 = vmatpush.msra.mxu0 0.0
        %4035 = vmatpush.msra.mxu0 0.0
        %4036 = vmatpush.msra.mxu0 0.0
        %4037 = vmatpush.msra.mxu0 0.0
        %4038 = vmatpush.msra.mxu0 0.0
        %4039 = vmatpush.msra.mxu0 0.0
        %4040 = vmatpush.msra.mxu0 0.0
        %4041 = vmatpush.msra.mxu0 0.0
        %4042 = vmatpush.msra.mxu0 0.0
        %4043 = vmatpush.msra.mxu0 0.0
        %4044 = vmatpush.msra.mxu0 %v460
        %4045 = vmatmul.f32.gmra.mxu0 %v4027
        %v4046 = vpop.f32.mrf.mxu0
        %v4047 = vadd.f32 0.0, %v4046
        %4048 = vdwg.mxu0
        %v4050 = vperm.slane %v3716, 0
        %v4052 = vmul.f32 %v4047, %v4050
        %v4053 = vmul.f32 %v4024, %v4052
        %v4055 = vperm.slane %v3717, 0
        %v4057 = vsub.f32 %v4055, %v4053
        %v4059 = vrot.slane %v4052, 1
        %v4061 = vrot.slane %v4057, 1
        %v4062 = vperm.slane %v4052, 0
        %v4063 = vperm.slane %v4059, 0
        %v4066 = vmul.f32 %v3557, %v4062
        %v4067 = vmul.f32 %v3559, %v4062
        %v4068 = vmul.f32 %v3562, %v4062
        %v4069 = vmul.f32 %v3564, %v4062
        %v4070 = vmul.f32 %v3567, %v4062
        %v4071 = vmul.f32 %v3569, %v4062
        %v4072 = vmul.f32 %v3572, %v4062
        %v4073 = vmul.f32 %v3574, %v4062
        %v4074 = vmul.f32 %v3577, %v4062
        %v4075 = vmul.f32 %v3579, %v4062
        %v4076 = vmul.f32 %v3582, %v4062
        %v4077 = vmul.f32 %v3584, %v4062
        %v4078 = vmul.f32 %v3587, %v4062
        %v4079 = vmul.f32 %v3589, %v4062
        %v4080 = vmul.f32 %v3592, %v4062
        %v4081 = vmul.f32 %v3594, %v4062
        %v4082 = vmul.f32 %v3597, %v4062
        %v4083 = vmul.f32 %v3599, %v4062
        %v4084 = vmul.f32 %v3602, %v4062
        %v4085 = vmul.f32 %v3604, %v4062
        %v4086 = vmul.f32 %v3607, %v4062
        %v4087 = vmul.f32 %v3609, %v4062
        %v4088 = vmul.f32 %v3612, %v4062
        %v4089 = vmul.f32 %v3614, %v4062
        %v4090 = vmul.f32 %v3617, %v4062
        %v4091 = vmul.f32 %v3619, %v4062
        %v4092 = vmul.f32 %v3622, %v4062
        %v4093 = vmul.f32 %v3624, %v4062
        %v4094 = vmul.f32 %v3627, %v4062
        %v4095 = vmul.f32 %v3629, %v4062
        %v4096 = vmul.f32 %v3632, %v4062
        %v4097 = vmul.f32 %v3634, %v4062
        %v4098 = vmul.f32 %v3637, %v4063
        %v4099 = vmul.f32 %v3639, %v4063
        %v4100 = vmul.f32 %v3642, %v4063
        %v4101 = vmul.f32 %v3644, %v4063
        %v4102 = vmul.f32 %v3647, %v4063
        %v4103 = vmul.f32 %v3649, %v4063
        %v4104 = vmul.f32 %v3652, %v4063
        %v4105 = vmul.f32 %v3654, %v4063
        %v4106 = vmul.f32 %v3657, %v4063
        %v4107 = vmul.f32 %v3659, %v4063
        %v4108 = vmul.f32 %v3662, %v4063
        %v4109 = vmul.f32 %v3664, %v4063
        %v4110 = vmul.f32 %v3667, %v4063
        %v4111 = vmul.f32 %v3669, %v4063
        %v4112 = vmul.f32 %v3672, %v4063
        %v4113 = vmul.f32 %v3674, %v4063
        %v4114 = vmul.f32 %v3677, %v4063
        %v4115 = vmul.f32 %v3679, %v4063
        %v4116 = vmul.f32 %v3682, %v4063
        %v4117 = vmul.f32 %v3684, %v4063
        %v4118 = vmul.f32 %v3687, %v4063
        %v4119 = vmul.f32 %v3689, %v4063
        %v4120 = vmul.f32 %v3692, %v4063
        %v4121 = vmul.f32 %v3694, %v4063
        %v4122 = vmul.f32 %v3697, %v4063
        %v4123 = vmul.f32 %v3699, %v4063
        %v4124 = vmul.f32 %v3702, %v4063
        %v4125 = vmul.f32 %v3704, %v4063
        %v4126 = vmul.f32 %v3707, %v4063
        %v4127 = vmul.f32 %v3709, %v4063
        %v4128 = vmul.f32 %v3712, %v4063
        %v4129 = vmul.f32 %v3714, %v4063
        %v4130 = vperm.slane %v4057, 0
        %v4131 = vperm.slane %v4061, 0
        %v4134 = vadd.f32 %v4066, %v4130
        %v4135 = vadd.f32 %v4067, %v4130
        %v4136 = vadd.f32 %v4068, %v4130
        %v4137 = vadd.f32 %v4069, %v4130
        %v4138 = vadd.f32 %v4070, %v4130
        %v4139 = vadd.f32 %v4071, %v4130
        %v4140 = vadd.f32 %v4072, %v4130
        %v4141 = vadd.f32 %v4073, %v4130
        %v4142 = vadd.f32 %v4074, %v4130
        %v4143 = vadd.f32 %v4075, %v4130
        %v4144 = vadd.f32 %v4076, %v4130
        %v4145 = vadd.f32 %v4077, %v4130
        %v4146 = vadd.f32 %v4078, %v4130
        %v4147 = vadd.f32 %v4079, %v4130
        %v4148 = vadd.f32 %v4080, %v4130
        %v4149 = vadd.f32 %v4081, %v4130
        %v4150 = vadd.f32 %v4082, %v4130
        %v4151 = vadd.f32 %v4083, %v4130
        %v4152 = vadd.f32 %v4084, %v4130
        %v4153 = vadd.f32 %v4085, %v4130
        %v4154 = vadd.f32 %v4086, %v4130
        %v4155 = vadd.f32 %v4087, %v4130
        %v4156 = vadd.f32 %v4088, %v4130
        %v4157 = vadd.f32 %v4089, %v4130
        %v4158 = vadd.f32 %v4090, %v4130
        %v4159 = vadd.f32 %v4091, %v4130
        %v4160 = vadd.f32 %v4092, %v4130
        %v4161 = vadd.f32 %v4093, %v4130
        %v4162 = vadd.f32 %v4094, %v4130
        %v4163 = vadd.f32 %v4095, %v4130
        %v4164 = vadd.f32 %v4096, %v4130
        %v4165 = vadd.f32 %v4097, %v4130
        %v4166 = vadd.f32 %v4098, %v4131
        %v4167 = vadd.f32 %v4099, %v4131
        %v4168 = vadd.f32 %v4100, %v4131
        %v4169 = vadd.f32 %v4101, %v4131
        %v4170 = vadd.f32 %v4102, %v4131
        %v4171 = vadd.f32 %v4103, %v4131
        %v4172 = vadd.f32 %v4104, %v4131
        %v4173 = vadd.f32 %v4105, %v4131
        %v4174 = vadd.f32 %v4106, %v4131
        %v4175 = vadd.f32 %v4107, %v4131
        %v4176 = vadd.f32 %v4108, %v4131
        %v4177 = vadd.f32 %v4109, %v4131
        %v4178 = vadd.f32 %v4110, %v4131
        %v4179 = vadd.f32 %v4111, %v4131
        %v4180 = vadd.f32 %v4112, %v4131
        %v4181 = vadd.f32 %v4113, %v4131
        %v4182 = vadd.f32 %v4114, %v4131
        %v4183 = vadd.f32 %v4115, %v4131
        %v4184 = vadd.f32 %v4116, %v4131
        %v4185 = vadd.f32 %v4117, %v4131
        %v4186 = vadd.f32 %v4118, %v4131
        %v4187 = vadd.f32 %v4119, %v4131
        %v4188 = vadd.f32 %v4120, %v4131
        %v4189 = vadd.f32 %v4121, %v4131
        %v4190 = vadd.f32 %v4122, %v4131
        %v4191 = vadd.f32 %v4123, %v4131
        %v4192 = vadd.f32 %v4124, %v4131
        %v4193 = vadd.f32 %v4125, %v4131
        %v4194 = vadd.f32 %v4126, %v4131
        %v4195 = vadd.f32 %v4127, %v4131
        %v4196 = vadd.f32 %v4128, %v4131
        %v4197 = vadd.f32 %v4129, %v4131
        %v4198 = vmax.f32 %v4134, 0.0
        %v4199 = vmax.f32 %v4135, 0.0
        %v4200 = vmax.f32 %v4136, 0.0
        %v4201 = vmax.f32 %v4137, 0.0
        %v4202 = vmax.f32 %v4138, 0.0
        %v4203 = vmax.f32 %v4139, 0.0
        %v4204 = vmax.f32 %v4140, 0.0
        %v4205 = vmax.f32 %v4141, 0.0
        %v4206 = vmax.f32 %v4142, 0.0
        %v4207 = vmax.f32 %v4143, 0.0
        %v4208 = vmax.f32 %v4144, 0.0
        %v4209 = vmax.f32 %v4145, 0.0
        %v4210 = vmax.f32 %v4146, 0.0
        %v4211 = vmax.f32 %v4147, 0.0
        %v4212 = vmax.f32 %v4148, 0.0
        %v4213 = vmax.f32 %v4149, 0.0
        %v4214 = vmax.f32 %v4150, 0.0
        %v4215 = vmax.f32 %v4151, 0.0
        %v4216 = vmax.f32 %v4152, 0.0
        %v4217 = vmax.f32 %v4153, 0.0
        %v4218 = vmax.f32 %v4154, 0.0
        %v4219 = vmax.f32 %v4155, 0.0
        %v4220 = vmax.f32 %v4156, 0.0
        %v4221 = vmax.f32 %v4157, 0.0
        %v4222 = vmax.f32 %v4158, 0.0
        %v4223 = vmax.f32 %v4159, 0.0
        %v4224 = vmax.f32 %v4160, 0.0
        %v4225 = vmax.f32 %v4161, 0.0
        %v4226 = vmax.f32 %v4162, 0.0
        %v4227 = vmax.f32 %v4163, 0.0
        %v4228 = vmax.f32 %v4164, 0.0
        %v4229 = vmax.f32 %v4165, 0.0
        %v4230 = vmax.f32 %v4166, 0.0
        %v4231 = vmax.f32 %v4167, 0.0
        %v4232 = vmax.f32 %v4168, 0.0
        %v4233 = vmax.f32 %v4169, 0.0
        %v4234 = vmax.f32 %v4170, 0.0
        %v4235 = vmax.f32 %v4171, 0.0
        %v4236 = vmax.f32 %v4172, 0.0
        %v4237 = vmax.f32 %v4173, 0.0
        %v4238 = vmax.f32 %v4174, 0.0
        %v4239 = vmax.f32 %v4175, 0.0
        %v4240 = vmax.f32 %v4176, 0.0
        %v4241 = vmax.f32 %v4177, 0.0
        %v4242 = vmax.f32 %v4178, 0.0
        %v4243 = vmax.f32 %v4179, 0.0
        %v4244 = vmax.f32 %v4180, 0.0
        %v4245 = vmax.f32 %v4181, 0.0
        %v4246 = vmax.f32 %v4182, 0.0
        %v4247 = vmax.f32 %v4183, 0.0
        %v4248 = vmax.f32 %v4184, 0.0
        %v4249 = vmax.f32 %v4185, 0.0
        %v4250 = vmax.f32 %v4186, 0.0
        %v4251 = vmax.f32 %v4187, 0.0
        %v4252 = vmax.f32 %v4188, 0.0
        %v4253 = vmax.f32 %v4189, 0.0
        %v4254 = vmax.f32 %v4190, 0.0
        %v4255 = vmax.f32 %v4191, 0.0
        %v4256 = vmax.f32 %v4192, 0.0
        %v4257 = vmax.f32 %v4193, 0.0
        %v4258 = vmax.f32 %v4194, 0.0
        %v4259 = vmax.f32 %v4195, 0.0
        %v4260 = vmax.f32 %v4196, 0.0
        %v4261 = vmax.f32 %v4197, 0.0
        %4262 = vst [vmem:[#allocation2] sm:$0xf] 0
        %4263 = vst [vmem:[#allocation2 + $0x4] sm:$0xf] 0
        %4264 = vst [vmem:[#allocation2 + $0x8] sm:$0xf] 0
        %4265 = vst [vmem:[#allocation2 + $0xd8] sm:$0xf] 0
        %4266 = vst [vmem:[#allocation2 + $0xdc] sm:$0xf] 0
        %4267 = vst [vmem:[#allocation2 + $0xe0] sm:$0xf] 0
        %s4268 = scalar_lea.vmem [#allocation2], 204
        %4269 = vst [vmem:[%s4268] sm:$0xf] 0
        %4270 = vst [vmem:[%s4268 + $0x4] sm:$0xf] 0
        %4271 = vst [vmem:[%s4268 + $0x8] sm:$0xf] 0
        %4272 = vst [vmem:[%s4268 + $0xd8] sm:$0xf] 0
        %4273 = vst [vmem:[%s4268 + $0xdc] sm:$0xf] 0
        %4274 = vst [vmem:[%s4268 + $0xe0] sm:$0xf] 0
        %s4275 = scalar_lea.vmem [#allocation2], 12
        %vm4276 = vcmask 1040384
        %vm4277 = vsmask.f32 256
        %vm4278 = vmand %vm4276, %vm4277
        %v4279 = vld [vmem:[%s4275] sm:$0x1]
        %v4280 = vsel %vm4278, 0, %v4279
        %4281 = vst [vmem:[%s4275] sm:$0x1] %v4280
        %v4282 = vld [vmem:[%s4275 + $0xc] sm:$0x1]
        %v4283 = vsel %vm4278, 0, %v4282
        %4284 = vst [vmem:[%s4275 + $0xc] sm:$0x1] %v4283
        %v4285 = vld [vmem:[%s4275 + $0x18] sm:$0x1]
        %v4286 = vsel %vm4278, 0, %v4285
        %4287 = vst [vmem:[%s4275 + $0x18] sm:$0x1] %v4286
        %v4288 = vld [vmem:[%s4275 + $0x24] sm:$0x1]
        %v4289 = vsel %vm4278, 0, %v4288
        %4290 = vst [vmem:[%s4275 + $0x24] sm:$0x1] %v4289
        %v4291 = vld [vmem:[%s4275 + $0x30] sm:$0x1]
        %v4292 = vsel %vm4278, 0, %v4291
        %4293 = vst [vmem:[%s4275 + $0x30] sm:$0x1] %v4292
        %v4294 = vld [vmem:[%s4275 + $0x3c] sm:$0x1]
        %v4295 = vsel %vm4278, 0, %v4294
        %4296 = vst [vmem:[%s4275 + $0x3c] sm:$0x1] %v4295
        %v4297 = vld [vmem:[%s4275 + $0x48] sm:$0x1]
        %v4298 = vsel %vm4278, 0, %v4297
        %4299 = vst [vmem:[%s4275 + $0x48] sm:$0x1] %v4298
        %v4300 = vld [vmem:[%s4275 + $0x54] sm:$0x1]
        %v4301 = vsel %vm4278, 0, %v4300
        %4302 = vst [vmem:[%s4275 + $0x54] sm:$0x1] %v4301
        %v4303 = vld [vmem:[%s4275 + $0x60] sm:$0x1]
        %v4304 = vsel %vm4278, 0, %v4303
        %4305 = vst [vmem:[%s4275 + $0x60] sm:$0x1] %v4304
        %v4306 = vld [vmem:[%s4275 + $0x6c] sm:$0x1]
        %v4307 = vsel %vm4278, 0, %v4306
        %4308 = vst [vmem:[%s4275 + $0x6c] sm:$0x1] %v4307
        %v4309 = vld [vmem:[%s4275 + $0x78] sm:$0x1]
        %v4310 = vsel %vm4278, 0, %v4309
        %4311 = vst [vmem:[%s4275 + $0x78] sm:$0x1] %v4310
        %v4312 = vld [vmem:[%s4275 + $0x84] sm:$0x1]
        %v4313 = vsel %vm4278, 0, %v4312
        %4314 = vst [vmem:[%s4275 + $0x84] sm:$0x1] %v4313
        %v4315 = vld [vmem:[%s4275 + $0x90] sm:$0x1]
        %v4316 = vsel %vm4278, 0, %v4315
        %4317 = vst [vmem:[%s4275 + $0x90] sm:$0x1] %v4316
        %v4318 = vld [vmem:[%s4275 + $0x9c] sm:$0x1]
        %v4319 = vsel %vm4278, 0, %v4318
        %4320 = vst [vmem:[%s4275 + $0x9c] sm:$0x1] %v4319
        %v4321 = vld [vmem:[%s4275 + $0xa8] sm:$0x1]
        %v4322 = vsel %vm4278, 0, %v4321
        %4323 = vst [vmem:[%s4275 + $0xa8] sm:$0x1] %v4322
        %v4324 = vld [vmem:[%s4275 + $0xb4] sm:$0x1]
        %v4325 = vsel %vm4278, 0, %v4324
        %4326 = vst [vmem:[%s4275 + $0xb4] sm:$0x1] %v4325
        %v4327 = vld [vmem:[%s4275 + $0xd8] sm:$0x1]
        %v4328 = vsel %vm4278, 0, %v4327
        %4329 = vst [vmem:[%s4275 + $0xd8] sm:$0x1] %v4328
        %v4330 = vld [vmem:[%s4275 + $0xe4] sm:$0x1]
        %v4331 = vsel %vm4278, 0, %v4330
        %4332 = vst [vmem:[%s4275 + $0xe4] sm:$0x1] %v4331
        %v4333 = vld [vmem:[%s4275 + $0xf0] sm:$0x1]
        %v4334 = vsel %vm4278, 0, %v4333
        %4335 = vst [vmem:[%s4275 + $0xf0] sm:$0x1] %v4334
        %v4336 = vld [vmem:[%s4275 + $0xfc] sm:$0x1]
        %v4337 = vsel %vm4278, 0, %v4336
        %4338 = vst [vmem:[%s4275 + $0xfc] sm:$0x1] %v4337
        %v4339 = vld [vmem:[%s4275 + $0x108] sm:$0x1]
        %v4340 = vsel %vm4278, 0, %v4339
        %4341 = vst [vmem:[%s4275 + $0x108] sm:$0x1] %v4340
        %v4342 = vld [vmem:[%s4275 + $0x114] sm:$0x1]
        %v4343 = vsel %vm4278, 0, %v4342
        %4344 = vst [vmem:[%s4275 + $0x114] sm:$0x1] %v4343
        %v4345 = vld [vmem:[%s4275 + $0x120] sm:$0x1]
        %v4346 = vsel %vm4278, 0, %v4345
        %4347 = vst [vmem:[%s4275 + $0x120] sm:$0x1] %v4346
        %v4348 = vld [vmem:[%s4275 + $0x12c] sm:$0x1]
        %v4349 = vsel %vm4278, 0, %v4348
        %4350 = vst [vmem:[%s4275 + $0x12c] sm:$0x1] %v4349
        %v4351 = vld [vmem:[%s4275 + $0x138] sm:$0x1]
        %v4352 = vsel %vm4278, 0, %v4351
        %4353 = vst [vmem:[%s4275 + $0x138] sm:$0x1] %v4352
        %v4354 = vld [vmem:[%s4275 + $0x144] sm:$0x1]
        %v4355 = vsel %vm4278, 0, %v4354
        %4356 = vst [vmem:[%s4275 + $0x144] sm:$0x1] %v4355
        %v4357 = vld [vmem:[%s4275 + $0x150] sm:$0x1]
        %v4358 = vsel %vm4278, 0, %v4357
        %4359 = vst [vmem:[%s4275 + $0x150] sm:$0x1] %v4358
        %v4360 = vld [vmem:[%s4275 + $0x15c] sm:$0x1]
        %v4361 = vsel %vm4278, 0, %v4360
        %4362 = vst [vmem:[%s4275 + $0x15c] sm:$0x1] %v4361
        %v4363 = vld [vmem:[%s4275 + $0x168] sm:$0x1]
        %v4364 = vsel %vm4278, 0, %v4363
        %4365 = vst [vmem:[%s4275 + $0x168] sm:$0x1] %v4364
        %v4366 = vld [vmem:[%s4275 + $0x174] sm:$0x1]
        %v4367 = vsel %vm4278, 0, %v4366
        %4368 = vst [vmem:[%s4275 + $0x174] sm:$0x1] %v4367
        %v4369 = vld [vmem:[%s4275 + $0x180] sm:$0x1]
        %v4370 = vsel %vm4278, 0, %v4369
        %4371 = vst [vmem:[%s4275 + $0x180] sm:$0x1] %v4370
        %v4372 = vld [vmem:[%s4275 + $0x18c] sm:$0x1]
        %v4373 = vsel %vm4278, 0, %v4372
        %4374 = vst [vmem:[%s4275 + $0x18c] sm:$0x1] %v4373
        %vm4375 = vsmask.f32 7938
        %vm4376 = vmand %vm4276, %vm4375
        %v4377 = vld [vmem:[%s4275 + $0x8] sm:$0x1]
        %v4378 = vsel %vm4376, 0, %v4377
        %4379 = vst [vmem:[%s4275 + $0x8] sm:$0x1] %v4378
        %v4380 = vld [vmem:[%s4275 + $0x14] sm:$0x1]
        %v4381 = vsel %vm4376, 0, %v4380
        %4382 = vst [vmem:[%s4275 + $0x14] sm:$0x1] %v4381
        %v4383 = vld [vmem:[%s4275 + $0x20] sm:$0x1]
        %v4384 = vsel %vm4376, 0, %v4383
        %4385 = vst [vmem:[%s4275 + $0x20] sm:$0x1] %v4384
        %v4386 = vld [vmem:[%s4275 + $0x2c] sm:$0x1]
        %v4387 = vsel %vm4376, 0, %v4386
        %4388 = vst [vmem:[%s4275 + $0x2c] sm:$0x1] %v4387
        %v4389 = vld [vmem:[%s4275 + $0x38] sm:$0x1]
        %v4390 = vsel %vm4376, 0, %v4389
        %4391 = vst [vmem:[%s4275 + $0x38] sm:$0x1] %v4390
        %v4392 = vld [vmem:[%s4275 + $0x44] sm:$0x1]
        %v4393 = vsel %vm4376, 0, %v4392
        %4394 = vst [vmem:[%s4275 + $0x44] sm:$0x1] %v4393
        %v4395 = vld [vmem:[%s4275 + $0x50] sm:$0x1]
        %v4396 = vsel %vm4376, 0, %v4395
        %4397 = vst [vmem:[%s4275 + $0x50] sm:$0x1] %v4396
        %v4398 = vld [vmem:[%s4275 + $0x5c] sm:$0x1]
        %v4399 = vsel %vm4376, 0, %v4398
        %4400 = vst [vmem:[%s4275 + $0x5c] sm:$0x1] %v4399
        %v4401 = vld [vmem:[%s4275 + $0x68] sm:$0x1]
        %v4402 = vsel %vm4376, 0, %v4401
        %4403 = vst [vmem:[%s4275 + $0x68] sm:$0x1] %v4402
        %v4404 = vld [vmem:[%s4275 + $0x74] sm:$0x1]
        %v4405 = vsel %vm4376, 0, %v4404
        %4406 = vst [vmem:[%s4275 + $0x74] sm:$0x1] %v4405
        %v4407 = vld [vmem:[%s4275 + $0x80] sm:$0x1]
        %v4408 = vsel %vm4376, 0, %v4407
        %4409 = vst [vmem:[%s4275 + $0x80] sm:$0x1] %v4408
        %v4410 = vld [vmem:[%s4275 + $0x8c] sm:$0x1]
        %v4411 = vsel %vm4376, 0, %v4410
        %4412 = vst [vmem:[%s4275 + $0x8c] sm:$0x1] %v4411
        %v4413 = vld [vmem:[%s4275 + $0x98] sm:$0x1]
        %v4414 = vsel %vm4376, 0, %v4413
        %4415 = vst [vmem:[%s4275 + $0x98] sm:$0x1] %v4414
        %v4416 = vld [vmem:[%s4275 + $0xa4] sm:$0x1]
        %v4417 = vsel %vm4376, 0, %v4416
        %4418 = vst [vmem:[%s4275 + $0xa4] sm:$0x1] %v4417
        %v4419 = vld [vmem:[%s4275 + $0xb0] sm:$0x1]
        %v4420 = vsel %vm4376, 0, %v4419
        %4421 = vst [vmem:[%s4275 + $0xb0] sm:$0x1] %v4420
        %v4422 = vld [vmem:[%s4275 + $0xbc] sm:$0x1]
        %v4423 = vsel %vm4376, 0, %v4422
        %4424 = vst [vmem:[%s4275 + $0xbc] sm:$0x1] %v4423
        %v4425 = vld [vmem:[%s4275 + $0xe0] sm:$0x1]
        %v4426 = vsel %vm4376, 0, %v4425
        %4427 = vst [vmem:[%s4275 + $0xe0] sm:$0x1] %v4426
        %v4428 = vld [vmem:[%s4275 + $0xec] sm:$0x1]
        %v4429 = vsel %vm4376, 0, %v4428
        %4430 = vst [vmem:[%s4275 + $0xec] sm:$0x1] %v4429
        %v4431 = vld [vmem:[%s4275 + $0xf8] sm:$0x1]
        %v4432 = vsel %vm4376, 0, %v4431
        %4433 = vst [vmem:[%s4275 + $0xf8] sm:$0x1] %v4432
        %v4434 = vld [vmem:[%s4275 + $0x104] sm:$0x1]
        %v4435 = vsel %vm4376, 0, %v4434
        %4436 = vst [vmem:[%s4275 + $0x104] sm:$0x1] %v4435
        %v4437 = vld [vmem:[%s4275 + $0x110] sm:$0x1]
        %v4438 = vsel %vm4376, 0, %v4437
        %4439 = vst [vmem:[%s4275 + $0x110] sm:$0x1] %v4438
        %v4440 = vld [vmem:[%s4275 + $0x11c] sm:$0x1]
        %v4441 = vsel %vm4376, 0, %v4440
        %4442 = vst [vmem:[%s4275 + $0x11c] sm:$0x1] %v4441
        %v4443 = vld [vmem:[%s4275 + $0x128] sm:$0x1]
        %v4444 = vsel %vm4376, 0, %v4443
        %4445 = vst [vmem:[%s4275 + $0x128] sm:$0x1] %v4444
        %v4446 = vld [vmem:[%s4275 + $0x134] sm:$0x1]
        %v4447 = vsel %vm4376, 0, %v4446
        %4448 = vst [vmem:[%s4275 + $0x134] sm:$0x1] %v4447
        %v4449 = vld [vmem:[%s4275 + $0x140] sm:$0x1]
        %v4450 = vsel %vm4376, 0, %v4449
        %4451 = vst [vmem:[%s4275 + $0x140] sm:$0x1] %v4450
        %v4452 = vld [vmem:[%s4275 + $0x14c] sm:$0x1]
        %v4453 = vsel %vm4376, 0, %v4452
        %4454 = vst [vmem:[%s4275 + $0x14c] sm:$0x1] %v4453
        %v4455 = vld [vmem:[%s4275 + $0x158] sm:$0x1]
        %v4456 = vsel %vm4376, 0, %v4455
        %4457 = vst [vmem:[%s4275 + $0x158] sm:$0x1] %v4456
        %v4458 = vld [vmem:[%s4275 + $0x164] sm:$0x1]
        %v4459 = vsel %vm4376, 0, %v4458
        %4460 = vst [vmem:[%s4275 + $0x164] sm:$0x1] %v4459
        %v4461 = vld [vmem:[%s4275 + $0x170] sm:$0x1]
        %v4462 = vsel %vm4376, 0, %v4461
        %4463 = vst [vmem:[%s4275 + $0x170] sm:$0x1] %v4462
        %v4464 = vld [vmem:[%s4275 + $0x17c] sm:$0x1]
        %v4465 = vsel %vm4376, 0, %v4464
        %4466 = vst [vmem:[%s4275 + $0x17c] sm:$0x1] %v4465
        %v4467 = vld [vmem:[%s4275 + $0x188] sm:$0x1]
        %v4468 = vsel %vm4376, 0, %v4467
        %4469 = vst [vmem:[%s4275 + $0x188] sm:$0x1] %v4468
        %v4470 = vld [vmem:[%s4275 + $0x194] sm:$0x1]
        %v4471 = vsel %vm4376, 0, %v4470
        %4472 = vst [vmem:[%s4275 + $0x194] sm:$0x1] %v4471
        %v4473 = vpack.c.bf16 %v4198, %v4198
        %v4474 = vpack.c.bf16 %v4199, %v4199
        %v4475 = vpack.c.bf16 %v4200, %v4200
        %v4476 = vpack.c.bf16 %v4201, %v4201
        %v4477 = vpack.c.bf16 %v4202, %v4202
        %v4478 = vpack.c.bf16 %v4203, %v4203
        %v4479 = vpack.c.bf16 %v4204, %v4204
        %v4480 = vpack.c.bf16 %v4205, %v4205
        %v4481 = vpack.c.bf16 %v4206, %v4206
        %v4482 = vpack.c.bf16 %v4207, %v4207
        %v4483 = vpack.c.bf16 %v4208, %v4208
        %v4484 = vpack.c.bf16 %v4209, %v4209
        %v4485 = vpack.c.bf16 %v4210, %v4210
        %v4486 = vpack.c.bf16 %v4211, %v4211
        %v4487 = vpack.c.bf16 %v4212, %v4212
        %v4488 = vpack.c.bf16 %v4213, %v4213
        %v4489 = vpack.c.bf16 %v4214, %v4214
        %v4490 = vpack.c.bf16 %v4215, %v4215
        %v4491 = vpack.c.bf16 %v4216, %v4216
        %v4492 = vpack.c.bf16 %v4217, %v4217
        %v4493 = vpack.c.bf16 %v4218, %v4218
        %v4494 = vpack.c.bf16 %v4219, %v4219
        %v4495 = vpack.c.bf16 %v4220, %v4220
        %v4496 = vpack.c.bf16 %v4221, %v4221
        %v4497 = vpack.c.bf16 %v4222, %v4222
        %v4498 = vpack.c.bf16 %v4223, %v4223
        %v4499 = vpack.c.bf16 %v4224, %v4224
        %v4500 = vpack.c.bf16 %v4225, %v4225
        %v4501 = vpack.c.bf16 %v4226, %v4226
        %v4502 = vpack.c.bf16 %v4227, %v4227
        %v4503 = vpack.c.bf16 %v4228, %v4228
        %v4504 = vpack.c.bf16 %v4229, %v4229
        %v4505 = vpack.c.bf16 %v4230, %v4230
        %v4506 = vpack.c.bf16 %v4231, %v4231
        %v4507 = vpack.c.bf16 %v4232, %v4232
        %v4508 = vpack.c.bf16 %v4233, %v4233
        %v4509 = vpack.c.bf16 %v4234, %v4234
        %v4510 = vpack.c.bf16 %v4235, %v4235
        %v4511 = vpack.c.bf16 %v4236, %v4236
        %v4512 = vpack.c.bf16 %v4237, %v4237
        %v4513 = vpack.c.bf16 %v4238, %v4238
        %v4514 = vpack.c.bf16 %v4239, %v4239
        %v4515 = vpack.c.bf16 %v4240, %v4240
        %v4516 = vpack.c.bf16 %v4241, %v4241
        %v4517 = vpack.c.bf16 %v4242, %v4242
        %v4518 = vpack.c.bf16 %v4243, %v4243
        %v4519 = vpack.c.bf16 %v4244, %v4244
        %v4520 = vpack.c.bf16 %v4245, %v4245
        %v4521 = vpack.c.bf16 %v4246, %v4246
        %v4522 = vpack.c.bf16 %v4247, %v4247
        %v4523 = vpack.c.bf16 %v4248, %v4248
        %v4524 = vpack.c.bf16 %v4249, %v4249
        %v4525 = vpack.c.bf16 %v4250, %v4250
        %v4526 = vpack.c.bf16 %v4251, %v4251
        %v4527 = vpack.c.bf16 %v4252, %v4252
        %v4528 = vpack.c.bf16 %v4253, %v4253
        %v4529 = vpack.c.bf16 %v4254, %v4254
        %v4530 = vpack.c.bf16 %v4255, %v4255
        %v4531 = vpack.c.bf16 %v4256, %v4256
        %v4532 = vpack.c.bf16 %v4257, %v4257
        %v4533 = vpack.c.bf16 %v4258, %v4258
        %v4534 = vpack.c.bf16 %v4259, %v4259
        %v4535 = vpack.c.bf16 %v4260, %v4260
        %v4536 = vpack.c.bf16 %v4261, %v4261
        %vm4537 = vsmask.f32 4368
        %vm4538 = vmor %vm4277, %vm4537
        %v4540 = vshrl.u32 %v4473, 16
        %v4542 = vrot.slane %v4540, 7
        %v4543 = vshll.u32 %v4473, 16
        %v4545 = vor.u32 %v4542, %v4543
        %v4546 = vrot.slane %v4542, 4
        %v4548 = vshrl.u32 %v4474, 16
        %v4550 = vrot.slane %v4548, 7
        %v4551 = vshll.u32 %v4474, 16
        %v4553 = vor.u32 %v4550, %v4551
        %v4554 = vsel %vm4538, %v4546, %v4553
        %v4555 = vrot.slane %v4550, 4
        %v4557 = vshrl.u32 %v4475, 16
        %v4559 = vrot.slane %v4557, 7
        %v4560 = vshll.u32 %v4475, 16
        %v4562 = vor.u32 %v4559, %v4560
        %v4563 = vrot.slane %v4559, 4
        %v4565 = vshrl.u32 %v4476, 16
        %v4567 = vrot.slane %v4565, 7
        %v4568 = vshll.u32 %v4476, 16
        %v4570 = vor.u32 %v4567, %v4568
        %v4571 = vsel %vm4538, %v4563, %v4570
        %v4572 = vrot.slane %v4567, 4
        %v4574 = vshrl.u32 %v4477, 16
        %v4576 = vrot.slane %v4574, 7
        %v4577 = vshll.u32 %v4477, 16
        %v4579 = vor.u32 %v4576, %v4577
        %v4580 = vrot.slane %v4576, 4
        %v4582 = vshrl.u32 %v4478, 16
        %v4584 = vrot.slane %v4582, 7
        %v4585 = vshll.u32 %v4478, 16
        %v4587 = vor.u32 %v4584, %v4585
        %v4588 = vsel %vm4538, %v4580, %v4587
        %v4589 = vrot.slane %v4584, 4
        %v4591 = vshrl.u32 %v4479, 16
        %v4593 = vrot.slane %v4591, 7
        %v4594 = vshll.u32 %v4479, 16
        %v4596 = vor.u32 %v4593, %v4594
        %v4597 = vrot.slane %v4593, 4
        %v4599 = vshrl.u32 %v4480, 16
        %v4601 = vrot.slane %v4599, 7
        %v4602 = vshll.u32 %v4480, 16
        %v4604 = vor.u32 %v4601, %v4602
        %v4605 = vsel %vm4538, %v4597, %v4604
        %v4606 = vrot.slane %v4601, 4
        %v4608 = vshrl.u32 %v4481, 16
        %v4610 = vrot.slane %v4608, 7
        %v4611 = vshll.u32 %v4481, 16
        %v4613 = vor.u32 %v4610, %v4611
        %v4614 = vrot.slane %v4610, 4
        %v4616 = vshrl.u32 %v4482, 16
        %v4618 = vrot.slane %v4616, 7
        %v4619 = vshll.u32 %v4482, 16
        %v4621 = vor.u32 %v4618, %v4619
        %v4622 = vsel %vm4538, %v4614, %v4621
        %v4623 = vrot.slane %v4618, 4
        %v4625 = vshrl.u32 %v4483, 16
        %v4627 = vrot.slane %v4625, 7
        %v4628 = vshll.u32 %v4483, 16
        %v4630 = vor.u32 %v4627, %v4628
        %v4631 = vrot.slane %v4627, 4
        %v4633 = vshrl.u32 %v4484, 16
        %v4635 = vrot.slane %v4633, 7
        %v4636 = vshll.u32 %v4484, 16
        %v4638 = vor.u32 %v4635, %v4636
        %v4639 = vsel %vm4538, %v4631, %v4638
        %v4640 = vrot.slane %v4635, 4
        %v4642 = vshrl.u32 %v4485, 16
        %v4644 = vrot.slane %v4642, 7
        %v4645 = vshll.u32 %v4485, 16
        %v4647 = vor.u32 %v4644, %v4645
        %v4648 = vrot.slane %v4644, 4
        %v4650 = vshrl.u32 %v4486, 16
        %v4652 = vrot.slane %v4650, 7
        %v4653 = vshll.u32 %v4486, 16
        %v4655 = vor.u32 %v4652, %v4653
        %v4656 = vsel %vm4538, %v4648, %v4655
        %v4657 = vrot.slane %v4652, 4
        %v4659 = vshrl.u32 %v4487, 16
        %v4661 = vrot.slane %v4659, 7
        %v4662 = vshll.u32 %v4487, 16
        %v4664 = vor.u32 %v4661, %v4662
        %v4665 = vrot.slane %v4661, 4
        %v4667 = vshrl.u32 %v4488, 16
        %v4669 = vrot.slane %v4667, 7
        %v4670 = vshll.u32 %v4488, 16
        %v4672 = vor.u32 %v4669, %v4670
        %v4673 = vsel %vm4538, %v4665, %v4672
        %v4674 = vrot.slane %v4669, 4
        %v4676 = vshrl.u32 %v4489, 16
        %v4678 = vrot.slane %v4676, 7
        %v4679 = vshll.u32 %v4489, 16
        %v4681 = vor.u32 %v4678, %v4679
        %v4682 = vrot.slane %v4678, 4
        %v4684 = vshrl.u32 %v4490, 16
        %v4686 = vrot.slane %v4684, 7
        %v4687 = vshll.u32 %v4490, 16
        %v4689 = vor.u32 %v4686, %v4687
        %v4690 = vsel %vm4538, %v4682, %v4689
        %v4691 = vrot.slane %v4686, 4
        %v4693 = vshrl.u32 %v4491, 16
        %v4695 = vrot.slane %v4693, 7
        %v4696 = vshll.u32 %v4491, 16
        %v4698 = vor.u32 %v4695, %v4696
        %v4699 = vrot.slane %v4695, 4
        %v4701 = vshrl.u32 %v4492, 16
        %v4703 = vrot.slane %v4701, 7
        %v4704 = vshll.u32 %v4492, 16
        %v4706 = vor.u32 %v4703, %v4704
        %v4707 = vsel %vm4538, %v4699, %v4706
        %v4708 = vrot.slane %v4703, 4
        %v4710 = vshrl.u32 %v4493, 16
        %v4712 = vrot.slane %v4710, 7
        %v4713 = vshll.u32 %v4493, 16
        %v4715 = vor.u32 %v4712, %v4713
        %v4716 = vrot.slane %v4712, 4
        %v4718 = vshrl.u32 %v4494, 16
        %v4720 = vrot.slane %v4718, 7
        %v4721 = vshll.u32 %v4494, 16
        %v4723 = vor.u32 %v4720, %v4721
        %v4724 = vsel %vm4538, %v4716, %v4723
        %v4725 = vrot.slane %v4720, 4
        %v4727 = vshrl.u32 %v4495, 16
        %v4729 = vrot.slane %v4727, 7
        %v4730 = vshll.u32 %v4495, 16
        %v4732 = vor.u32 %v4729, %v4730
        %v4733 = vrot.slane %v4729, 4
        %v4735 = vshrl.u32 %v4496, 16
        %v4737 = vrot.slane %v4735, 7
        %v4738 = vshll.u32 %v4496, 16
        %v4740 = vor.u32 %v4737, %v4738
        %v4741 = vsel %vm4538, %v4733, %v4740
        %v4742 = vrot.slane %v4737, 4
        %v4744 = vshrl.u32 %v4497, 16
        %v4746 = vrot.slane %v4744, 7
        %v4747 = vshll.u32 %v4497, 16
        %v4749 = vor.u32 %v4746, %v4747
        %v4750 = vrot.slane %v4746, 4
        %v4752 = vshrl.u32 %v4498, 16
        %v4754 = vrot.slane %v4752, 7
        %v4755 = vshll.u32 %v4498, 16
        %v4757 = vor.u32 %v4754, %v4755
        %v4758 = vsel %vm4538, %v4750, %v4757
        %v4759 = vrot.slane %v4754, 4
        %v4761 = vshrl.u32 %v4499, 16
        %v4763 = vrot.slane %v4761, 7
        %v4764 = vshll.u32 %v4499, 16
        %v4766 = vor.u32 %v4763, %v4764
        %v4767 = vrot.slane %v4763, 4
        %v4769 = vshrl.u32 %v4500, 16
        %v4771 = vrot.slane %v4769, 7
        %v4772 = vshll.u32 %v4500, 16
        %v4774 = vor.u32 %v4771, %v4772
        %v4775 = vsel %vm4538, %v4767, %v4774
        %v4776 = vrot.slane %v4771, 4
        %v4778 = vshrl.u32 %v4501, 16
        %v4780 = vrot.slane %v4778, 7
        %v4781 = vshll.u32 %v4501, 16
        %v4783 = vor.u32 %v4780, %v4781
        %v4784 = vrot.slane %v4780, 4
        %v4786 = vshrl.u32 %v4502, 16
        %v4788 = vrot.slane %v4786, 7
        %v4789 = vshll.u32 %v4502, 16
        %v4791 = vor.u32 %v4788, %v4789
        %v4792 = vsel %vm4538, %v4784, %v4791
        %v4793 = vrot.slane %v4788, 4
        %v4795 = vshrl.u32 %v4503, 16
        %v4797 = vrot.slane %v4795, 7
        %v4798 = vshll.u32 %v4503, 16
        %v4800 = vor.u32 %v4797, %v4798
        %v4801 = vrot.slane %v4797, 4
        %v4803 = vshrl.u32 %v4504, 16
        %v4805 = vrot.slane %v4803, 7
        %v4806 = vshll.u32 %v4504, 16
        %v4808 = vor.u32 %v4805, %v4806
        %v4809 = vsel %vm4538, %v4801, %v4808
        %v4810 = vrot.slane %v4805, 4
        %v4812 = vshrl.u32 %v4505, 16
        %v4814 = vrot.slane %v4812, 7
        %v4815 = vshll.u32 %v4505, 16
        %v4817 = vor.u32 %v4814, %v4815
        %v4818 = vrot.slane %v4814, 4
        %v4820 = vshrl.u32 %v4506, 16
        %v4822 = vrot.slane %v4820, 7
        %v4823 = vshll.u32 %v4506, 16
        %v4825 = vor.u32 %v4822, %v4823
        %v4826 = vsel %vm4538, %v4818, %v4825
        %v4827 = vrot.slane %v4822, 4
        %v4829 = vshrl.u32 %v4507, 16
        %v4831 = vrot.slane %v4829, 7
        %v4832 = vshll.u32 %v4507, 16
        %v4834 = vor.u32 %v4831, %v4832
        %v4835 = vrot.slane %v4831, 4
        %v4837 = vshrl.u32 %v4508, 16
        %v4839 = vrot.slane %v4837, 7
        %v4840 = vshll.u32 %v4508, 16
        %v4842 = vor.u32 %v4839, %v4840
        %v4843 = vsel %vm4538, %v4835, %v4842
        %v4844 = vrot.slane %v4839, 4
        %v4846 = vshrl.u32 %v4509, 16
        %v4848 = vrot.slane %v4846, 7
        %v4849 = vshll.u32 %v4509, 16
        %v4851 = vor.u32 %v4848, %v4849
        %v4852 = vrot.slane %v4848, 4
        %v4854 = vshrl.u32 %v4510, 16
        %v4856 = vrot.slane %v4854, 7
        %v4857 = vshll.u32 %v4510, 16
        %v4859 = vor.u32 %v4856, %v4857
        %v4860 = vsel %vm4538, %v4852, %v4859
        %v4861 = vrot.slane %v4856, 4
        %v4863 = vshrl.u32 %v4511, 16
        %v4865 = vrot.slane %v4863, 7
        %v4866 = vshll.u32 %v4511, 16
        %v4868 = vor.u32 %v4865, %v4866
        %v4869 = vrot.slane %v4865, 4
        %v4871 = vshrl.u32 %v4512, 16
        %v4873 = vrot.slane %v4871, 7
        %v4874 = vshll.u32 %v4512, 16
        %v4876 = vor.u32 %v4873, %v4874
        %v4877 = vsel %vm4538, %v4869, %v4876
        %v4878 = vrot.slane %v4873, 4
        %v4880 = vshrl.u32 %v4513, 16
        %v4882 = vrot.slane %v4880, 7
        %v4883 = vshll.u32 %v4513, 16
        %v4885 = vor.u32 %v4882, %v4883
        %v4886 = vrot.slane %v4882, 4
        %v4888 = vshrl.u32 %v4514, 16
        %v4890 = vrot.slane %v4888, 7
        %v4891 = vshll.u32 %v4514, 16
        %v4893 = vor.u32 %v4890, %v4891
        %v4894 = vsel %vm4538, %v4886, %v4893
        %v4895 = vrot.slane %v4890, 4
        %v4897 = vshrl.u32 %v4515, 16
        %v4899 = vrot.slane %v4897, 7
        %v4900 = vshll.u32 %v4515, 16
        %v4902 = vor.u32 %v4899, %v4900
        %v4903 = vrot.slane %v4899, 4
        %v4905 = vshrl.u32 %v4516, 16
        %v4907 = vrot.slane %v4905, 7
        %v4908 = vshll.u32 %v4516, 16
        %v4910 = vor.u32 %v4907, %v4908
        %v4911 = vsel %vm4538, %v4903, %v4910
        %v4912 = vrot.slane %v4907, 4
        %v4914 = vshrl.u32 %v4517, 16
        %v4916 = vrot.slane %v4914, 7
        %v4917 = vshll.u32 %v4517, 16
        %v4919 = vor.u32 %v4916, %v4917
        %v4920 = vrot.slane %v4916, 4
        %v4922 = vshrl.u32 %v4518, 16
        %v4924 = vrot.slane %v4922, 7
        %v4925 = vshll.u32 %v4518, 16
        %v4927 = vor.u32 %v4924, %v4925
        %v4928 = vsel %vm4538, %v4920, %v4927
        %v4929 = vrot.slane %v4924, 4
        %v4931 = vshrl.u32 %v4519, 16
        %v4933 = vrot.slane %v4931, 7
        %v4934 = vshll.u32 %v4519, 16
        %v4936 = vor.u32 %v4933, %v4934
        %v4937 = vrot.slane %v4933, 4
        %v4939 = vshrl.u32 %v4520, 16
        %v4941 = vrot.slane %v4939, 7
        %v4942 = vshll.u32 %v4520, 16
        %v4944 = vor.u32 %v4941, %v4942
        %v4945 = vsel %vm4538, %v4937, %v4944
        %v4946 = vrot.slane %v4941, 4
        %v4948 = vshrl.u32 %v4521, 16
        %v4950 = vrot.slane %v4948, 7
        %v4951 = vshll.u32 %v4521, 16
        %v4953 = vor.u32 %v4950, %v4951
        %v4954 = vrot.slane %v4950, 4
        %v4956 = vshrl.u32 %v4522, 16
        %v4958 = vrot.slane %v4956, 7
        %v4959 = vshll.u32 %v4522, 16
        %v4961 = vor.u32 %v4958, %v4959
        %v4962 = vsel %vm4538, %v4954, %v4961
        %v4963 = vrot.slane %v4958, 4
        %v4965 = vshrl.u32 %v4523, 16
        %v4967 = vrot.slane %v4965, 7
        %v4968 = vshll.u32 %v4523, 16
        %v4970 = vor.u32 %v4967, %v4968
        %v4971 = vrot.slane %v4967, 4
        %v4973 = vshrl.u32 %v4524, 16
        %v4975 = vrot.slane %v4973, 7
        %v4976 = vshll.u32 %v4524, 16
        %v4978 = vor.u32 %v4975, %v4976
        %v4979 = vsel %vm4538, %v4971, %v4978
        %v4980 = vrot.slane %v4975, 4
        %v4982 = vshrl.u32 %v4525, 16
        %v4984 = vrot.slane %v4982, 7
        %v4985 = vshll.u32 %v4525, 16
        %v4987 = vor.u32 %v4984, %v4985
        %v4988 = vrot.slane %v4984, 4
        %v4990 = vshrl.u32 %v4526, 16
        %v4992 = vrot.slane %v4990, 7
        %v4993 = vshll.u32 %v4526, 16
        %v4995 = vor.u32 %v4992, %v4993
        %v4996 = vsel %vm4538, %v4988, %v4995
        %v4997 = vrot.slane %v4992, 4
        %v4999 = vshrl.u32 %v4527, 16
        %v5001 = vrot.slane %v4999, 7
        %v5002 = vshll.u32 %v4527, 16
        %v5004 = vor.u32 %v5001, %v5002
        %v5005 = vrot.slane %v5001, 4
        %v5007 = vshrl.u32 %v4528, 16
        %v5009 = vrot.slane %v5007, 7
        %v5010 = vshll.u32 %v4528, 16
        %v5012 = vor.u32 %v5009, %v5010
        %v5013 = vsel %vm4538, %v5005, %v5012
        %v5014 = vrot.slane %v5009, 4
        %v5016 = vshrl.u32 %v4529, 16
        %v5018 = vrot.slane %v5016, 7
        %v5019 = vshll.u32 %v4529, 16
        %v5021 = vor.u32 %v5018, %v5019
        %v5022 = vrot.slane %v5018, 4
        %v5024 = vshrl.u32 %v4530, 16
        %v5026 = vrot.slane %v5024, 7
        %v5027 = vshll.u32 %v4530, 16
        %v5029 = vor.u32 %v5026, %v5027
        %v5030 = vsel %vm4538, %v5022, %v5029
        %v5031 = vrot.slane %v5026, 4
        %v5033 = vshrl.u32 %v4531, 16
        %v5035 = vrot.slane %v5033, 7
        %v5036 = vshll.u32 %v4531, 16
        %v5038 = vor.u32 %v5035, %v5036
        %v5039 = vrot.slane %v5035, 4
        %v5041 = vshrl.u32 %v4532, 16
        %v5043 = vrot.slane %v5041, 7
        %v5044 = vshll.u32 %v4532, 16
        %v5046 = vor.u32 %v5043, %v5044
        %v5047 = vsel %vm4538, %v5039, %v5046
        %v5048 = vrot.slane %v5043, 4
        %v5050 = vshrl.u32 %v4533, 16
        %v5052 = vrot.slane %v5050, 7
        %v5053 = vshll.u32 %v4533, 16
        %v5055 = vor.u32 %v5052, %v5053
        %v5056 = vrot.slane %v5052, 4
        %v5058 = vshrl.u32 %v4534, 16
        %v5060 = vrot.slane %v5058, 7
        %v5061 = vshll.u32 %v4534, 16
        %v5063 = vor.u32 %v5060, %v5061
        %v5064 = vsel %vm4538, %v5056, %v5063
        %v5065 = vrot.slane %v5060, 4
        %v5067 = vshrl.u32 %v4535, 16
        %v5069 = vrot.slane %v5067, 7
        %v5070 = vshll.u32 %v4535, 16
        %v5072 = vor.u32 %v5069, %v5070
        %v5073 = vrot.slane %v5069, 4
        %v5075 = vshrl.u32 %v4536, 16
        %v5077 = vrot.slane %v5075, 7
        %v5078 = vshll.u32 %v4536, 16
        %v5080 = vor.u32 %v5077, %v5078
        %v5081 = vsel %vm4538, %v5073, %v5080
        %v5082 = vrot.slane %v5077, 4
        %vm5179 = vcmask 1043456
        %vm5180 = vmand %vm5179, %vm4375
        %v5181 = vld [vmem:[%s4275] sm:$0xf]
        %v5182 = vsel %vm5180, %v4545, %v5181
        %5183 = vst [vmem:[%s4275] sm:$0xf] %v5182
        %5184 = vst [vmem:[%s4275 + $0x4] sm:$0xf] %v4554
        %v5185 = vld [vmem:[%s4275 + $0x8] sm:$0x1]
        %v5186 = vsel %vm4278, %v4555, %v5185
        %5187 = vst [vmem:[%s4275 + $0x8] sm:$0x1] %v5186
        %v5188 = vld [vmem:[%s4275 + $0xc] sm:$0xf]
        %v5189 = vsel %vm5180, %v4562, %v5188
        %5190 = vst [vmem:[%s4275 + $0xc] sm:$0xf] %v5189
        %5191 = vst [vmem:[%s4275 + $0x10] sm:$0xf] %v4571
        %v5192 = vld [vmem:[%s4275 + $0x14] sm:$0x1]
        %v5193 = vsel %vm4278, %v4572, %v5192
        %5194 = vst [vmem:[%s4275 + $0x14] sm:$0x1] %v5193
        %v5195 = vld [vmem:[%s4275 + $0x18] sm:$0xf]
        %v5196 = vsel %vm5180, %v4579, %v5195
        %5197 = vst [vmem:[%s4275 + $0x18] sm:$0xf] %v5196
        %5198 = vst [vmem:[%s4275 + $0x1c] sm:$0xf] %v4588
        %v5199 = vld [vmem:[%s4275 + $0x20] sm:$0x1]
        %v5200 = vsel %vm4278, %v4589, %v5199
        %5201 = vst [vmem:[%s4275 + $0x20] sm:$0x1] %v5200
        %v5202 = vld [vmem:[%s4275 + $0x24] sm:$0xf]
        %v5203 = vsel %vm5180, %v4596, %v5202
        %5204 = vst [vmem:[%s4275 + $0x24] sm:$0xf] %v5203
        %5205 = vst [vmem:[%s4275 + $0x28] sm:$0xf] %v4605
        %v5206 = vld [vmem:[%s4275 + $0x2c] sm:$0x1]
        %v5207 = vsel %vm4278, %v4606, %v5206
        %5208 = vst [vmem:[%s4275 + $0x2c] sm:$0x1] %v5207
        %v5209 = vld [vmem:[%s4275 + $0x30] sm:$0xf]
        %v5210 = vsel %vm5180, %v4613, %v5209
        %5211 = vst [vmem:[%s4275 + $0x30] sm:$0xf] %v5210
        %5212 = vst [vmem:[%s4275 + $0x34] sm:$0xf] %v4622
        %v5213 = vld [vmem:[%s4275 + $0x38] sm:$0x1]
        %v5214 = vsel %vm4278, %v4623, %v5213
        %5215 = vst [vmem:[%s4275 + $0x38] sm:$0x1] %v5214
        %v5216 = vld [vmem:[%s4275 + $0x3c] sm:$0xf]
        %v5217 = vsel %vm5180, %v4630, %v5216
        %5218 = vst [vmem:[%s4275 + $0x3c] sm:$0xf] %v5217
        %5219 = vst [vmem:[%s4275 + $0x40] sm:$0xf] %v4639
        %v5220 = vld [vmem:[%s4275 + $0x44] sm:$0x1]
        %v5221 = vsel %vm4278, %v4640, %v5220
        %5222 = vst [vmem:[%s4275 + $0x44] sm:$0x1] %v5221
        %v5223 = vld [vmem:[%s4275 + $0x48] sm:$0xf]
        %v5224 = vsel %vm5180, %v4647, %v5223
        %5225 = vst [vmem:[%s4275 + $0x48] sm:$0xf] %v5224
        %5226 = vst [vmem:[%s4275 + $0x4c] sm:$0xf] %v4656
        %v5227 = vld [vmem:[%s4275 + $0x50] sm:$0x1]
        %v5228 = vsel %vm4278, %v4657, %v5227
        %5229 = vst [vmem:[%s4275 + $0x50] sm:$0x1] %v5228
        %v5230 = vld [vmem:[%s4275 + $0x54] sm:$0xf]
        %v5231 = vsel %vm5180, %v4664, %v5230
        %5232 = vst [vmem:[%s4275 + $0x54] sm:$0xf] %v5231
        %5233 = vst [vmem:[%s4275 + $0x58] sm:$0xf] %v4673
        %v5234 = vld [vmem:[%s4275 + $0x5c] sm:$0x1]
        %v5235 = vsel %vm4278, %v4674, %v5234
        %5236 = vst [vmem:[%s4275 + $0x5c] sm:$0x1] %v5235
        %v5237 = vld [vmem:[%s4275 + $0x60] sm:$0xf]
        %v5238 = vsel %vm5180, %v4681, %v5237
        %5239 = vst [vmem:[%s4275 + $0x60] sm:$0xf] %v5238
        %5240 = vst [vmem:[%s4275 + $0x64] sm:$0xf] %v4690
        %v5241 = vld [vmem:[%s4275 + $0x68] sm:$0x1]
        %v5242 = vsel %vm4278, %v4691, %v5241
        %5243 = vst [vmem:[%s4275 + $0x68] sm:$0x1] %v5242
        %v5244 = vld [vmem:[%s4275 + $0x6c] sm:$0xf]
        %v5245 = vsel %vm5180, %v4698, %v5244
        %5246 = vst [vmem:[%s4275 + $0x6c] sm:$0xf] %v5245
        %5247 = vst [vmem:[%s4275 + $0x70] sm:$0xf] %v4707
        %v5248 = vld [vmem:[%s4275 + $0x74] sm:$0x1]
        %v5249 = vsel %vm4278, %v4708, %v5248
        %5250 = vst [vmem:[%s4275 + $0x74] sm:$0x1] %v5249
        %v5251 = vld [vmem:[%s4275 + $0x78] sm:$0xf]
        %v5252 = vsel %vm5180, %v4715, %v5251
        %5253 = vst [vmem:[%s4275 + $0x78] sm:$0xf] %v5252
        %5254 = vst [vmem:[%s4275 + $0x7c] sm:$0xf] %v4724
        %v5255 = vld [vmem:[%s4275 + $0x80] sm:$0x1]
        %v5256 = vsel %vm4278, %v4725, %v5255
        %5257 = vst [vmem:[%s4275 + $0x80] sm:$0x1] %v5256
        %v5258 = vld [vmem:[%s4275 + $0x84] sm:$0xf]
        %v5259 = vsel %vm5180, %v4732, %v5258
        %5260 = vst [vmem:[%s4275 + $0x84] sm:$0xf] %v5259
        %5261 = vst [vmem:[%s4275 + $0x88] sm:$0xf] %v4741
        %v5262 = vld [vmem:[%s4275 + $0x8c] sm:$0x1]
        %v5263 = vsel %vm4278, %v4742, %v5262
        %5264 = vst [vmem:[%s4275 + $0x8c] sm:$0x1] %v5263
        %v5265 = vld [vmem:[%s4275 + $0x90] sm:$0xf]
        %v5266 = vsel %vm5180, %v4749, %v5265
        %5267 = vst [vmem:[%s4275 + $0x90] sm:$0xf] %v5266
        %5268 = vst [vmem:[%s4275 + $0x94] sm:$0xf] %v4758
        %v5269 = vld [vmem:[%s4275 + $0x98] sm:$0x1]
        %v5270 = vsel %vm4278, %v4759, %v5269
        %5271 = vst [vmem:[%s4275 + $0x98] sm:$0x1] %v5270
        %v5272 = vld [vmem:[%s4275 + $0x9c] sm:$0xf]
        %v5273 = vsel %vm5180, %v4766, %v5272
        %5274 = vst [vmem:[%s4275 + $0x9c] sm:$0xf] %v5273
        %5275 = vst [vmem:[%s4275 + $0xa0] sm:$0xf] %v4775
        %v5276 = vld [vmem:[%s4275 + $0xa4] sm:$0x1]
        %v5277 = vsel %vm4278, %v4776, %v5276
        %5278 = vst [vmem:[%s4275 + $0xa4] sm:$0x1] %v5277
        %v5279 = vld [vmem:[%s4275 + $0xa8] sm:$0xf]
        %v5280 = vsel %vm5180, %v4783, %v5279
        %5281 = vst [vmem:[%s4275 + $0xa8] sm:$0xf] %v5280
        %5282 = vst [vmem:[%s4275 + $0xac] sm:$0xf] %v4792
        %v5283 = vld [vmem:[%s4275 + $0xb0] sm:$0x1]
        %v5284 = vsel %vm4278, %v4793, %v5283
        %5285 = vst [vmem:[%s4275 + $0xb0] sm:$0x1] %v5284
        %v5286 = vld [vmem:[%s4275 + $0xb4] sm:$0xf]
        %v5287 = vsel %vm5180, %v4800, %v5286
        %5288 = vst [vmem:[%s4275 + $0xb4] sm:$0xf] %v5287
        %5289 = vst [vmem:[%s4275 + $0xb8] sm:$0xf] %v4809
        %v5290 = vld [vmem:[%s4275 + $0xbc] sm:$0x1]
        %v5291 = vsel %vm4278, %v4810, %v5290
        %5292 = vst [vmem:[%s4275 + $0xbc] sm:$0x1] %v5291
        %v5293 = vld [vmem:[%s4275 + $0xd8] sm:$0xf]
        %v5294 = vsel %vm5180, %v4817, %v5293
        %5295 = vst [vmem:[%s4275 + $0xd8] sm:$0xf] %v5294
        %5296 = vst [vmem:[%s4275 + $0xdc] sm:$0xf] %v4826
        %v5297 = vld [vmem:[%s4275 + $0xe0] sm:$0x1]
        %v5298 = vsel %vm4278, %v4827, %v5297
        %5299 = vst [vmem:[%s4275 + $0xe0] sm:$0x1] %v5298
        %v5300 = vld [vmem:[%s4275 + $0xe4] sm:$0xf]
        %v5301 = vsel %vm5180, %v4834, %v5300
        %5302 = vst [vmem:[%s4275 + $0xe4] sm:$0xf] %v5301
        %5303 = vst [vmem:[%s4275 + $0xe8] sm:$0xf] %v4843
        %v5304 = vld [vmem:[%s4275 + $0xec] sm:$0x1]
        %v5305 = vsel %vm4278, %v4844, %v5304
        %5306 = vst [vmem:[%s4275 + $0xec] sm:$0x1] %v5305
        %v5307 = vld [vmem:[%s4275 + $0xf0] sm:$0xf]
        %v5308 = vsel %vm5180, %v4851, %v5307
        %5309 = vst [vmem:[%s4275 + $0xf0] sm:$0xf] %v5308
        %5310 = vst [vmem:[%s4275 + $0xf4] sm:$0xf] %v4860
        %v5311 = vld [vmem:[%s4275 + $0xf8] sm:$0x1]
        %v5312 = vsel %vm4278, %v4861, %v5311
        %5313 = vst [vmem:[%s4275 + $0xf8] sm:$0x1] %v5312
        %v5314 = vld [vmem:[%s4275 + $0xfc] sm:$0xf]
        %v5315 = vsel %vm5180, %v4868, %v5314
        %5316 = vst [vmem:[%s4275 + $0xfc] sm:$0xf] %v5315
        %5317 = vst [vmem:[%s4275 + $0x100] sm:$0xf] %v4877
        %v5318 = vld [vmem:[%s4275 + $0x104] sm:$0x1]
        %v5319 = vsel %vm4278, %v4878, %v5318
        %5320 = vst [vmem:[%s4275 + $0x104] sm:$0x1] %v5319
        %v5321 = vld [vmem:[%s4275 + $0x108] sm:$0xf]
        %v5322 = vsel %vm5180, %v4885, %v5321
        %5323 = vst [vmem:[%s4275 + $0x108] sm:$0xf] %v5322
        %5324 = vst [vmem:[%s4275 + $0x10c] sm:$0xf] %v4894
        %v5325 = vld [vmem:[%s4275 + $0x110] sm:$0x1]
        %v5326 = vsel %vm4278, %v4895, %v5325
        %5327 = vst [vmem:[%s4275 + $0x110] sm:$0x1] %v5326
        %v5328 = vld [vmem:[%s4275 + $0x114] sm:$0xf]
        %v5329 = vsel %vm5180, %v4902, %v5328
        %5330 = vst [vmem:[%s4275 + $0x114] sm:$0xf] %v5329
        %5331 = vst [vmem:[%s4275 + $0x118] sm:$0xf] %v4911
        %v5332 = vld [vmem:[%s4275 + $0x11c] sm:$0x1]
        %v5333 = vsel %vm4278, %v4912, %v5332
        %5334 = vst [vmem:[%s4275 + $0x11c] sm:$0x1] %v5333
        %v5335 = vld [vmem:[%s4275 + $0x120] sm:$0xf]
        %v5336 = vsel %vm5180, %v4919, %v5335
        %5337 = vst [vmem:[%s4275 + $0x120] sm:$0xf] %v5336
        %5338 = vst [vmem:[%s4275 + $0x124] sm:$0xf] %v4928
        %v5339 = vld [vmem:[%s4275 + $0x128] sm:$0x1]
        %v5340 = vsel %vm4278, %v4929, %v5339
        %5341 = vst [vmem:[%s4275 + $0x128] sm:$0x1] %v5340
        %v5342 = vld [vmem:[%s4275 + $0x12c] sm:$0xf]
        %v5343 = vsel %vm5180, %v4936, %v5342
        %5344 = vst [vmem:[%s4275 + $0x12c] sm:$0xf] %v5343
        %5345 = vst [vmem:[%s4275 + $0x130] sm:$0xf] %v4945
        %v5346 = vld [vmem:[%s4275 + $0x134] sm:$0x1]
        %v5347 = vsel %vm4278, %v4946, %v5346
        %5348 = vst [vmem:[%s4275 + $0x134] sm:$0x1] %v5347
        %v5349 = vld [vmem:[%s4275 + $0x138] sm:$0xf]
        %v5350 = vsel %vm5180, %v4953, %v5349
        %5351 = vst [vmem:[%s4275 + $0x138] sm:$0xf] %v5350
        %5352 = vst [vmem:[%s4275 + $0x13c] sm:$0xf] %v4962
        %v5353 = vld [vmem:[%s4275 + $0x140] sm:$0x1]
        %v5354 = vsel %vm4278, %v4963, %v5353
        %5355 = vst [vmem:[%s4275 + $0x140] sm:$0x1] %v5354
        %v5356 = vld [vmem:[%s4275 + $0x144] sm:$0xf]
        %v5357 = vsel %vm5180, %v4970, %v5356
        %5358 = vst [vmem:[%s4275 + $0x144] sm:$0xf] %v5357
        %5359 = vst [vmem:[%s4275 + $0x148] sm:$0xf] %v4979
        %v5360 = vld [vmem:[%s4275 + $0x14c] sm:$0x1]
        %v5361 = vsel %vm4278, %v4980, %v5360
        %5362 = vst [vmem:[%s4275 + $0x14c] sm:$0x1] %v5361
        %v5363 = vld [vmem:[%s4275 + $0x150] sm:$0xf]
        %v5364 = vsel %vm5180, %v4987, %v5363
        %5365 = vst [vmem:[%s4275 + $0x150] sm:$0xf] %v5364
        %5366 = vst [vmem:[%s4275 + $0x154] sm:$0xf] %v4996
        %v5367 = vld [vmem:[%s4275 + $0x158] sm:$0x1]
        %v5368 = vsel %vm4278, %v4997, %v5367
        %5369 = vst [vmem:[%s4275 + $0x158] sm:$0x1] %v5368
        %v5370 = vld [vmem:[%s4275 + $0x15c] sm:$0xf]
        %v5371 = vsel %vm5180, %v5004, %v5370
        %5372 = vst [vmem:[%s4275 + $0x15c] sm:$0xf] %v5371
        %5373 = vst [vmem:[%s4275 + $0x160] sm:$0xf] %v5013
        %v5374 = vld [vmem:[%s4275 + $0x164] sm:$0x1]
        %v5375 = vsel %vm4278, %v5014, %v5374
        %5376 = vst [vmem:[%s4275 + $0x164] sm:$0x1] %v5375
        %v5377 = vld [vmem:[%s4275 + $0x168] sm:$0xf]
        %v5378 = vsel %vm5180, %v5021, %v5377
        %5379 = vst [vmem:[%s4275 + $0x168] sm:$0xf] %v5378
        %5380 = vst [vmem:[%s4275 + $0x16c] sm:$0xf] %v5030
        %v5381 = vld [vmem:[%s4275 + $0x170] sm:$0x1]
        %v5382 = vsel %vm4278, %v5031, %v5381
        %5383 = vst [vmem:[%s4275 + $0x170] sm:$0x1] %v5382
        %v5384 = vld [vmem:[%s4275 + $0x174] sm:$0xf]
        %v5385 = vsel %vm5180, %v5038, %v5384
        %5386 = vst [vmem:[%s4275 + $0x174] sm:$0xf] %v5385
        %5387 = vst [vmem:[%s4275 + $0x178] sm:$0xf] %v5047
        %v5388 = vld [vmem:[%s4275 + $0x17c] sm:$0x1]
        %v5389 = vsel %vm4278, %v5048, %v5388
        %5390 = vst [vmem:[%s4275 + $0x17c] sm:$0x1] %v5389
        %v5391 = vld [vmem:[%s4275 + $0x180] sm:$0xf]
        %v5392 = vsel %vm5180, %v5055, %v5391
        %5393 = vst [vmem:[%s4275 + $0x180] sm:$0xf] %v5392
        %5394 = vst [vmem:[%s4275 + $0x184] sm:$0xf] %v5064
        %v5395 = vld [vmem:[%s4275 + $0x188] sm:$0x1]
        %v5396 = vsel %vm4278, %v5065, %v5395
        %5397 = vst [vmem:[%s4275 + $0x188] sm:$0x1] %v5396
        %v5398 = vld [vmem:[%s4275 + $0x18c] sm:$0xf]
        %v5399 = vsel %vm5180, %v5072, %v5398
        %5400 = vst [vmem:[%s4275 + $0x18c] sm:$0xf] %v5399
        %5401 = vst [vmem:[%s4275 + $0x190] sm:$0xf] %v5081
        %v5402 = vld [vmem:[%s4275 + $0x194] sm:$0x1]
        %v5403 = vsel %vm4278, %v5082, %v5402
        %5404 = vst [vmem:[%s4275 + $0x194] sm:$0x1] %v5403
        %v5405 = vld [vmem:[#allocation2] sm:$0xf]
        %v5406 = vld [vmem:[#allocation2 + $0x4] sm:$0xf]
        %v5407 = vld [vmem:[#allocation2 + $0x8] sm:$0xf]
        %v5408 = vld [vmem:[#allocation2 + $0xc] sm:$0xf]
        %v5409 = vld [vmem:[#allocation2 + $0x10] sm:$0xf]
        %v5410 = vld [vmem:[#allocation2 + $0x14] sm:$0xf]
        %v5411 = vld [vmem:[#allocation2 + $0x18] sm:$0xf]
        %v5412 = vld [vmem:[#allocation2 + $0x1c] sm:$0xf]
        %v5413 = vld [vmem:[#allocation2 + $0x20] sm:$0xf]
        %v5414 = vld [vmem:[#allocation2 + $0x24] sm:$0xf]
        %v5415 = vld [vmem:[#allocation2 + $0x28] sm:$0xf]
        %v5416 = vld [vmem:[#allocation2 + $0x2c] sm:$0xf]
        %v5417 = vld [vmem:[#allocation2 + $0x30] sm:$0xf]
        %v5418 = vld [vmem:[#allocation2 + $0x34] sm:$0xf]
        %v5419 = vld [vmem:[#allocation2 + $0x38] sm:$0xf]
        %v5420 = vld [vmem:[#allocation2 + $0x3c] sm:$0xf]
        %v5421 = vld [vmem:[#allocation2 + $0x40] sm:$0xf]
        %v5422 = vld [vmem:[#allocation2 + $0x44] sm:$0xf]
        %v5423 = vld [vmem:[#allocation2 + $0x48] sm:$0xf]
        %v5424 = vld [vmem:[#allocation2 + $0x4c] sm:$0xf]
        %v5425 = vld [vmem:[#allocation2 + $0x50] sm:$0xf]
        %v5426 = vld [vmem:[#allocation2 + $0x54] sm:$0xf]
        %v5427 = vld [vmem:[#allocation2 + $0x58] sm:$0xf]
        %v5428 = vld [vmem:[#allocation2 + $0x5c] sm:$0xf]
        %v5429 = vld [vmem:[#allocation2 + $0x60] sm:$0xf]
        %v5430 = vld [vmem:[#allocation2 + $0x64] sm:$0xf]
        %v5431 = vld [vmem:[#allocation2 + $0x68] sm:$0xf]
        %v5432 = vld [vmem:[#allocation2 + $0x6c] sm:$0xf]
        %v5433 = vld [vmem:[#allocation2 + $0x70] sm:$0xf]
        %v5434 = vld [vmem:[#allocation2 + $0x74] sm:$0xf]
        %v5435 = vld [vmem:[#allocation2 + $0x78] sm:$0xf]
        %v5436 = vld [vmem:[#allocation2 + $0x7c] sm:$0xf]
        %v5437 = vld [vmem:[#allocation2 + $0x80] sm:$0xf]
        %v5438 = vld [vmem:[#allocation2 + $0x84] sm:$0xf]
        %v5439 = vld [vmem:[#allocation2 + $0x88] sm:$0xf]
        %v5440 = vld [vmem:[#allocation2 + $0x8c] sm:$0xf]
        %v5441 = vld [vmem:[#allocation2 + $0x90] sm:$0xf]
        %v5442 = vld [vmem:[#allocation2 + $0x94] sm:$0xf]
        %v5443 = vld [vmem:[#allocation2 + $0x98] sm:$0xf]
        %v5444 = vld [vmem:[#allocation2 + $0x9c] sm:$0xf]
        %v5445 = vld [vmem:[#allocation2 + $0xa0] sm:$0xf]
        %v5446 = vld [vmem:[#allocation2 + $0xa4] sm:$0xf]
        %v5447 = vld [vmem:[#allocation2 + $0xa8] sm:$0xf]
        %v5448 = vld [vmem:[#allocation2 + $0xac] sm:$0xf]
        %v5449 = vld [vmem:[#allocation2 + $0xb0] sm:$0xf]
        %v5450 = vld [vmem:[#allocation2 + $0xb4] sm:$0xf]
        %v5451 = vld [vmem:[#allocation2 + $0xb8] sm:$0xf]
        %v5452 = vld [vmem:[#allocation2 + $0xbc] sm:$0xf]
        %v5453 = vld [vmem:[#allocation2 + $0xc0] sm:$0xf]
        %v5454 = vld [vmem:[#allocation2 + $0xc4] sm:$0xf]
        %v5455 = vld [vmem:[#allocation2 + $0xc8] sm:$0xf]
        %v5456 = vld [vmem:[#allocation2 + $0xcc] sm:$0xf]
        %v5457 = vld [vmem:[#allocation2 + $0xd0] sm:$0xf]
        %v5458 = vld [vmem:[#allocation2 + $0xd4] sm:$0xf]
        %v5459 = vld [vmem:[#allocation2 + $0xd8] sm:$0xf]
        %v5460 = vld [vmem:[#allocation2 + $0xdc] sm:$0xf]
        %v5461 = vld [vmem:[#allocation2 + $0xe0] sm:$0xf]
        %v5462 = vld [vmem:[#allocation2 + $0xe4] sm:$0xf]
        %v5463 = vld [vmem:[#allocation2 + $0xe8] sm:$0xf]
        %v5464 = vld [vmem:[#allocation2 + $0xec] sm:$0xf]
        %v5465 = vld [vmem:[#allocation2 + $0xf0] sm:$0xf]
        %v5466 = vld [vmem:[#allocation2 + $0xf4] sm:$0xf]
        %v5467 = vld [vmem:[#allocation2 + $0xf8] sm:$0xf]
        %v5468 = vld [vmem:[#allocation2 + $0xfc] sm:$0xf]
        %v5469 = vld [vmem:[#allocation2 + $0x100] sm:$0xf]
        %v5470 = vld [vmem:[#allocation2 + $0x104] sm:$0xf]
        %v5471 = vld [vmem:[#allocation2 + $0x108] sm:$0xf]
        %v5472 = vld [vmem:[#allocation2 + $0x10c] sm:$0xf]
        %v5473 = vld [vmem:[#allocation2 + $0x110] sm:$0xf]
        %v5474 = vld [vmem:[#allocation2 + $0x114] sm:$0xf]
        %v5475 = vld [vmem:[#allocation2 + $0x118] sm:$0xf]
        %v5476 = vld [vmem:[#allocation2 + $0x11c] sm:$0xf]
        %v5477 = vld [vmem:[#allocation2 + $0x120] sm:$0xf]
        %v5478 = vld [vmem:[#allocation2 + $0x124] sm:$0xf]
        %v5479 = vld [vmem:[#allocation2 + $0x128] sm:$0xf]
        %v5480 = vld [vmem:[#allocation2 + $0x12c] sm:$0xf]
        %v5481 = vld [vmem:[#allocation2 + $0x130] sm:$0xf]
        %v5482 = vld [vmem:[#allocation2 + $0x134] sm:$0xf]
        %v5483 = vld [vmem:[#allocation2 + $0x138] sm:$0xf]
        %v5484 = vld [vmem:[#allocation2 + $0x13c] sm:$0xf]
        %v5485 = vld [vmem:[#allocation2 + $0x140] sm:$0xf]
        %v5486 = vld [vmem:[#allocation2 + $0x144] sm:$0xf]
        %v5487 = vld [vmem:[#allocation2 + $0x148] sm:$0xf]
        %v5488 = vld [vmem:[#allocation2 + $0x14c] sm:$0xf]
        %v5489 = vld [vmem:[#allocation2 + $0x150] sm:$0xf]
        %v5490 = vld [vmem:[#allocation2 + $0x154] sm:$0xf]
        %v5491 = vld [vmem:[#allocation2 + $0x158] sm:$0xf]
        %v5492 = vld [vmem:[#allocation2 + $0x15c] sm:$0xf]
        %v5493 = vld [vmem:[#allocation2 + $0x160] sm:$0xf]
        %v5494 = vld [vmem:[#allocation2 + $0x164] sm:$0xf]
        %v5495 = vld [vmem:[#allocation2 + $0x168] sm:$0xf]
        %v5496 = vld [vmem:[#allocation2 + $0x16c] sm:$0xf]
        %v5497 = vld [vmem:[#allocation2 + $0x170] sm:$0xf]
        %v5498 = vld [vmem:[#allocation2 + $0x174] sm:$0xf]
        %v5499 = vld [vmem:[#allocation2 + $0x178] sm:$0xf]
        %v5500 = vld [vmem:[#allocation2 + $0x17c] sm:$0xf]
        %v5501 = vld [vmem:[#allocation2 + $0x180] sm:$0xf]
        %v5502 = vld [vmem:[#allocation2 + $0x184] sm:$0xf]
        %v5503 = vld [vmem:[#allocation2 + $0x188] sm:$0xf]
        %v5504 = vld [vmem:[#allocation2 + $0x18c] sm:$0xf]
        %v5505 = vld [vmem:[#allocation2 + $0x190] sm:$0xf]
        %v5506 = vld [vmem:[#allocation2 + $0x194] sm:$0xf]
        %v5507 = vld [vmem:[#allocation2 + $0x198] sm:$0xf]
        %v5508 = vld [vmem:[#allocation2 + $0x19c] sm:$0xf]
        %v5509 = vld [vmem:[#allocation2 + $0x1a0] sm:$0xf]
        %v5510 = vld [vmem:[#allocation2 + $0x1a4] sm:$0xf]
        %v5511 = vld [vmem:[#allocation2 + $0x1a8] sm:$0xf]
        %v5512 = vld [vmem:[#allocation2 + $0x1ac] sm:$0xf]
        %v5513 = vld [vmem:[%s6] sm:$0x1]
        %v5578 = vunpack.c.l.b16 %v5405
        %v5579 = vunpack.c.l.b16 %v5406
        %v5580 = vunpack.c.l.b16 %v5408
        %v5581 = vunpack.c.l.b16 %v5409
        %v5582 = vunpack.c.l.b16 %v5411
        %v5583 = vunpack.c.l.b16 %v5412
        %v5584 = vunpack.c.l.b16 %v5414
        %v5585 = vunpack.c.l.b16 %v5415
        %v5586 = vunpack.c.l.b16 %v5417
        %v5587 = vunpack.c.l.b16 %v5418
        %v5588 = vunpack.c.l.b16 %v5420
        %v5589 = vunpack.c.l.b16 %v5421
        %v5590 = vunpack.c.l.b16 %v5423
        %v5591 = vunpack.c.l.b16 %v5424
        %v5592 = vunpack.c.l.b16 %v5426
        %v5593 = vunpack.c.l.b16 %v5427
        %v5594 = vunpack.c.l.b16 %v5429
        %v5595 = vunpack.c.l.b16 %v5430
        %v5596 = vunpack.c.l.b16 %v5432
        %v5597 = vunpack.c.l.b16 %v5433
        %v5598 = vunpack.c.l.b16 %v5435
        %v5599 = vunpack.c.l.b16 %v5436
        %v5600 = vunpack.c.l.b16 %v5438
        %v5601 = vunpack.c.l.b16 %v5439
        %v5602 = vunpack.c.l.b16 %v5441
        %v5603 = vunpack.c.l.b16 %v5442
        %v5604 = vunpack.c.l.b16 %v5444
        %v5605 = vunpack.c.l.b16 %v5445
        %v5606 = vunpack.c.l.b16 %v5447
        %v5607 = vunpack.c.l.b16 %v5448
        %v5608 = vunpack.c.l.b16 %v5450
        %v5609 = vunpack.c.l.b16 %v5451
        %v5610 = vunpack.c.l.b16 %v5459
        %v5611 = vunpack.c.l.b16 %v5460
        %v5612 = vunpack.c.l.b16 %v5462
        %v5613 = vunpack.c.l.b16 %v5463
        %v5614 = vunpack.c.l.b16 %v5465
        %v5615 = vunpack.c.l.b16 %v5466
        %v5616 = vunpack.c.l.b16 %v5468
        %v5617 = vunpack.c.l.b16 %v5469
        %v5618 = vunpack.c.l.b16 %v5471
        %v5619 = vunpack.c.l.b16 %v5472
        %v5620 = vunpack.c.l.b16 %v5474
        %v5621 = vunpack.c.l.b16 %v5475
        %v5622 = vunpack.c.l.b16 %v5477
        %v5623 = vunpack.c.l.b16 %v5478
        %v5624 = vunpack.c.l.b16 %v5480
        %v5625 = vunpack.c.l.b16 %v5481
        %v5626 = vunpack.c.l.b16 %v5483
        %v5627 = vunpack.c.l.b16 %v5484
        %v5628 = vunpack.c.l.b16 %v5486
        %v5629 = vunpack.c.l.b16 %v5487
        %v5630 = vunpack.c.l.b16 %v5489
        %v5631 = vunpack.c.l.b16 %v5490
        %v5632 = vunpack.c.l.b16 %v5492
        %v5633 = vunpack.c.l.b16 %v5493
        %v5634 = vunpack.c.l.b16 %v5495
        %v5635 = vunpack.c.l.b16 %v5496
        %v5636 = vunpack.c.l.b16 %v5498
        %v5637 = vunpack.c.l.b16 %v5499
        %v5638 = vunpack.c.l.b16 %v5501
        %v5639 = vunpack.c.l.b16 %v5502
        %v5640 = vunpack.c.l.b16 %v5504
        %v5641 = vunpack.c.l.b16 %v5505
        %v5642 = vpack.c.b16 %v5579, %v5578
        %v5643 = vpack.c.b16 %v5581, %v5580
        %v5644 = vpack.c.b16 %v5583, %v5582
        %v5645 = vpack.c.b16 %v5585, %v5584
        %v5646 = vpack.c.b16 %v5587, %v5586
        %v5647 = vpack.c.b16 %v5589, %v5588
        %v5648 = vpack.c.b16 %v5591, %v5590
        %v5649 = vpack.c.b16 %v5593, %v5592
        %v5650 = vpack.c.b16 %v5595, %v5594
        %v5651 = vpack.c.b16 %v5597, %v5596
        %v5652 = vpack.c.b16 %v5599, %v5598
        %v5653 = vpack.c.b16 %v5601, %v5600
        %v5654 = vpack.c.b16 %v5603, %v5602
        %v5655 = vpack.c.b16 %v5605, %v5604
        %v5656 = vpack.c.b16 %v5607, %v5606
        %v5657 = vpack.c.b16 %v5609, %v5608
        %v5658 = vpack.c.b16 %v5611, %v5610
        %v5659 = vpack.c.b16 %v5613, %v5612
        %v5660 = vpack.c.b16 %v5615, %v5614
        %v5661 = vpack.c.b16 %v5617, %v5616
        %v5662 = vpack.c.b16 %v5619, %v5618
        %v5663 = vpack.c.b16 %v5621, %v5620
        %v5664 = vpack.c.b16 %v5623, %v5622
        %v5665 = vpack.c.b16 %v5625, %v5624
        %v5666 = vpack.c.b16 %v5627, %v5626
        %v5667 = vpack.c.b16 %v5629, %v5628
        %v5668 = vpack.c.b16 %v5631, %v5630
        %v5669 = vpack.c.b16 %v5633, %v5632
        %v5670 = vpack.c.b16 %v5635, %v5634
        %v5671 = vpack.c.b16 %v5637, %v5636
        %v5672 = vpack.c.b16 %v5639, %v5638
        %v5673 = vpack.c.b16 %v5641, %v5640
        %v5738 = vunpack.c.l.b16 %v5407
        %v5739 = vunpack.c.l.b16 %v5410
        %v5740 = vunpack.c.l.b16 %v5413
        %v5741 = vunpack.c.l.b16 %v5416
        %v5742 = vunpack.c.l.b16 %v5419
        %v5743 = vunpack.c.l.b16 %v5422
        %v5744 = vunpack.c.l.b16 %v5425
        %v5745 = vunpack.c.l.b16 %v5428
        %v5746 = vunpack.c.l.b16 %v5431
        %v5747 = vunpack.c.l.b16 %v5434
        %v5748 = vunpack.c.l.b16 %v5437
        %v5749 = vunpack.c.l.b16 %v5440
        %v5750 = vunpack.c.l.b16 %v5443
        %v5751 = vunpack.c.l.b16 %v5446
        %v5752 = vunpack.c.l.b16 %v5449
        %v5753 = vunpack.c.l.b16 %v5452
        %v5754 = vunpack.c.l.b16 %v5461
        %v5755 = vunpack.c.l.b16 %v5464
        %v5756 = vunpack.c.l.b16 %v5467
        %v5757 = vunpack.c.l.b16 %v5470
        %v5758 = vunpack.c.l.b16 %v5473
        %v5759 = vunpack.c.l.b16 %v5476
        %v5760 = vunpack.c.l.b16 %v5479
        %v5761 = vunpack.c.l.b16 %v5482
        %v5762 = vunpack.c.l.b16 %v5485
        %v5763 = vunpack.c.l.b16 %v5488
        %v5764 = vunpack.c.l.b16 %v5491
        %v5765 = vunpack.c.l.b16 %v5494
        %v5766 = vunpack.c.l.b16 %v5497
        %v5767 = vunpack.c.l.b16 %v5500
        %v5768 = vunpack.c.l.b16 %v5503
        %v5769 = vunpack.c.l.b16 %v5506
        %v5770 = vpack.c.b16 %v5738, %v5738
        %v5771 = vpack.c.b16 %v5739, %v5739
        %v5772 = vpack.c.b16 %v5740, %v5740
        %v5773 = vpack.c.b16 %v5741, %v5741
        %v5774 = vpack.c.b16 %v5742, %v5742
        %v5775 = vpack.c.b16 %v5743, %v5743
        %v5776 = vpack.c.b16 %v5744, %v5744
        %v5777 = vpack.c.b16 %v5745, %v5745
        %v5778 = vpack.c.b16 %v5746, %v5746
        %v5779 = vpack.c.b16 %v5747, %v5747
        %v5780 = vpack.c.b16 %v5748, %v5748
        %v5781 = vpack.c.b16 %v5749, %v5749
        %v5782 = vpack.c.b16 %v5750, %v5750
        %v5783 = vpack.c.b16 %v5751, %v5751
        %v5784 = vpack.c.b16 %v5752, %v5752
        %v5785 = vpack.c.b16 %v5753, %v5753
        %v5786 = vpack.c.b16 %v5754, %v5754
        %v5787 = vpack.c.b16 %v5755, %v5755
        %v5788 = vpack.c.b16 %v5756, %v5756
        %v5789 = vpack.c.b16 %v5757, %v5757
        %v5790 = vpack.c.b16 %v5758, %v5758
        %v5791 = vpack.c.b16 %v5759, %v5759
        %v5792 = vpack.c.b16 %v5760, %v5760
        %v5793 = vpack.c.b16 %v5761, %v5761
        %v5794 = vpack.c.b16 %v5762, %v5762
        %v5795 = vpack.c.b16 %v5763, %v5763
        %v5796 = vpack.c.b16 %v5764, %v5764
        %v5797 = vpack.c.b16 %v5765, %v5765
        %v5798 = vpack.c.b16 %v5766, %v5766
        %v5799 = vpack.c.b16 %v5767, %v5767
        %v5800 = vpack.c.b16 %v5768, %v5768
        %v5801 = vpack.c.b16 %v5769, %v5769
        %v5803 = vshrl.u32 %v5642, 16
        %v5805 = vshll.u32 %v5642, 16
        %v5807 = vrot.slane %v5805, 1
        %v5808 = vor.u32 %v5803, %v5807
        %v5810 = vshll.u32 %v5770, 16
        %v5812 = vrot.slane %v5810, 1
        %v5813 = vsel %vm966, %v5808, %v5812
        %v5815 = vshrl.u32 %v5643, 16
        %v5817 = vshll.u32 %v5643, 16
        %v5819 = vrot.slane %v5817, 1
        %v5820 = vor.u32 %v5815, %v5819
        %v5822 = vshll.u32 %v5771, 16
        %v5824 = vrot.slane %v5822, 1
        %v5825 = vsel %vm966, %v5820, %v5824
        %v5827 = vshrl.u32 %v5644, 16
        %v5829 = vshll.u32 %v5644, 16
        %v5831 = vrot.slane %v5829, 1
        %v5832 = vor.u32 %v5827, %v5831
        %v5834 = vshll.u32 %v5772, 16
        %v5836 = vrot.slane %v5834, 1
        %v5837 = vsel %vm966, %v5832, %v5836
        %v5839 = vshrl.u32 %v5645, 16
        %v5841 = vshll.u32 %v5645, 16
        %v5843 = vrot.slane %v5841, 1
        %v5844 = vor.u32 %v5839, %v5843
        %v5846 = vshll.u32 %v5773, 16
        %v5848 = vrot.slane %v5846, 1
        %v5849 = vsel %vm966, %v5844, %v5848
        %v5851 = vshrl.u32 %v5646, 16
        %v5853 = vshll.u32 %v5646, 16
        %v5855 = vrot.slane %v5853, 1
        %v5856 = vor.u32 %v5851, %v5855
        %v5858 = vshll.u32 %v5774, 16
        %v5860 = vrot.slane %v5858, 1
        %v5861 = vsel %vm966, %v5856, %v5860
        %v5863 = vshrl.u32 %v5647, 16
        %v5865 = vshll.u32 %v5647, 16
        %v5867 = vrot.slane %v5865, 1
        %v5868 = vor.u32 %v5863, %v5867
        %v5870 = vshll.u32 %v5775, 16
        %v5872 = vrot.slane %v5870, 1
        %v5873 = vsel %vm966, %v5868, %v5872
        %v5875 = vshrl.u32 %v5648, 16
        %v5877 = vshll.u32 %v5648, 16
        %v5879 = vrot.slane %v5877, 1
        %v5880 = vor.u32 %v5875, %v5879
        %v5882 = vshll.u32 %v5776, 16
        %v5884 = vrot.slane %v5882, 1
        %v5885 = vsel %vm966, %v5880, %v5884
        %v5887 = vshrl.u32 %v5649, 16
        %v5889 = vshll.u32 %v5649, 16
        %v5891 = vrot.slane %v5889, 1
        %v5892 = vor.u32 %v5887, %v5891
        %v5894 = vshll.u32 %v5777, 16
        %v5896 = vrot.slane %v5894, 1
        %v5897 = vsel %vm966, %v5892, %v5896
        %v5899 = vshrl.u32 %v5650, 16
        %v5901 = vshll.u32 %v5650, 16
        %v5903 = vrot.slane %v5901, 1
        %v5904 = vor.u32 %v5899, %v5903
        %v5906 = vshll.u32 %v5778, 16
        %v5908 = vrot.slane %v5906, 1
        %v5909 = vsel %vm966, %v5904, %v5908
        %v5911 = vshrl.u32 %v5651, 16
        %v5913 = vshll.u32 %v5651, 16
        %v5915 = vrot.slane %v5913, 1
        %v5916 = vor.u32 %v5911, %v5915
        %v5918 = vshll.u32 %v5779, 16
        %v5920 = vrot.slane %v5918, 1
        %v5921 = vsel %vm966, %v5916, %v5920
        %v5923 = vshrl.u32 %v5652, 16
        %v5925 = vshll.u32 %v5652, 16
        %v5927 = vrot.slane %v5925, 1
        %v5928 = vor.u32 %v5923, %v5927
        %v5930 = vshll.u32 %v5780, 16
        %v5932 = vrot.slane %v5930, 1
        %v5933 = vsel %vm966, %v5928, %v5932
        %v5935 = vshrl.u32 %v5653, 16
        %v5937 = vshll.u32 %v5653, 16
        %v5939 = vrot.slane %v5937, 1
        %v5940 = vor.u32 %v5935, %v5939
        %v5942 = vshll.u32 %v5781, 16
        %v5944 = vrot.slane %v5942, 1
        %v5945 = vsel %vm966, %v5940, %v5944
        %v5947 = vshrl.u32 %v5654, 16
        %v5949 = vshll.u32 %v5654, 16
        %v5951 = vrot.slane %v5949, 1
        %v5952 = vor.u32 %v5947, %v5951
        %v5954 = vshll.u32 %v5782, 16
        %v5956 = vrot.slane %v5954, 1
        %v5957 = vsel %vm966, %v5952, %v5956
        %v5959 = vshrl.u32 %v5655, 16
        %v5961 = vshll.u32 %v5655, 16
        %v5963 = vrot.slane %v5961, 1
        %v5964 = vor.u32 %v5959, %v5963
        %v5966 = vshll.u32 %v5783, 16
        %v5968 = vrot.slane %v5966, 1
        %v5969 = vsel %vm966, %v5964, %v5968
        %v5971 = vshrl.u32 %v5656, 16
        %v5973 = vshll.u32 %v5656, 16
        %v5975 = vrot.slane %v5973, 1
        %v5976 = vor.u32 %v5971, %v5975
        %v5978 = vshll.u32 %v5784, 16
        %v5980 = vrot.slane %v5978, 1
        %v5981 = vsel %vm966, %v5976, %v5980
        %v5983 = vshrl.u32 %v5657, 16
        %v5985 = vshll.u32 %v5657, 16
        %v5987 = vrot.slane %v5985, 1
        %v5988 = vor.u32 %v5983, %v5987
        %v5990 = vshll.u32 %v5785, 16
        %v5992 = vrot.slane %v5990, 1
        %v5993 = vsel %vm966, %v5988, %v5992
        %v5995 = vshrl.u32 %v5658, 16
        %v5997 = vshll.u32 %v5658, 16
        %v5999 = vrot.slane %v5997, 1
        %v6000 = vor.u32 %v5995, %v5999
        %v6002 = vshll.u32 %v5786, 16
        %v6004 = vrot.slane %v6002, 1
        %v6005 = vsel %vm966, %v6000, %v6004
        %v6007 = vshrl.u32 %v5659, 16
        %v6009 = vshll.u32 %v5659, 16
        %v6011 = vrot.slane %v6009, 1
        %v6012 = vor.u32 %v6007, %v6011
        %v6014 = vshll.u32 %v5787, 16
        %v6016 = vrot.slane %v6014, 1
        %v6017 = vsel %vm966, %v6012, %v6016
        %v6019 = vshrl.u32 %v5660, 16
        %v6021 = vshll.u32 %v5660, 16
        %v6023 = vrot.slane %v6021, 1
        %v6024 = vor.u32 %v6019, %v6023
        %v6026 = vshll.u32 %v5788, 16
        %v6028 = vrot.slane %v6026, 1
        %v6029 = vsel %vm966, %v6024, %v6028
        %v6031 = vshrl.u32 %v5661, 16
        %v6033 = vshll.u32 %v5661, 16
        %v6035 = vrot.slane %v6033, 1
        %v6036 = vor.u32 %v6031, %v6035
        %v6038 = vshll.u32 %v5789, 16
        %v6040 = vrot.slane %v6038, 1
        %v6041 = vsel %vm966, %v6036, %v6040
        %v6043 = vshrl.u32 %v5662, 16
        %v6045 = vshll.u32 %v5662, 16
        %v6047 = vrot.slane %v6045, 1
        %v6048 = vor.u32 %v6043, %v6047
        %v6050 = vshll.u32 %v5790, 16
        %v6052 = vrot.slane %v6050, 1
        %v6053 = vsel %vm966, %v6048, %v6052
        %v6055 = vshrl.u32 %v5663, 16
        %v6057 = vshll.u32 %v5663, 16
        %v6059 = vrot.slane %v6057, 1
        %v6060 = vor.u32 %v6055, %v6059
        %v6062 = vshll.u32 %v5791, 16
        %v6064 = vrot.slane %v6062, 1
        %v6065 = vsel %vm966, %v6060, %v6064
        %v6067 = vshrl.u32 %v5664, 16
        %v6069 = vshll.u32 %v5664, 16
        %v6071 = vrot.slane %v6069, 1
        %v6072 = vor.u32 %v6067, %v6071
        %v6074 = vshll.u32 %v5792, 16
        %v6076 = vrot.slane %v6074, 1
        %v6077 = vsel %vm966, %v6072, %v6076
        %v6079 = vshrl.u32 %v5665, 16
        %v6081 = vshll.u32 %v5665, 16
        %v6083 = vrot.slane %v6081, 1
        %v6084 = vor.u32 %v6079, %v6083
        %v6086 = vshll.u32 %v5793, 16
        %v6088 = vrot.slane %v6086, 1
        %v6089 = vsel %vm966, %v6084, %v6088
        %v6091 = vshrl.u32 %v5666, 16
        %v6093 = vshll.u32 %v5666, 16
        %v6095 = vrot.slane %v6093, 1
        %v6096 = vor.u32 %v6091, %v6095
        %v6098 = vshll.u32 %v5794, 16
        %v6100 = vrot.slane %v6098, 1
        %v6101 = vsel %vm966, %v6096, %v6100
        %v6103 = vshrl.u32 %v5667, 16
        %v6105 = vshll.u32 %v5667, 16
        %v6107 = vrot.slane %v6105, 1
        %v6108 = vor.u32 %v6103, %v6107
        %v6110 = vshll.u32 %v5795, 16
        %v6112 = vrot.slane %v6110, 1
        %v6113 = vsel %vm966, %v6108, %v6112
        %v6115 = vshrl.u32 %v5668, 16
        %v6117 = vshll.u32 %v5668, 16
        %v6119 = vrot.slane %v6117, 1
        %v6120 = vor.u32 %v6115, %v6119
        %v6122 = vshll.u32 %v5796, 16
        %v6124 = vrot.slane %v6122, 1
        %v6125 = vsel %vm966, %v6120, %v6124
        %v6127 = vshrl.u32 %v5669, 16
        %v6129 = vshll.u32 %v5669, 16
        %v6131 = vrot.slane %v6129, 1
        %v6132 = vor.u32 %v6127, %v6131
        %v6134 = vshll.u32 %v5797, 16
        %v6136 = vrot.slane %v6134, 1
        %v6137 = vsel %vm966, %v6132, %v6136
        %v6139 = vshrl.u32 %v5670, 16
        %v6141 = vshll.u32 %v5670, 16
        %v6143 = vrot.slane %v6141, 1
        %v6144 = vor.u32 %v6139, %v6143
        %v6146 = vshll.u32 %v5798, 16
        %v6148 = vrot.slane %v6146, 1
        %v6149 = vsel %vm966, %v6144, %v6148
        %v6151 = vshrl.u32 %v5671, 16
        %v6153 = vshll.u32 %v5671, 16
        %v6155 = vrot.slane %v6153, 1
        %v6156 = vor.u32 %v6151, %v6155
        %v6158 = vshll.u32 %v5799, 16
        %v6160 = vrot.slane %v6158, 1
        %v6161 = vsel %vm966, %v6156, %v6160
        %v6163 = vshrl.u32 %v5672, 16
        %v6165 = vshll.u32 %v5672, 16
        %v6167 = vrot.slane %v6165, 1
        %v6168 = vor.u32 %v6163, %v6167
        %v6170 = vshll.u32 %v5800, 16
        %v6172 = vrot.slane %v6170, 1
        %v6173 = vsel %vm966, %v6168, %v6172
        %v6175 = vshrl.u32 %v5673, 16
        %v6177 = vshll.u32 %v5673, 16
        %v6179 = vrot.slane %v6177, 1
        %v6180 = vor.u32 %v6175, %v6179
        %v6182 = vshll.u32 %v5801, 16
        %v6184 = vrot.slane %v6182, 1
        %v6185 = vsel %vm966, %v6180, %v6184
        %v6218 = vrot.slane %v5642, 1
        %v6219 = vrot.slane %v5770, 1
        %v6220 = vsel %vm1383, %v6218, %v6219
        %v6221 = vrot.slane %v5643, 1
        %v6222 = vrot.slane %v5771, 1
        %v6223 = vsel %vm1383, %v6221, %v6222
        %v6224 = vrot.slane %v5644, 1
        %v6225 = vrot.slane %v5772, 1
        %v6226 = vsel %vm1383, %v6224, %v6225
        %v6227 = vrot.slane %v5645, 1
        %v6228 = vrot.slane %v5773, 1
        %v6229 = vsel %vm1383, %v6227, %v6228
        %v6230 = vrot.slane %v5646, 1
        %v6231 = vrot.slane %v5774, 1
        %v6232 = vsel %vm1383, %v6230, %v6231
        %v6233 = vrot.slane %v5647, 1
        %v6234 = vrot.slane %v5775, 1
        %v6235 = vsel %vm1383, %v6233, %v6234
        %v6236 = vrot.slane %v5648, 1
        %v6237 = vrot.slane %v5776, 1
        %v6238 = vsel %vm1383, %v6236, %v6237
        %v6239 = vrot.slane %v5649, 1
        %v6240 = vrot.slane %v5777, 1
        %v6241 = vsel %vm1383, %v6239, %v6240
        %v6242 = vrot.slane %v5650, 1
        %v6243 = vrot.slane %v5778, 1
        %v6244 = vsel %vm1383, %v6242, %v6243
        %v6245 = vrot.slane %v5651, 1
        %v6246 = vrot.slane %v5779, 1
        %v6247 = vsel %vm1383, %v6245, %v6246
        %v6248 = vrot.slane %v5652, 1
        %v6249 = vrot.slane %v5780, 1
        %v6250 = vsel %vm1383, %v6248, %v6249
        %v6251 = vrot.slane %v5653, 1
        %v6252 = vrot.slane %v5781, 1
        %v6253 = vsel %vm1383, %v6251, %v6252
        %v6254 = vrot.slane %v5654, 1
        %v6255 = vrot.slane %v5782, 1
        %v6256 = vsel %vm1383, %v6254, %v6255
        %v6257 = vrot.slane %v5655, 1
        %v6258 = vrot.slane %v5783, 1
        %v6259 = vsel %vm1383, %v6257, %v6258
        %v6260 = vrot.slane %v5656, 1
        %v6261 = vrot.slane %v5784, 1
        %v6262 = vsel %vm1383, %v6260, %v6261
        %v6263 = vrot.slane %v5657, 1
        %v6264 = vrot.slane %v5785, 1
        %v6265 = vsel %vm1383, %v6263, %v6264
        %v6266 = vrot.slane %v5658, 1
        %v6267 = vrot.slane %v5786, 1
        %v6268 = vsel %vm1383, %v6266, %v6267
        %v6269 = vrot.slane %v5659, 1
        %v6270 = vrot.slane %v5787, 1
        %v6271 = vsel %vm1383, %v6269, %v6270
        %v6272 = vrot.slane %v5660, 1
        %v6273 = vrot.slane %v5788, 1
        %v6274 = vsel %vm1383, %v6272, %v6273
        %v6275 = vrot.slane %v5661, 1
        %v6276 = vrot.slane %v5789, 1
        %v6277 = vsel %vm1383, %v6275, %v6276
        %v6278 = vrot.slane %v5662, 1
        %v6279 = vrot.slane %v5790, 1
        %v6280 = vsel %vm1383, %v6278, %v6279
        %v6281 = vrot.slane %v5663, 1
        %v6282 = vrot.slane %v5791, 1
        %v6283 = vsel %vm1383, %v6281, %v6282
        %v6284 = vrot.slane %v5664, 1
        %v6285 = vrot.slane %v5792, 1
        %v6286 = vsel %vm1383, %v6284, %v6285
        %v6287 = vrot.slane %v5665, 1
        %v6288 = vrot.slane %v5793, 1
        %v6289 = vsel %vm1383, %v6287, %v6288
        %v6290 = vrot.slane %v5666, 1
        %v6291 = vrot.slane %v5794, 1
        %v6292 = vsel %vm1383, %v6290, %v6291
        %v6293 = vrot.slane %v5667, 1
        %v6294 = vrot.slane %v5795, 1
        %v6295 = vsel %vm1383, %v6293, %v6294
        %v6296 = vrot.slane %v5668, 1
        %v6297 = vrot.slane %v5796, 1
        %v6298 = vsel %vm1383, %v6296, %v6297
        %v6299 = vrot.slane %v5669, 1
        %v6300 = vrot.slane %v5797, 1
        %v6301 = vsel %vm1383, %v6299, %v6300
        %v6302 = vrot.slane %v5670, 1
        %v6303 = vrot.slane %v5798, 1
        %v6304 = vsel %vm1383, %v6302, %v6303
        %v6305 = vrot.slane %v5671, 1
        %v6306 = vrot.slane %v5799, 1
        %v6307 = vsel %vm1383, %v6305, %v6306
        %v6308 = vrot.slane %v5672, 1
        %v6309 = vrot.slane %v5800, 1
        %v6310 = vsel %vm1383, %v6308, %v6309
        %v6311 = vrot.slane %v5673, 1
        %v6312 = vrot.slane %v5801, 1
        %v6313 = vsel %vm1383, %v6311, %v6312
        %v6350 = vunpack.c.l.b16 %v5453
        %v6351 = vunpack.c.l.b16 %v5454
        %v6352 = vunpack.c.l.b16 %v5507
        %v6353 = vunpack.c.l.b16 %v5508
        %v6354 = vpack.c.b16 %v6351, %v6350
        %v6355 = vpack.c.b16 %v6353, %v6352
        %v6360 = vunpack.c.l.b16 %v5455
        %v6361 = vunpack.c.l.b16 %v5509
        %v6362 = vpack.c.b16 %v6360, %v6360
        %v6363 = vpack.c.b16 %v6361, %v6361
        %v6365 = vshrl.u32 %v6354, 16
        %v6367 = vshll.u32 %v6354, 16
        %v6369 = vrot.slane %v6367, 1
        %v6370 = vor.u32 %v6365, %v6369
        %v6372 = vshll.u32 %v6362, 16
        %v6374 = vrot.slane %v6372, 1
        %v6375 = vsel %vm966, %v6370, %v6374
        %v6377 = vshrl.u32 %v6355, 16
        %v6379 = vshll.u32 %v6355, 16
        %v6381 = vrot.slane %v6379, 1
        %v6382 = vor.u32 %v6377, %v6381
        %v6384 = vshll.u32 %v6363, 16
        %v6386 = vrot.slane %v6384, 1
        %v6387 = vsel %vm966, %v6382, %v6386
        %v6390 = vrot.slane %v6354, 1
        %v6391 = vrot.slane %v6362, 1
        %v6392 = vsel %vm1383, %v6390, %v6391
        %v6393 = vrot.slane %v6355, 1
        %v6394 = vrot.slane %v6363, 1
        %v6395 = vsel %vm1383, %v6393, %v6394
        %v6402 = vunpack.c.l.b16 %v5456
        %v6403 = vunpack.c.l.b16 %v5457
        %v6404 = vunpack.c.l.b16 %v5510
        %v6405 = vunpack.c.l.b16 %v5511
        %v6406 = vpack.c.b16 %v6403, %v6402
        %v6407 = vpack.c.b16 %v6405, %v6404
        %v6412 = vunpack.c.l.b16 %v5458
        %v6413 = vunpack.c.l.b16 %v5512
        %v6414 = vpack.c.b16 %v6412, %v6412
        %v6415 = vpack.c.b16 %v6413, %v6413
        %v6417 = vshrl.u32 %v6406, 16
        %v6419 = vshll.u32 %v6406, 16
        %v6421 = vrot.slane %v6419, 1
        %v6422 = vor.u32 %v6417, %v6421
        %v6424 = vshll.u32 %v6414, 16
        %v6426 = vrot.slane %v6424, 1
        %v6427 = vsel %vm966, %v6422, %v6426
        %v6429 = vshrl.u32 %v6407, 16
        %v6431 = vshll.u32 %v6407, 16
        %v6433 = vrot.slane %v6431, 1
        %v6434 = vor.u32 %v6429, %v6433
        %v6436 = vshll.u32 %v6415, 16
        %v6438 = vrot.slane %v6436, 1
        %v6439 = vsel %vm966, %v6434, %v6438
        %v6442 = vrot.slane %v6406, 1
        %v6443 = vrot.slane %v6414, 1
        %v6444 = vsel %vm1383, %v6442, %v6443
        %v6445 = vrot.slane %v6407, 1
        %v6446 = vrot.slane %v6415, 1
        %v6447 = vsel %vm1383, %v6445, %v6446
        %v6450 = vld [vmem:[#allocation8] sm:$0xf]
        %v6451 = vld [vmem:[#allocation8 + $0x4] sm:$0xf]
        %v6452 = vld [vmem:[#allocation8 + $0x8] sm:$0xf]
        %v6453 = vld [vmem:[#allocation8 + $0xc] sm:$0xf]
        %v6454 = vld [vmem:[#allocation8 + $0x10] sm:$0xf]
        %v6455 = vld [vmem:[#allocation8 + $0x14] sm:$0xf]
        %v6456 = vld [vmem:[#allocation8 + $0x18] sm:$0xf]
        %v6457 = vld [vmem:[#allocation8 + $0x1c] sm:$0xf]
        %v6458 = vld [vmem:[#allocation8 + $0x20] sm:$0xf]
        %v6459 = vld [vmem:[#allocation8 + $0x24] sm:$0xf]
        %v6460 = vld [vmem:[#allocation8 + $0x28] sm:$0xf]
        %v6461 = vld [vmem:[#allocation8 + $0x2c] sm:$0xf]
        %v6462 = vld [vmem:[#allocation8 + $0x30] sm:$0xf]
        %v6463 = vld [vmem:[#allocation8 + $0x34] sm:$0xf]
        %v6464 = vld [vmem:[#allocation8 + $0x38] sm:$0xf]
        %v6465 = vld [vmem:[#allocation8 + $0x3c] sm:$0xf]
        %v6466 = vld [vmem:[#allocation8 + $0x40] sm:$0xf]
        %v6467 = vld [vmem:[#allocation8 + $0x44] sm:$0xf]
        %v6468 = vld [vmem:[#allocation8 + $0x48] sm:$0xf]
        %v6469 = vld [vmem:[#allocation8 + $0x4c] sm:$0xf]
        %v6470 = vld [vmem:[#allocation8 + $0x50] sm:$0xf]
        %v6471 = vld [vmem:[#allocation8 + $0x54] sm:$0xf]
        %v6472 = vld [vmem:[#allocation8 + $0x58] sm:$0xf]
        %v6473 = vld [vmem:[#allocation8 + $0x5c] sm:$0xf]
        %v6474 = vld [vmem:[#allocation8 + $0x60] sm:$0xf]
        %v6475 = vld [vmem:[#allocation8 + $0x64] sm:$0xf]
        %v6476 = vld [vmem:[#allocation8 + $0x68] sm:$0xf]
        %v6477 = vld [vmem:[#allocation8 + $0x6c] sm:$0xf]
        %v6478 = vld [vmem:[#allocation8 + $0x70] sm:$0xf]
        %v6479 = vld [vmem:[#allocation8 + $0x74] sm:$0xf]
        %v6480 = vld [vmem:[#allocation8 + $0x78] sm:$0xf]
        %v6481 = vld [vmem:[#allocation8 + $0x7c] sm:$0xf]
        %v6482 = vld [vmem:[#allocation8 + $0x80] sm:$0xf]
        %v6483 = vld [vmem:[#allocation8 + $0x84] sm:$0xf]
        %v6484 = vld [vmem:[#allocation8 + $0x88] sm:$0xf]
        %v6485 = vld [vmem:[#allocation8 + $0x8c] sm:$0xf]
        %v6486 = vld [vmem:[#allocation8 + $0x90] sm:$0xf]
        %v6487 = vld [vmem:[#allocation8 + $0x94] sm:$0xf]
        %v6488 = vld [vmem:[#allocation8 + $0x98] sm:$0xf]
        %v6489 = vld [vmem:[#allocation8 + $0x9c] sm:$0xf]
        %v6490 = vld [vmem:[#allocation8 + $0xa0] sm:$0xf]
        %v6491 = vld [vmem:[#allocation8 + $0xa4] sm:$0xf]
        %v6492 = vld [vmem:[#allocation8 + $0xa8] sm:$0xf]
        %v6493 = vld [vmem:[#allocation8 + $0xac] sm:$0xf]
        %v6494 = vld [vmem:[#allocation8 + $0xb0] sm:$0xf]
        %v6495 = vld [vmem:[#allocation8 + $0xb4] sm:$0xf]
        %v6496 = vld [vmem:[#allocation8 + $0xb8] sm:$0xf]
        %v6497 = vld [vmem:[#allocation8 + $0xbc] sm:$0xf]
        %v6498 = vld [vmem:[#allocation8 + $0xc0] sm:$0xf]
        %v6499 = vld [vmem:[#allocation8 + $0xc4] sm:$0xf]
        %v6500 = vld [vmem:[#allocation8 + $0xc8] sm:$0xf]
        %v6501 = vld [vmem:[#allocation8 + $0xcc] sm:$0xf]
        %v6502 = vld [vmem:[#allocation8 + $0xd0] sm:$0xf]
        %v6503 = vld [vmem:[#allocation8 + $0xd4] sm:$0xf]
        %v6504 = vld [vmem:[#allocation8 + $0xd8] sm:$0xf]
        %v6505 = vld [vmem:[#allocation8 + $0xdc] sm:$0xf]
        %v6506 = vld [vmem:[#allocation8 + $0xe0] sm:$0xf]
        %v6507 = vld [vmem:[#allocation8 + $0xe4] sm:$0xf]
        %v6508 = vld [vmem:[#allocation8 + $0xe8] sm:$0xf]
        %v6509 = vld [vmem:[#allocation8 + $0xec] sm:$0xf]
        %v6510 = vld [vmem:[#allocation8 + $0xf0] sm:$0xf]
        %v6511 = vld [vmem:[#allocation8 + $0xf4] sm:$0xf]
        %v6512 = vld [vmem:[#allocation8 + $0xf8] sm:$0xf]
        %v6513 = vld [vmem:[#allocation8 + $0xfc] sm:$0xf]
        %v6514 = vld [vmem:[#allocation8 + $0x100] sm:$0xf]
        %v6515 = vld [vmem:[#allocation8 + $0x104] sm:$0xf]
        %v6516 = vld [vmem:[#allocation8 + $0x108] sm:$0xf]
        %v6517 = vld [vmem:[#allocation8 + $0x10c] sm:$0xf]
        %v6518 = vld [vmem:[#allocation8 + $0x110] sm:$0xf]
        %v6519 = vld [vmem:[#allocation8 + $0x114] sm:$0xf]
        %v6520 = vld [vmem:[#allocation8 + $0x118] sm:$0xf]
        %v6521 = vld [vmem:[#allocation8 + $0x11c] sm:$0xf]
        %v6522 = vld [vmem:[#allocation8 + $0x120] sm:$0xf]
        %v6523 = vld [vmem:[#allocation8 + $0x124] sm:$0xf]
        %v6524 = vld [vmem:[#allocation8 + $0x128] sm:$0xf]
        %v6525 = vld [vmem:[#allocation8 + $0x12c] sm:$0xf]
        %v6526 = vld [vmem:[#allocation8 + $0x130] sm:$0xf]
        %v6527 = vld [vmem:[#allocation8 + $0x134] sm:$0xf]
        %v6528 = vld [vmem:[#allocation8 + $0x138] sm:$0xf]
        %v6529 = vld [vmem:[#allocation8 + $0x13c] sm:$0xf]
        %v6530 = vld [vmem:[#allocation8 + $0x140] sm:$0xf]
        %v6531 = vld [vmem:[#allocation8 + $0x144] sm:$0xf]
        %v6532 = vld [vmem:[#allocation8 + $0x148] sm:$0xf]
        %v6533 = vld [vmem:[#allocation8 + $0x14c] sm:$0xf]
        %v6534 = vld [vmem:[#allocation8 + $0x150] sm:$0xf]
        %v6535 = vld [vmem:[#allocation8 + $0x154] sm:$0xf]
        %v6536 = vld [vmem:[#allocation8 + $0x158] sm:$0xf]
        %v6537 = vld [vmem:[#allocation8 + $0x15c] sm:$0xf]
        %v6538 = vld [vmem:[#allocation8 + $0x160] sm:$0xf]
        %v6539 = vld [vmem:[#allocation8 + $0x164] sm:$0xf]
        %v6540 = vld [vmem:[#allocation8 + $0x168] sm:$0xf]
        %v6541 = vld [vmem:[#allocation8 + $0x16c] sm:$0xf]
        %v6542 = vld [vmem:[#allocation8 + $0x170] sm:$0xf]
        %v6543 = vld [vmem:[#allocation8 + $0x174] sm:$0xf]
        %v6544 = vld [vmem:[#allocation8 + $0x178] sm:$0xf]
        %v6545 = vld [vmem:[#allocation8 + $0x17c] sm:$0xf]
        %v6546 = vld [vmem:[#allocation8 + $0x180] sm:$0xf]
        %v6547 = vld [vmem:[#allocation8 + $0x184] sm:$0xf]
        %v6548 = vld [vmem:[#allocation8 + $0x188] sm:$0xf]
        %v6549 = vld [vmem:[#allocation8 + $0x18c] sm:$0xf]
        %v6550 = vld [vmem:[#allocation8 + $0x190] sm:$0xf]
        %v6551 = vld [vmem:[#allocation8 + $0x194] sm:$0xf]
        %v6552 = vld [vmem:[#allocation8 + $0x198] sm:$0xf]
        %v6553 = vld [vmem:[#allocation8 + $0x19c] sm:$0xf]
        %v6554 = vld [vmem:[#allocation8 + $0x1a0] sm:$0xf]
        %v6555 = vld [vmem:[#allocation8 + $0x1a4] sm:$0xf]
        %v6556 = vld [vmem:[#allocation8 + $0x1a8] sm:$0xf]
        %v6557 = vld [vmem:[#allocation8 + $0x1ac] sm:$0xf]
        %v6558 = vld [vmem:[#allocation8 + $0x1b0] sm:$0xf]
        %v6559 = vld [vmem:[#allocation8 + $0x1b4] sm:$0xf]
        %v6560 = vld [vmem:[#allocation8 + $0x1b8] sm:$0xf]
        %v6561 = vld [vmem:[#allocation8 + $0x1bc] sm:$0xf]
        %v6562 = vld [vmem:[#allocation8 + $0x1c0] sm:$0xf]
        %v6563 = vld [vmem:[#allocation8 + $0x1c4] sm:$0xf]
        %v6564 = vld [vmem:[#allocation8 + $0x1c8] sm:$0xf]
        %v6565 = vld [vmem:[#allocation8 + $0x1cc] sm:$0xf]
        %v6566 = vld [vmem:[#allocation8 + $0x1d0] sm:$0xf]
        %v6567 = vld [vmem:[#allocation8 + $0x1d4] sm:$0xf]
        %v6568 = vld [vmem:[#allocation8 + $0x1d8] sm:$0xf]
        %v6569 = vld [vmem:[#allocation8 + $0x1dc] sm:$0xf]
        %v6570 = vld [vmem:[#allocation8 + $0x1e0] sm:$0xf]
        %v6571 = vld [vmem:[#allocation8 + $0x1e4] sm:$0xf]
        %v6572 = vld [vmem:[#allocation8 + $0x1e8] sm:$0xf]
        %v6573 = vld [vmem:[#allocation8 + $0x1ec] sm:$0xf]
        %v6574 = vld [vmem:[#allocation8 + $0x1f0] sm:$0xf]
        %v6575 = vld [vmem:[#allocation8 + $0x1f4] sm:$0xf]
        %v6576 = vld [vmem:[#allocation8 + $0x1f8] sm:$0xf]
        %v6577 = vld [vmem:[#allocation8 + $0x1fc] sm:$0xf]
        %v6578 = vld [vmem:[#allocation8 + $0x200] sm:$0xf]
        %v6579 = vld [vmem:[#allocation8 + $0x204] sm:$0xf]
        %v6580 = vld [vmem:[#allocation8 + $0x208] sm:$0xf]
        %v6581 = vld [vmem:[#allocation8 + $0x20c] sm:$0xf]
        %v6582 = vld [vmem:[#allocation8 + $0x210] sm:$0xf]
        %v6583 = vld [vmem:[#allocation8 + $0x214] sm:$0xf]
        %v6584 = vld [vmem:[#allocation8 + $0x218] sm:$0xf]
        %v6585 = vld [vmem:[#allocation8 + $0x21c] sm:$0xf]
        %v6586 = vld [vmem:[#allocation8 + $0x220] sm:$0xf]
        %v6587 = vld [vmem:[#allocation8 + $0x224] sm:$0xf]
        %v6588 = vld [vmem:[#allocation8 + $0x228] sm:$0xf]
        %v6589 = vld [vmem:[#allocation8 + $0x22c] sm:$0xf]
        %v6590 = vld [vmem:[#allocation8 + $0x230] sm:$0xf]
        %v6591 = vld [vmem:[#allocation8 + $0x234] sm:$0xf]
        %v6592 = vld [vmem:[#allocation8 + $0x238] sm:$0xf]
        %v6593 = vld [vmem:[#allocation8 + $0x23c] sm:$0xf]
        %v6595 = vperm.slane %v5513, 0
        %v6741 = vunpack.c.l.b16 %v6450
        %v6742 = vunpack.c.l.b16 %v6451
        %v6743 = vunpack.c.l.b16 %v6452
        %v6744 = vunpack.c.l.b16 %v6453
        %v6745 = vunpack.c.l.b16 %v6454
        %v6746 = vunpack.c.l.b16 %v6455
        %v6747 = vunpack.c.l.b16 %v6456
        %v6748 = vunpack.c.l.b16 %v6457
        %v6749 = vunpack.c.l.b16 %v6458
        %v6750 = vunpack.c.l.b16 %v6459
        %v6751 = vunpack.c.l.b16 %v6460
        %v6752 = vunpack.c.l.b16 %v6461
        %v6753 = vunpack.c.l.b16 %v6462
        %v6754 = vunpack.c.l.b16 %v6463
        %v6755 = vunpack.c.l.b16 %v6464
        %v6756 = vunpack.c.l.b16 %v6465
        %v6757 = vunpack.c.l.b16 %v6466
        %v6758 = vunpack.c.l.b16 %v6467
        %v6759 = vunpack.c.l.b16 %v6468
        %v6760 = vunpack.c.l.b16 %v6469
        %v6761 = vunpack.c.l.b16 %v6470
        %v6762 = vunpack.c.l.b16 %v6471
        %v6763 = vunpack.c.l.b16 %v6472
        %v6764 = vunpack.c.l.b16 %v6473
        %v6765 = vunpack.c.l.b16 %v6474
        %v6766 = vunpack.c.l.b16 %v6475
        %v6767 = vunpack.c.l.b16 %v6476
        %v6768 = vunpack.c.l.b16 %v6477
        %v6769 = vunpack.c.l.b16 %v6478
        %v6770 = vunpack.c.l.b16 %v6479
        %v6771 = vunpack.c.l.b16 %v6480
        %v6772 = vunpack.c.l.b16 %v6481
        %v6773 = vunpack.c.l.b16 %v6482
        %v6774 = vunpack.c.l.b16 %v6483
        %v6775 = vunpack.c.l.b16 %v6484
        %v6776 = vunpack.c.l.b16 %v6485
        %v6777 = vunpack.c.l.b16 %v6486
        %v6778 = vunpack.c.l.b16 %v6487
        %v6779 = vunpack.c.l.b16 %v6488
        %v6780 = vunpack.c.l.b16 %v6489
        %v6781 = vunpack.c.l.b16 %v6490
        %v6782 = vunpack.c.l.b16 %v6491
        %v6783 = vunpack.c.l.b16 %v6492
        %v6784 = vunpack.c.l.b16 %v6493
        %v6785 = vunpack.c.l.b16 %v6494
        %v6786 = vunpack.c.l.b16 %v6495
        %v6787 = vunpack.c.l.b16 %v6496
        %v6788 = vunpack.c.l.b16 %v6497
        %v6789 = vunpack.c.l.b16 %v6498
        %v6790 = vunpack.c.l.b16 %v6499
        %v6791 = vunpack.c.l.b16 %v6500
        %v6792 = vunpack.c.l.b16 %v6501
        %v6793 = vunpack.c.l.b16 %v6502
        %v6794 = vunpack.c.l.b16 %v6503
        %v6795 = vunpack.c.l.b16 %v6504
        %v6796 = vunpack.c.l.b16 %v6505
        %v6797 = vunpack.c.l.b16 %v6506
        %v6798 = vunpack.c.l.b16 %v6507
        %v6799 = vunpack.c.l.b16 %v6508
        %v6800 = vunpack.c.l.b16 %v6509
        %v6801 = vunpack.c.l.b16 %v6510
        %v6802 = vunpack.c.l.b16 %v6511
        %v6803 = vunpack.c.l.b16 %v6512
        %v6804 = vunpack.c.l.b16 %v6513
        %v6805 = vunpack.c.l.b16 %v6514
        %v6806 = vunpack.c.l.b16 %v6515
        %v6807 = vunpack.c.l.b16 %v6516
        %v6808 = vunpack.c.l.b16 %v6517
        %v6809 = vunpack.c.l.b16 %v6518
        %v6810 = vunpack.c.l.b16 %v6519
        %v6811 = vunpack.c.l.b16 %v6520
        %v6812 = vunpack.c.l.b16 %v6521
        %v6813 = vunpack.c.l.b16 %v6522
        %v6814 = vunpack.c.l.b16 %v6523
        %v6815 = vunpack.c.l.b16 %v6524
        %v6816 = vunpack.c.l.b16 %v6525
        %v6817 = vunpack.c.l.b16 %v6526
        %v6818 = vunpack.c.l.b16 %v6527
        %v6819 = vunpack.c.l.b16 %v6528
        %v6820 = vunpack.c.l.b16 %v6529
        %v6821 = vunpack.c.l.b16 %v6530
        %v6822 = vunpack.c.l.b16 %v6531
        %v6823 = vunpack.c.l.b16 %v6532
        %v6824 = vunpack.c.l.b16 %v6533
        %v6825 = vunpack.c.l.b16 %v6534
        %v6826 = vunpack.c.l.b16 %v6535
        %v6827 = vunpack.c.l.b16 %v6536
        %v6828 = vunpack.c.l.b16 %v6537
        %v6829 = vunpack.c.l.b16 %v6538
        %v6830 = vunpack.c.l.b16 %v6539
        %v6831 = vunpack.c.l.b16 %v6540
        %v6832 = vunpack.c.l.b16 %v6541
        %v6833 = vunpack.c.l.b16 %v6542
        %v6834 = vunpack.c.l.b16 %v6543
        %v6835 = vunpack.c.l.b16 %v6544
        %v6836 = vunpack.c.l.b16 %v6545
        %v6837 = vunpack.c.l.b16 %v6546
        %v6838 = vunpack.c.l.b16 %v6547
        %v6839 = vunpack.c.l.b16 %v6548
        %v6840 = vunpack.c.l.b16 %v6549
        %v6841 = vunpack.c.l.b16 %v6550
        %v6842 = vunpack.c.l.b16 %v6551
        %v6843 = vunpack.c.l.b16 %v6552
        %v6844 = vunpack.c.l.b16 %v6553
        %v6845 = vunpack.c.l.b16 %v6554
        %v6846 = vunpack.c.l.b16 %v6555
        %v6847 = vunpack.c.l.b16 %v6556
        %v6848 = vunpack.c.l.b16 %v6557
        %v6849 = vunpack.c.l.b16 %v6558
        %v6850 = vunpack.c.l.b16 %v6559
        %v6851 = vunpack.c.l.b16 %v6560
        %v6852 = vunpack.c.l.b16 %v6561
        %v6853 = vunpack.c.l.b16 %v6562
        %v6854 = vunpack.c.l.b16 %v6563
        %v6855 = vunpack.c.l.b16 %v6564
        %v6856 = vunpack.c.l.b16 %v6565
        %v6857 = vunpack.c.l.b16 %v6566
        %v6858 = vunpack.c.l.b16 %v6567
        %v6859 = vunpack.c.l.b16 %v6568
        %v6860 = vunpack.c.l.b16 %v6569
        %v6861 = vunpack.c.l.b16 %v6570
        %v6862 = vunpack.c.l.b16 %v6571
        %v6863 = vunpack.c.l.b16 %v6572
        %v6864 = vunpack.c.l.b16 %v6573
        %v6865 = vunpack.c.l.b16 %v6574
        %v6866 = vunpack.c.l.b16 %v6575
        %v6867 = vunpack.c.l.b16 %v6576
        %v6868 = vunpack.c.l.b16 %v6577
        %v6869 = vunpack.c.l.b16 %v6578
        %v6870 = vunpack.c.l.b16 %v6579
        %v6871 = vunpack.c.l.b16 %v6580
        %v6872 = vunpack.c.l.b16 %v6581
        %v6873 = vunpack.c.l.b16 %v6582
        %v6874 = vunpack.c.l.b16 %v6583
        %v6875 = vunpack.c.l.b16 %v6584
        %v6876 = vunpack.c.l.b16 %v6585
        %v6877 = vunpack.c.l.b16 %v6586
        %v6878 = vunpack.c.l.b16 %v6587
        %v6879 = vunpack.c.l.b16 %v6588
        %v6880 = vunpack.c.l.b16 %v6589
        %v6881 = vunpack.c.l.b16 %v6590
        %v6882 = vunpack.c.l.b16 %v6591
        %v6883 = vunpack.c.l.b16 %v6592
        %v6884 = vunpack.c.l.b16 %v6593
        %v6885 = vpack.c.b16 %v6742, %v6741
        %v6886 = vpack.c.b16 %v6744, %v6743
        %v6887 = vpack.c.b16 %v6746, %v6745
        %v6888 = vpack.c.b16 %v6748, %v6747
        %v6889 = vpack.c.b16 %v6750, %v6749
        %v6890 = vpack.c.b16 %v6752, %v6751
        %v6891 = vpack.c.b16 %v6754, %v6753
        %v6892 = vpack.c.b16 %v6756, %v6755
        %v6893 = vpack.c.b16 %v6758, %v6757
        %v6894 = vpack.c.b16 %v6760, %v6759
        %v6895 = vpack.c.b16 %v6762, %v6761
        %v6896 = vpack.c.b16 %v6764, %v6763
        %v6897 = vpack.c.b16 %v6766, %v6765
        %v6898 = vpack.c.b16 %v6768, %v6767
        %v6899 = vpack.c.b16 %v6770, %v6769
        %v6900 = vpack.c.b16 %v6772, %v6771
        %v6901 = vpack.c.b16 %v6774, %v6773
        %v6902 = vpack.c.b16 %v6776, %v6775
        %v6903 = vpack.c.b16 %v6778, %v6777
        %v6904 = vpack.c.b16 %v6780, %v6779
        %v6905 = vpack.c.b16 %v6782, %v6781
        %v6906 = vpack.c.b16 %v6784, %v6783
        %v6907 = vpack.c.b16 %v6786, %v6785
        %v6908 = vpack.c.b16 %v6788, %v6787
        %v6909 = vpack.c.b16 %v6790, %v6789
        %v6910 = vpack.c.b16 %v6792, %v6791
        %v6911 = vpack.c.b16 %v6794, %v6793
        %v6912 = vpack.c.b16 %v6796, %v6795
        %v6913 = vpack.c.b16 %v6798, %v6797
        %v6914 = vpack.c.b16 %v6800, %v6799
        %v6915 = vpack.c.b16 %v6802, %v6801
        %v6916 = vpack.c.b16 %v6804, %v6803
        %v6917 = vpack.c.b16 %v6806, %v6805
        %v6918 = vpack.c.b16 %v6808, %v6807
        %v6919 = vpack.c.b16 %v6810, %v6809
        %v6920 = vpack.c.b16 %v6812, %v6811
        %v6921 = vpack.c.b16 %v6814, %v6813
        %v6922 = vpack.c.b16 %v6816, %v6815
        %v6923 = vpack.c.b16 %v6818, %v6817
        %v6924 = vpack.c.b16 %v6820, %v6819
        %v6925 = vpack.c.b16 %v6822, %v6821
        %v6926 = vpack.c.b16 %v6824, %v6823
        %v6927 = vpack.c.b16 %v6826, %v6825
        %v6928 = vpack.c.b16 %v6828, %v6827
        %v6929 = vpack.c.b16 %v6830, %v6829
        %v6930 = vpack.c.b16 %v6832, %v6831
        %v6931 = vpack.c.b16 %v6834, %v6833
        %v6932 = vpack.c.b16 %v6836, %v6835
        %v6933 = vpack.c.b16 %v6838, %v6837
        %v6934 = vpack.c.b16 %v6840, %v6839
        %v6935 = vpack.c.b16 %v6842, %v6841
        %v6936 = vpack.c.b16 %v6844, %v6843
        %v6937 = vpack.c.b16 %v6846, %v6845
        %v6938 = vpack.c.b16 %v6848, %v6847
        %v6939 = vpack.c.b16 %v6850, %v6849
        %v6940 = vpack.c.b16 %v6852, %v6851
        %v6941 = vpack.c.b16 %v6854, %v6853
        %v6942 = vpack.c.b16 %v6856, %v6855
        %v6943 = vpack.c.b16 %v6858, %v6857
        %v6944 = vpack.c.b16 %v6860, %v6859
        %v6945 = vpack.c.b16 %v6862, %v6861
        %v6946 = vpack.c.b16 %v6864, %v6863
        %v6947 = vpack.c.b16 %v6866, %v6865
        %v6948 = vpack.c.b16 %v6868, %v6867
        %v6949 = vpack.c.b16 %v6870, %v6869
        %v6950 = vpack.c.b16 %v6872, %v6871
        %v6951 = vpack.c.b16 %v6874, %v6873
        %v6952 = vpack.c.b16 %v6876, %v6875
        %v6953 = vpack.c.b16 %v6878, %v6877
        %v6954 = vpack.c.b16 %v6880, %v6879
        %v6955 = vpack.c.b16 %v6882, %v6881
        %v6956 = vpack.c.b16 %v6884, %v6883
        %7029 = vmatpush.bf16.msra.mxu0 %v6892
        %7030 = vmatpush.bf16.msra.mxu0 %v6891
        %7031 = vmatpush.bf16.msra.mxu0 %v6890
        %7032 = vmatpush.bf16.msra.mxu0 %v6889
        %7033 = vmatpush.bf16.msra.mxu0 %v6888
        %7034 = vmatpush.bf16.msra.mxu0 %v6887
        %7035 = vmatpush.bf16.msra.mxu0 %v6886
        %7036 = vmatpush.bf16.msra.mxu0 %v6885
        %7037 = vmatmul.bf16.gmra.mxu0 %v5642
        %v7038 = vpop.f32.mrf.mxu0
        %v7039 = vadd.f32 %v6595, %v7038
        %v7040 = vpop.f32.mrf.mxu0
        %v7041 = vadd.f32 %v6595, %v7040
        %7042 = vmatmul.bf16.gmra.mxu0 %v5643
        %v7043 = vpop.f32.mrf.mxu0
        %v7044 = vadd.f32 %v6595, %v7043
        %v7045 = vpop.f32.mrf.mxu0
        %v7046 = vadd.f32 %v6595, %v7045
        %7047 = vmatmul.bf16.gmra.mxu0 %v5644
        %v7048 = vpop.f32.mrf.mxu0
        %v7049 = vadd.f32 %v6595, %v7048
        %v7050 = vpop.f32.mrf.mxu0
        %v7051 = vadd.f32 %v6595, %v7050
        %7052 = vmatmul.bf16.gmra.mxu0 %v5645
        %v7053 = vpop.f32.mrf.mxu0
        %v7054 = vadd.f32 %v6595, %v7053
        %v7055 = vpop.f32.mrf.mxu0
        %v7056 = vadd.f32 %v6595, %v7055
        %7057 = vmatmul.bf16.gmra.mxu0 %v5646
        %v7058 = vpop.f32.mrf.mxu0
        %v7059 = vadd.f32 %v6595, %v7058
        %v7060 = vpop.f32.mrf.mxu0
        %v7061 = vadd.f32 %v6595, %v7060
        %7062 = vmatmul.bf16.gmra.mxu0 %v5647
        %v7063 = vpop.f32.mrf.mxu0
        %v7064 = vadd.f32 %v6595, %v7063
        %v7065 = vpop.f32.mrf.mxu0
        %v7066 = vadd.f32 %v6595, %v7065
        %7067 = vmatmul.bf16.gmra.mxu0 %v5648
        %v7068 = vpop.f32.mrf.mxu0
        %v7069 = vadd.f32 %v6595, %v7068
        %v7070 = vpop.f32.mrf.mxu0
        %v7071 = vadd.f32 %v6595, %v7070
        %7072 = vmatmul.bf16.gmra.mxu0 %v5649
        %v7073 = vpop.f32.mrf.mxu0
        %v7074 = vadd.f32 %v6595, %v7073
        %v7075 = vpop.f32.mrf.mxu0
        %v7076 = vadd.f32 %v6595, %v7075
        %7077 = vmatmul.bf16.gmra.mxu0 %v5650
        %v7078 = vpop.f32.mrf.mxu0
        %v7079 = vadd.f32 %v6595, %v7078
        %v7080 = vpop.f32.mrf.mxu0
        %v7081 = vadd.f32 %v6595, %v7080
        %7082 = vmatmul.bf16.gmra.mxu0 %v5651
        %v7083 = vpop.f32.mrf.mxu0
        %v7084 = vadd.f32 %v6595, %v7083
        %v7085 = vpop.f32.mrf.mxu0
        %v7086 = vadd.f32 %v6595, %v7085
        %7087 = vmatmul.bf16.gmra.mxu0 %v5652
        %v7088 = vpop.f32.mrf.mxu0
        %v7089 = vadd.f32 %v6595, %v7088
        %v7090 = vpop.f32.mrf.mxu0
        %v7091 = vadd.f32 %v6595, %v7090
        %7092 = vmatmul.bf16.gmra.mxu0 %v5653
        %v7093 = vpop.f32.mrf.mxu0
        %v7094 = vadd.f32 %v6595, %v7093
        %v7095 = vpop.f32.mrf.mxu0
        %v7096 = vadd.f32 %v6595, %v7095
        %7097 = vmatmul.bf16.gmra.mxu0 %v5654
        %v7098 = vpop.f32.mrf.mxu0
        %v7099 = vadd.f32 %v6595, %v7098
        %v7100 = vpop.f32.mrf.mxu0
        %v7101 = vadd.f32 %v6595, %v7100
        %7102 = vmatmul.bf16.gmra.mxu0 %v5655
        %v7103 = vpop.f32.mrf.mxu0
        %v7104 = vadd.f32 %v6595, %v7103
        %v7105 = vpop.f32.mrf.mxu0
        %v7106 = vadd.f32 %v6595, %v7105
        %7107 = vmatmul.bf16.gmra.mxu0 %v5656
        %v7108 = vpop.f32.mrf.mxu0
        %v7109 = vadd.f32 %v6595, %v7108
        %v7110 = vpop.f32.mrf.mxu0
        %v7111 = vadd.f32 %v6595, %v7110
        %7112 = vmatmul.bf16.gmra.mxu0 %v5657
        %v7113 = vpop.f32.mrf.mxu0
        %v7114 = vadd.f32 %v6595, %v7113
        %v7115 = vpop.f32.mrf.mxu0
        %v7116 = vadd.f32 %v6595, %v7115
        %7117 = vmatmul.bf16.gmra.mxu0 %v5658
        %v7118 = vpop.f32.mrf.mxu0
        %v7119 = vadd.f32 %v6595, %v7118
        %v7120 = vpop.f32.mrf.mxu0
        %v7121 = vadd.f32 %v6595, %v7120
        %7122 = vmatmul.bf16.gmra.mxu0 %v5659
        %v7123 = vpop.f32.mrf.mxu0
        %v7124 = vadd.f32 %v6595, %v7123
        %v7125 = vpop.f32.mrf.mxu0
        %v7126 = vadd.f32 %v6595, %v7125
        %7127 = vmatmul.bf16.gmra.mxu0 %v5660
        %v7128 = vpop.f32.mrf.mxu0
        %v7129 = vadd.f32 %v6595, %v7128
        %v7130 = vpop.f32.mrf.mxu0
        %v7131 = vadd.f32 %v6595, %v7130
        %7132 = vmatmul.bf16.gmra.mxu0 %v5661
        %v7133 = vpop.f32.mrf.mxu0
        %v7134 = vadd.f32 %v6595, %v7133
        %v7135 = vpop.f32.mrf.mxu0
        %v7136 = vadd.f32 %v6595, %v7135
        %7137 = vmatmul.bf16.gmra.mxu0 %v5662
        %v7138 = vpop.f32.mrf.mxu0
        %v7139 = vadd.f32 %v6595, %v7138
        %v7140 = vpop.f32.mrf.mxu0
        %v7141 = vadd.f32 %v6595, %v7140
        %7142 = vmatmul.bf16.gmra.mxu0 %v5663
        %v7143 = vpop.f32.mrf.mxu0
        %v7144 = vadd.f32 %v6595, %v7143
        %v7145 = vpop.f32.mrf.mxu0
        %v7146 = vadd.f32 %v6595, %v7145
        %7147 = vmatmul.bf16.gmra.mxu0 %v5664
        %v7148 = vpop.f32.mrf.mxu0
        %v7149 = vadd.f32 %v6595, %v7148
        %v7150 = vpop.f32.mrf.mxu0
        %v7151 = vadd.f32 %v6595, %v7150
        %7152 = vmatmul.bf16.gmra.mxu0 %v5665
        %v7153 = vpop.f32.mrf.mxu0
        %v7154 = vadd.f32 %v6595, %v7153
        %v7155 = vpop.f32.mrf.mxu0
        %v7156 = vadd.f32 %v6595, %v7155
        %7157 = vmatmul.bf16.gmra.mxu0 %v5666
        %v7158 = vpop.f32.mrf.mxu0
        %v7159 = vadd.f32 %v6595, %v7158
        %v7160 = vpop.f32.mrf.mxu0
        %v7161 = vadd.f32 %v6595, %v7160
        %7162 = vmatmul.bf16.gmra.mxu0 %v5667
        %v7163 = vpop.f32.mrf.mxu0
        %v7164 = vadd.f32 %v6595, %v7163
        %v7165 = vpop.f32.mrf.mxu0
        %v7166 = vadd.f32 %v6595, %v7165
        %7167 = vmatmul.bf16.gmra.mxu0 %v5668
        %v7168 = vpop.f32.mrf.mxu0
        %v7169 = vadd.f32 %v6595, %v7168
        %v7170 = vpop.f32.mrf.mxu0
        %v7171 = vadd.f32 %v6595, %v7170
        %7172 = vmatmul.bf16.gmra.mxu0 %v5669
        %v7173 = vpop.f32.mrf.mxu0
        %v7174 = vadd.f32 %v6595, %v7173
        %v7175 = vpop.f32.mrf.mxu0
        %v7176 = vadd.f32 %v6595, %v7175
        %7177 = vmatmul.bf16.gmra.mxu0 %v5670
        %v7178 = vpop.f32.mrf.mxu0
        %v7179 = vadd.f32 %v6595, %v7178
        %v7180 = vpop.f32.mrf.mxu0
        %v7181 = vadd.f32 %v6595, %v7180
        %7182 = vmatmul.bf16.gmra.mxu0 %v5671
        %v7183 = vpop.f32.mrf.mxu0
        %v7184 = vadd.f32 %v6595, %v7183
        %v7185 = vpop.f32.mrf.mxu0
        %v7186 = vadd.f32 %v6595, %v7185
        %7187 = vmatmul.bf16.gmra.mxu0 %v5672
        %v7188 = vpop.f32.mrf.mxu0
        %v7189 = vadd.f32 %v6595, %v7188
        %v7190 = vpop.f32.mrf.mxu0
        %v7191 = vadd.f32 %v6595, %v7190
        %7192 = vmatmul.bf16.gmra.mxu0 %v5673
        %v7193 = vpop.f32.mrf.mxu0
        %v7194 = vadd.f32 %v6595, %v7193
        %v7195 = vpop.f32.mrf.mxu0
        %v7196 = vadd.f32 %v6595, %v7195
        %7197 = vdwg.mxu0
        %7198 = vmatpush.bf16.msra.mxu0 %v6900
        %7199 = vmatpush.bf16.msra.mxu0 %v6899
        %7200 = vmatpush.bf16.msra.mxu0 %v6898
        %7201 = vmatpush.bf16.msra.mxu0 %v6897
        %7202 = vmatpush.bf16.msra.mxu0 %v6896
        %7203 = vmatpush.bf16.msra.mxu0 %v6895
        %7204 = vmatpush.bf16.msra.mxu0 %v6894
        %7205 = vmatpush.bf16.msra.mxu0 %v6893
        %7206 = vmatmul.bf16.gmra.mxu0 %v5813
        %v7207 = vpop.f32.mrf.mxu0
        %v7208 = vadd.f32 %v7039, %v7207
        %v7209 = vpop.f32.mrf.mxu0
        %v7210 = vadd.f32 %v7041, %v7209
        %7211 = vmatmul.bf16.gmra.mxu0 %v5825
        %v7212 = vpop.f32.mrf.mxu0
        %v7213 = vadd.f32 %v7044, %v7212
        %v7214 = vpop.f32.mrf.mxu0
        %v7215 = vadd.f32 %v7046, %v7214
        %7216 = vmatmul.bf16.gmra.mxu0 %v5837
        %v7217 = vpop.f32.mrf.mxu0
        %v7218 = vadd.f32 %v7049, %v7217
        %v7219 = vpop.f32.mrf.mxu0
        %v7220 = vadd.f32 %v7051, %v7219
        %7221 = vmatmul.bf16.gmra.mxu0 %v5849
        %v7222 = vpop.f32.mrf.mxu0
        %v7223 = vadd.f32 %v7054, %v7222
        %v7224 = vpop.f32.mrf.mxu0
        %v7225 = vadd.f32 %v7056, %v7224
        %7226 = vmatmul.bf16.gmra.mxu0 %v5861
        %v7227 = vpop.f32.mrf.mxu0
        %v7228 = vadd.f32 %v7059, %v7227
        %v7229 = vpop.f32.mrf.mxu0
        %v7230 = vadd.f32 %v7061, %v7229
        %7231 = vmatmul.bf16.gmra.mxu0 %v5873
        %v7232 = vpop.f32.mrf.mxu0
        %v7233 = vadd.f32 %v7064, %v7232
        %v7234 = vpop.f32.mrf.mxu0
        %v7235 = vadd.f32 %v7066, %v7234
        %7236 = vmatmul.bf16.gmra.mxu0 %v5885
        %v7237 = vpop.f32.mrf.mxu0
        %v7238 = vadd.f32 %v7069, %v7237
        %v7239 = vpop.f32.mrf.mxu0
        %v7240 = vadd.f32 %v7071, %v7239
        %7241 = vmatmul.bf16.gmra.mxu0 %v5897
        %v7242 = vpop.f32.mrf.mxu0
        %v7243 = vadd.f32 %v7074, %v7242
        %v7244 = vpop.f32.mrf.mxu0
        %v7245 = vadd.f32 %v7076, %v7244
        %7246 = vmatmul.bf16.gmra.mxu0 %v5909
        %v7247 = vpop.f32.mrf.mxu0
        %v7248 = vadd.f32 %v7079, %v7247
        %v7249 = vpop.f32.mrf.mxu0
        %v7250 = vadd.f32 %v7081, %v7249
        %7251 = vmatmul.bf16.gmra.mxu0 %v5921
        %v7252 = vpop.f32.mrf.mxu0
        %v7253 = vadd.f32 %v7084, %v7252
        %v7254 = vpop.f32.mrf.mxu0
        %v7255 = vadd.f32 %v7086, %v7254
        %7256 = vmatmul.bf16.gmra.mxu0 %v5933
        %v7257 = vpop.f32.mrf.mxu0
        %v7258 = vadd.f32 %v7089, %v7257
        %v7259 = vpop.f32.mrf.mxu0
        %v7260 = vadd.f32 %v7091, %v7259
        %7261 = vmatmul.bf16.gmra.mxu0 %v5945
        %v7262 = vpop.f32.mrf.mxu0
        %v7263 = vadd.f32 %v7094, %v7262
        %v7264 = vpop.f32.mrf.mxu0
        %v7265 = vadd.f32 %v7096, %v7264
        %7266 = vmatmul.bf16.gmra.mxu0 %v5957
        %v7267 = vpop.f32.mrf.mxu0
        %v7268 = vadd.f32 %v7099, %v7267
        %v7269 = vpop.f32.mrf.mxu0
        %v7270 = vadd.f32 %v7101, %v7269
        %7271 = vmatmul.bf16.gmra.mxu0 %v5969
        %v7272 = vpop.f32.mrf.mxu0
        %v7273 = vadd.f32 %v7104, %v7272
        %v7274 = vpop.f32.mrf.mxu0
        %v7275 = vadd.f32 %v7106, %v7274
        %7276 = vmatmul.bf16.gmra.mxu0 %v5981
        %v7277 = vpop.f32.mrf.mxu0
        %v7278 = vadd.f32 %v7109, %v7277
        %v7279 = vpop.f32.mrf.mxu0
        %v7280 = vadd.f32 %v7111, %v7279
        %7281 = vmatmul.bf16.gmra.mxu0 %v5993
        %v7282 = vpop.f32.mrf.mxu0
        %v7283 = vadd.f32 %v7114, %v7282
        %v7284 = vpop.f32.mrf.mxu0
        %v7285 = vadd.f32 %v7116, %v7284
        %7286 = vmatmul.bf16.gmra.mxu0 %v6005
        %v7287 = vpop.f32.mrf.mxu0
        %v7288 = vadd.f32 %v7119, %v7287
        %v7289 = vpop.f32.mrf.mxu0
        %v7290 = vadd.f32 %v7121, %v7289
        %7291 = vmatmul.bf16.gmra.mxu0 %v6017
        %v7292 = vpop.f32.mrf.mxu0
        %v7293 = vadd.f32 %v7124, %v7292
        %v7294 = vpop.f32.mrf.mxu0
        %v7295 = vadd.f32 %v7126, %v7294
        %7296 = vmatmul.bf16.gmra.mxu0 %v6029
        %v7297 = vpop.f32.mrf.mxu0
        %v7298 = vadd.f32 %v7129, %v7297
        %v7299 = vpop.f32.mrf.mxu0
        %v7300 = vadd.f32 %v7131, %v7299
        %7301 = vmatmul.bf16.gmra.mxu0 %v6041
        %v7302 = vpop.f32.mrf.mxu0
        %v7303 = vadd.f32 %v7134, %v7302
        %v7304 = vpop.f32.mrf.mxu0
        %v7305 = vadd.f32 %v7136, %v7304
        %7306 = vmatmul.bf16.gmra.mxu0 %v6053
        %v7307 = vpop.f32.mrf.mxu0
        %v7308 = vadd.f32 %v7139, %v7307
        %v7309 = vpop.f32.mrf.mxu0
        %v7310 = vadd.f32 %v7141, %v7309
        %7311 = vmatmul.bf16.gmra.mxu0 %v6065
        %v7312 = vpop.f32.mrf.mxu0
        %v7313 = vadd.f32 %v7144, %v7312
        %v7314 = vpop.f32.mrf.mxu0
        %v7315 = vadd.f32 %v7146, %v7314
        %7316 = vmatmul.bf16.gmra.mxu0 %v6077
        %v7317 = vpop.f32.mrf.mxu0
        %v7318 = vadd.f32 %v7149, %v7317
        %v7319 = vpop.f32.mrf.mxu0
        %v7320 = vadd.f32 %v7151, %v7319
        %7321 = vmatmul.bf16.gmra.mxu0 %v6089
        %v7322 = vpop.f32.mrf.mxu0
        %v7323 = vadd.f32 %v7154, %v7322
        %v7324 = vpop.f32.mrf.mxu0
        %v7325 = vadd.f32 %v7156, %v7324
        %7326 = vmatmul.bf16.gmra.mxu0 %v6101
        %v7327 = vpop.f32.mrf.mxu0
        %v7328 = vadd.f32 %v7159, %v7327
        %v7329 = vpop.f32.mrf.mxu0
        %v7330 = vadd.f32 %v7161, %v7329
        %7331 = vmatmul.bf16.gmra.mxu0 %v6113
        %v7332 = vpop.f32.mrf.mxu0
        %v7333 = vadd.f32 %v7164, %v7332
        %v7334 = vpop.f32.mrf.mxu0
        %v7335 = vadd.f32 %v7166, %v7334
        %7336 = vmatmul.bf16.gmra.mxu0 %v6125
        %v7337 = vpop.f32.mrf.mxu0
        %v7338 = vadd.f32 %v7169, %v7337
        %v7339 = vpop.f32.mrf.mxu0
        %v7340 = vadd.f32 %v7171, %v7339
        %7341 = vmatmul.bf16.gmra.mxu0 %v6137
        %v7342 = vpop.f32.mrf.mxu0
        %v7343 = vadd.f32 %v7174, %v7342
        %v7344 = vpop.f32.mrf.mxu0
        %v7345 = vadd.f32 %v7176, %v7344
        %7346 = vmatmul.bf16.gmra.mxu0 %v6149
        %v7347 = vpop.f32.mrf.mxu0
        %v7348 = vadd.f32 %v7179, %v7347
        %v7349 = vpop.f32.mrf.mxu0
        %v7350 = vadd.f32 %v7181, %v7349
        %7351 = vmatmul.bf16.gmra.mxu0 %v6161
        %v7352 = vpop.f32.mrf.mxu0
        %v7353 = vadd.f32 %v7184, %v7352
        %v7354 = vpop.f32.mrf.mxu0
        %v7355 = vadd.f32 %v7186, %v7354
        %7356 = vmatmul.bf16.gmra.mxu0 %v6173
        %v7357 = vpop.f32.mrf.mxu0
        %v7358 = vadd.f32 %v7189, %v7357
        %v7359 = vpop.f32.mrf.mxu0
        %v7360 = vadd.f32 %v7191, %v7359
        %7361 = vmatmul.bf16.gmra.mxu0 %v6185
        %v7362 = vpop.f32.mrf.mxu0
        %v7363 = vadd.f32 %v7194, %v7362
        %v7364 = vpop.f32.mrf.mxu0
        %v7365 = vadd.f32 %v7196, %v7364
        %7366 = vdwg.mxu0
        %7367 = vmatpush.bf16.msra.mxu0 %v6908
        %7368 = vmatpush.bf16.msra.mxu0 %v6907
        %7369 = vmatpush.bf16.msra.mxu0 %v6906
        %7370 = vmatpush.bf16.msra.mxu0 %v6905
        %7371 = vmatpush.bf16.msra.mxu0 %v6904
        %7372 = vmatpush.bf16.msra.mxu0 %v6903
        %7373 = vmatpush.bf16.msra.mxu0 %v6902
        %7374 = vmatpush.bf16.msra.mxu0 %v6901
        %7375 = vmatmul.bf16.gmra.mxu0 %v6220
        %v7376 = vpop.f32.mrf.mxu0
        %v7377 = vadd.f32 %v7208, %v7376
        %v7378 = vpop.f32.mrf.mxu0
        %v7379 = vadd.f32 %v7210, %v7378
        %7380 = vmatmul.bf16.gmra.mxu0 %v6223
        %v7381 = vpop.f32.mrf.mxu0
        %v7382 = vadd.f32 %v7213, %v7381
        %v7383 = vpop.f32.mrf.mxu0
        %v7384 = vadd.f32 %v7215, %v7383
        %7385 = vmatmul.bf16.gmra.mxu0 %v6226
        %v7386 = vpop.f32.mrf.mxu0
        %v7387 = vadd.f32 %v7218, %v7386
        %v7388 = vpop.f32.mrf.mxu0
        %v7389 = vadd.f32 %v7220, %v7388
        %7390 = vmatmul.bf16.gmra.mxu0 %v6229
        %v7391 = vpop.f32.mrf.mxu0
        %v7392 = vadd.f32 %v7223, %v7391
        %v7393 = vpop.f32.mrf.mxu0
        %v7394 = vadd.f32 %v7225, %v7393
        %7395 = vmatmul.bf16.gmra.mxu0 %v6232
        %v7396 = vpop.f32.mrf.mxu0
        %v7397 = vadd.f32 %v7228, %v7396
        %v7398 = vpop.f32.mrf.mxu0
        %v7399 = vadd.f32 %v7230, %v7398
        %7400 = vmatmul.bf16.gmra.mxu0 %v6235
        %v7401 = vpop.f32.mrf.mxu0
        %v7402 = vadd.f32 %v7233, %v7401
        %v7403 = vpop.f32.mrf.mxu0
        %v7404 = vadd.f32 %v7235, %v7403
        %7405 = vmatmul.bf16.gmra.mxu0 %v6238
        %v7406 = vpop.f32.mrf.mxu0
        %v7407 = vadd.f32 %v7238, %v7406
        %v7408 = vpop.f32.mrf.mxu0
        %v7409 = vadd.f32 %v7240, %v7408
        %7410 = vmatmul.bf16.gmra.mxu0 %v6241
        %v7411 = vpop.f32.mrf.mxu0
        %v7412 = vadd.f32 %v7243, %v7411
        %v7413 = vpop.f32.mrf.mxu0
        %v7414 = vadd.f32 %v7245, %v7413
        %7415 = vmatmul.bf16.gmra.mxu0 %v6244
        %v7416 = vpop.f32.mrf.mxu0
        %v7417 = vadd.f32 %v7248, %v7416
        %v7418 = vpop.f32.mrf.mxu0
        %v7419 = vadd.f32 %v7250, %v7418
        %7420 = vmatmul.bf16.gmra.mxu0 %v6247
        %v7421 = vpop.f32.mrf.mxu0
        %v7422 = vadd.f32 %v7253, %v7421
        %v7423 = vpop.f32.mrf.mxu0
        %v7424 = vadd.f32 %v7255, %v7423
        %7425 = vmatmul.bf16.gmra.mxu0 %v6250
        %v7426 = vpop.f32.mrf.mxu0
        %v7427 = vadd.f32 %v7258, %v7426
        %v7428 = vpop.f32.mrf.mxu0
        %v7429 = vadd.f32 %v7260, %v7428
        %7430 = vmatmul.bf16.gmra.mxu0 %v6253
        %v7431 = vpop.f32.mrf.mxu0
        %v7432 = vadd.f32 %v7263, %v7431
        %v7433 = vpop.f32.mrf.mxu0
        %v7434 = vadd.f32 %v7265, %v7433
        %7435 = vmatmul.bf16.gmra.mxu0 %v6256
        %v7436 = vpop.f32.mrf.mxu0
        %v7437 = vadd.f32 %v7268, %v7436
        %v7438 = vpop.f32.mrf.mxu0
        %v7439 = vadd.f32 %v7270, %v7438
        %7440 = vmatmul.bf16.gmra.mxu0 %v6259
        %v7441 = vpop.f32.mrf.mxu0
        %v7442 = vadd.f32 %v7273, %v7441
        %v7443 = vpop.f32.mrf.mxu0
        %v7444 = vadd.f32 %v7275, %v7443
        %7445 = vmatmul.bf16.gmra.mxu0 %v6262
        %v7446 = vpop.f32.mrf.mxu0
        %v7447 = vadd.f32 %v7278, %v7446
        %v7448 = vpop.f32.mrf.mxu0
        %v7449 = vadd.f32 %v7280, %v7448
        %7450 = vmatmul.bf16.gmra.mxu0 %v6265
        %v7451 = vpop.f32.mrf.mxu0
        %v7452 = vadd.f32 %v7283, %v7451
        %v7453 = vpop.f32.mrf.mxu0
        %v7454 = vadd.f32 %v7285, %v7453
        %7455 = vmatmul.bf16.gmra.mxu0 %v6268
        %v7456 = vpop.f32.mrf.mxu0
        %v7457 = vadd.f32 %v7288, %v7456
        %v7458 = vpop.f32.mrf.mxu0
        %v7459 = vadd.f32 %v7290, %v7458
        %7460 = vmatmul.bf16.gmra.mxu0 %v6271
        %v7461 = vpop.f32.mrf.mxu0
        %v7462 = vadd.f32 %v7293, %v7461
        %v7463 = vpop.f32.mrf.mxu0
        %v7464 = vadd.f32 %v7295, %v7463
        %7465 = vmatmul.bf16.gmra.mxu0 %v6274
        %v7466 = vpop.f32.mrf.mxu0
        %v7467 = vadd.f32 %v7298, %v7466
        %v7468 = vpop.f32.mrf.mxu0
        %v7469 = vadd.f32 %v7300, %v7468
        %7470 = vmatmul.bf16.gmra.mxu0 %v6277
        %v7471 = vpop.f32.mrf.mxu0
        %v7472 = vadd.f32 %v7303, %v7471
        %v7473 = vpop.f32.mrf.mxu0
        %v7474 = vadd.f32 %v7305, %v7473
        %7475 = vmatmul.bf16.gmra.mxu0 %v6280
        %v7476 = vpop.f32.mrf.mxu0
        %v7477 = vadd.f32 %v7308, %v7476
        %v7478 = vpop.f32.mrf.mxu0
        %v7479 = vadd.f32 %v7310, %v7478
        %7480 = vmatmul.bf16.gmra.mxu0 %v6283
        %v7481 = vpop.f32.mrf.mxu0
        %v7482 = vadd.f32 %v7313, %v7481
        %v7483 = vpop.f32.mrf.mxu0
        %v7484 = vadd.f32 %v7315, %v7483
        %7485 = vmatmul.bf16.gmra.mxu0 %v6286
        %v7486 = vpop.f32.mrf.mxu0
        %v7487 = vadd.f32 %v7318, %v7486
        %v7488 = vpop.f32.mrf.mxu0
        %v7489 = vadd.f32 %v7320, %v7488
        %7490 = vmatmul.bf16.gmra.mxu0 %v6289
        %v7491 = vpop.f32.mrf.mxu0
        %v7492 = vadd.f32 %v7323, %v7491
        %v7493 = vpop.f32.mrf.mxu0
        %v7494 = vadd.f32 %v7325, %v7493
        %7495 = vmatmul.bf16.gmra.mxu0 %v6292
        %v7496 = vpop.f32.mrf.mxu0
        %v7497 = vadd.f32 %v7328, %v7496
        %v7498 = vpop.f32.mrf.mxu0
        %v7499 = vadd.f32 %v7330, %v7498
        %7500 = vmatmul.bf16.gmra.mxu0 %v6295
        %v7501 = vpop.f32.mrf.mxu0
        %v7502 = vadd.f32 %v7333, %v7501
        %v7503 = vpop.f32.mrf.mxu0
        %v7504 = vadd.f32 %v7335, %v7503
        %7505 = vmatmul.bf16.gmra.mxu0 %v6298
        %v7506 = vpop.f32.mrf.mxu0
        %v7507 = vadd.f32 %v7338, %v7506
        %v7508 = vpop.f32.mrf.mxu0
        %v7509 = vadd.f32 %v7340, %v7508
        %7510 = vmatmul.bf16.gmra.mxu0 %v6301
        %v7511 = vpop.f32.mrf.mxu0
        %v7512 = vadd.f32 %v7343, %v7511
        %v7513 = vpop.f32.mrf.mxu0
        %v7514 = vadd.f32 %v7345, %v7513
        %7515 = vmatmul.bf16.gmra.mxu0 %v6304
        %v7516 = vpop.f32.mrf.mxu0
        %v7517 = vadd.f32 %v7348, %v7516
        %v7518 = vpop.f32.mrf.mxu0
        %v7519 = vadd.f32 %v7350, %v7518
        %7520 = vmatmul.bf16.gmra.mxu0 %v6307
        %v7521 = vpop.f32.mrf.mxu0
        %v7522 = vadd.f32 %v7353, %v7521
        %v7523 = vpop.f32.mrf.mxu0
        %v7524 = vadd.f32 %v7355, %v7523
        %7525 = vmatmul.bf16.gmra.mxu0 %v6310
        %v7526 = vpop.f32.mrf.mxu0
        %v7527 = vadd.f32 %v7358, %v7526
        %v7528 = vpop.f32.mrf.mxu0
        %v7529 = vadd.f32 %v7360, %v7528
        %7530 = vmatmul.bf16.gmra.mxu0 %v6313
        %v7531 = vpop.f32.mrf.mxu0
        %v7532 = vadd.f32 %v7363, %v7531
        %v7533 = vpop.f32.mrf.mxu0
        %v7534 = vadd.f32 %v7365, %v7533
        %7535 = vdwg.mxu0
        %7536 = vmatpush.bf16.msra.mxu0 %v6916
        %7537 = vmatpush.bf16.msra.mxu0 %v6915
        %7538 = vmatpush.bf16.msra.mxu0 %v6914
        %7539 = vmatpush.bf16.msra.mxu0 %v6913
        %7540 = vmatpush.bf16.msra.mxu0 %v6912
        %7541 = vmatpush.bf16.msra.mxu0 %v6911
        %7542 = vmatpush.bf16.msra.mxu0 %v6910
        %7543 = vmatpush.bf16.msra.mxu0 %v6909
        %7544 = vmatmul.bf16.gmra.mxu0 %v5643
        %v7545 = vpop.f32.mrf.mxu0
        %v7546 = vadd.f32 %v7377, %v7545
        %v7547 = vpop.f32.mrf.mxu0
        %v7548 = vadd.f32 %v7379, %v7547
        %7549 = vmatmul.bf16.gmra.mxu0 %v5644
        %v7550 = vpop.f32.mrf.mxu0
        %v7551 = vadd.f32 %v7382, %v7550
        %v7552 = vpop.f32.mrf.mxu0
        %v7553 = vadd.f32 %v7384, %v7552
        %7554 = vmatmul.bf16.gmra.mxu0 %v5645
        %v7555 = vpop.f32.mrf.mxu0
        %v7556 = vadd.f32 %v7387, %v7555
        %v7557 = vpop.f32.mrf.mxu0
        %v7558 = vadd.f32 %v7389, %v7557
        %7559 = vmatmul.bf16.gmra.mxu0 %v5646
        %v7560 = vpop.f32.mrf.mxu0
        %v7561 = vadd.f32 %v7392, %v7560
        %v7562 = vpop.f32.mrf.mxu0
        %v7563 = vadd.f32 %v7394, %v7562
        %7564 = vmatmul.bf16.gmra.mxu0 %v5647
        %v7565 = vpop.f32.mrf.mxu0
        %v7566 = vadd.f32 %v7397, %v7565
        %v7567 = vpop.f32.mrf.mxu0
        %v7568 = vadd.f32 %v7399, %v7567
        %7569 = vmatmul.bf16.gmra.mxu0 %v5648
        %v7570 = vpop.f32.mrf.mxu0
        %v7571 = vadd.f32 %v7402, %v7570
        %v7572 = vpop.f32.mrf.mxu0
        %v7573 = vadd.f32 %v7404, %v7572
        %7574 = vmatmul.bf16.gmra.mxu0 %v5649
        %v7575 = vpop.f32.mrf.mxu0
        %v7576 = vadd.f32 %v7407, %v7575
        %v7577 = vpop.f32.mrf.mxu0
        %v7578 = vadd.f32 %v7409, %v7577
        %7579 = vmatmul.bf16.gmra.mxu0 %v5650
        %v7580 = vpop.f32.mrf.mxu0
        %v7581 = vadd.f32 %v7412, %v7580
        %v7582 = vpop.f32.mrf.mxu0
        %v7583 = vadd.f32 %v7414, %v7582
        %7584 = vmatmul.bf16.gmra.mxu0 %v5651
        %v7585 = vpop.f32.mrf.mxu0
        %v7586 = vadd.f32 %v7417, %v7585
        %v7587 = vpop.f32.mrf.mxu0
        %v7588 = vadd.f32 %v7419, %v7587
        %7589 = vmatmul.bf16.gmra.mxu0 %v5652
        %v7590 = vpop.f32.mrf.mxu0
        %v7591 = vadd.f32 %v7422, %v7590
        %v7592 = vpop.f32.mrf.mxu0
        %v7593 = vadd.f32 %v7424, %v7592
        %7594 = vmatmul.bf16.gmra.mxu0 %v5653
        %v7595 = vpop.f32.mrf.mxu0
        %v7596 = vadd.f32 %v7427, %v7595
        %v7597 = vpop.f32.mrf.mxu0
        %v7598 = vadd.f32 %v7429, %v7597
        %7599 = vmatmul.bf16.gmra.mxu0 %v5654
        %v7600 = vpop.f32.mrf.mxu0
        %v7601 = vadd.f32 %v7432, %v7600
        %v7602 = vpop.f32.mrf.mxu0
        %v7603 = vadd.f32 %v7434, %v7602
        %7604 = vmatmul.bf16.gmra.mxu0 %v5655
        %v7605 = vpop.f32.mrf.mxu0
        %v7606 = vadd.f32 %v7437, %v7605
        %v7607 = vpop.f32.mrf.mxu0
        %v7608 = vadd.f32 %v7439, %v7607
        %7609 = vmatmul.bf16.gmra.mxu0 %v5656
        %v7610 = vpop.f32.mrf.mxu0
        %v7611 = vadd.f32 %v7442, %v7610
        %v7612 = vpop.f32.mrf.mxu0
        %v7613 = vadd.f32 %v7444, %v7612
        %7614 = vmatmul.bf16.gmra.mxu0 %v5657
        %v7615 = vpop.f32.mrf.mxu0
        %v7616 = vadd.f32 %v7447, %v7615
        %v7617 = vpop.f32.mrf.mxu0
        %v7618 = vadd.f32 %v7449, %v7617
        %7619 = vmatmul.bf16.gmra.mxu0 %v6354
        %v7620 = vpop.f32.mrf.mxu0
        %v7621 = vadd.f32 %v7452, %v7620
        %v7622 = vpop.f32.mrf.mxu0
        %v7623 = vadd.f32 %v7454, %v7622
        %7624 = vmatmul.bf16.gmra.mxu0 %v5659
        %v7625 = vpop.f32.mrf.mxu0
        %v7626 = vadd.f32 %v7457, %v7625
        %v7627 = vpop.f32.mrf.mxu0
        %v7628 = vadd.f32 %v7459, %v7627
        %7629 = vmatmul.bf16.gmra.mxu0 %v5660
        %v7630 = vpop.f32.mrf.mxu0
        %v7631 = vadd.f32 %v7462, %v7630
        %v7632 = vpop.f32.mrf.mxu0
        %v7633 = vadd.f32 %v7464, %v7632
        %7634 = vmatmul.bf16.gmra.mxu0 %v5661
        %v7635 = vpop.f32.mrf.mxu0
        %v7636 = vadd.f32 %v7467, %v7635
        %v7637 = vpop.f32.mrf.mxu0
        %v7638 = vadd.f32 %v7469, %v7637
        %7639 = vmatmul.bf16.gmra.mxu0 %v5662
        %v7640 = vpop.f32.mrf.mxu0
        %v7641 = vadd.f32 %v7472, %v7640
        %v7642 = vpop.f32.mrf.mxu0
        %v7643 = vadd.f32 %v7474, %v7642
        %7644 = vmatmul.bf16.gmra.mxu0 %v5663
        %v7645 = vpop.f32.mrf.mxu0
        %v7646 = vadd.f32 %v7477, %v7645
        %v7647 = vpop.f32.mrf.mxu0
        %v7648 = vadd.f32 %v7479, %v7647
        %7649 = vmatmul.bf16.gmra.mxu0 %v5664
        %v7650 = vpop.f32.mrf.mxu0
        %v7651 = vadd.f32 %v7482, %v7650
        %v7652 = vpop.f32.mrf.mxu0
        %v7653 = vadd.f32 %v7484, %v7652
        %7654 = vmatmul.bf16.gmra.mxu0 %v5665
        %v7655 = vpop.f32.mrf.mxu0
        %v7656 = vadd.f32 %v7487, %v7655
        %v7657 = vpop.f32.mrf.mxu0
        %v7658 = vadd.f32 %v7489, %v7657
        %7659 = vmatmul.bf16.gmra.mxu0 %v5666
        %v7660 = vpop.f32.mrf.mxu0
        %v7661 = vadd.f32 %v7492, %v7660
        %v7662 = vpop.f32.mrf.mxu0
        %v7663 = vadd.f32 %v7494, %v7662
        %7664 = vmatmul.bf16.gmra.mxu0 %v5667
        %v7665 = vpop.f32.mrf.mxu0
        %v7666 = vadd.f32 %v7497, %v7665
        %v7667 = vpop.f32.mrf.mxu0
        %v7668 = vadd.f32 %v7499, %v7667
        %7669 = vmatmul.bf16.gmra.mxu0 %v5668
        %v7670 = vpop.f32.mrf.mxu0
        %v7671 = vadd.f32 %v7502, %v7670
        %v7672 = vpop.f32.mrf.mxu0
        %v7673 = vadd.f32 %v7504, %v7672
        %7674 = vmatmul.bf16.gmra.mxu0 %v5669
        %v7675 = vpop.f32.mrf.mxu0
        %v7676 = vadd.f32 %v7507, %v7675
        %v7677 = vpop.f32.mrf.mxu0
        %v7678 = vadd.f32 %v7509, %v7677
        %7679 = vmatmul.bf16.gmra.mxu0 %v5670
        %v7680 = vpop.f32.mrf.mxu0
        %v7681 = vadd.f32 %v7512, %v7680
        %v7682 = vpop.f32.mrf.mxu0
        %v7683 = vadd.f32 %v7514, %v7682
        %7684 = vmatmul.bf16.gmra.mxu0 %v5671
        %v7685 = vpop.f32.mrf.mxu0
        %v7686 = vadd.f32 %v7517, %v7685
        %v7687 = vpop.f32.mrf.mxu0
        %v7688 = vadd.f32 %v7519, %v7687
        %7689 = vmatmul.bf16.gmra.mxu0 %v5672
        %v7690 = vpop.f32.mrf.mxu0
        %v7691 = vadd.f32 %v7522, %v7690
        %v7692 = vpop.f32.mrf.mxu0
        %v7693 = vadd.f32 %v7524, %v7692
        %7694 = vmatmul.bf16.gmra.mxu0 %v5673
        %v7695 = vpop.f32.mrf.mxu0
        %v7696 = vadd.f32 %v7527, %v7695
        %v7697 = vpop.f32.mrf.mxu0
        %v7698 = vadd.f32 %v7529, %v7697
        %7699 = vmatmul.bf16.gmra.mxu0 %v6355
        %v7700 = vpop.f32.mrf.mxu0
        %v7701 = vadd.f32 %v7532, %v7700
        %v7702 = vpop.f32.mrf.mxu0
        %v7703 = vadd.f32 %v7534, %v7702
        %7704 = vdwg.mxu0
        %7705 = vmatpush.bf16.msra.mxu0 %v6924
        %7706 = vmatpush.bf16.msra.mxu0 %v6923
        %7707 = vmatpush.bf16.msra.mxu0 %v6922
        %7708 = vmatpush.bf16.msra.mxu0 %v6921
        %7709 = vmatpush.bf16.msra.mxu0 %v6920
        %7710 = vmatpush.bf16.msra.mxu0 %v6919
        %7711 = vmatpush.bf16.msra.mxu0 %v6918
        %7712 = vmatpush.bf16.msra.mxu0 %v6917
        %7713 = vmatmul.bf16.gmra.mxu0 %v5825
        %v7714 = vpop.f32.mrf.mxu0
        %v7715 = vadd.f32 %v7546, %v7714
        %v7716 = vpop.f32.mrf.mxu0
        %v7717 = vadd.f32 %v7548, %v7716
        %7718 = vmatmul.bf16.gmra.mxu0 %v5837
        %v7719 = vpop.f32.mrf.mxu0
        %v7720 = vadd.f32 %v7551, %v7719
        %v7721 = vpop.f32.mrf.mxu0
        %v7722 = vadd.f32 %v7553, %v7721
        %7723 = vmatmul.bf16.gmra.mxu0 %v5849
        %v7724 = vpop.f32.mrf.mxu0
        %v7725 = vadd.f32 %v7556, %v7724
        %v7726 = vpop.f32.mrf.mxu0
        %v7727 = vadd.f32 %v7558, %v7726
        %7728 = vmatmul.bf16.gmra.mxu0 %v5861
        %v7729 = vpop.f32.mrf.mxu0
        %v7730 = vadd.f32 %v7561, %v7729
        %v7731 = vpop.f32.mrf.mxu0
        %v7732 = vadd.f32 %v7563, %v7731
        %7733 = vmatmul.bf16.gmra.mxu0 %v5873
        %v7734 = vpop.f32.mrf.mxu0
        %v7735 = vadd.f32 %v7566, %v7734
        %v7736 = vpop.f32.mrf.mxu0
        %v7737 = vadd.f32 %v7568, %v7736
        %7738 = vmatmul.bf16.gmra.mxu0 %v5885
        %v7739 = vpop.f32.mrf.mxu0
        %v7740 = vadd.f32 %v7571, %v7739
        %v7741 = vpop.f32.mrf.mxu0
        %v7742 = vadd.f32 %v7573, %v7741
        %7743 = vmatmul.bf16.gmra.mxu0 %v5897
        %v7744 = vpop.f32.mrf.mxu0
        %v7745 = vadd.f32 %v7576, %v7744
        %v7746 = vpop.f32.mrf.mxu0
        %v7747 = vadd.f32 %v7578, %v7746
        %7748 = vmatmul.bf16.gmra.mxu0 %v5909
        %v7749 = vpop.f32.mrf.mxu0
        %v7750 = vadd.f32 %v7581, %v7749
        %v7751 = vpop.f32.mrf.mxu0
        %v7752 = vadd.f32 %v7583, %v7751
        %7753 = vmatmul.bf16.gmra.mxu0 %v5921
        %v7754 = vpop.f32.mrf.mxu0
        %v7755 = vadd.f32 %v7586, %v7754
        %v7756 = vpop.f32.mrf.mxu0
        %v7757 = vadd.f32 %v7588, %v7756
        %7758 = vmatmul.bf16.gmra.mxu0 %v5933
        %v7759 = vpop.f32.mrf.mxu0
        %v7760 = vadd.f32 %v7591, %v7759
        %v7761 = vpop.f32.mrf.mxu0
        %v7762 = vadd.f32 %v7593, %v7761
        %7763 = vmatmul.bf16.gmra.mxu0 %v5945
        %v7764 = vpop.f32.mrf.mxu0
        %v7765 = vadd.f32 %v7596, %v7764
        %v7766 = vpop.f32.mrf.mxu0
        %v7767 = vadd.f32 %v7598, %v7766
        %7768 = vmatmul.bf16.gmra.mxu0 %v5957
        %v7769 = vpop.f32.mrf.mxu0
        %v7770 = vadd.f32 %v7601, %v7769
        %v7771 = vpop.f32.mrf.mxu0
        %v7772 = vadd.f32 %v7603, %v7771
        %7773 = vmatmul.bf16.gmra.mxu0 %v5969
        %v7774 = vpop.f32.mrf.mxu0
        %v7775 = vadd.f32 %v7606, %v7774
        %v7776 = vpop.f32.mrf.mxu0
        %v7777 = vadd.f32 %v7608, %v7776
        %7778 = vmatmul.bf16.gmra.mxu0 %v5981
        %v7779 = vpop.f32.mrf.mxu0
        %v7780 = vadd.f32 %v7611, %v7779
        %v7781 = vpop.f32.mrf.mxu0
        %v7782 = vadd.f32 %v7613, %v7781
        %7783 = vmatmul.bf16.gmra.mxu0 %v5993
        %v7784 = vpop.f32.mrf.mxu0
        %v7785 = vadd.f32 %v7616, %v7784
        %v7786 = vpop.f32.mrf.mxu0
        %v7787 = vadd.f32 %v7618, %v7786
        %7788 = vmatmul.bf16.gmra.mxu0 %v6375
        %v7789 = vpop.f32.mrf.mxu0
        %v7790 = vadd.f32 %v7621, %v7789
        %v7791 = vpop.f32.mrf.mxu0
        %v7792 = vadd.f32 %v7623, %v7791
        %7793 = vmatmul.bf16.gmra.mxu0 %v6017
        %v7794 = vpop.f32.mrf.mxu0
        %v7795 = vadd.f32 %v7626, %v7794
        %v7796 = vpop.f32.mrf.mxu0
        %v7797 = vadd.f32 %v7628, %v7796
        %7798 = vmatmul.bf16.gmra.mxu0 %v6029
        %v7799 = vpop.f32.mrf.mxu0
        %v7800 = vadd.f32 %v7631, %v7799
        %v7801 = vpop.f32.mrf.mxu0
        %v7802 = vadd.f32 %v7633, %v7801
        %7803 = vmatmul.bf16.gmra.mxu0 %v6041
        %v7804 = vpop.f32.mrf.mxu0
        %v7805 = vadd.f32 %v7636, %v7804
        %v7806 = vpop.f32.mrf.mxu0
        %v7807 = vadd.f32 %v7638, %v7806
        %7808 = vmatmul.bf16.gmra.mxu0 %v6053
        %v7809 = vpop.f32.mrf.mxu0
        %v7810 = vadd.f32 %v7641, %v7809
        %v7811 = vpop.f32.mrf.mxu0
        %v7812 = vadd.f32 %v7643, %v7811
        %7813 = vmatmul.bf16.gmra.mxu0 %v6065
        %v7814 = vpop.f32.mrf.mxu0
        %v7815 = vadd.f32 %v7646, %v7814
        %v7816 = vpop.f32.mrf.mxu0
        %v7817 = vadd.f32 %v7648, %v7816
        %7818 = vmatmul.bf16.gmra.mxu0 %v6077
        %v7819 = vpop.f32.mrf.mxu0
        %v7820 = vadd.f32 %v7651, %v7819
        %v7821 = vpop.f32.mrf.mxu0
        %v7822 = vadd.f32 %v7653, %v7821
        %7823 = vmatmul.bf16.gmra.mxu0 %v6089
        %v7824 = vpop.f32.mrf.mxu0
        %v7825 = vadd.f32 %v7656, %v7824
        %v7826 = vpop.f32.mrf.mxu0
        %v7827 = vadd.f32 %v7658, %v7826
        %7828 = vmatmul.bf16.gmra.mxu0 %v6101
        %v7829 = vpop.f32.mrf.mxu0
        %v7830 = vadd.f32 %v7661, %v7829
        %v7831 = vpop.f32.mrf.mxu0
        %v7832 = vadd.f32 %v7663, %v7831
        %7833 = vmatmul.bf16.gmra.mxu0 %v6113
        %v7834 = vpop.f32.mrf.mxu0
        %v7835 = vadd.f32 %v7666, %v7834
        %v7836 = vpop.f32.mrf.mxu0
        %v7837 = vadd.f32 %v7668, %v7836
        %7838 = vmatmul.bf16.gmra.mxu0 %v6125
        %v7839 = vpop.f32.mrf.mxu0
        %v7840 = vadd.f32 %v7671, %v7839
        %v7841 = vpop.f32.mrf.mxu0
        %v7842 = vadd.f32 %v7673, %v7841
        %7843 = vmatmul.bf16.gmra.mxu0 %v6137
        %v7844 = vpop.f32.mrf.mxu0
        %v7845 = vadd.f32 %v7676, %v7844
        %v7846 = vpop.f32.mrf.mxu0
        %v7847 = vadd.f32 %v7678, %v7846
        %7848 = vmatmul.bf16.gmra.mxu0 %v6149
        %v7849 = vpop.f32.mrf.mxu0
        %v7850 = vadd.f32 %v7681, %v7849
        %v7851 = vpop.f32.mrf.mxu0
        %v7852 = vadd.f32 %v7683, %v7851
        %7853 = vmatmul.bf16.gmra.mxu0 %v6161
        %v7854 = vpop.f32.mrf.mxu0
        %v7855 = vadd.f32 %v7686, %v7854
        %v7856 = vpop.f32.mrf.mxu0
        %v7857 = vadd.f32 %v7688, %v7856
        %7858 = vmatmul.bf16.gmra.mxu0 %v6173
        %v7859 = vpop.f32.mrf.mxu0
        %v7860 = vadd.f32 %v7691, %v7859
        %v7861 = vpop.f32.mrf.mxu0
        %v7862 = vadd.f32 %v7693, %v7861
        %7863 = vmatmul.bf16.gmra.mxu0 %v6185
        %v7864 = vpop.f32.mrf.mxu0
        %v7865 = vadd.f32 %v7696, %v7864
        %v7866 = vpop.f32.mrf.mxu0
        %v7867 = vadd.f32 %v7698, %v7866
        %7868 = vmatmul.bf16.gmra.mxu0 %v6387
        %v7869 = vpop.f32.mrf.mxu0
        %v7870 = vadd.f32 %v7701, %v7869
        %v7871 = vpop.f32.mrf.mxu0
        %v7872 = vadd.f32 %v7703, %v7871
        %7873 = vdwg.mxu0
        %7874 = vmatpush.bf16.msra.mxu0 %v6932
        %7875 = vmatpush.bf16.msra.mxu0 %v6931
        %7876 = vmatpush.bf16.msra.mxu0 %v6930
        %7877 = vmatpush.bf16.msra.mxu0 %v6929
        %7878 = vmatpush.bf16.msra.mxu0 %v6928
        %7879 = vmatpush.bf16.msra.mxu0 %v6927
        %7880 = vmatpush.bf16.msra.mxu0 %v6926
        %7881 = vmatpush.bf16.msra.mxu0 %v6925
        %7882 = vmatmul.bf16.gmra.mxu0 %v6223
        %v7883 = vpop.f32.mrf.mxu0
        %v7884 = vadd.f32 %v7715, %v7883
        %v7885 = vpop.f32.mrf.mxu0
        %v7886 = vadd.f32 %v7717, %v7885
        %7887 = vmatmul.bf16.gmra.mxu0 %v6226
        %v7888 = vpop.f32.mrf.mxu0
        %v7889 = vadd.f32 %v7720, %v7888
        %v7890 = vpop.f32.mrf.mxu0
        %v7891 = vadd.f32 %v7722, %v7890
        %7892 = vmatmul.bf16.gmra.mxu0 %v6229
        %v7893 = vpop.f32.mrf.mxu0
        %v7894 = vadd.f32 %v7725, %v7893
        %v7895 = vpop.f32.mrf.mxu0
        %v7896 = vadd.f32 %v7727, %v7895
        %7897 = vmatmul.bf16.gmra.mxu0 %v6232
        %v7898 = vpop.f32.mrf.mxu0
        %v7899 = vadd.f32 %v7730, %v7898
        %v7900 = vpop.f32.mrf.mxu0
        %v7901 = vadd.f32 %v7732, %v7900
        %7902 = vmatmul.bf16.gmra.mxu0 %v6235
        %v7903 = vpop.f32.mrf.mxu0
        %v7904 = vadd.f32 %v7735, %v7903
        %v7905 = vpop.f32.mrf.mxu0
        %v7906 = vadd.f32 %v7737, %v7905
        %7907 = vmatmul.bf16.gmra.mxu0 %v6238
        %v7908 = vpop.f32.mrf.mxu0
        %v7909 = vadd.f32 %v7740, %v7908
        %v7910 = vpop.f32.mrf.mxu0
        %v7911 = vadd.f32 %v7742, %v7910
        %7912 = vmatmul.bf16.gmra.mxu0 %v6241
        %v7913 = vpop.f32.mrf.mxu0
        %v7914 = vadd.f32 %v7745, %v7913
        %v7915 = vpop.f32.mrf.mxu0
        %v7916 = vadd.f32 %v7747, %v7915
        %7917 = vmatmul.bf16.gmra.mxu0 %v6244
        %v7918 = vpop.f32.mrf.mxu0
        %v7919 = vadd.f32 %v7750, %v7918
        %v7920 = vpop.f32.mrf.mxu0
        %v7921 = vadd.f32 %v7752, %v7920
        %7922 = vmatmul.bf16.gmra.mxu0 %v6247
        %v7923 = vpop.f32.mrf.mxu0
        %v7924 = vadd.f32 %v7755, %v7923
        %v7925 = vpop.f32.mrf.mxu0
        %v7926 = vadd.f32 %v7757, %v7925
        %7927 = vmatmul.bf16.gmra.mxu0 %v6250
        %v7928 = vpop.f32.mrf.mxu0
        %v7929 = vadd.f32 %v7760, %v7928
        %v7930 = vpop.f32.mrf.mxu0
        %v7931 = vadd.f32 %v7762, %v7930
        %7932 = vmatmul.bf16.gmra.mxu0 %v6253
        %v7933 = vpop.f32.mrf.mxu0
        %v7934 = vadd.f32 %v7765, %v7933
        %v7935 = vpop.f32.mrf.mxu0
        %v7936 = vadd.f32 %v7767, %v7935
        %7937 = vmatmul.bf16.gmra.mxu0 %v6256
        %v7938 = vpop.f32.mrf.mxu0
        %v7939 = vadd.f32 %v7770, %v7938
        %v7940 = vpop.f32.mrf.mxu0
        %v7941 = vadd.f32 %v7772, %v7940
        %7942 = vmatmul.bf16.gmra.mxu0 %v6259
        %v7943 = vpop.f32.mrf.mxu0
        %v7944 = vadd.f32 %v7775, %v7943
        %v7945 = vpop.f32.mrf.mxu0
        %v7946 = vadd.f32 %v7777, %v7945
        %7947 = vmatmul.bf16.gmra.mxu0 %v6262
        %v7948 = vpop.f32.mrf.mxu0
        %v7949 = vadd.f32 %v7780, %v7948
        %v7950 = vpop.f32.mrf.mxu0
        %v7951 = vadd.f32 %v7782, %v7950
        %7952 = vmatmul.bf16.gmra.mxu0 %v6265
        %v7953 = vpop.f32.mrf.mxu0
        %v7954 = vadd.f32 %v7785, %v7953
        %v7955 = vpop.f32.mrf.mxu0
        %v7956 = vadd.f32 %v7787, %v7955
        %7957 = vmatmul.bf16.gmra.mxu0 %v6392
        %v7958 = vpop.f32.mrf.mxu0
        %v7959 = vadd.f32 %v7790, %v7958
        %v7960 = vpop.f32.mrf.mxu0
        %v7961 = vadd.f32 %v7792, %v7960
        %7962 = vmatmul.bf16.gmra.mxu0 %v6271
        %v7963 = vpop.f32.mrf.mxu0
        %v7964 = vadd.f32 %v7795, %v7963
        %v7965 = vpop.f32.mrf.mxu0
        %v7966 = vadd.f32 %v7797, %v7965
        %7967 = vmatmul.bf16.gmra.mxu0 %v6274
        %v7968 = vpop.f32.mrf.mxu0
        %v7969 = vadd.f32 %v7800, %v7968
        %v7970 = vpop.f32.mrf.mxu0
        %v7971 = vadd.f32 %v7802, %v7970
        %7972 = vmatmul.bf16.gmra.mxu0 %v6277
        %v7973 = vpop.f32.mrf.mxu0
        %v7974 = vadd.f32 %v7805, %v7973
        %v7975 = vpop.f32.mrf.mxu0
        %v7976 = vadd.f32 %v7807, %v7975
        %7977 = vmatmul.bf16.gmra.mxu0 %v6280
        %v7978 = vpop.f32.mrf.mxu0
        %v7979 = vadd.f32 %v7810, %v7978
        %v7980 = vpop.f32.mrf.mxu0
        %v7981 = vadd.f32 %v7812, %v7980
        %7982 = vmatmul.bf16.gmra.mxu0 %v6283
        %v7983 = vpop.f32.mrf.mxu0
        %v7984 = vadd.f32 %v7815, %v7983
        %v7985 = vpop.f32.mrf.mxu0
        %v7986 = vadd.f32 %v7817, %v7985
        %7987 = vmatmul.bf16.gmra.mxu0 %v6286
        %v7988 = vpop.f32.mrf.mxu0
        %v7989 = vadd.f32 %v7820, %v7988
        %v7990 = vpop.f32.mrf.mxu0
        %v7991 = vadd.f32 %v7822, %v7990
        %7992 = vmatmul.bf16.gmra.mxu0 %v6289
        %v7993 = vpop.f32.mrf.mxu0
        %v7994 = vadd.f32 %v7825, %v7993
        %v7995 = vpop.f32.mrf.mxu0
        %v7996 = vadd.f32 %v7827, %v7995
        %7997 = vmatmul.bf16.gmra.mxu0 %v6292
        %v7998 = vpop.f32.mrf.mxu0
        %v7999 = vadd.f32 %v7830, %v7998
        %v8000 = vpop.f32.mrf.mxu0
        %v8001 = vadd.f32 %v7832, %v8000
        %8002 = vmatmul.bf16.gmra.mxu0 %v6295
        %v8003 = vpop.f32.mrf.mxu0
        %v8004 = vadd.f32 %v7835, %v8003
        %v8005 = vpop.f32.mrf.mxu0
        %v8006 = vadd.f32 %v7837, %v8005
        %8007 = vmatmul.bf16.gmra.mxu0 %v6298
        %v8008 = vpop.f32.mrf.mxu0
        %v8009 = vadd.f32 %v7840, %v8008
        %v8010 = vpop.f32.mrf.mxu0
        %v8011 = vadd.f32 %v7842, %v8010
        %8012 = vmatmul.bf16.gmra.mxu0 %v6301
        %v8013 = vpop.f32.mrf.mxu0
        %v8014 = vadd.f32 %v7845, %v8013
        %v8015 = vpop.f32.mrf.mxu0
        %v8016 = vadd.f32 %v7847, %v8015
        %8017 = vmatmul.bf16.gmra.mxu0 %v6304
        %v8018 = vpop.f32.mrf.mxu0
        %v8019 = vadd.f32 %v7850, %v8018
        %v8020 = vpop.f32.mrf.mxu0
        %v8021 = vadd.f32 %v7852, %v8020
        %8022 = vmatmul.bf16.gmra.mxu0 %v6307
        %v8023 = vpop.f32.mrf.mxu0
        %v8024 = vadd.f32 %v7855, %v8023
        %v8025 = vpop.f32.mrf.mxu0
        %v8026 = vadd.f32 %v7857, %v8025
        %8027 = vmatmul.bf16.gmra.mxu0 %v6310
        %v8028 = vpop.f32.mrf.mxu0
        %v8029 = vadd.f32 %v7860, %v8028
        %v8030 = vpop.f32.mrf.mxu0
        %v8031 = vadd.f32 %v7862, %v8030
        %8032 = vmatmul.bf16.gmra.mxu0 %v6313
        %v8033 = vpop.f32.mrf.mxu0
        %v8034 = vadd.f32 %v7865, %v8033
        %v8035 = vpop.f32.mrf.mxu0
        %v8036 = vadd.f32 %v7867, %v8035
        %8037 = vmatmul.bf16.gmra.mxu0 %v6395
        %v8038 = vpop.f32.mrf.mxu0
        %v8039 = vadd.f32 %v7870, %v8038
        %v8040 = vpop.f32.mrf.mxu0
        %v8041 = vadd.f32 %v7872, %v8040
        %8042 = vdwg.mxu0
        %8043 = vmatpush.bf16.msra.mxu0 %v6940
        %8044 = vmatpush.bf16.msra.mxu0 %v6939
        %8045 = vmatpush.bf16.msra.mxu0 %v6938
        %8046 = vmatpush.bf16.msra.mxu0 %v6937
        %8047 = vmatpush.bf16.msra.mxu0 %v6936
        %8048 = vmatpush.bf16.msra.mxu0 %v6935
        %8049 = vmatpush.bf16.msra.mxu0 %v6934
        %8050 = vmatpush.bf16.msra.mxu0 %v6933
        %8051 = vmatmul.bf16.gmra.mxu0 %v5644
        %v8052 = vpop.f32.mrf.mxu0
        %v8053 = vadd.f32 %v7884, %v8052
        %v8054 = vpop.f32.mrf.mxu0
        %v8055 = vadd.f32 %v7886, %v8054
        %8056 = vmatmul.bf16.gmra.mxu0 %v5645
        %v8057 = vpop.f32.mrf.mxu0
        %v8058 = vadd.f32 %v7889, %v8057
        %v8059 = vpop.f32.mrf.mxu0
        %v8060 = vadd.f32 %v7891, %v8059
        %8061 = vmatmul.bf16.gmra.mxu0 %v5646
        %v8062 = vpop.f32.mrf.mxu0
        %v8063 = vadd.f32 %v7894, %v8062
        %v8064 = vpop.f32.mrf.mxu0
        %v8065 = vadd.f32 %v7896, %v8064
        %8066 = vmatmul.bf16.gmra.mxu0 %v5647
        %v8067 = vpop.f32.mrf.mxu0
        %v8068 = vadd.f32 %v7899, %v8067
        %v8069 = vpop.f32.mrf.mxu0
        %v8070 = vadd.f32 %v7901, %v8069
        %8071 = vmatmul.bf16.gmra.mxu0 %v5648
        %v8072 = vpop.f32.mrf.mxu0
        %v8073 = vadd.f32 %v7904, %v8072
        %v8074 = vpop.f32.mrf.mxu0
        %v8075 = vadd.f32 %v7906, %v8074
        %8076 = vmatmul.bf16.gmra.mxu0 %v5649
        %v8077 = vpop.f32.mrf.mxu0
        %v8078 = vadd.f32 %v7909, %v8077
        %v8079 = vpop.f32.mrf.mxu0
        %v8080 = vadd.f32 %v7911, %v8079
        %8081 = vmatmul.bf16.gmra.mxu0 %v5650
        %v8082 = vpop.f32.mrf.mxu0
        %v8083 = vadd.f32 %v7914, %v8082
        %v8084 = vpop.f32.mrf.mxu0
        %v8085 = vadd.f32 %v7916, %v8084
        %8086 = vmatmul.bf16.gmra.mxu0 %v5651
        %v8087 = vpop.f32.mrf.mxu0
        %v8088 = vadd.f32 %v7919, %v8087
        %v8089 = vpop.f32.mrf.mxu0
        %v8090 = vadd.f32 %v7921, %v8089
        %8091 = vmatmul.bf16.gmra.mxu0 %v5652
        %v8092 = vpop.f32.mrf.mxu0
        %v8093 = vadd.f32 %v7924, %v8092
        %v8094 = vpop.f32.mrf.mxu0
        %v8095 = vadd.f32 %v7926, %v8094
        %8096 = vmatmul.bf16.gmra.mxu0 %v5653
        %v8097 = vpop.f32.mrf.mxu0
        %v8098 = vadd.f32 %v7929, %v8097
        %v8099 = vpop.f32.mrf.mxu0
        %v8100 = vadd.f32 %v7931, %v8099
        %8101 = vmatmul.bf16.gmra.mxu0 %v5654
        %v8102 = vpop.f32.mrf.mxu0
        %v8103 = vadd.f32 %v7934, %v8102
        %v8104 = vpop.f32.mrf.mxu0
        %v8105 = vadd.f32 %v7936, %v8104
        %8106 = vmatmul.bf16.gmra.mxu0 %v5655
        %v8107 = vpop.f32.mrf.mxu0
        %v8108 = vadd.f32 %v7939, %v8107
        %v8109 = vpop.f32.mrf.mxu0
        %v8110 = vadd.f32 %v7941, %v8109
        %8111 = vmatmul.bf16.gmra.mxu0 %v5656
        %v8112 = vpop.f32.mrf.mxu0
        %v8113 = vadd.f32 %v7944, %v8112
        %v8114 = vpop.f32.mrf.mxu0
        %v8115 = vadd.f32 %v7946, %v8114
        %8116 = vmatmul.bf16.gmra.mxu0 %v5657
        %v8117 = vpop.f32.mrf.mxu0
        %v8118 = vadd.f32 %v7949, %v8117
        %v8119 = vpop.f32.mrf.mxu0
        %v8120 = vadd.f32 %v7951, %v8119
        %8121 = vmatmul.bf16.gmra.mxu0 %v6354
        %v8122 = vpop.f32.mrf.mxu0
        %v8123 = vadd.f32 %v7954, %v8122
        %v8124 = vpop.f32.mrf.mxu0
        %v8125 = vadd.f32 %v7956, %v8124
        %8126 = vmatmul.bf16.gmra.mxu0 %v6406
        %v8127 = vpop.f32.mrf.mxu0
        %v8128 = vadd.f32 %v7959, %v8127
        %v8129 = vpop.f32.mrf.mxu0
        %v8130 = vadd.f32 %v7961, %v8129
        %8131 = vmatmul.bf16.gmra.mxu0 %v5660
        %v8132 = vpop.f32.mrf.mxu0
        %v8133 = vadd.f32 %v7964, %v8132
        %v8134 = vpop.f32.mrf.mxu0
        %v8135 = vadd.f32 %v7966, %v8134
        %8136 = vmatmul.bf16.gmra.mxu0 %v5661
        %v8137 = vpop.f32.mrf.mxu0
        %v8138 = vadd.f32 %v7969, %v8137
        %v8139 = vpop.f32.mrf.mxu0
        %v8140 = vadd.f32 %v7971, %v8139
        %8141 = vmatmul.bf16.gmra.mxu0 %v5662
        %v8142 = vpop.f32.mrf.mxu0
        %v8143 = vadd.f32 %v7974, %v8142
        %v8144 = vpop.f32.mrf.mxu0
        %v8145 = vadd.f32 %v7976, %v8144
        %8146 = vmatmul.bf16.gmra.mxu0 %v5663
        %v8147 = vpop.f32.mrf.mxu0
        %v8148 = vadd.f32 %v7979, %v8147
        %v8149 = vpop.f32.mrf.mxu0
        %v8150 = vadd.f32 %v7981, %v8149
        %8151 = vmatmul.bf16.gmra.mxu0 %v5664
        %v8152 = vpop.f32.mrf.mxu0
        %v8153 = vadd.f32 %v7984, %v8152
        %v8154 = vpop.f32.mrf.mxu0
        %v8155 = vadd.f32 %v7986, %v8154
        %8156 = vmatmul.bf16.gmra.mxu0 %v5665
        %v8157 = vpop.f32.mrf.mxu0
        %v8158 = vadd.f32 %v7989, %v8157
        %v8159 = vpop.f32.mrf.mxu0
        %v8160 = vadd.f32 %v7991, %v8159
        %8161 = vmatmul.bf16.gmra.mxu0 %v5666
        %v8162 = vpop.f32.mrf.mxu0
        %v8163 = vadd.f32 %v7994, %v8162
        %v8164 = vpop.f32.mrf.mxu0
        %v8165 = vadd.f32 %v7996, %v8164
        %8166 = vmatmul.bf16.gmra.mxu0 %v5667
        %v8167 = vpop.f32.mrf.mxu0
        %v8168 = vadd.f32 %v7999, %v8167
        %v8169 = vpop.f32.mrf.mxu0
        %v8170 = vadd.f32 %v8001, %v8169
        %8171 = vmatmul.bf16.gmra.mxu0 %v5668
        %v8172 = vpop.f32.mrf.mxu0
        %v8173 = vadd.f32 %v8004, %v8172
        %v8174 = vpop.f32.mrf.mxu0
        %v8175 = vadd.f32 %v8006, %v8174
        %8176 = vmatmul.bf16.gmra.mxu0 %v5669
        %v8177 = vpop.f32.mrf.mxu0
        %v8178 = vadd.f32 %v8009, %v8177
        %v8179 = vpop.f32.mrf.mxu0
        %v8180 = vadd.f32 %v8011, %v8179
        %8181 = vmatmul.bf16.gmra.mxu0 %v5670
        %v8182 = vpop.f32.mrf.mxu0
        %v8183 = vadd.f32 %v8014, %v8182
        %v8184 = vpop.f32.mrf.mxu0
        %v8185 = vadd.f32 %v8016, %v8184
        %8186 = vmatmul.bf16.gmra.mxu0 %v5671
        %v8187 = vpop.f32.mrf.mxu0
        %v8188 = vadd.f32 %v8019, %v8187
        %v8189 = vpop.f32.mrf.mxu0
        %v8190 = vadd.f32 %v8021, %v8189
        %8191 = vmatmul.bf16.gmra.mxu0 %v5672
        %v8192 = vpop.f32.mrf.mxu0
        %v8193 = vadd.f32 %v8024, %v8192
        %v8194 = vpop.f32.mrf.mxu0
        %v8195 = vadd.f32 %v8026, %v8194
        %8196 = vmatmul.bf16.gmra.mxu0 %v5673
        %v8197 = vpop.f32.mrf.mxu0
        %v8198 = vadd.f32 %v8029, %v8197
        %v8199 = vpop.f32.mrf.mxu0
        %v8200 = vadd.f32 %v8031, %v8199
        %8201 = vmatmul.bf16.gmra.mxu0 %v6355
        %v8202 = vpop.f32.mrf.mxu0
        %v8203 = vadd.f32 %v8034, %v8202
        %v8204 = vpop.f32.mrf.mxu0
        %v8205 = vadd.f32 %v8036, %v8204
        %8206 = vmatmul.bf16.gmra.mxu0 %v6407
        %v8207 = vpop.f32.mrf.mxu0
        %v8208 = vadd.f32 %v8039, %v8207
        %v8209 = vpop.f32.mrf.mxu0
        %v8210 = vadd.f32 %v8041, %v8209
        %8211 = vdwg.mxu0
        %8212 = vmatpush.bf16.msra.mxu0 %v6948
        %8213 = vmatpush.bf16.msra.mxu0 %v6947
        %8214 = vmatpush.bf16.msra.mxu0 %v6946
        %8215 = vmatpush.bf16.msra.mxu0 %v6945
        %8216 = vmatpush.bf16.msra.mxu0 %v6944
        %8217 = vmatpush.bf16.msra.mxu0 %v6943
        %8218 = vmatpush.bf16.msra.mxu0 %v6942
        %8219 = vmatpush.bf16.msra.mxu0 %v6941
        %8220 = vmatmul.bf16.gmra.mxu0 %v5837
        %v8221 = vpop.f32.mrf.mxu0
        %v8222 = vadd.f32 %v8053, %v8221
        %v8223 = vpop.f32.mrf.mxu0
        %v8224 = vadd.f32 %v8055, %v8223
        %8225 = vmatmul.bf16.gmra.mxu0 %v5849
        %v8226 = vpop.f32.mrf.mxu0
        %v8227 = vadd.f32 %v8058, %v8226
        %v8228 = vpop.f32.mrf.mxu0
        %v8229 = vadd.f32 %v8060, %v8228
        %8230 = vmatmul.bf16.gmra.mxu0 %v5861
        %v8231 = vpop.f32.mrf.mxu0
        %v8232 = vadd.f32 %v8063, %v8231
        %v8233 = vpop.f32.mrf.mxu0
        %v8234 = vadd.f32 %v8065, %v8233
        %8235 = vmatmul.bf16.gmra.mxu0 %v5873
        %v8236 = vpop.f32.mrf.mxu0
        %v8237 = vadd.f32 %v8068, %v8236
        %v8238 = vpop.f32.mrf.mxu0
        %v8239 = vadd.f32 %v8070, %v8238
        %8240 = vmatmul.bf16.gmra.mxu0 %v5885
        %v8241 = vpop.f32.mrf.mxu0
        %v8242 = vadd.f32 %v8073, %v8241
        %v8243 = vpop.f32.mrf.mxu0
        %v8244 = vadd.f32 %v8075, %v8243
        %8245 = vmatmul.bf16.gmra.mxu0 %v5897
        %v8246 = vpop.f32.mrf.mxu0
        %v8247 = vadd.f32 %v8078, %v8246
        %v8248 = vpop.f32.mrf.mxu0
        %v8249 = vadd.f32 %v8080, %v8248
        %8250 = vmatmul.bf16.gmra.mxu0 %v5909
        %v8251 = vpop.f32.mrf.mxu0
        %v8252 = vadd.f32 %v8083, %v8251
        %v8253 = vpop.f32.mrf.mxu0
        %v8254 = vadd.f32 %v8085, %v8253
        %8255 = vmatmul.bf16.gmra.mxu0 %v5921
        %v8256 = vpop.f32.mrf.mxu0
        %v8257 = vadd.f32 %v8088, %v8256
        %v8258 = vpop.f32.mrf.mxu0
        %v8259 = vadd.f32 %v8090, %v8258
        %8260 = vmatmul.bf16.gmra.mxu0 %v5933
        %v8261 = vpop.f32.mrf.mxu0
        %v8262 = vadd.f32 %v8093, %v8261
        %v8263 = vpop.f32.mrf.mxu0
        %v8264 = vadd.f32 %v8095, %v8263
        %8265 = vmatmul.bf16.gmra.mxu0 %v5945
        %v8266 = vpop.f32.mrf.mxu0
        %v8267 = vadd.f32 %v8098, %v8266
        %v8268 = vpop.f32.mrf.mxu0
        %v8269 = vadd.f32 %v8100, %v8268
        %8270 = vmatmul.bf16.gmra.mxu0 %v5957
        %v8271 = vpop.f32.mrf.mxu0
        %v8272 = vadd.f32 %v8103, %v8271
        %v8273 = vpop.f32.mrf.mxu0
        %v8274 = vadd.f32 %v8105, %v8273
        %8275 = vmatmul.bf16.gmra.mxu0 %v5969
        %v8276 = vpop.f32.mrf.mxu0
        %v8277 = vadd.f32 %v8108, %v8276
        %v8278 = vpop.f32.mrf.mxu0
        %v8279 = vadd.f32 %v8110, %v8278
        %8280 = vmatmul.bf16.gmra.mxu0 %v5981
        %v8281 = vpop.f32.mrf.mxu0
        %v8282 = vadd.f32 %v8113, %v8281
        %v8283 = vpop.f32.mrf.mxu0
        %v8284 = vadd.f32 %v8115, %v8283
        %8285 = vmatmul.bf16.gmra.mxu0 %v5993
        %v8286 = vpop.f32.mrf.mxu0
        %v8287 = vadd.f32 %v8118, %v8286
        %v8288 = vpop.f32.mrf.mxu0
        %v8289 = vadd.f32 %v8120, %v8288
        %8290 = vmatmul.bf16.gmra.mxu0 %v6375
        %v8291 = vpop.f32.mrf.mxu0
        %v8292 = vadd.f32 %v8123, %v8291
        %v8293 = vpop.f32.mrf.mxu0
        %v8294 = vadd.f32 %v8125, %v8293
        %8295 = vmatmul.bf16.gmra.mxu0 %v6427
        %v8296 = vpop.f32.mrf.mxu0
        %v8297 = vadd.f32 %v8128, %v8296
        %v8298 = vpop.f32.mrf.mxu0
        %v8299 = vadd.f32 %v8130, %v8298
        %8300 = vmatmul.bf16.gmra.mxu0 %v6029
        %v8301 = vpop.f32.mrf.mxu0
        %v8302 = vadd.f32 %v8133, %v8301
        %v8303 = vpop.f32.mrf.mxu0
        %v8304 = vadd.f32 %v8135, %v8303
        %8305 = vmatmul.bf16.gmra.mxu0 %v6041
        %v8306 = vpop.f32.mrf.mxu0
        %v8307 = vadd.f32 %v8138, %v8306
        %v8308 = vpop.f32.mrf.mxu0
        %v8309 = vadd.f32 %v8140, %v8308
        %8310 = vmatmul.bf16.gmra.mxu0 %v6053
        %v8311 = vpop.f32.mrf.mxu0
        %v8312 = vadd.f32 %v8143, %v8311
        %v8313 = vpop.f32.mrf.mxu0
        %v8314 = vadd.f32 %v8145, %v8313
        %8315 = vmatmul.bf16.gmra.mxu0 %v6065
        %v8316 = vpop.f32.mrf.mxu0
        %v8317 = vadd.f32 %v8148, %v8316
        %v8318 = vpop.f32.mrf.mxu0
        %v8319 = vadd.f32 %v8150, %v8318
        %8320 = vmatmul.bf16.gmra.mxu0 %v6077
        %v8321 = vpop.f32.mrf.mxu0
        %v8322 = vadd.f32 %v8153, %v8321
        %v8323 = vpop.f32.mrf.mxu0
        %v8324 = vadd.f32 %v8155, %v8323
        %8325 = vmatmul.bf16.gmra.mxu0 %v6089
        %v8326 = vpop.f32.mrf.mxu0
        %v8327 = vadd.f32 %v8158, %v8326
        %v8328 = vpop.f32.mrf.mxu0
        %v8329 = vadd.f32 %v8160, %v8328
        %8330 = vmatmul.bf16.gmra.mxu0 %v6101
        %v8331 = vpop.f32.mrf.mxu0
        %v8332 = vadd.f32 %v8163, %v8331
        %v8333 = vpop.f32.mrf.mxu0
        %v8334 = vadd.f32 %v8165, %v8333
        %8335 = vmatmul.bf16.gmra.mxu0 %v6113
        %v8336 = vpop.f32.mrf.mxu0
        %v8337 = vadd.f32 %v8168, %v8336
        %v8338 = vpop.f32.mrf.mxu0
        %v8339 = vadd.f32 %v8170, %v8338
        %8340 = vmatmul.bf16.gmra.mxu0 %v6125
        %v8341 = vpop.f32.mrf.mxu0
        %v8342 = vadd.f32 %v8173, %v8341
        %v8343 = vpop.f32.mrf.mxu0
        %v8344 = vadd.f32 %v8175, %v8343
        %8345 = vmatmul.bf16.gmra.mxu0 %v6137
        %v8346 = vpop.f32.mrf.mxu0
        %v8347 = vadd.f32 %v8178, %v8346
        %v8348 = vpop.f32.mrf.mxu0
        %v8349 = vadd.f32 %v8180, %v8348
        %8350 = vmatmul.bf16.gmra.mxu0 %v6149
        %v8351 = vpop.f32.mrf.mxu0
        %v8352 = vadd.f32 %v8183, %v8351
        %v8353 = vpop.f32.mrf.mxu0
        %v8354 = vadd.f32 %v8185, %v8353
        %8355 = vmatmul.bf16.gmra.mxu0 %v6161
        %v8356 = vpop.f32.mrf.mxu0
        %v8357 = vadd.f32 %v8188, %v8356
        %v8358 = vpop.f32.mrf.mxu0
        %v8359 = vadd.f32 %v8190, %v8358
        %8360 = vmatmul.bf16.gmra.mxu0 %v6173
        %v8361 = vpop.f32.mrf.mxu0
        %v8362 = vadd.f32 %v8193, %v8361
        %v8363 = vpop.f32.mrf.mxu0
        %v8364 = vadd.f32 %v8195, %v8363
        %8365 = vmatmul.bf16.gmra.mxu0 %v6185
        %v8366 = vpop.f32.mrf.mxu0
        %v8367 = vadd.f32 %v8198, %v8366
        %v8368 = vpop.f32.mrf.mxu0
        %v8369 = vadd.f32 %v8200, %v8368
        %8370 = vmatmul.bf16.gmra.mxu0 %v6387
        %v8371 = vpop.f32.mrf.mxu0
        %v8372 = vadd.f32 %v8203, %v8371
        %v8373 = vpop.f32.mrf.mxu0
        %v8374 = vadd.f32 %v8205, %v8373
        %8375 = vmatmul.bf16.gmra.mxu0 %v6439
        %v8376 = vpop.f32.mrf.mxu0
        %v8377 = vadd.f32 %v8208, %v8376
        %v8378 = vpop.f32.mrf.mxu0
        %v8379 = vadd.f32 %v8210, %v8378
        %8380 = vdwg.mxu0
        %8381 = vmatpush.bf16.msra.mxu0 %v6956
        %8382 = vmatpush.bf16.msra.mxu0 %v6955
        %8383 = vmatpush.bf16.msra.mxu0 %v6954
        %8384 = vmatpush.bf16.msra.mxu0 %v6953
        %8385 = vmatpush.bf16.msra.mxu0 %v6952
        %8386 = vmatpush.bf16.msra.mxu0 %v6951
        %8387 = vmatpush.bf16.msra.mxu0 %v6950
        %8388 = vmatpush.bf16.msra.mxu0 %v6949
        %8389 = vmatmul.bf16.gmra.mxu0 %v6226
        %v8390 = vpop.f32.mrf.mxu0
        %v8391 = vadd.f32 %v8222, %v8390
        %v8392 = vpop.f32.mrf.mxu0
        %v8393 = vadd.f32 %v8224, %v8392
        %8394 = vmatmul.bf16.gmra.mxu0 %v6229
        %v8395 = vpop.f32.mrf.mxu0
        %v8396 = vadd.f32 %v8227, %v8395
        %v8397 = vpop.f32.mrf.mxu0
        %v8398 = vadd.f32 %v8229, %v8397
        %8399 = vmatmul.bf16.gmra.mxu0 %v6232
        %v8400 = vpop.f32.mrf.mxu0
        %v8401 = vadd.f32 %v8232, %v8400
        %v8402 = vpop.f32.mrf.mxu0
        %v8403 = vadd.f32 %v8234, %v8402
        %8404 = vmatmul.bf16.gmra.mxu0 %v6235
        %v8405 = vpop.f32.mrf.mxu0
        %v8406 = vadd.f32 %v8237, %v8405
        %v8407 = vpop.f32.mrf.mxu0
        %v8408 = vadd.f32 %v8239, %v8407
        %8409 = vmatmul.bf16.gmra.mxu0 %v6238
        %v8410 = vpop.f32.mrf.mxu0
        %v8411 = vadd.f32 %v8242, %v8410
        %v8412 = vpop.f32.mrf.mxu0
        %v8413 = vadd.f32 %v8244, %v8412
        %8414 = vmatmul.bf16.gmra.mxu0 %v6241
        %v8415 = vpop.f32.mrf.mxu0
        %v8416 = vadd.f32 %v8247, %v8415
        %v8417 = vpop.f32.mrf.mxu0
        %v8418 = vadd.f32 %v8249, %v8417
        %8419 = vmatmul.bf16.gmra.mxu0 %v6244
        %v8420 = vpop.f32.mrf.mxu0
        %v8421 = vadd.f32 %v8252, %v8420
        %v8422 = vpop.f32.mrf.mxu0
        %v8423 = vadd.f32 %v8254, %v8422
        %8424 = vmatmul.bf16.gmra.mxu0 %v6247
        %v8425 = vpop.f32.mrf.mxu0
        %v8426 = vadd.f32 %v8257, %v8425
        %v8427 = vpop.f32.mrf.mxu0
        %v8428 = vadd.f32 %v8259, %v8427
        %8429 = vmatmul.bf16.gmra.mxu0 %v6250
        %v8430 = vpop.f32.mrf.mxu0
        %v8431 = vadd.f32 %v8262, %v8430
        %v8432 = vpop.f32.mrf.mxu0
        %v8433 = vadd.f32 %v8264, %v8432
        %8434 = vmatmul.bf16.gmra.mxu0 %v6253
        %v8435 = vpop.f32.mrf.mxu0
        %v8436 = vadd.f32 %v8267, %v8435
        %v8437 = vpop.f32.mrf.mxu0
        %v8438 = vadd.f32 %v8269, %v8437
        %8439 = vmatmul.bf16.gmra.mxu0 %v6256
        %v8440 = vpop.f32.mrf.mxu0
        %v8441 = vadd.f32 %v8272, %v8440
        %v8442 = vpop.f32.mrf.mxu0
        %v8443 = vadd.f32 %v8274, %v8442
        %8444 = vmatmul.bf16.gmra.mxu0 %v6259
        %v8445 = vpop.f32.mrf.mxu0
        %v8446 = vadd.f32 %v8277, %v8445
        %v8447 = vpop.f32.mrf.mxu0
        %v8448 = vadd.f32 %v8279, %v8447
        %8449 = vmatmul.bf16.gmra.mxu0 %v6262
        %v8450 = vpop.f32.mrf.mxu0
        %v8451 = vadd.f32 %v8282, %v8450
        %v8452 = vpop.f32.mrf.mxu0
        %v8453 = vadd.f32 %v8284, %v8452
        %8454 = vmatmul.bf16.gmra.mxu0 %v6265
        %v8455 = vpop.f32.mrf.mxu0
        %v8456 = vadd.f32 %v8287, %v8455
        %v8457 = vpop.f32.mrf.mxu0
        %v8458 = vadd.f32 %v8289, %v8457
        %8459 = vmatmul.bf16.gmra.mxu0 %v6392
        %v8460 = vpop.f32.mrf.mxu0
        %v8461 = vadd.f32 %v8292, %v8460
        %v8462 = vpop.f32.mrf.mxu0
        %v8463 = vadd.f32 %v8294, %v8462
        %8464 = vmatmul.bf16.gmra.mxu0 %v6444
        %v8465 = vpop.f32.mrf.mxu0
        %v8466 = vadd.f32 %v8297, %v8465
        %v8467 = vpop.f32.mrf.mxu0
        %v8468 = vadd.f32 %v8299, %v8467
        %8469 = vmatmul.bf16.gmra.mxu0 %v6274
        %v8470 = vpop.f32.mrf.mxu0
        %v8471 = vadd.f32 %v8302, %v8470
        %v8472 = vpop.f32.mrf.mxu0
        %v8473 = vadd.f32 %v8304, %v8472
        %8474 = vmatmul.bf16.gmra.mxu0 %v6277
        %v8475 = vpop.f32.mrf.mxu0
        %v8476 = vadd.f32 %v8307, %v8475
        %v8477 = vpop.f32.mrf.mxu0
        %v8478 = vadd.f32 %v8309, %v8477
        %8479 = vmatmul.bf16.gmra.mxu0 %v6280
        %v8480 = vpop.f32.mrf.mxu0
        %v8481 = vadd.f32 %v8312, %v8480
        %v8482 = vpop.f32.mrf.mxu0
        %v8483 = vadd.f32 %v8314, %v8482
        %8484 = vmatmul.bf16.gmra.mxu0 %v6283
        %v8485 = vpop.f32.mrf.mxu0
        %v8486 = vadd.f32 %v8317, %v8485
        %v8487 = vpop.f32.mrf.mxu0
        %v8488 = vadd.f32 %v8319, %v8487
        %8489 = vmatmul.bf16.gmra.mxu0 %v6286
        %v8490 = vpop.f32.mrf.mxu0
        %v8491 = vadd.f32 %v8322, %v8490
        %v8492 = vpop.f32.mrf.mxu0
        %v8493 = vadd.f32 %v8324, %v8492
        %8494 = vmatmul.bf16.gmra.mxu0 %v6289
        %v8495 = vpop.f32.mrf.mxu0
        %v8496 = vadd.f32 %v8327, %v8495
        %v8497 = vpop.f32.mrf.mxu0
        %v8498 = vadd.f32 %v8329, %v8497
        %8499 = vmatmul.bf16.gmra.mxu0 %v6292
        %v8500 = vpop.f32.mrf.mxu0
        %v8501 = vadd.f32 %v8332, %v8500
        %v8502 = vpop.f32.mrf.mxu0
        %v8503 = vadd.f32 %v8334, %v8502
        %8504 = vmatmul.bf16.gmra.mxu0 %v6295
        %v8505 = vpop.f32.mrf.mxu0
        %v8506 = vadd.f32 %v8337, %v8505
        %v8507 = vpop.f32.mrf.mxu0
        %v8508 = vadd.f32 %v8339, %v8507
        %8509 = vmatmul.bf16.gmra.mxu0 %v6298
        %v8510 = vpop.f32.mrf.mxu0
        %v8511 = vadd.f32 %v8342, %v8510
        %v8512 = vpop.f32.mrf.mxu0
        %v8513 = vadd.f32 %v8344, %v8512
        %8514 = vmatmul.bf16.gmra.mxu0 %v6301
        %v8515 = vpop.f32.mrf.mxu0
        %v8516 = vadd.f32 %v8347, %v8515
        %v8517 = vpop.f32.mrf.mxu0
        %v8518 = vadd.f32 %v8349, %v8517
        %8519 = vmatmul.bf16.gmra.mxu0 %v6304
        %v8520 = vpop.f32.mrf.mxu0
        %v8521 = vadd.f32 %v8352, %v8520
        %v8522 = vpop.f32.mrf.mxu0
        %v8523 = vadd.f32 %v8354, %v8522
        %8524 = vmatmul.bf16.gmra.mxu0 %v6307
        %v8525 = vpop.f32.mrf.mxu0
        %v8526 = vadd.f32 %v8357, %v8525
        %v8527 = vpop.f32.mrf.mxu0
        %v8528 = vadd.f32 %v8359, %v8527
        %8529 = vmatmul.bf16.gmra.mxu0 %v6310
        %v8530 = vpop.f32.mrf.mxu0
        %v8531 = vadd.f32 %v8362, %v8530
        %v8532 = vpop.f32.mrf.mxu0
        %v8533 = vadd.f32 %v8364, %v8532
        %8534 = vmatmul.bf16.gmra.mxu0 %v6313
        %v8535 = vpop.f32.mrf.mxu0
        %v8536 = vadd.f32 %v8367, %v8535
        %v8537 = vpop.f32.mrf.mxu0
        %v8538 = vadd.f32 %v8369, %v8537
        %8539 = vmatmul.bf16.gmra.mxu0 %v6395
        %v8540 = vpop.f32.mrf.mxu0
        %v8541 = vadd.f32 %v8372, %v8540
        %v8542 = vpop.f32.mrf.mxu0
        %v8543 = vadd.f32 %v8374, %v8542
        %8544 = vmatmul.bf16.gmra.mxu0 %v6447
        %v8545 = vpop.f32.mrf.mxu0
        %v8546 = vadd.f32 %v8377, %v8545
        %v8547 = vpop.f32.mrf.mxu0
        %v8548 = vadd.f32 %v8379, %v8547
        %8549 = vdwg.mxu0
        %v8550 = vld [vmem:[%s7] sm:$0x1]
        %v8551 = vld [vmem:[%s8] sm:$0x1]
        %v8552 = vadd.f32 %v8391, %v8393
        %v8553 = vadd.f32 %v8552, %v8396
        %v8554 = vadd.f32 %v8553, %v8398
        %v8555 = vadd.f32 %v8554, %v8401
        %v8556 = vadd.f32 %v8555, %v8403
        %v8557 = vadd.f32 %v8556, %v8406
        %v8558 = vadd.f32 %v8557, %v8408
        %v8559 = vadd.f32 %v8558, %v8411
        %v8560 = vadd.f32 %v8559, %v8413
        %v8561 = vadd.f32 %v8560, %v8416
        %v8562 = vadd.f32 %v8561, %v8418
        %v8563 = vadd.f32 %v8562, %v8421
        %v8564 = vadd.f32 %v8563, %v8423
        %v8565 = vadd.f32 %v8564, %v8426
        %v8566 = vadd.f32 %v8565, %v8428
        %v8567 = vadd.f32 %v8566, %v8431
        %v8568 = vadd.f32 %v8567, %v8433
        %v8569 = vadd.f32 %v8568, %v8436
        %v8570 = vadd.f32 %v8569, %v8438
        %v8571 = vadd.f32 %v8570, %v8441
        %v8572 = vadd.f32 %v8571, %v8443
        %v8573 = vadd.f32 %v8572, %v8446
        %v8574 = vadd.f32 %v8573, %v8448
        %v8575 = vadd.f32 %v8574, %v8451
        %v8576 = vadd.f32 %v8575, %v8453
        %v8577 = vadd.f32 %v8576, %v8456
        %v8578 = vadd.f32 %v8577, %v8458
        %v8579 = vadd.f32 %v8578, %v8461
        %v8580 = vadd.f32 %v8579, %v8463
        %v8581 = vadd.f32 %v8580, %v8466
        %v8582 = vadd.f32 %v8581, %v8468
        %v8583 = vrot.slane %v8582, 4
        %v8584 = vadd.f32 %v8582, %v8583
        %v8585 = vrot.slane %v8584, 2
        %v8586 = vadd.f32 %v8584, %v8585
        %v8587 = vrot.slane %v8586, 1
        %v8588 = vadd.f32 %v8586, %v8587
        %v8589 = vadd.f32 %v8471, %v8473
        %v8590 = vadd.f32 %v8589, %v8476
        %v8591 = vadd.f32 %v8590, %v8478
        %v8592 = vadd.f32 %v8591, %v8481
        %v8593 = vadd.f32 %v8592, %v8483
        %v8594 = vadd.f32 %v8593, %v8486
        %v8595 = vadd.f32 %v8594, %v8488
        %v8596 = vadd.f32 %v8595, %v8491
        %v8597 = vadd.f32 %v8596, %v8493
        %v8598 = vadd.f32 %v8597, %v8496
        %v8599 = vadd.f32 %v8598, %v8498
        %v8600 = vadd.f32 %v8599, %v8501
        %v8601 = vadd.f32 %v8600, %v8503
        %v8602 = vadd.f32 %v8601, %v8506
        %v8603 = vadd.f32 %v8602, %v8508
        %v8604 = vadd.f32 %v8603, %v8511
        %v8605 = vadd.f32 %v8604, %v8513
        %v8606 = vadd.f32 %v8605, %v8516
        %v8607 = vadd.f32 %v8606, %v8518
        %v8608 = vadd.f32 %v8607, %v8521
        %v8609 = vadd.f32 %v8608, %v8523
        %v8610 = vadd.f32 %v8609, %v8526
        %v8611 = vadd.f32 %v8610, %v8528
        %v8612 = vadd.f32 %v8611, %v8531
        %v8613 = vadd.f32 %v8612, %v8533
        %v8614 = vadd.f32 %v8613, %v8536
        %v8615 = vadd.f32 %v8614, %v8538
        %v8616 = vadd.f32 %v8615, %v8541
        %v8617 = vadd.f32 %v8616, %v8543
        %v8618 = vadd.f32 %v8617, %v8546
        %v8619 = vadd.f32 %v8618, %v8548
        %v8620 = vrot.slane %v8619, 4
        %v8621 = vadd.f32 %v8619, %v8620
        %v8622 = vrot.slane %v8621, 2
        %v8623 = vadd.f32 %v8621, %v8622
        %v8624 = vrot.slane %v8623, 1
        %v8625 = vadd.f32 %v8623, %v8624
        %v8626 = vmul.f32 %v8391, %v8391
        %v8627 = vmul.f32 %v8393, %v8393
        %v8628 = vmul.f32 %v8396, %v8396
        %v8629 = vmul.f32 %v8398, %v8398
        %v8630 = vmul.f32 %v8401, %v8401
        %v8631 = vmul.f32 %v8403, %v8403
        %v8632 = vmul.f32 %v8406, %v8406
        %v8633 = vmul.f32 %v8408, %v8408
        %v8634 = vmul.f32 %v8411, %v8411
        %v8635 = vmul.f32 %v8413, %v8413
        %v8636 = vmul.f32 %v8416, %v8416
        %v8637 = vmul.f32 %v8418, %v8418
        %v8638 = vmul.f32 %v8421, %v8421
        %v8639 = vmul.f32 %v8423, %v8423
        %v8640 = vmul.f32 %v8426, %v8426
        %v8641 = vmul.f32 %v8428, %v8428
        %v8642 = vmul.f32 %v8431, %v8431
        %v8643 = vmul.f32 %v8433, %v8433
        %v8644 = vmul.f32 %v8436, %v8436
        %v8645 = vmul.f32 %v8438, %v8438
        %v8646 = vmul.f32 %v8441, %v8441
        %v8647 = vmul.f32 %v8443, %v8443
        %v8648 = vmul.f32 %v8446, %v8446
        %v8649 = vmul.f32 %v8448, %v8448
        %v8650 = vmul.f32 %v8451, %v8451
        %v8651 = vmul.f32 %v8453, %v8453
        %v8652 = vmul.f32 %v8456, %v8456
        %v8653 = vmul.f32 %v8458, %v8458
        %v8654 = vmul.f32 %v8461, %v8461
        %v8655 = vmul.f32 %v8463, %v8463
        %v8656 = vmul.f32 %v8466, %v8466
        %v8657 = vmul.f32 %v8468, %v8468
        %v8658 = vmul.f32 %v8471, %v8471
        %v8659 = vmul.f32 %v8473, %v8473
        %v8660 = vmul.f32 %v8476, %v8476
        %v8661 = vmul.f32 %v8478, %v8478
        %v8662 = vmul.f32 %v8481, %v8481
        %v8663 = vmul.f32 %v8483, %v8483
        %v8664 = vmul.f32 %v8486, %v8486
        %v8665 = vmul.f32 %v8488, %v8488
        %v8666 = vmul.f32 %v8491, %v8491
        %v8667 = vmul.f32 %v8493, %v8493
        %v8668 = vmul.f32 %v8496, %v8496
        %v8669 = vmul.f32 %v8498, %v8498
        %v8670 = vmul.f32 %v8501, %v8501
        %v8671 = vmul.f32 %v8503, %v8503
        %v8672 = vmul.f32 %v8506, %v8506
        %v8673 = vmul.f32 %v8508, %v8508
        %v8674 = vmul.f32 %v8511, %v8511
        %v8675 = vmul.f32 %v8513, %v8513
        %v8676 = vmul.f32 %v8516, %v8516
        %v8677 = vmul.f32 %v8518, %v8518
        %v8678 = vmul.f32 %v8521, %v8521
        %v8679 = vmul.f32 %v8523, %v8523
        %v8680 = vmul.f32 %v8526, %v8526
        %v8681 = vmul.f32 %v8528, %v8528
        %v8682 = vmul.f32 %v8531, %v8531
        %v8683 = vmul.f32 %v8533, %v8533
        %v8684 = vmul.f32 %v8536, %v8536
        %v8685 = vmul.f32 %v8538, %v8538
        %v8686 = vmul.f32 %v8541, %v8541
        %v8687 = vmul.f32 %v8543, %v8543
        %v8688 = vmul.f32 %v8546, %v8546
        %v8689 = vmul.f32 %v8548, %v8548
        %v8690 = vadd.f32 %v8626, %v8627
        %v8691 = vadd.f32 %v8690, %v8628
        %v8692 = vadd.f32 %v8691, %v8629
        %v8693 = vadd.f32 %v8692, %v8630
        %v8694 = vadd.f32 %v8693, %v8631
        %v8695 = vadd.f32 %v8694, %v8632
        %v8696 = vadd.f32 %v8695, %v8633
        %v8697 = vadd.f32 %v8696, %v8634
        %v8698 = vadd.f32 %v8697, %v8635
        %v8699 = vadd.f32 %v8698, %v8636
        %v8700 = vadd.f32 %v8699, %v8637
        %v8701 = vadd.f32 %v8700, %v8638
        %v8702 = vadd.f32 %v8701, %v8639
        %v8703 = vadd.f32 %v8702, %v8640
        %v8704 = vadd.f32 %v8703, %v8641
        %v8705 = vadd.f32 %v8704, %v8642
        %v8706 = vadd.f32 %v8705, %v8643
        %v8707 = vadd.f32 %v8706, %v8644
        %v8708 = vadd.f32 %v8707, %v8645
        %v8709 = vadd.f32 %v8708, %v8646
        %v8710 = vadd.f32 %v8709, %v8647
        %v8711 = vadd.f32 %v8710, %v8648
        %v8712 = vadd.f32 %v8711, %v8649
        %v8713 = vadd.f32 %v8712, %v8650
        %v8714 = vadd.f32 %v8713, %v8651
        %v8715 = vadd.f32 %v8714, %v8652
        %v8716 = vadd.f32 %v8715, %v8653
        %v8717 = vadd.f32 %v8716, %v8654
        %v8718 = vadd.f32 %v8717, %v8655
        %v8719 = vadd.f32 %v8718, %v8656
        %v8720 = vadd.f32 %v8719, %v8657
        %v8721 = vrot.slane %v8720, 4
        %v8722 = vadd.f32 %v8720, %v8721
        %v8723 = vrot.slane %v8722, 2
        %v8724 = vadd.f32 %v8722, %v8723
        %v8725 = vrot.slane %v8724, 1
        %v8726 = vadd.f32 %v8724, %v8725
        %v8727 = vadd.f32 %v8658, %v8659
        %v8728 = vadd.f32 %v8727, %v8660
        %v8729 = vadd.f32 %v8728, %v8661
        %v8730 = vadd.f32 %v8729, %v8662
        %v8731 = vadd.f32 %v8730, %v8663
        %v8732 = vadd.f32 %v8731, %v8664
        %v8733 = vadd.f32 %v8732, %v8665
        %v8734 = vadd.f32 %v8733, %v8666
        %v8735 = vadd.f32 %v8734, %v8667
        %v8736 = vadd.f32 %v8735, %v8668
        %v8737 = vadd.f32 %v8736, %v8669
        %v8738 = vadd.f32 %v8737, %v8670
        %v8739 = vadd.f32 %v8738, %v8671
        %v8740 = vadd.f32 %v8739, %v8672
        %v8741 = vadd.f32 %v8740, %v8673
        %v8742 = vadd.f32 %v8741, %v8674
        %v8743 = vadd.f32 %v8742, %v8675
        %v8744 = vadd.f32 %v8743, %v8676
        %v8745 = vadd.f32 %v8744, %v8677
        %v8746 = vadd.f32 %v8745, %v8678
        %v8747 = vadd.f32 %v8746, %v8679
        %v8748 = vadd.f32 %v8747, %v8680
        %v8749 = vadd.f32 %v8748, %v8681
        %v8750 = vadd.f32 %v8749, %v8682
        %v8751 = vadd.f32 %v8750, %v8683
        %v8752 = vadd.f32 %v8751, %v8684
        %v8753 = vadd.f32 %v8752, %v8685
        %v8754 = vadd.f32 %v8753, %v8686
        %v8755 = vadd.f32 %v8754, %v8687
        %v8756 = vadd.f32 %v8755, %v8688
        %v8757 = vadd.f32 %v8756, %v8689
        %v8758 = vrot.slane %v8757, 4
        %v8759 = vadd.f32 %v8757, %v8758
        %v8760 = vrot.slane %v8759, 2
        %v8761 = vadd.f32 %v8759, %v8760
        %v8762 = vrot.slane %v8761, 1
        %v8763 = vadd.f32 %v8761, %v8762
        %v8766 = vsel %vm3932, %v8625, %v8588
        %8768 = vmatpush.msra.mxu0 %v459
        %8769 = vmatpush.msra.mxu0 %v458
        %8770 = vmatpush.msra.mxu0 %v457
        %8771 = vmatpush.msra.mxu0 %v456
        %8772 = vmatpush.msra.mxu0 %v455
        %8773 = vmatpush.msra.mxu0 %v454
        %8774 = vmatpush.msra.mxu0 %v453
        %8775 = vmatpush.msra.mxu0 %v452
        %8776 = vmatpush.msra.mxu0 %v451
        %8777 = vmatpush.msra.mxu0 %v450
        %8778 = vmatpush.msra.mxu0 %v449
        %8779 = vmatpush.msra.mxu0 %v448
        %8780 = vmatpush.msra.mxu0 %v447
        %8781 = vmatpush.msra.mxu0 %v446
        %8782 = vmatpush.msra.mxu0 %v445
        %8783 = vmatpush.msra.mxu0 %v444
        %8784 = vmatmul.f32.gmra.mxu0 %v8766
        %v8785 = vpop.f32.mrf.mxu0
        %v8786 = vadd.f32 0.0, %v8785
        %8787 = vdwg.mxu0
        %v8790 = vsel %vm3932, %v8763, %v8726
        %8792 = vmatpush.msra.mxu0 %v459
        %8793 = vmatpush.msra.mxu0 %v458
        %8794 = vmatpush.msra.mxu0 %v457
        %8795 = vmatpush.msra.mxu0 %v456
        %8796 = vmatpush.msra.mxu0 %v455
        %8797 = vmatpush.msra.mxu0 %v454
        %8798 = vmatpush.msra.mxu0 %v453
        %8799 = vmatpush.msra.mxu0 %v452
        %8800 = vmatpush.msra.mxu0 %v451
        %8801 = vmatpush.msra.mxu0 %v450
        %8802 = vmatpush.msra.mxu0 %v449
        %8803 = vmatpush.msra.mxu0 %v448
        %8804 = vmatpush.msra.mxu0 %v447
        %8805 = vmatpush.msra.mxu0 %v446
        %8806 = vmatpush.msra.mxu0 %v445
        %8807 = vmatpush.msra.mxu0 %v444
        %8808 = vmatmul.f32.gmra.mxu0 %v8790
        %v8809 = vpop.f32.mrf.mxu0
        %v8810 = vadd.f32 0.0, %v8809
        %8811 = vdwg.mxu0
        %v8812 = vmul.f32 %v8786, %v3985
        %v8813 = vmul.f32 %v8810, %v3985
        %v8814 = vmul.f32 %v8812, %v8812
        %v8815 = vsub.f32 %v8813, %v8814
        %v8816 = vmax.f32 %v8815, 0.0
        %v8817 = vadd.f32 %v8816, 1e-05
        %v8818 = vrsqrt.pop %v8817
        %v8819 = vmul.f32 %v8818, %v8817
        %v8820 = vmul.f32 %v8819, %v8818
        %v8821 = vmul.f32 0.5, %v8820
        %v8822 = vsub.f32 1.5, %v8821
        %v8823 = vmul.f32 %v8818, %v8822
        %vm8824 = vweird.f32 %v8817
        %vm8825 = vweird.f32 %v8818
        %vm8826 = vmor %vm8824, %vm8825
        %v8827 = vsel %vm8826, %v8818, %v8823
        %v8829 = vsel %vm4002, %v8812, 0
        %8831 = vmatpush.msra.mxu0 0.0
        %8832 = vmatpush.msra.mxu0 0.0
        %8833 = vmatpush.msra.mxu0 0.0
        %8834 = vmatpush.msra.mxu0 0.0
        %8835 = vmatpush.msra.mxu0 0.0
        %8836 = vmatpush.msra.mxu0 0.0
        %8837 = vmatpush.msra.mxu0 0.0
        %8838 = vmatpush.msra.mxu0 0.0
        %8839 = vmatpush.msra.mxu0 0.0
        %8840 = vmatpush.msra.mxu0 0.0
        %8841 = vmatpush.msra.mxu0 0.0
        %8842 = vmatpush.msra.mxu0 0.0
        %8843 = vmatpush.msra.mxu0 0.0
        %8844 = vmatpush.msra.mxu0 0.0
        %8845 = vmatpush.msra.mxu0 0.0
        %8846 = vmatpush.msra.mxu0 %v460
        %8847 = vmatmul.f32.gmra.mxu0 %v8829
        %v8848 = vpop.f32.mrf.mxu0
        %v8849 = vadd.f32 0.0, %v8848
        %8850 = vdwg.mxu0
        %v8852 = vsel %vm4002, %v8827, 0
        %8854 = vmatpush.msra.mxu0 0.0
        %8855 = vmatpush.msra.mxu0 0.0
        %8856 = vmatpush.msra.mxu0 0.0
        %8857 = vmatpush.msra.mxu0 0.0
        %8858 = vmatpush.msra.mxu0 0.0
        %8859 = vmatpush.msra.mxu0 0.0
        %8860 = vmatpush.msra.mxu0 0.0
        %8861 = vmatpush.msra.mxu0 0.0
        %8862 = vmatpush.msra.mxu0 0.0
        %8863 = vmatpush.msra.mxu0 0.0
        %8864 = vmatpush.msra.mxu0 0.0
        %8865 = vmatpush.msra.mxu0 0.0
        %8866 = vmatpush.msra.mxu0 0.0
        %8867 = vmatpush.msra.mxu0 0.0
        %8868 = vmatpush.msra.mxu0 0.0
        %8869 = vmatpush.msra.mxu0 %v460
        %8870 = vmatmul.f32.gmra.mxu0 %v8852
        %v8871 = vpop.f32.mrf.mxu0
        %v8872 = vadd.f32 0.0, %v8871
        %8873 = vdwg.mxu0
        %v8875 = vperm.slane %v8550, 0
        %v8877 = vmul.f32 %v8872, %v8875
        %v8878 = vmul.f32 %v8849, %v8877
        %v8880 = vperm.slane %v8551, 0
        %v8882 = vsub.f32 %v8880, %v8878
        %v8884 = vrot.slane %v8877, 1
        %v8886 = vrot.slane %v8882, 1
        %v8887 = vperm.slane %v8877, 0
        %v8888 = vperm.slane %v8884, 0
        %v8891 = vmul.f32 %v8391, %v8887
        %v8892 = vmul.f32 %v8393, %v8887
        %v8893 = vmul.f32 %v8396, %v8887
        %v8894 = vmul.f32 %v8398, %v8887
        %v8895 = vmul.f32 %v8401, %v8887
        %v8896 = vmul.f32 %v8403, %v8887
        %v8897 = vmul.f32 %v8406, %v8887
        %v8898 = vmul.f32 %v8408, %v8887
        %v8899 = vmul.f32 %v8411, %v8887
        %v8900 = vmul.f32 %v8413, %v8887
        %v8901 = vmul.f32 %v8416, %v8887
        %v8902 = vmul.f32 %v8418, %v8887
        %v8903 = vmul.f32 %v8421, %v8887
        %v8904 = vmul.f32 %v8423, %v8887
        %v8905 = vmul.f32 %v8426, %v8887
        %v8906 = vmul.f32 %v8428, %v8887
        %v8907 = vmul.f32 %v8431, %v8887
        %v8908 = vmul.f32 %v8433, %v8887
        %v8909 = vmul.f32 %v8436, %v8887
        %v8910 = vmul.f32 %v8438, %v8887
        %v8911 = vmul.f32 %v8441, %v8887
        %v8912 = vmul.f32 %v8443, %v8887
        %v8913 = vmul.f32 %v8446, %v8887
        %v8914 = vmul.f32 %v8448, %v8887
        %v8915 = vmul.f32 %v8451, %v8887
        %v8916 = vmul.f32 %v8453, %v8887
        %v8917 = vmul.f32 %v8456, %v8887
        %v8918 = vmul.f32 %v8458, %v8887
        %v8919 = vmul.f32 %v8461, %v8887
        %v8920 = vmul.f32 %v8463, %v8887
        %v8921 = vmul.f32 %v8466, %v8887
        %v8922 = vmul.f32 %v8468, %v8887
        %v8923 = vmul.f32 %v8471, %v8888
        %v8924 = vmul.f32 %v8473, %v8888
        %v8925 = vmul.f32 %v8476, %v8888
        %v8926 = vmul.f32 %v8478, %v8888
        %v8927 = vmul.f32 %v8481, %v8888
        %v8928 = vmul.f32 %v8483, %v8888
        %v8929 = vmul.f32 %v8486, %v8888
        %v8930 = vmul.f32 %v8488, %v8888
        %v8931 = vmul.f32 %v8491, %v8888
        %v8932 = vmul.f32 %v8493, %v8888
        %v8933 = vmul.f32 %v8496, %v8888
        %v8934 = vmul.f32 %v8498, %v8888
        %v8935 = vmul.f32 %v8501, %v8888
        %v8936 = vmul.f32 %v8503, %v8888
        %v8937 = vmul.f32 %v8506, %v8888
        %v8938 = vmul.f32 %v8508, %v8888
        %v8939 = vmul.f32 %v8511, %v8888
        %v8940 = vmul.f32 %v8513, %v8888
        %v8941 = vmul.f32 %v8516, %v8888
        %v8942 = vmul.f32 %v8518, %v8888
        %v8943 = vmul.f32 %v8521, %v8888
        %v8944 = vmul.f32 %v8523, %v8888
        %v8945 = vmul.f32 %v8526, %v8888
        %v8946 = vmul.f32 %v8528, %v8888
        %v8947 = vmul.f32 %v8531, %v8888
        %v8948 = vmul.f32 %v8533, %v8888
        %v8949 = vmul.f32 %v8536, %v8888
        %v8950 = vmul.f32 %v8538, %v8888
        %v8951 = vmul.f32 %v8541, %v8888
        %v8952 = vmul.f32 %v8543, %v8888
        %v8953 = vmul.f32 %v8546, %v8888
        %v8954 = vmul.f32 %v8548, %v8888
        %v8955 = vperm.slane %v8882, 0
        %v8956 = vperm.slane %v8886, 0
        %v8959 = vadd.f32 %v8891, %v8955
        %v8960 = vadd.f32 %v8892, %v8955
        %v8961 = vadd.f32 %v8893, %v8955
        %v8962 = vadd.f32 %v8894, %v8955
        %v8963 = vadd.f32 %v8895, %v8955
        %v8964 = vadd.f32 %v8896, %v8955
        %v8965 = vadd.f32 %v8897, %v8955
        %v8966 = vadd.f32 %v8898, %v8955
        %v8967 = vadd.f32 %v8899, %v8955
        %v8968 = vadd.f32 %v8900, %v8955
        %v8969 = vadd.f32 %v8901, %v8955
        %v8970 = vadd.f32 %v8902, %v8955
        %v8971 = vadd.f32 %v8903, %v8955
        %v8972 = vadd.f32 %v8904, %v8955
        %v8973 = vadd.f32 %v8905, %v8955
        %v8974 = vadd.f32 %v8906, %v8955
        %v8975 = vadd.f32 %v8907, %v8955
        %v8976 = vadd.f32 %v8908, %v8955
        %v8977 = vadd.f32 %v8909, %v8955
        %v8978 = vadd.f32 %v8910, %v8955
        %v8979 = vadd.f32 %v8911, %v8955
        %v8980 = vadd.f32 %v8912, %v8955
        %v8981 = vadd.f32 %v8913, %v8955
        %v8982 = vadd.f32 %v8914, %v8955
        %v8983 = vadd.f32 %v8915, %v8955
        %v8984 = vadd.f32 %v8916, %v8955
        %v8985 = vadd.f32 %v8917, %v8955
        %v8986 = vadd.f32 %v8918, %v8955
        %v8987 = vadd.f32 %v8919, %v8955
        %v8988 = vadd.f32 %v8920, %v8955
        %v8989 = vadd.f32 %v8921, %v8955
        %v8990 = vadd.f32 %v8922, %v8955
        %v8991 = vadd.f32 %v8923, %v8956
        %v8992 = vadd.f32 %v8924, %v8956
        %v8993 = vadd.f32 %v8925, %v8956
        %v8994 = vadd.f32 %v8926, %v8956
        %v8995 = vadd.f32 %v8927, %v8956
        %v8996 = vadd.f32 %v8928, %v8956
        %v8997 = vadd.f32 %v8929, %v8956
        %v8998 = vadd.f32 %v8930, %v8956
        %v8999 = vadd.f32 %v8931, %v8956
        %v9000 = vadd.f32 %v8932, %v8956
        %v9001 = vadd.f32 %v8933, %v8956
        %v9002 = vadd.f32 %v8934, %v8956
        %v9003 = vadd.f32 %v8935, %v8956
        %v9004 = vadd.f32 %v8936, %v8956
        %v9005 = vadd.f32 %v8937, %v8956
        %v9006 = vadd.f32 %v8938, %v8956
        %v9007 = vadd.f32 %v8939, %v8956
        %v9008 = vadd.f32 %v8940, %v8956
        %v9009 = vadd.f32 %v8941, %v8956
        %v9010 = vadd.f32 %v8942, %v8956
        %v9011 = vadd.f32 %v8943, %v8956
        %v9012 = vadd.f32 %v8944, %v8956
        %v9013 = vadd.f32 %v8945, %v8956
        %v9014 = vadd.f32 %v8946, %v8956
        %v9015 = vadd.f32 %v8947, %v8956
        %v9016 = vadd.f32 %v8948, %v8956
        %v9017 = vadd.f32 %v8949, %v8956
        %v9018 = vadd.f32 %v8950, %v8956
        %v9019 = vadd.f32 %v8951, %v8956
        %v9020 = vadd.f32 %v8952, %v8956
        %v9021 = vadd.f32 %v8953, %v8956
        %v9022 = vadd.f32 %v8954, %v8956
        %vm9087 = vcmask 1040384
        %v9088 = vrot.slane %v8959, 7
        %v9089 = vrot.slane %v8960, 7
        %v9090 = vsel %vm9087, %v9088, %v9089
        %v9091 = vrot.slane %v8961, 7
        %v9092 = vrot.slane %v8962, 7
        %v9093 = vsel %vm9087, %v9091, %v9092
        %v9094 = vrot.slane %v8963, 7
        %v9095 = vrot.slane %v8964, 7
        %v9096 = vsel %vm9087, %v9094, %v9095
        %v9097 = vrot.slane %v8965, 7
        %v9098 = vrot.slane %v8966, 7
        %v9099 = vsel %vm9087, %v9097, %v9098
        %v9100 = vrot.slane %v8967, 7
        %v9101 = vrot.slane %v8968, 7
        %v9102 = vsel %vm9087, %v9100, %v9101
        %v9103 = vrot.slane %v8969, 7
        %v9104 = vrot.slane %v8970, 7
        %v9105 = vsel %vm9087, %v9103, %v9104
        %v9106 = vrot.slane %v8971, 7
        %v9107 = vrot.slane %v8972, 7
        %v9108 = vsel %vm9087, %v9106, %v9107
        %v9109 = vrot.slane %v8973, 7
        %v9110 = vrot.slane %v8974, 7
        %v9111 = vsel %vm9087, %v9109, %v9110
        %v9112 = vrot.slane %v8975, 7
        %v9113 = vrot.slane %v8976, 7
        %v9114 = vsel %vm9087, %v9112, %v9113
        %v9115 = vrot.slane %v8977, 7
        %v9116 = vrot.slane %v8978, 7
        %v9117 = vsel %vm9087, %v9115, %v9116
        %v9118 = vrot.slane %v8979, 7
        %v9119 = vrot.slane %v8980, 7
        %v9120 = vsel %vm9087, %v9118, %v9119
        %v9121 = vrot.slane %v8981, 7
        %v9122 = vrot.slane %v8982, 7
        %v9123 = vsel %vm9087, %v9121, %v9122
        %v9124 = vrot.slane %v8983, 7
        %v9125 = vrot.slane %v8984, 7
        %v9126 = vsel %vm9087, %v9124, %v9125
        %v9127 = vrot.slane %v8985, 7
        %v9128 = vrot.slane %v8986, 7
        %v9129 = vsel %vm9087, %v9127, %v9128
        %v9130 = vrot.slane %v8987, 7
        %v9131 = vrot.slane %v8988, 7
        %v9132 = vsel %vm9087, %v9130, %v9131
        %v9133 = vrot.slane %v8989, 7
        %v9134 = vrot.slane %v8990, 7
        %v9135 = vsel %vm9087, %v9133, %v9134
        %v9136 = vrot.slane %v8991, 7
        %v9137 = vrot.slane %v8992, 7
        %v9138 = vsel %vm9087, %v9136, %v9137
        %v9139 = vrot.slane %v8993, 7
        %v9140 = vrot.slane %v8994, 7
        %v9141 = vsel %vm9087, %v9139, %v9140
        %v9142 = vrot.slane %v8995, 7
        %v9143 = vrot.slane %v8996, 7
        %v9144 = vsel %vm9087, %v9142, %v9143
        %v9145 = vrot.slane %v8997, 7
        %v9146 = vrot.slane %v8998, 7
        %v9147 = vsel %vm9087, %v9145, %v9146
        %v9148 = vrot.slane %v8999, 7
        %v9149 = vrot.slane %v9000, 7
        %v9150 = vsel %vm9087, %v9148, %v9149
        %v9151 = vrot.slane %v9001, 7
        %v9152 = vrot.slane %v9002, 7
        %v9153 = vsel %vm9087, %v9151, %v9152
        %v9154 = vrot.slane %v9003, 7
        %v9155 = vrot.slane %v9004, 7
        %v9156 = vsel %vm9087, %v9154, %v9155
        %v9157 = vrot.slane %v9005, 7
        %v9158 = vrot.slane %v9006, 7
        %v9159 = vsel %vm9087, %v9157, %v9158
        %v9160 = vrot.slane %v9007, 7
        %v9161 = vrot.slane %v9008, 7
        %v9162 = vsel %vm9087, %v9160, %v9161
        %v9163 = vrot.slane %v9009, 7
        %v9164 = vrot.slane %v9010, 7
        %v9165 = vsel %vm9087, %v9163, %v9164
        %v9166 = vrot.slane %v9011, 7
        %v9167 = vrot.slane %v9012, 7
        %v9168 = vsel %vm9087, %v9166, %v9167
        %v9169 = vrot.slane %v9013, 7
        %v9170 = vrot.slane %v9014, 7
        %v9171 = vsel %vm9087, %v9169, %v9170
        %v9172 = vrot.slane %v9015, 7
        %v9173 = vrot.slane %v9016, 7
        %v9174 = vsel %vm9087, %v9172, %v9173
        %v9175 = vrot.slane %v9017, 7
        %v9176 = vrot.slane %v9018, 7
        %v9177 = vsel %vm9087, %v9175, %v9176
        %v9178 = vrot.slane %v9019, 7
        %v9179 = vrot.slane %v9020, 7
        %v9180 = vsel %vm9087, %v9178, %v9179
        %v9181 = vrot.slane %v9021, 7
        %v9182 = vrot.slane %v9022, 7
        %v9183 = vsel %vm9087, %v9181, %v9182
        %v9280 = vadd.f32 %v464, %v9088
        %v9281 = vadd.f32 %v465, %v9090
        %v9282 = vadd.f32 %v466, %v9089
        %v9283 = vadd.f32 %v467, %v9091
        %v9284 = vadd.f32 %v468, %v9093
        %v9285 = vadd.f32 %v469, %v9092
        %v9286 = vadd.f32 %v470, %v9094
        %v9287 = vadd.f32 %v471, %v9096
        %v9288 = vadd.f32 %v472, %v9095
        %v9289 = vadd.f32 %v473, %v9097
        %v9290 = vadd.f32 %v474, %v9099
        %v9291 = vadd.f32 %v475, %v9098
        %v9292 = vadd.f32 %v476, %v9100
        %v9293 = vadd.f32 %v477, %v9102
        %v9294 = vadd.f32 %v478, %v9101
        %v9295 = vadd.f32 %v479, %v9103
        %v9296 = vadd.f32 %v480, %v9105
        %v9297 = vadd.f32 %v481, %v9104
        %v9298 = vadd.f32 %v482, %v9106
        %v9299 = vadd.f32 %v483, %v9108
        %v9300 = vadd.f32 %v484, %v9107
        %v9301 = vadd.f32 %v485, %v9109
        %v9302 = vadd.f32 %v486, %v9111
        %v9303 = vadd.f32 %v487, %v9110
        %v9304 = vadd.f32 %v488, %v9112
        %v9305 = vadd.f32 %v489, %v9114
        %v9306 = vadd.f32 %v490, %v9113
        %v9307 = vadd.f32 %v491, %v9115
        %v9308 = vadd.f32 %v492, %v9117
        %v9309 = vadd.f32 %v493, %v9116
        %v9310 = vadd.f32 %v494, %v9118
        %v9311 = vadd.f32 %v495, %v9120
        %v9312 = vadd.f32 %v496, %v9119
        %v9313 = vadd.f32 %v497, %v9121
        %v9314 = vadd.f32 %v498, %v9123
        %v9315 = vadd.f32 %v499, %v9122
        %v9316 = vadd.f32 %v500, %v9124
        %v9317 = vadd.f32 %v501, %v9126
        %v9318 = vadd.f32 %v502, %v9125
        %v9319 = vadd.f32 %v503, %v9127
        %v9320 = vadd.f32 %v504, %v9129
        %v9321 = vadd.f32 %v505, %v9128
        %v9322 = vadd.f32 %v506, %v9130
        %v9323 = vadd.f32 %v507, %v9132
        %v9324 = vadd.f32 %v508, %v9131
        %v9325 = vadd.f32 %v509, %v9133
        %v9326 = vadd.f32 %v510, %v9135
        %v9327 = vadd.f32 %v511, %v9134
        %v9328 = vadd.f32 %v518, %v9136
        %v9329 = vadd.f32 %v519, %v9138
        %v9330 = vadd.f32 %v520, %v9137
        %v9331 = vadd.f32 %v521, %v9139
        %v9332 = vadd.f32 %v522, %v9141
        %v9333 = vadd.f32 %v523, %v9140
        %v9334 = vadd.f32 %v524, %v9142
        %v9335 = vadd.f32 %v525, %v9144
        %v9336 = vadd.f32 %v526, %v9143
        %v9337 = vadd.f32 %v527, %v9145
        %v9338 = vadd.f32 %v528, %v9147
        %v9339 = vadd.f32 %v529, %v9146
        %v9340 = vadd.f32 %v530, %v9148
        %v9341 = vadd.f32 %v531, %v9150
        %v9342 = vadd.f32 %v532, %v9149
        %v9343 = vadd.f32 %v533, %v9151
        %v9344 = vadd.f32 %v534, %v9153
        %v9345 = vadd.f32 %v535, %v9152
        %v9346 = vadd.f32 %v536, %v9154
        %v9347 = vadd.f32 %v537, %v9156
        %v9348 = vadd.f32 %v538, %v9155
        %v9349 = vadd.f32 %v539, %v9157
        %v9350 = vadd.f32 %v540, %v9159
        %v9351 = vadd.f32 %v541, %v9158
        %v9352 = vadd.f32 %v542, %v9160
        %v9353 = vadd.f32 %v543, %v9162
        %v9354 = vadd.f32 %v544, %v9161
        %v9355 = vadd.f32 %v545, %v9163
        %v9356 = vadd.f32 %v546, %v9165
        %v9357 = vadd.f32 %v547, %v9164
        %v9358 = vadd.f32 %v548, %v9166
        %v9359 = vadd.f32 %v549, %v9168
        %v9360 = vadd.f32 %v550, %v9167
        %v9361 = vadd.f32 %v551, %v9169
        %v9362 = vadd.f32 %v552, %v9171
        %v9363 = vadd.f32 %v553, %v9170
        %v9364 = vadd.f32 %v554, %v9172
        %v9365 = vadd.f32 %v555, %v9174
        %v9366 = vadd.f32 %v556, %v9173
        %v9367 = vadd.f32 %v557, %v9175
        %v9368 = vadd.f32 %v558, %v9177
        %v9369 = vadd.f32 %v559, %v9176
        %v9370 = vadd.f32 %v560, %v9178
        %v9371 = vadd.f32 %v561, %v9180
        %v9372 = vadd.f32 %v562, %v9179
        %v9373 = vadd.f32 %v563, %v9181
        %v9374 = vadd.f32 %v564, %v9183
        %v9375 = vadd.f32 %v565, %v9182
        %v9376 = vmax.f32 %v9280, 0.0
        %v9377 = vmax.f32 %v9281, 0.0
        %v9378 = vmax.f32 %v9282, 0.0
        %v9379 = vmax.f32 %v9283, 0.0
        %v9380 = vmax.f32 %v9284, 0.0
        %v9381 = vmax.f32 %v9285, 0.0
        %v9382 = vmax.f32 %v9286, 0.0
        %v9383 = vmax.f32 %v9287, 0.0
        %v9384 = vmax.f32 %v9288, 0.0
        %v9385 = vmax.f32 %v9289, 0.0
        %v9386 = vmax.f32 %v9290, 0.0
        %v9387 = vmax.f32 %v9291, 0.0
        %v9388 = vmax.f32 %v9292, 0.0
        %v9389 = vmax.f32 %v9293, 0.0
        %v9390 = vmax.f32 %v9294, 0.0
        %v9391 = vmax.f32 %v9295, 0.0
        %v9392 = vmax.f32 %v9296, 0.0
        %v9393 = vmax.f32 %v9297, 0.0
        %v9394 = vmax.f32 %v9298, 0.0
        %v9395 = vmax.f32 %v9299, 0.0
        %v9396 = vmax.f32 %v9300, 0.0
        %v9397 = vmax.f32 %v9301, 0.0
        %v9398 = vmax.f32 %v9302, 0.0
        %v9399 = vmax.f32 %v9303, 0.0
        %v9400 = vmax.f32 %v9304, 0.0
        %v9401 = vmax.f32 %v9305, 0.0
        %v9402 = vmax.f32 %v9306, 0.0
        %v9403 = vmax.f32 %v9307, 0.0
        %v9404 = vmax.f32 %v9308, 0.0
        %v9405 = vmax.f32 %v9309, 0.0
        %v9406 = vmax.f32 %v9310, 0.0
        %v9407 = vmax.f32 %v9311, 0.0
        %v9408 = vmax.f32 %v9312, 0.0
        %v9409 = vmax.f32 %v9313, 0.0
        %v9410 = vmax.f32 %v9314, 0.0
        %v9411 = vmax.f32 %v9315, 0.0
        %v9412 = vmax.f32 %v9316, 0.0
        %v9413 = vmax.f32 %v9317, 0.0
        %v9414 = vmax.f32 %v9318, 0.0
        %v9415 = vmax.f32 %v9319, 0.0
        %v9416 = vmax.f32 %v9320, 0.0
        %v9417 = vmax.f32 %v9321, 0.0
        %v9418 = vmax.f32 %v9322, 0.0
        %v9419 = vmax.f32 %v9323, 0.0
        %v9420 = vmax.f32 %v9324, 0.0
        %v9421 = vmax.f32 %v9325, 0.0
        %v9422 = vmax.f32 %v9326, 0.0
        %v9423 = vmax.f32 %v9327, 0.0
        %v9424 = vmax.f32 %v9328, 0.0
        %v9425 = vmax.f32 %v9329, 0.0
        %v9426 = vmax.f32 %v9330, 0.0
        %v9427 = vmax.f32 %v9331, 0.0
        %v9428 = vmax.f32 %v9332, 0.0
        %v9429 = vmax.f32 %v9333, 0.0
        %v9430 = vmax.f32 %v9334, 0.0
        %v9431 = vmax.f32 %v9335, 0.0
        %v9432 = vmax.f32 %v9336, 0.0
        %v9433 = vmax.f32 %v9337, 0.0
        %v9434 = vmax.f32 %v9338, 0.0
        %v9435 = vmax.f32 %v9339, 0.0
        %v9436 = vmax.f32 %v9340, 0.0
        %v9437 = vmax.f32 %v9341, 0.0
        %v9438 = vmax.f32 %v9342, 0.0
        %v9439 = vmax.f32 %v9343, 0.0
        %v9440 = vmax.f32 %v9344, 0.0
        %v9441 = vmax.f32 %v9345, 0.0
        %v9442 = vmax.f32 %v9346, 0.0
        %v9443 = vmax.f32 %v9347, 0.0
        %v9444 = vmax.f32 %v9348, 0.0
        %v9445 = vmax.f32 %v9349, 0.0
        %v9446 = vmax.f32 %v9350, 0.0
        %v9447 = vmax.f32 %v9351, 0.0
        %v9448 = vmax.f32 %v9352, 0.0
        %v9449 = vmax.f32 %v9353, 0.0
        %v9450 = vmax.f32 %v9354, 0.0
        %v9451 = vmax.f32 %v9355, 0.0
        %v9452 = vmax.f32 %v9356, 0.0
        %v9453 = vmax.f32 %v9357, 0.0
        %v9454 = vmax.f32 %v9358, 0.0
        %v9455 = vmax.f32 %v9359, 0.0
        %v9456 = vmax.f32 %v9360, 0.0
        %v9457 = vmax.f32 %v9361, 0.0
        %v9458 = vmax.f32 %v9362, 0.0
        %v9459 = vmax.f32 %v9363, 0.0
        %v9460 = vmax.f32 %v9364, 0.0
        %v9461 = vmax.f32 %v9365, 0.0
        %v9462 = vmax.f32 %v9366, 0.0
        %v9463 = vmax.f32 %v9367, 0.0
        %v9464 = vmax.f32 %v9368, 0.0
        %v9465 = vmax.f32 %v9369, 0.0
        %v9466 = vmax.f32 %v9370, 0.0
        %v9467 = vmax.f32 %v9371, 0.0
        %v9468 = vmax.f32 %v9372, 0.0
        %v9469 = vmax.f32 %v9373, 0.0
        %v9470 = vmax.f32 %v9374, 0.0
        %v9471 = vmax.f32 %v9375, 0.0
        %9472 = vst [vmem:[%s440 - $0x1] sm:$0xfe] %v9376
        %9473 = vst [vmem:[%s440 + $0x7] sm:$0xff] %v9377
        %9474 = vst [vmem:[%s440 + $0xf] sm:$0x1] %v9378
        %9475 = vst [vmem:[%s440 + $0xf] sm:$0xfe] %v9379
        %9476 = vst [vmem:[%s440 + $0x17] sm:$0xff] %v9380
        %9477 = vst [vmem:[%s440 + $0x1f] sm:$0x1] %v9381
        %9478 = vst [vmem:[%s440 + $0x1f] sm:$0xfe] %v9382
        %9479 = vst [vmem:[%s440 + $0x27] sm:$0xff] %v9383
        %9480 = vst [vmem:[%s440 + $0x2f] sm:$0x1] %v9384
        %9481 = vst [vmem:[%s440 + $0x2f] sm:$0xfe] %v9385
        %9482 = vst [vmem:[%s440 + $0x37] sm:$0xff] %v9386
        %9483 = vst [vmem:[%s440 + $0x3f] sm:$0x1] %v9387
        %9484 = vst [vmem:[%s440 + $0x3f] sm:$0xfe] %v9388
        %9485 = vst [vmem:[%s440 + $0x47] sm:$0xff] %v9389
        %9486 = vst [vmem:[%s440 + $0x4f] sm:$0x1] %v9390
        %9487 = vst [vmem:[%s440 + $0x4f] sm:$0xfe] %v9391
        %9488 = vst [vmem:[%s440 + $0x57] sm:$0xff] %v9392
        %9489 = vst [vmem:[%s440 + $0x5f] sm:$0x1] %v9393
        %9490 = vst [vmem:[%s440 + $0x5f] sm:$0xfe] %v9394
        %9491 = vst [vmem:[%s440 + $0x67] sm:$0xff] %v9395
        %9492 = vst [vmem:[%s440 + $0x6f] sm:$0x1] %v9396
        %9493 = vst [vmem:[%s440 + $0x6f] sm:$0xfe] %v9397
        %9494 = vst [vmem:[%s440 + $0x77] sm:$0xff] %v9398
        %9495 = vst [vmem:[%s440 + $0x7f] sm:$0x1] %v9399
        %9496 = vst [vmem:[%s440 + $0x7f] sm:$0xfe] %v9400
        %9497 = vst [vmem:[%s440 + $0x87] sm:$0xff] %v9401
        %9498 = vst [vmem:[%s440 + $0x8f] sm:$0x1] %v9402
        %9499 = vst [vmem:[%s440 + $0x8f] sm:$0xfe] %v9403
        %9500 = vst [vmem:[%s440 + $0x97] sm:$0xff] %v9404
        %9501 = vst [vmem:[%s440 + $0x9f] sm:$0x1] %v9405
        %9502 = vst [vmem:[%s440 + $0x9f] sm:$0xfe] %v9406
        %9503 = vst [vmem:[%s440 + $0xa7] sm:$0xff] %v9407
        %9504 = vst [vmem:[%s440 + $0xaf] sm:$0x1] %v9408
        %9505 = vst [vmem:[%s440 + $0xaf] sm:$0xfe] %v9409
        %9506 = vst [vmem:[%s440 + $0xb7] sm:$0xff] %v9410
        %9507 = vst [vmem:[%s440 + $0xbf] sm:$0x1] %v9411
        %9508 = vst [vmem:[%s440 + $0xbf] sm:$0xfe] %v9412
        %9509 = vst [vmem:[%s440 + $0xc7] sm:$0xff] %v9413
        %9510 = vst [vmem:[%s440 + $0xcf] sm:$0x1] %v9414
        %9511 = vst [vmem:[%s440 + $0xcf] sm:$0xfe] %v9415
        %9512 = vst [vmem:[%s440 + $0xd7] sm:$0xff] %v9416
        %9513 = vst [vmem:[%s440 + $0xdf] sm:$0x1] %v9417
        %9514 = vst [vmem:[%s440 + $0xdf] sm:$0xfe] %v9418
        %9515 = vst [vmem:[%s440 + $0xe7] sm:$0xff] %v9419
        %9516 = vst [vmem:[%s440 + $0xef] sm:$0x1] %v9420
        %9517 = vst [vmem:[%s440 + $0xef] sm:$0xfe] %v9421
        %9518 = vst [vmem:[%s440 + $0xf7] sm:$0xff] %v9422
        %9519 = vst [vmem:[%s440 + $0xff] sm:$0x1] %v9423
        %9520 = vst [vmem:[%s440 + $0xff] sm:$0xfe] %v9424
        %9521 = vst [vmem:[%s440 + $0x107] sm:$0xff] %v9425
        %9522 = vst [vmem:[%s440 + $0x10f] sm:$0x1] %v9426
        %9523 = vst [vmem:[%s440 + $0x10f] sm:$0xfe] %v9427
        %9524 = vst [vmem:[%s440 + $0x117] sm:$0xff] %v9428
        %9525 = vst [vmem:[%s440 + $0x11f] sm:$0x1] %v9429
        %9526 = vst [vmem:[%s440 + $0x11f] sm:$0xfe] %v9430
        %9527 = vst [vmem:[%s440 + $0x127] sm:$0xff] %v9431
        %9528 = vst [vmem:[%s440 + $0x12f] sm:$0x1] %v9432
        %9529 = vst [vmem:[%s440 + $0x12f] sm:$0xfe] %v9433
        %9530 = vst [vmem:[%s440 + $0x137] sm:$0xff] %v9434
        %9531 = vst [vmem:[%s440 + $0x13f] sm:$0x1] %v9435
        %9532 = vst [vmem:[%s440 + $0x13f] sm:$0xfe] %v9436
        %9533 = vst [vmem:[%s440 + $0x147] sm:$0xff] %v9437
        %9534 = vst [vmem:[%s440 + $0x14f] sm:$0x1] %v9438
        %9535 = vst [vmem:[%s440 + $0x14f] sm:$0xfe] %v9439
        %9536 = vst [vmem:[%s440 + $0x157] sm:$0xff] %v9440
        %9537 = vst [vmem:[%s440 + $0x15f] sm:$0x1] %v9441
        %9538 = vst [vmem:[%s440 + $0x15f] sm:$0xfe] %v9442
        %9539 = vst [vmem:[%s440 + $0x167] sm:$0xff] %v9443
        %9540 = vst [vmem:[%s440 + $0x16f] sm:$0x1] %v9444
        %9541 = vst [vmem:[%s440 + $0x16f] sm:$0xfe] %v9445
        %9542 = vst [vmem:[%s440 + $0x177] sm:$0xff] %v9446
        %9543 = vst [vmem:[%s440 + $0x17f] sm:$0x1] %v9447
        %9544 = vst [vmem:[%s440 + $0x17f] sm:$0xfe] %v9448
        %9545 = vst [vmem:[%s440 + $0x187] sm:$0xff] %v9449
        %9546 = vst [vmem:[%s440 + $0x18f] sm:$0x1] %v9450
        %9547 = vst [vmem:[%s440 + $0x18f] sm:$0xfe] %v9451
        %9548 = vst [vmem:[%s440 + $0x197] sm:$0xff] %v9452
        %9549 = vst [vmem:[%s440 + $0x19f] sm:$0x1] %v9453
        %9550 = vst [vmem:[%s440 + $0x19f] sm:$0xfe] %v9454
        %9551 = vst [vmem:[%s440 + $0x1a7] sm:$0xff] %v9455
        %9552 = vst [vmem:[%s440 + $0x1af] sm:$0x1] %v9456
        %9553 = vst [vmem:[%s440 + $0x1af] sm:$0xfe] %v9457
        %9554 = vst [vmem:[%s440 + $0x1b7] sm:$0xff] %v9458
        %9555 = vst [vmem:[%s440 + $0x1bf] sm:$0x1] %v9459
        %9556 = vst [vmem:[%s440 + $0x1bf] sm:$0xfe] %v9460
        %9557 = vst [vmem:[%s440 + $0x1c7] sm:$0xff] %v9461
        %9558 = vst [vmem:[%s440 + $0x1cf] sm:$0x1] %v9462
        %9559 = vst [vmem:[%s440 + $0x1cf] sm:$0xfe] %v9463
        %9560 = vst [vmem:[%s440 + $0x1d7] sm:$0xff] %v9464
        %9561 = vst [vmem:[%s440 + $0x1df] sm:$0x1] %v9465
        %9562 = vst [vmem:[%s440 + $0x1df] sm:$0xfe] %v9466
        %9563 = vst [vmem:[%s440 + $0x1e7] sm:$0xff] %v9467
        %9564 = vst [vmem:[%s440 + $0x1ef] sm:$0x1] %v9468
        %9565 = vst [vmem:[%s440 + $0x1ef] sm:$0xfe] %v9469
        %9566 = vst [vmem:[%s440 + $0x1f7] sm:$0xff] %v9470
        %9567 = vst [vmem:[%s440 + $0x1ff] sm:$0x1] %v9471
        %s9568 = sand.u32 %s273, 1
        %s9569 = scalar_lea.sflag [#allocation5], %s9568
        %s9570 = sand.u32 %s273, 1
        %s9571 = smul.addr %s9570, 512
        %s9572 = scalar_lea.vmem [#allocation9], %s9571
        // Predicated region
        $region77: #{tpu_custom_call.1} parent=63 // pred_check
          %p9573 = pneg %p283
        $region78: #{tpu_custom_call.1} parent=63 // pred_check_branch
          %9575 = sbr.rel (%p9573) target = $region80
        $region79: #{tpu_custom_call.1} parent=63 // pred_region
          %s9576 = smul.u32 2, %s29
          %9578 = vsyncadd %s9569, 0
          %s9579 = smul.addr %s9576, 32
          %s9580 = smul.addr %s9579, 8
          %s9581 = scalar_lea.hbm %s11, %s9580
          %s9582 = sshll.u32 %s9572, 4
          %s9583 = int_to_ptr.vmem [resolvable:$true] %s9582
          %s9584 = sshll.u32 %s9581, 4
          %s9585 = int_to_ptr.hbm [resolvable:$true] %s9584
          %9590 = dma.vmem_to_hbm [thread:$0]  %s9583, 8192, %s9585, %s9569, 128, 128, 8
        $region80: #{tpu_custom_call.1} parent=63 // pred_fallthru
          _
      $region64: #{tpu_custom_call.1} parent=5 // pred_fallthru
        _
      %p9591 = scmp.le.s32.totalorder 2, %s24
      // Predicated region
      $region81: #{tpu_custom_call.1} parent=5 // pred_check
        %p9592 = pneg %p9591
      $region82: #{tpu_custom_call.1} parent=5 // pred_check_branch
        %9594 = sbr.rel (%p9592) target = $region84
      $region83: #{tpu_custom_call.1} parent=5 // pred_region
        %s9595 = ssub.s32 %s24, 2
        // Predicated region
        $region85: #{tpu_custom_call.1} parent=83 // pred_check
          %p9596 = pneg %p289
        $region86: #{tpu_custom_call.1} parent=83 // pred_check_branch
          %9598 = sbr.rel (%p9596) target = $region88
        $region87: #{tpu_custom_call.1} parent=83 // pred_region
          %s9599 = sand.u32 %s274, 1
          %s9600 = scalar_lea.sflag [#allocation5], %s9599
          %s9601 = sand.u32 %s274, 1
          %s9602 = smul.addr %s9601, 512
          %s9603 = scalar_lea.vmem [#allocation9], %s9602
          %9605 = dma.done %s9600, 8192
        $region88: #{tpu_custom_call.1} parent=83 // pred_fallthru
          _
      $region84: #{tpu_custom_call.1} parent=5 // pred_fallthru
        _
    $region6: #{tpu_custom_call.1} parent=1 // loop_footer
      %s28 = sadd.s32 1, %s24
    $region7: #{tpu_custom_call.1} parent=1 // loop_footer_branch
      %23 = sbr.rel target = $region3
    $region8: #{tpu_custom_call.1} parent=1 // loop_exit
      _
    %9606 = vsyncpa [#allocation4], 1
    %s9607 = scalar_lea.sflag [#allocation4], 1
    %9608 = vsyncpa %s9607, 1
    %9609 = vsyncpa [#allocation7], 1
    %9610 = vsyncpa [#allocation5], 1
    %s9611 = scalar_lea.sflag [#allocation5], 1
    %9612 = vsyncpa %s9611, 1

</llo_original>
